<compile_context>
chip_gen: v6e
topology: v6e:2x2x1
jax: 0.10.0
libtpu: 0.0.40
codegen_flags: <defaults>
</compile_context>

<pallas_src>
import functools

import numpy as np
import jax
import jax.numpy as jnp
from jax import lax
from jax.experimental import pallas as pl
from jax.experimental.pallas import tpu as pltpu


def _ban_kernel(q_ref, k_ref, wq_ref, bq_ref, wk_ref, bk_ref,
                watt_ref, wout3_ref, bout_ref, gloveT_ref, out_ref, *, n_ans):
    # blocks: q_ref (bt, Nq, E), k_ref (bt, Nk, E), out_ref (bt, A_pad)
    bt, nq, e = q_ref.shape
    nk = k_ref.shape[1]
    g, h = watt_ref.shape
    a_pad = out_ref.shape[1]
    z = g * bt                                   # fused (head, batch) dim, head-major

    # ---- q2h / k2h projections: single flat 2-D matmuls over all bt*N rows ----
    # TODO(synk): dropout omitted (inference/eval semantics); training-mode RNG
    # dropout could be added with pltpu.prng_random_bits if needed.
    q2d = q_ref[...].reshape(bt * nq, e)
    k2d = k_ref[...].reshape(bt * nk, e)
    hq = (jnp.dot(q2d, wq_ref[...], preferred_element_type=jnp.float32)
          + bq_ref[...]).reshape(bt, nq, h)                      # (bt, Nq, H)
    hk = (jnp.dot(k2d, wk_ref[...], preferred_element_type=jnp.float32)
          + bk_ref[...]).reshape(bt, nk, h)                      # (bt, Nk, H)

    # ---- all-head bilinear attention logits with ONE batched matmul ----
    # (only leading dims are merged; the (sublane, lane) dims are untouched)
    hq_s = (watt_ref[...][:, None, None, :] * hq[None]).reshape(z, nq, h)
    hk_b = jnp.broadcast_to(hk[None], (g, bt, nk, h)).reshape(z, nk, h)
    hq_b = jnp.broadcast_to(hq[None], (g, bt, nq, h)).reshape(z, nq, h)
    # NOTE: the h2att bias is constant over each head's flattened (Nq*Nk)
    # softmax map, so it cancels exactly in the softmax and is omitted here.
    att = jnp.einsum('zih,zjh->zij', hq_s, hk_b,
                     preferred_element_type=jnp.float32)         # (z, Nq, Nk)

    # flattened softmax over (Nq*Nk); normalization deferred past the pooling
    m = jnp.max(att, axis=2, keepdims=True)
    m = jnp.max(m, axis=1, keepdims=True)                        # (z, 1, 1)
    p = jnp.exp(att - m)
    s = jnp.sum(p, axis=2, keepdims=True)
    s = jnp.sum(s, axis=1, keepdims=True)                        # (z, 1, 1)

    # ---- bilinear pooling, batched over all (head, batch) pairs ----
    phk = jnp.einsum('zij,zjh->zih', p, hk_b,
                     preferred_element_type=jnp.float32)         # (z, Nq, H)
    og = jnp.sum(hq_b * phk, axis=1)                             # (z, H)
    og = og * pl.reciprocal(s, approx=True)[:, 0, :]             # deferred 1/sum (EUP)

    # ---- fc_out: one head-batched dot, then reduce over heads ----
    og3 = og.reshape(g, bt, h)                                   # tile-aligned split (bt % 8 == 0)
    contrib = jnp.einsum('gbh,gho->gbo', og3, wout3_ref[...],
                         preferred_element_type=jnp.float32)     # (g, bt, n_out)
    logits = bout_ref[...] + jnp.sum(contrib, axis=0)            # (bt, n_out)

    # ---- AnswerSelector: similarity + log_softmax over lane-padded candidates ----
    sim = jnp.dot(logits, gloveT_ref[...],
                  preferred_element_type=jnp.float32)            # (bt, A_pad)
    col = lax.broadcasted_iota(jnp.int32, (bt, a_pad), 1)
    sim = jnp.where(col < n_ans, sim, jnp.float32(-1e30))        # mask pad candidates
    mx = jnp.max(sim, axis=1, keepdims=True)
    zc = sim - mx
    lse = jnp.log(jnp.sum(jnp.exp(zc), axis=1, keepdims=True))
    out_ref[...] = zc - lse                                      # lane-dense store


def ban_forward(q_ids, k_ids, params, *, bt=8):
    """BAN.forward(batch=(he_ques, he_kg)) -> log-softmax over answer candidates."""
    assert bt % 8 == 0, "batch tile must be a multiple of the 8-row sublane tile"

    # Embedding lookup (ClassEmbedding) is a gather -> done as JAX glue.
    emb = params['emb']
    q_emb = jnp.take(emb, q_ids, axis=0).astype(jnp.float32)     # (B, Nq, E)
    k_emb = jnp.take(emb, k_ids, axis=0).astype(jnp.float32)     # (B, Nk, E)

    B, Nq, E = q_emb.shape
    Nk = k_emb.shape[1]
    H = params['wq'].shape[1]
    G = params['wattT'].shape[0]
    n_out = params['wout'].shape[1]
    A = params['gloveT'].shape[1]

    # Batch-tile the grid: bt examples per grid step (pad B up to a multiple).
    B_pad = ((B + bt - 1) // bt) * bt
    if B_pad != B:
        q_emb = jnp.pad(q_emb, ((0, B_pad - B), (0, 0), (0, 0)))
        k_emb = jnp.pad(k_emb, ((0, B_pad - B), (0, 0), (0, 0)))

    # Lane-dense output store: pad answer candidates to a multiple of 128.
    A_pad = ((A + 127) // 128) * 128
    gloveT = params['gloveT']
    if A_pad != A:
        gloveT = jnp.pad(gloveT, ((0, 0), (0, A_pad - A)))

    # fc_out weight as (head, hidden, n_out) so the kernel issues one batched dot.
    wout3 = params['wout'].reshape(G, H, n_out)

    kernel = functools.partial(_ban_kernel, n_ans=A)

    flops = 2 * B_pad * (Nq * E * H + Nk * E * H + 2 * G * Nq * Nk * H
                         + G * H * n_out + n_out * A_pad)
    transcendentals = B_pad * (G * Nq * Nk + A_pad)
    bytes_accessed = 4 * (int(q_emb.size) + int(k_emb.size) + int(params['wq'].size)
                          + int(params['bq'].size) + int(params['wk'].size)
                          + int(params['bk'].size) + int(params['wattT'].size)
                          + int(wout3.size) + int(params['bout'].size)
                          + int(gloveT.size) + B_pad * A_pad)
    cost = pl.CostEstimate(flops=int(flops), transcendentals=int(transcendentals),
                           bytes_accessed=int(bytes_accessed))

    out = pl.pallas_call(
        kernel,
        out_shape=jax.ShapeDtypeStruct((B_pad, A_pad), jnp.float32),
        grid=(B_pad // bt,),
        in_specs=[
            pl.BlockSpec((bt, Nq, E), lambda b: (b, 0, 0)),
            pl.BlockSpec((bt, Nk, E), lambda b: (b, 0, 0)),
            # grid-invariant weights (constant index maps); at production sizes
            # these could be single-buffered via pipeline_mode if the Mosaic dump
            # shows them double-buffered.
            pl.BlockSpec((E, H), lambda b: (0, 0)),
            pl.BlockSpec((1, H), lambda b: (0, 0)),
            pl.BlockSpec((E, H), lambda b: (0, 0)),
            pl.BlockSpec((1, H), lambda b: (0, 0)),
            pl.BlockSpec((G, H), lambda b: (0, 0)),
            pl.BlockSpec((G, H, n_out), lambda b: (0, 0, 0)),
            pl.BlockSpec((1, n_out), lambda b: (0, 0)),
            pl.BlockSpec((n_out, A_pad), lambda b: (0, 0)),
        ],
        out_specs=pl.BlockSpec((bt, A_pad), lambda b: (b, 0)),
        compiler_params=pltpu.CompilerParams(
            dimension_semantics=("parallel",),       # batch tiles are independent
            vmem_limit_bytes=32 * 1024 * 1024),
        cost_estimate=cost,
    )(q_emb, k_emb, params['wq'], params['bq'], params['wk'], params['bk'],
      params['wattT'], wout3, params['bout'], gloveT)

    return out[:B, :A]


def ban_reference(q_ids, k_ids, p):
    """Pure-JAX mirror of the PyTorch forward for verification."""
    q = jnp.take(p['emb'], q_ids, axis=0)
    k = jnp.take(p['emb'], k_ids, axis=0)
    hq = q @ p['wq'] + p['bq'][0]                    # (B, Nq, H)
    hk = k @ p['wk'] + p['bk'][0]                    # (B, Nk, H)
    L = jnp.einsum('bih,bjh,gh->bijg', hq, hk, p['wattT']) + p['batt'][0]
    B, Nq, Nk, G = L.shape
    Lf = jnp.transpose(L, (0, 3, 1, 2)).reshape(B, G, Nq * Nk)
    att = jax.nn.softmax(Lf, axis=2).reshape(B, G, Nq, Nk)
    og = jnp.einsum('bih,bgij,bjh->bgh', hq, att, hk)   # (B, G, H)
    out = og.reshape(B, G * hq.shape[-1])
    logits = out @ p['wout'] + p['bout'][0]
    sim = logits @ p['gloveT']
    return jax.nn.log_softmax(sim, axis=1)


def init_params(key, *, vocab=50, emb_dim=32, hidden=32, heads=4, n_out=32, n_ans=16):
    ks = jax.random.split(key, 11)
    f = lambda k, shape, scale=0.1: (scale * jax.random.normal(k, shape)).astype(jnp.float32)
    return {
        'emb':    f(ks[0], (vocab, emb_dim), 0.5),          # ClassEmbedding (GloVe surrogate)
        'wq':     f(ks[1], (emb_dim, hidden)),               # q2h  (in, out)
        'bq':     f(ks[2], (1, hidden)),
        'wk':     f(ks[3], (emb_dim, hidden)),               # k2h
        'bk':     f(ks[4], (1, hidden)),
        'wattT':  f(ks[5], (heads, hidden)),                 # h2att weight (out, in) torch layout
        'batt':   f(ks[6], (1, heads)),                      # cancels in softmax (ref only)
        'wout':   f(ks[7], (hidden * heads, n_out)),         # fc_out (in, out), head-major rows
        'bout':   f(ks[8], (1, n_out)),
        'gloveT': f(ks[9], (n_out, n_ans), 0.5),             # glove_cands.T (answer selector)
    }


if __name__ == "__main__":
    key = jax.random.PRNGKey(0)
    kp, kq, kk = jax.random.split(key, 3)

    B, Nq, Nk = 2, 8, 8
    VOCAB = 50
    params = init_params(kp, vocab=VOCAB, emb_dim=32, hidden=32, heads=4,
                         n_out=32, n_ans=16)

    he_ques = jax.random.randint(kq, (B, Nq), 0, VOCAB, dtype=jnp.int32)
    he_kg = jax.random.randint(kk, (B, Nk), 0, VOCAB, dtype=jnp.int32)

    pred = jax.block_until_ready(ban_forward(he_ques, he_kg, params))
    ref = jax.block_until_ready(ban_reference(he_ques, he_kg, params))

    np.testing.assert_allclose(np.asarray(pred), np.asarray(ref), rtol=1e-2, atol=1e-2)
    print("KERNEL_OK")
</pallas_src>

<mosaic_0001>
module attributes {stable_mosaic.version = 11 : i64} {
  func.func @_ban_kernel(%arg0: i32, %arg1: memref<8x8x32xf32, #tpu.memory_space<vmem>>, %arg2: memref<8x8x32xf32, #tpu.memory_space<vmem>>, %arg3: memref<32x32xf32, #tpu.memory_space<vmem>>, %arg4: memref<1x32xf32, #tpu.memory_space<vmem>>, %arg5: memref<32x32xf32, #tpu.memory_space<vmem>>, %arg6: memref<1x32xf32, #tpu.memory_space<vmem>>, %arg7: memref<4x32xf32, #tpu.memory_space<vmem>>, %arg8: memref<4x32x32xf32, #tpu.memory_space<vmem>>, %arg9: memref<1x32xf32, #tpu.memory_space<vmem>>, %arg10: memref<32x128xf32, #tpu.memory_space<vmem>>, %arg11: memref<8x128xf32, #tpu.memory_space<vmem>>) attributes {dimension_semantics = [#tpu.dimension_semantics<parallel>], iteration_bounds = array<i64: 1>, scalar_prefetch = 0 : i64, scratch_operands = 0 : i64, tpu.core_type = #tpu.core_type<tc>, window_params = [{transform_indices = @transform_0, window_bounds = array<i64: 8, 8, 32>}, {transform_indices = @transform_1, window_bounds = array<i64: 8, 8, 32>}, {pipeline_mode = #tpu.pipeline_mode<synchronous>, transform_indices = @transform_2, window_bounds = array<i64: 32, 32>}, {pipeline_mode = #tpu.pipeline_mode<synchronous>, transform_indices = @transform_3, window_bounds = array<i64: 1, 32>}, {pipeline_mode = #tpu.pipeline_mode<synchronous>, transform_indices = @transform_4, window_bounds = array<i64: 32, 32>}, {pipeline_mode = #tpu.pipeline_mode<synchronous>, transform_indices = @transform_5, window_bounds = array<i64: 1, 32>}, {pipeline_mode = #tpu.pipeline_mode<synchronous>, transform_indices = @transform_6, window_bounds = array<i64: 4, 32>}, {pipeline_mode = #tpu.pipeline_mode<synchronous>, transform_indices = @transform_7, window_bounds = array<i64: 4, 32, 32>}, {pipeline_mode = #tpu.pipeline_mode<synchronous>, transform_indices = @transform_8, window_bounds = array<i64: 1, 32>}, {pipeline_mode = #tpu.pipeline_mode<synchronous>, transform_indices = @transform_9, window_bounds = array<i64: 32, 128>}, {transform_indices = @transform_10, window_bounds = array<i64: 8, 128>}]} {
    %c0 = arith.constant 0 : index
    %c0_0 = arith.constant 0 : index
    %c0_1 = arith.constant 0 : index
    %0 = vector.load %arg1[%c0, %c0_0, %c0_1] : memref<8x8x32xf32, #tpu.memory_space<vmem>>, vector<8x8x32xf32>
    %1 = vector.shape_cast %0 : vector<8x8x32xf32> to vector<64x32xf32>
    %c0_2 = arith.constant 0 : index
    %c0_3 = arith.constant 0 : index
    %c0_4 = arith.constant 0 : index
    %2 = vector.load %arg2[%c0_2, %c0_3, %c0_4] : memref<8x8x32xf32, #tpu.memory_space<vmem>>, vector<8x8x32xf32>
    %3 = vector.shape_cast %2 : vector<8x8x32xf32> to vector<64x32xf32>
    %c0_5 = arith.constant 0 : index
    %c0_6 = arith.constant 0 : index
    %4 = vector.load %arg3[%c0_5, %c0_6] : memref<32x32xf32, #tpu.memory_space<vmem>>, vector<32x32xf32>
    %cst = arith.constant dense<0.000000e+00> : vector<64x32xf32>
    %5 = tpu.matmul %1, %4, %cst {dimension_numbers = #tpu.dot_dimension_numbers<[1], [0], [0], [1], [0, 0, 1, 1], [], []>} : vector<64x32xf32>, vector<32x32xf32>, vector<64x32xf32> -> vector<64x32xf32>
    %c0_7 = arith.constant 0 : index
    %c0_8 = arith.constant 0 : index
    %6 = vector.load %arg4[%c0_7, %c0_8] : memref<1x32xf32, #tpu.memory_space<vmem>>, vector<1x32xf32>
    %7 = vector.broadcast %6 : vector<1x32xf32> to vector<64x32xf32>
    %8 = arith.addf %5, %7 : vector<64x32xf32>
    %9 = vector.shape_cast %8 : vector<64x32xf32> to vector<8x8x32xf32>
    %c0_9 = arith.constant 0 : index
    %c0_10 = arith.constant 0 : index
    %10 = vector.load %arg5[%c0_9, %c0_10] : memref<32x32xf32, #tpu.memory_space<vmem>>, vector<32x32xf32>
    %cst_11 = arith.constant dense<0.000000e+00> : vector<64x32xf32>
    %11 = tpu.matmul %3, %10, %cst_11 {dimension_numbers = #tpu.dot_dimension_numbers<[1], [0], [0], [1], [0, 0, 1, 1], [], []>} : vector<64x32xf32>, vector<32x32xf32>, vector<64x32xf32> -> vector<64x32xf32>
    %c0_12 = arith.constant 0 : index
    %c0_13 = arith.constant 0 : index
    %12 = vector.load %arg6[%c0_12, %c0_13] : memref<1x32xf32, #tpu.memory_space<vmem>>, vector<1x32xf32>
    %13 = vector.broadcast %12 : vector<1x32xf32> to vector<64x32xf32>
    %14 = arith.addf %11, %13 : vector<64x32xf32>
    %15 = vector.shape_cast %14 : vector<64x32xf32> to vector<8x8x32xf32>
    %c0_14 = arith.constant 0 : index
    %c0_15 = arith.constant 0 : index
    %16 = vector.load %arg7[%c0_14, %c0_15] : memref<4x32xf32, #tpu.memory_space<vmem>>, vector<4x32xf32>
    %17 = vector.shape_cast %16 : vector<4x32xf32> to vector<4x1x1x32xf32>
    %18 = vector.shape_cast %9 : vector<8x8x32xf32> to vector<1x8x8x32xf32>
    %19 = vector.broadcast %17 : vector<4x1x1x32xf32> to vector<4x8x8x32xf32>
    %20 = vector.broadcast %18 : vector<1x8x8x32xf32> to vector<4x8x8x32xf32>
    %21 = arith.mulf %19, %20 : vector<4x8x8x32xf32>
    %22 = vector.shape_cast %21 : vector<4x8x8x32xf32> to vector<32x8x32xf32>
    %23 = vector.shape_cast %15 : vector<8x8x32xf32> to vector<1x8x8x32xf32>
    %24 = vector.shape_cast %23 : vector<1x8x8x32xf32> to vector<1x8x8x32xf32>
    %25 = vector.broadcast %24 : vector<1x8x8x32xf32> to vector<4x8x8x32xf32>
    %26 = vector.shape_cast %25 : vector<4x8x8x32xf32> to vector<32x8x32xf32>
    %27 = vector.shape_cast %9 : vector<8x8x32xf32> to vector<1x8x8x32xf32>
    %28 = vector.shape_cast %27 : vector<1x8x8x32xf32> to vector<1x8x8x32xf32>
    %29 = vector.broadcast %28 : vector<1x8x8x32xf32> to vector<4x8x8x32xf32>
    %30 = vector.shape_cast %29 : vector<4x8x8x32xf32> to vector<32x8x32xf32>
    "tpu.trace_start"() <{level = 10 : i32, message = "zih,zjh->zij"}> : () -> ()
    %cst_16 = arith.constant dense<0.000000e+00> : vector<32x8x8xf32>
    %31 = tpu.matmul %22, %26, %cst_16 {dimension_numbers = #tpu.dot_dimension_numbers<[2], [2], [1], [1], [0, 0, 0, 1, 1, 1], [0], [0]>} : vector<32x8x32xf32>, vector<32x8x32xf32>, vector<32x8x8xf32> -> vector<32x8x8xf32>
    "tpu.trace_stop"() : () -> ()
    %cst_17 = arith.constant dense<0xFF800000> : vector<32x8xf32>
    %32 = vector.multi_reduction <maximumf>, %31, %cst_17 [2] : vector<32x8x8xf32> to vector<32x8xf32>
    %33 = vector.shape_cast %32 : vector<32x8xf32> to vector<32x8x1xf32>
    %cst_18 = arith.constant dense<0xFF800000> : vector<32x1xf32>
    %34 = vector.multi_reduction <maximumf>, %33, %cst_18 [1] : vector<32x8x1xf32> to vector<32x1xf32>
    %35 = vector.shape_cast %34 : vector<32x1xf32> to vector<32x1x1xf32>
    %36 = vector.broadcast %35 : vector<32x1x1xf32> to vector<32x8x8xf32>
    %37 = arith.subf %31, %36 : vector<32x8x8xf32>
    %38 = math.exp %37 : vector<32x8x8xf32>
    %cst_19 = arith.constant dense<0.000000e+00> : vector<32x8xf32>
    %39 = vector.multi_reduction <add>, %38, %cst_19 [2] : vector<32x8x8xf32> to vector<32x8xf32>
    %40 = vector.shape_cast %39 : vector<32x8xf32> to vector<32x8x1xf32>
    %cst_20 = arith.constant dense<0.000000e+00> : vector<32x1xf32>
    %41 = vector.multi_reduction <add>, %40, %cst_20 [1] : vector<32x8x1xf32> to vector<32x1xf32>
    %42 = vector.shape_cast %41 : vector<32x1xf32> to vector<32x1x1xf32>
    "tpu.trace_start"() <{level = 10 : i32, message = "zij,zjh->zih"}> : () -> ()
    %cst_21 = arith.constant dense<0.000000e+00> : vector<32x8x32xf32>
    %43 = tpu.matmul %38, %26, %cst_21 {dimension_numbers = #tpu.dot_dimension_numbers<[2], [1], [1], [2], [0, 0, 0, 1, 1, 2], [0], [0]>} : vector<32x8x8xf32>, vector<32x8x32xf32>, vector<32x8x32xf32> -> vector<32x8x32xf32>
    "tpu.trace_stop"() : () -> ()
    %44 = arith.mulf %30, %43 : vector<32x8x32xf32>
    %cst_22 = arith.constant dense<0.000000e+00> : vector<32x32xf32>
    %45 = vector.multi_reduction <add>, %44, %cst_22 [1] : vector<32x8x32xf32> to vector<32x32xf32>
    %46 = tpu.reciprocal %42 {approx = true} : vector<32x1x1xf32> -> vector<32x1x1xf32>
    %47 = vector.shape_cast %46 : vector<32x1x1xf32> to vector<32x1xf32>
    %48 = vector.broadcast %47 : vector<32x1xf32> to vector<32x32xf32>
    %49 = arith.mulf %45, %48 : vector<32x32xf32>
    %50 = vector.shape_cast %49 : vector<32x32xf32> to vector<4x8x32xf32>
    %c0_23 = arith.constant 0 : index
    %c0_24 = arith.constant 0 : index
    %c0_25 = arith.constant 0 : index
    %51 = vector.load %arg8[%c0_23, %c0_24, %c0_25] : memref<4x32x32xf32, #tpu.memory_space<vmem>>, vector<4x32x32xf32>
    "tpu.trace_start"() <{level = 10 : i32, message = "gbh,gho->gbo"}> : () -> ()
    %cst_26 = arith.constant dense<0.000000e+00> : vector<4x8x32xf32>
    %52 = tpu.matmul %50, %51, %cst_26 {dimension_numbers = #tpu.dot_dimension_numbers<[2], [1], [1], [2], [0, 0, 0, 1, 1, 2], [0], [0]>} : vector<4x8x32xf32>, vector<4x32x32xf32>, vector<4x8x32xf32> -> vector<4x8x32xf32>
    "tpu.trace_stop"() : () -> ()
    %c0_27 = arith.constant 0 : index
    %c0_28 = arith.constant 0 : index
    %53 = vector.load %arg9[%c0_27, %c0_28] : memref<1x32xf32, #tpu.memory_space<vmem>>, vector<1x32xf32>
    %cst_29 = arith.constant dense<0.000000e+00> : vector<8x32xf32>
    %54 = vector.multi_reduction <add>, %52, %cst_29 [0] : vector<4x8x32xf32> to vector<8x32xf32>
    %55 = vector.broadcast %53 : vector<1x32xf32> to vector<8x32xf32>
    %56 = arith.addf %55, %54 : vector<8x32xf32>
    %c0_30 = arith.constant 0 : index
    %c0_31 = arith.constant 0 : index
    %57 = vector.load %arg10[%c0_30, %c0_31] : memref<32x128xf32, #tpu.memory_space<vmem>>, vector<32x128xf32>
    %cst_32 = arith.constant dense<0.000000e+00> : vector<8x128xf32>
    %58 = tpu.matmul %56, %57, %cst_32 {dimension_numbers = #tpu.dot_dimension_numbers<[1], [0], [0], [1], [0, 0, 1, 1], [], []>} : vector<8x32xf32>, vector<32x128xf32>, vector<8x128xf32> -> vector<8x128xf32>
    %59 = tpu.iota {dimensions = array<i32: 1>} : vector<8x128xi32>
    %c16_i32 = arith.constant 16 : i32
    %60 = vector.broadcast %c16_i32 : i32 to vector<8x128xi32>
    %61 = arith.cmpi slt, %59, %60 : vector<8x128xi32>
    %cst_33 = arith.constant -1.000000e+30 : f32
    %62 = vector.broadcast %cst_33 : f32 to vector<8x128xf32>
    %63 = arith.select %61, %58, %62 : vector<8x128xi1>, vector<8x128xf32>
    %cst_34 = arith.constant dense<0xFF800000> : vector<8xf32>
    %64 = vector.multi_reduction <maximumf>, %63, %cst_34 [1] : vector<8x128xf32> to vector<8xf32>
    %65 = vector.shape_cast %64 : vector<8xf32> to vector<8x1xf32>
    %66 = vector.broadcast %65 : vector<8x1xf32> to vector<8x128xf32>
    %67 = arith.subf %63, %66 : vector<8x128xf32>
    %68 = math.exp %67 : vector<8x128xf32>
    %cst_35 = arith.constant dense<0.000000e+00> : vector<8xf32>
    %69 = vector.multi_reduction <add>, %68, %cst_35 [1] : vector<8x128xf32> to vector<8xf32>
    %70 = vector.shape_cast %69 : vector<8xf32> to vector<8x1xf32>
    %71 = math.log %70 : vector<8x1xf32>
    %72 = vector.broadcast %71 : vector<8x1xf32> to vector<8x128xf32>
    %73 = arith.subf %67, %72 : vector<8x128xf32>
    %c0_36 = arith.constant 0 : index
    %c0_37 = arith.constant 0 : index
    %74 = vector.load %arg11[%c0_36, %c0_37] : memref<8x128xf32, #tpu.memory_space<vmem>>, vector<8x128xf32>
    tpu.vector_store %arg11[%c0_36, %c0_37], %73 {strides = array<i32>} : memref<8x128xf32, #tpu.memory_space<vmem>>, vector<8x128xf32>,
    return
  }
  func.func @transform_0(%arg0: i32) -> (i32, i32, i32) {
    %c0_i32 = arith.constant 0 : i32
    %c0_i32_0 = arith.constant 0 : i32
    %c0_i32_1 = arith.constant 0 : i32
    return %arg0, %c0_i32, %c0_i32_0 : i32, i32, i32
  }
  func.func @transform_1(%arg0: i32) -> (i32, i32, i32) {
    %c0_i32 = arith.constant 0 : i32
    %c0_i32_0 = arith.constant 0 : i32
    %c0_i32_1 = arith.constant 0 : i32
    return %arg0, %c0_i32, %c0_i32_0 : i32, i32, i32
  }
  func.func @transform_2(%arg0: i32) -> (i32, i32) {
    %c0_i32 = arith.constant 0 : i32
    %c0_i32_0 = arith.constant 0 : i32
    %c0_i32_1 = arith.constant 0 : i32
    return %c0_i32, %c0_i32_0 : i32, i32
  }
  func.func @transform_3(%arg0: i32) -> (i32, i32) {
    %c0_i32 = arith.constant 0 : i32
    %c0_i32_0 = arith.constant 0 : i32
    %c0_i32_1 = arith.constant 0 : i32
    return %c0_i32, %c0_i32_0 : i32, i32
  }
  func.func @transform_4(%arg0: i32) -> (i32, i32) {
    %c0_i32 = arith.constant 0 : i32
    %c0_i32_0 = arith.constant 0 : i32
    %c0_i32_1 = arith.constant 0 : i32
    return %c0_i32, %c0_i32_0 : i32, i32
  }
  func.func @transform_5(%arg0: i32) -> (i32, i32) {
    %c0_i32 = arith.constant 0 : i32
    %c0_i32_0 = arith.constant 0 : i32
    %c0_i32_1 = arith.constant 0 : i32
    return %c0_i32, %c0_i32_0 : i32, i32
  }
  func.func @transform_6(%arg0: i32) -> (i32, i32) {
    %c0_i32 = arith.constant 0 : i32
    %c0_i32_0 = arith.constant 0 : i32
    %c0_i32_1 = arith.constant 0 : i32
    return %c0_i32, %c0_i32_0 : i32, i32
  }
  func.func @transform_7(%arg0: i32) -> (i32, i32, i32) {
    %c0_i32 = arith.constant 0 : i32
    %c0_i32_0 = arith.constant 0 : i32
    %c0_i32_1 = arith.constant 0 : i32
    %c0_i32_2 = arith.constant 0 : i32
    return %c0_i32, %c0_i32_0, %c0_i32_1 : i32, i32, i32
  }
  func.func @transform_8(%arg0: i32) -> (i32, i32) {
    %c0_i32 = arith.constant 0 : i32
    %c0_i32_0 = arith.constant 0 : i32
    %c0_i32_1 = arith.constant 0 : i32
    return %c0_i32, %c0_i32_0 : i32, i32
  }
  func.func @transform_9(%arg0: i32) -> (i32, i32) {
    %c0_i32 = arith.constant 0 : i32
    %c0_i32_0 = arith.constant 0 : i32
    %c0_i32_1 = arith.constant 0 : i32
    return %c0_i32, %c0_i32_0 : i32, i32
  }
  func.func @transform_10(%arg0: i32) -> (i32, i32) {
    %c0_i32 = arith.constant 0 : i32
    %c0_i32_0 = arith.constant 0 : i32
    return %arg0, %c0_i32 : i32, i32
  }
}

</mosaic_0001>

<llo_original>
// kernel: tpu_custom_call.1
$region0: #{tpu_custom_call.1}
  #allocation0 [shape = 'u32[]', space=smem, size = 0x4, offset = 0x4, fixed_abs, tag = 'smem constant byte address 0x4 - core index']
  #allocation1 [shape = 'u32[144,128]{1,0:T(1,128)}', space=vmem, size = 0x12000, scoped, tag = 'internal scratch']
  %s0 = inlined_call_operand.hbm [shape: f32[8,8,32], index: 0, kind: input, shape index: {}]
  %s1 = inlined_call_operand.hbm [shape: f32[8,8,32], index: 1, kind: input, shape index: {}]
  %s2 = inlined_call_operand.hbm [shape: f32[32,32], index: 2, kind: input, shape index: {}]
  %s3 = inlined_call_operand.vmem [shape: f32[1,32], index: 3, kind: input, shape index: {}]
  %s4 = inlined_call_operand.hbm [shape: f32[32,32], index: 4, kind: input, shape index: {}]
  %s5 = inlined_call_operand.vmem [shape: f32[1,32], index: 5, kind: input, shape index: {}]
  %s6 = inlined_call_operand.vmem [shape: f32[4,32], index: 6, kind: input, shape index: {}]
  %s7 = inlined_call_operand.hbm [shape: f32[4,32,32], index: 7, kind: input, shape index: {}]
  %s8 = inlined_call_operand.vmem [shape: f32[1,32], index: 8, kind: input, shape index: {}]
  %s9 = inlined_call_operand.hbm [shape: f32[32,128], index: 9, kind: input, shape index: {}]
  %s10 = inlined_call_operand.hbm [shape: f32[8,128], index: 10, kind: output, shape index: {}]
  %s11 = sld [smem:[#allocation0]]
  $region74: #{tpu_custom_call.1} parent=0
    _
  %s13 = ssub.s32 1, %s11
  %s14 = scalar_select 0, %s13, %s11
  $region1: #{tpu_custom_call.1} parent=0
    #allocation2 [shape = 'u8[32768]{0}', space=vmem, size = 0x8000, scoped, tag = 'input window, operand 0, single buffered']
    #allocation3 [shape = 's32[1]{0}', space=sflag, size = 0x4, scoped, tag = 'scoped memory for tpu_custom_call.1']
    #allocation4 [shape = 's32[1]{0}', space=sflag, size = 0x4, scoped, tag = 'scoped memory for tpu_custom_call.1']
    #allocation5 [shape = 'u8[32768]{0}', space=vmem, size = 0x8000, scoped, tag = 'input window, operand 1, single buffered']
    #allocation6 [shape = 's32[1]{0}', space=sflag, size = 0x4, scoped, tag = 'scoped memory for tpu_custom_call.1']
    #allocation7 [shape = 'u8[16384]{0}', space=vmem, size = 0x4000, scoped, tag = 'input window, operand 2, single buffered']
    #allocation8 [shape = 'u8[16384]{0}', space=vmem, size = 0x4000, scoped, tag = 'input window, operand 4, single buffered']
    #allocation9 [shape = 's32[1]{0}', space=sflag, size = 0x4, scoped, tag = 'scoped memory for tpu_custom_call.1']
    #allocation10 [shape = 'u8[65536]{0}', space=vmem, size = 0x10000, scoped, tag = 'input window, operand 7, single buffered']
    #allocation11 [shape = 'u8[16384]{0}', space=vmem, size = 0x4000, scoped, tag = 'input window, operand 9, single buffered']
    #allocation12 [shape = 's32[1]{0}', space=sflag, size = 0x4, scoped, tag = 'scoped memory for tpu_custom_call.1']
    #allocation13 [shape = 'u8[4096]{0}', space=vmem, size = 0x1000, scoped, tag = 'output window, operand 0, single buffered']
    %15 = vsyncpa [#allocation3], 0
    %16 = vsyncpa [#allocation6], 0
    %17 = vsyncpa [#allocation9], 0
    %18 = vsyncpa [#allocation12], 0
    %19 = vsyncpa [#allocation4], 0
    // Predicated region
    $region2: #{tpu_custom_call.1} parent=1 // pred_check
      _
    $region3: #{tpu_custom_call.1} parent=1 // pred_check_branch
      %21 = sbr.rel (0) target = $region5
    $region4: #{tpu_custom_call.1} parent=1 // pred_region
      %s23 = ssub.s32 1024, 1024
      %24 = vsyncadd [#allocation3], %s23
      %s25 = sshll.u32 [#allocation2], 4
      %s26 = int_to_ptr.vmem [resolvable:$true] %s25
      %31 = dma.hbm_to_vmem [thread:$0]  %s0, 1024, %s26, [#allocation3], 128, 128, 8
    $region5: #{tpu_custom_call.1} parent=1 // pred_fallthru
      _
    // Predicated region
    $region6: #{tpu_custom_call.1} parent=1 // pred_check
      _
    $region7: #{tpu_custom_call.1} parent=1 // pred_check_branch
      %33 = sbr.rel (0) target = $region9
    $region8: #{tpu_custom_call.1} parent=1 // pred_region
      %s35 = ssub.s32 1024, 1024
      %36 = vsyncadd [#allocation6], %s35
      %s37 = sshll.u32 [#allocation5], 4
      %s38 = int_to_ptr.vmem [resolvable:$true] %s37
      %43 = dma.hbm_to_vmem [thread:$0]  %s1, 1024, %s38, [#allocation6], 128, 128, 8
    $region9: #{tpu_custom_call.1} parent=1 // pred_fallthru
      _
    // Predicated region
    $region10: #{tpu_custom_call.1} parent=1 // pred_check
      _
    $region11: #{tpu_custom_call.1} parent=1 // pred_check_branch
      %45 = sbr.rel (0) target = $region13
    $region12: #{tpu_custom_call.1} parent=1 // pred_region
      %s47 = ssub.s32 512, 512
      %48 = vsyncadd [#allocation6], %s47
      %s49 = sshll.u32 [#allocation7], 4
      %s50 = int_to_ptr.vmem [resolvable:$true] %s49
      %55 = dma.hbm_to_vmem [thread:$0]  %s2, 512, %s50, [#allocation6], 128, 128, 8
    $region13: #{tpu_custom_call.1} parent=1 // pred_fallthru
      _
    // Predicated region
    $region14: #{tpu_custom_call.1} parent=1 // pred_check
      _
    $region15: #{tpu_custom_call.1} parent=1 // pred_check_branch
      %57 = sbr.rel (0) target = $region17
    $region16: #{tpu_custom_call.1} parent=1 // pred_region
      _
    $region17: #{tpu_custom_call.1} parent=1 // pred_fallthru
      _
    // Predicated region
    $region18: #{tpu_custom_call.1} parent=1 // pred_check
      _
    $region19: #{tpu_custom_call.1} parent=1 // pred_check_branch
      %59 = sbr.rel (0) target = $region21
    $region20: #{tpu_custom_call.1} parent=1 // pred_region
      %s61 = ssub.s32 512, 512
      %62 = vsyncadd [#allocation9], %s61
      %s63 = sshll.u32 [#allocation8], 4
      %s64 = int_to_ptr.vmem [resolvable:$true] %s63
      %69 = dma.hbm_to_vmem [thread:$0]  %s4, 512, %s64, [#allocation9], 128, 128, 8
    $region21: #{tpu_custom_call.1} parent=1 // pred_fallthru
      _
    // Predicated region
    $region22: #{tpu_custom_call.1} parent=1 // pred_check
      _
    $region23: #{tpu_custom_call.1} parent=1 // pred_check_branch
      %71 = sbr.rel (0) target = $region25
    $region24: #{tpu_custom_call.1} parent=1 // pred_region
      _
    $region25: #{tpu_custom_call.1} parent=1 // pred_fallthru
      _
    // Predicated region
    $region26: #{tpu_custom_call.1} parent=1 // pred_check
      _
    $region27: #{tpu_custom_call.1} parent=1 // pred_check_branch
      %73 = sbr.rel (0) target = $region29
    $region28: #{tpu_custom_call.1} parent=1 // pred_region
      _
    $region29: #{tpu_custom_call.1} parent=1 // pred_fallthru
      _
    // Predicated region
    $region30: #{tpu_custom_call.1} parent=1 // pred_check
      _
    $region31: #{tpu_custom_call.1} parent=1 // pred_check_branch
      %75 = sbr.rel (0) target = $region33
    $region32: #{tpu_custom_call.1} parent=1 // pred_region
      %s77 = ssub.s32 2048, 2048
      %78 = vsyncadd [#allocation9], %s77
      %s79 = sshll.u32 [#allocation10], 4
      %s80 = int_to_ptr.vmem [resolvable:$true] %s79
      %85 = dma.hbm_to_vmem [thread:$0]  %s7, 2048, %s80, [#allocation9], 128, 128, 8
    $region33: #{tpu_custom_call.1} parent=1 // pred_fallthru
      _
    // Predicated region
    $region34: #{tpu_custom_call.1} parent=1 // pred_check
      _
    $region35: #{tpu_custom_call.1} parent=1 // pred_check_branch
      %87 = sbr.rel (0) target = $region37
    $region36: #{tpu_custom_call.1} parent=1 // pred_region
      _
    $region37: #{tpu_custom_call.1} parent=1 // pred_fallthru
      _
    // Predicated region
    $region38: #{tpu_custom_call.1} parent=1 // pred_check
      _
    $region39: #{tpu_custom_call.1} parent=1 // pred_check_branch
      %89 = sbr.rel (0) target = $region41
    $region40: #{tpu_custom_call.1} parent=1 // pred_region
      %s91 = ssub.s32 512, 512
      %92 = vsyncadd [#allocation12], %s91
      %s93 = sshll.u32 [#allocation11], 4
      %s94 = int_to_ptr.vmem [resolvable:$true] %s93
      %99 = dma.hbm_to_vmem [thread:$0]  %s9, 512, %s94, [#allocation12], 128, 128, 8
    $region41: #{tpu_custom_call.1} parent=1 // pred_fallthru
      _
    // Predicated region
    $region42: #{tpu_custom_call.1} parent=1 // pred_check
      _
    $region43: #{tpu_custom_call.1} parent=1 // pred_check_branch
      %101 = sbr.rel (0) target = $region45
    $region44: #{tpu_custom_call.1} parent=1 // pred_region
      %102 = dma.done [#allocation3], 1024
    $region45: #{tpu_custom_call.1} parent=1 // pred_fallthru
      _
    // Predicated region
    $region46: #{tpu_custom_call.1} parent=1 // pred_check
      _
    $region47: #{tpu_custom_call.1} parent=1 // pred_check_branch
      %104 = sbr.rel (0) target = $region49
    $region48: #{tpu_custom_call.1} parent=1 // pred_region
      %105 = dma.done [#allocation6], 1024
    $region49: #{tpu_custom_call.1} parent=1 // pred_fallthru
      _
    // Predicated region
    $region50: #{tpu_custom_call.1} parent=1 // pred_check
      _
    $region51: #{tpu_custom_call.1} parent=1 // pred_check_branch
      %107 = sbr.rel (0) target = $region53
    $region52: #{tpu_custom_call.1} parent=1 // pred_region
      %108 = dma.done [#allocation6], 512
    $region53: #{tpu_custom_call.1} parent=1 // pred_fallthru
      _
    // Predicated region
    $region54: #{tpu_custom_call.1} parent=1 // pred_check
      _
    $region55: #{tpu_custom_call.1} parent=1 // pred_check_branch
      %110 = sbr.rel (0) target = $region57
    $region56: #{tpu_custom_call.1} parent=1 // pred_region
      %111 = dma.done [#allocation9], 512
    $region57: #{tpu_custom_call.1} parent=1 // pred_fallthru
      _
    // Predicated region
    $region58: #{tpu_custom_call.1} parent=1 // pred_check
      _
    $region59: #{tpu_custom_call.1} parent=1 // pred_check_branch
      %113 = sbr.rel (0) target = $region61
    $region60: #{tpu_custom_call.1} parent=1 // pred_region
      %114 = dma.done [#allocation9], 2048
    $region61: #{tpu_custom_call.1} parent=1 // pred_fallthru
      _
    // Predicated region
    $region62: #{tpu_custom_call.1} parent=1 // pred_check
      _
    $region63: #{tpu_custom_call.1} parent=1 // pred_check_branch
      %116 = sbr.rel (0) target = $region65
    $region64: #{tpu_custom_call.1} parent=1 // pred_region
      %117 = dma.done [#allocation12], 512
    $region65: #{tpu_custom_call.1} parent=1 // pred_fallthru
      _
    %v118 = vld [vmem:[#allocation2] sm:$0xff]
    %v119 = vld [vmem:[#allocation2 + $0x8] sm:$0xff]
    %v120 = vld [vmem:[#allocation2 + $0x10] sm:$0xff]
    %v121 = vld [vmem:[#allocation2 + $0x18] sm:$0xff]
    %v122 = vld [vmem:[#allocation2 + $0x20] sm:$0xff]
    %v123 = vld [vmem:[#allocation2 + $0x28] sm:$0xff]
    %v124 = vld [vmem:[#allocation2 + $0x30] sm:$0xff]
    %v125 = vld [vmem:[#allocation2 + $0x38] sm:$0xff]
    %v126 = vld [vmem:[#allocation5] sm:$0xff]
    %v127 = vld [vmem:[#allocation5 + $0x8] sm:$0xff]
    %v128 = vld [vmem:[#allocation5 + $0x10] sm:$0xff]
    %v129 = vld [vmem:[#allocation5 + $0x18] sm:$0xff]
    %v130 = vld [vmem:[#allocation5 + $0x20] sm:$0xff]
    %v131 = vld [vmem:[#allocation5 + $0x28] sm:$0xff]
    %v132 = vld [vmem:[#allocation5 + $0x30] sm:$0xff]
    %v133 = vld [vmem:[#allocation5 + $0x38] sm:$0xff]
    %v134 = vld [vmem:[#allocation7] sm:$0xff]
    %v135 = vld [vmem:[#allocation7 + $0x8] sm:$0xff]
    %v136 = vld [vmem:[#allocation7 + $0x10] sm:$0xff]
    %v137 = vld [vmem:[#allocation7 + $0x18] sm:$0xff]
    %v138 = vld [vmem:[%s3] sm:$0x1]
    %v140 = vlaneseq
    %v141 = vshrl.u32 %v140, 7
    %v142 = vsub.s32 0, %v141
    %v143 = vrot.slane %v138, %v142
    %vm145 = vcmask 261120
    %v147 = vsel %vm145, %v118, 0
    %v150 = vsel %vm145, %v119, 0
    %v153 = vsel %vm145, %v120, 0
    %v156 = vsel %vm145, %v121, 0
    %v159 = vsel %vm145, %v122, 0
    %v162 = vsel %vm145, %v123, 0
    %v165 = vsel %vm145, %v124, 0
    %v168 = vsel %vm145, %v125, 0
    %170 = vmatprep.subr.mxu0 0.0
    %171 = vmatpush1.msra.mxu0 0.0
    %172 = vmatprep.subr.mxu0 0.0
    %173 = vmatpush1.msra.mxu0 0.0
    %174 = vmatprep.subr.mxu0 0.0
    %175 = vmatpush1.msra.mxu0 0.0
    %176 = vmatprep.subr.mxu0 0.0
    %177 = vmatpush1.msra.mxu0 0.0
    %178 = vmatprep.subr.mxu0 0.0
    %179 = vmatpush1.msra.mxu0 0.0
    %180 = vmatprep.subr.mxu0 0.0
    %181 = vmatpush1.msra.mxu0 0.0
    %182 = vmatprep.subr.mxu0 0.0
    %183 = vmatpush1.msra.mxu0 0.0
    %184 = vmatprep.subr.mxu0 0.0
    %185 = vmatpush1.msra.mxu0 0.0
    %186 = vmatprep.subr.mxu0 0.0
    %187 = vmatpush1.msra.mxu0 0.0
    %188 = vmatprep.subr.mxu0 0.0
    %189 = vmatpush1.msra.mxu0 0.0
    %190 = vmatprep.subr.mxu0 0.0
    %191 = vmatpush1.msra.mxu0 0.0
    %192 = vmatprep.subr.mxu0 0.0
    %193 = vmatpush1.msra.mxu0 0.0
    %194 = vmatprep.subr.mxu0 0.0
    %195 = vmatpush1.msra.mxu0 %v137
    %196 = vmatprep.subr.mxu0 0.0
    %197 = vmatpush1.msra.mxu0 %v136
    %198 = vmatprep.subr.mxu0 0.0
    %199 = vmatpush1.msra.mxu0 %v135
    %200 = vmatprep.subr.mxu0 0.0
    %201 = vmatpush1.msra.mxu0 %v134
    %202 = vmatprep.subr.mxu0 0.0
    %203 = vmatpush2.msra.mxu0 0.0
    %204 = vmatprep.subr.mxu0 0.0
    %205 = vmatpush2.msra.mxu0 0.0
    %206 = vmatprep.subr.mxu0 0.0
    %207 = vmatpush2.msra.mxu0 0.0
    %208 = vmatprep.subr.mxu0 0.0
    %209 = vmatpush2.msra.mxu0 0.0
    %210 = vmatprep.subr.mxu0 0.0
    %211 = vmatpush2.msra.mxu0 0.0
    %212 = vmatprep.subr.mxu0 0.0
    %213 = vmatpush2.msra.mxu0 0.0
    %214 = vmatprep.subr.mxu0 0.0
    %215 = vmatpush2.msra.mxu0 0.0
    %216 = vmatprep.subr.mxu0 0.0
    %217 = vmatpush2.msra.mxu0 0.0
    %218 = vmatprep.subr.mxu0 0.0
    %219 = vmatpush2.msra.mxu0 0.0
    %220 = vmatprep.subr.mxu0 0.0
    %221 = vmatpush2.msra.mxu0 0.0
    %222 = vmatprep.subr.mxu0 0.0
    %223 = vmatpush2.msra.mxu0 0.0
    %224 = vmatprep.subr.mxu0 0.0
    %225 = vmatpush2.msra.mxu0 0.0
    %226 = vmatprep.subr.mxu0 0.0
    %227 = vmatpush2.msra.mxu0 0.0
    %228 = vmatprep.subr.mxu0 0.0
    %229 = vmatpush2.msra.mxu0 0.0
    %230 = vmatprep.subr.mxu0 0.0
    %231 = vmatpush2.msra.mxu0 0.0
    %232 = vmatprep.subr.mxu0 0.0
    %233 = vmatpush2.msra.mxu0 0.0
    %234 = vmatprep.mubr.f32.mxu0 0.0
    %235 = vmatmul.mubr.f32.gmra.mxu0 %v147
    %v236 = vpop.f32.mrf.mxu0
    %v237 = vadd.f32 %v143, %v236
    %v238 = vpop.f32.mrf.mxu0
    %239 = vmatprep.mubr.f32.mxu0 0.0
    %240 = vmatmul.mubr.f32.gmra.mxu0 %v150
    %v241 = vpop.f32.mrf.mxu0
    %v242 = vadd.f32 %v143, %v241
    %v243 = vpop.f32.mrf.mxu0
    %244 = vmatprep.mubr.f32.mxu0 0.0
    %245 = vmatmul.mubr.f32.gmra.mxu0 %v153
    %v246 = vpop.f32.mrf.mxu0
    %v247 = vadd.f32 %v143, %v246
    %v248 = vpop.f32.mrf.mxu0
    %249 = vmatprep.mubr.f32.mxu0 0.0
    %250 = vmatmul.mubr.f32.gmra.mxu0 %v156
    %v251 = vpop.f32.mrf.mxu0
    %v252 = vadd.f32 %v143, %v251
    %v253 = vpop.f32.mrf.mxu0
    %254 = vmatprep.mubr.f32.mxu0 0.0
    %255 = vmatmul.mubr.f32.gmra.mxu0 %v159
    %v256 = vpop.f32.mrf.mxu0
    %v257 = vadd.f32 %v143, %v256
    %v258 = vpop.f32.mrf.mxu0
    %259 = vmatprep.mubr.f32.mxu0 0.0
    %260 = vmatmul.mubr.f32.gmra.mxu0 %v162
    %v261 = vpop.f32.mrf.mxu0
    %v262 = vadd.f32 %v143, %v261
    %v263 = vpop.f32.mrf.mxu0
    %264 = vmatprep.mubr.f32.mxu0 0.0
    %265 = vmatmul.mubr.f32.gmra.mxu0 %v165
    %v266 = vpop.f32.mrf.mxu0
    %v267 = vadd.f32 %v143, %v266
    %v268 = vpop.f32.mrf.mxu0
    %269 = vmatprep.mubr.f32.mxu0 0.0
    %270 = vmatmul.mubr.f32.gmra.mxu0 %v168
    %v271 = vpop.f32.mrf.mxu0
    %v272 = vadd.f32 %v143, %v271
    %v273 = vpop.f32.mrf.mxu0
    %274 = vdwg.mxu0
    %v275 = vld [vmem:[#allocation8] sm:$0xff]
    %v276 = vld [vmem:[#allocation8 + $0x8] sm:$0xff]
    %v277 = vld [vmem:[#allocation8 + $0x10] sm:$0xff]
    %v278 = vld [vmem:[#allocation8 + $0x18] sm:$0xff]
    %v279 = vld [vmem:[%s5] sm:$0x1]
    %v281 = vlaneseq
    %v282 = vshrl.u32 %v281, 7
    %v283 = vsub.s32 0, %v282
    %v284 = vrot.slane %v279, %v283
    %v287 = vsel %vm145, %v126, 0
    %v290 = vsel %vm145, %v127, 0
    %v293 = vsel %vm145, %v128, 0
    %v296 = vsel %vm145, %v129, 0
    %v299 = vsel %vm145, %v130, 0
    %v302 = vsel %vm145, %v131, 0
    %v305 = vsel %vm145, %v132, 0
    %v308 = vsel %vm145, %v133, 0
    %310 = vmatprep.subr.mxu0 0.0
    %311 = vmatpush1.msra.mxu0 0.0
    %312 = vmatprep.subr.mxu0 0.0
    %313 = vmatpush1.msra.mxu0 0.0
    %314 = vmatprep.subr.mxu0 0.0
    %315 = vmatpush1.msra.mxu0 0.0
    %316 = vmatprep.subr.mxu0 0.0
    %317 = vmatpush1.msra.mxu0 0.0
    %318 = vmatprep.subr.mxu0 0.0
    %319 = vmatpush1.msra.mxu0 0.0
    %320 = vmatprep.subr.mxu0 0.0
    %321 = vmatpush1.msra.mxu0 0.0
    %322 = vmatprep.subr.mxu0 0.0
    %323 = vmatpush1.msra.mxu0 0.0
    %324 = vmatprep.subr.mxu0 0.0
    %325 = vmatpush1.msra.mxu0 0.0
    %326 = vmatprep.subr.mxu0 0.0
    %327 = vmatpush1.msra.mxu0 0.0
    %328 = vmatprep.subr.mxu0 0.0
    %329 = vmatpush1.msra.mxu0 0.0
    %330 = vmatprep.subr.mxu0 0.0
    %331 = vmatpush1.msra.mxu0 0.0
    %332 = vmatprep.subr.mxu0 0.0
    %333 = vmatpush1.msra.mxu0 0.0
    %334 = vmatprep.subr.mxu0 0.0
    %335 = vmatpush1.msra.mxu0 %v278
    %336 = vmatprep.subr.mxu0 0.0
    %337 = vmatpush1.msra.mxu0 %v277
    %338 = vmatprep.subr.mxu0 0.0
    %339 = vmatpush1.msra.mxu0 %v276
    %340 = vmatprep.subr.mxu0 0.0
    %341 = vmatpush1.msra.mxu0 %v275
    %342 = vmatprep.subr.mxu0 0.0
    %343 = vmatpush2.msra.mxu0 0.0
    %344 = vmatprep.subr.mxu0 0.0
    %345 = vmatpush2.msra.mxu0 0.0
    %346 = vmatprep.subr.mxu0 0.0
    %347 = vmatpush2.msra.mxu0 0.0
    %348 = vmatprep.subr.mxu0 0.0
    %349 = vmatpush2.msra.mxu0 0.0
    %350 = vmatprep.subr.mxu0 0.0
    %351 = vmatpush2.msra.mxu0 0.0
    %352 = vmatprep.subr.mxu0 0.0
    %353 = vmatpush2.msra.mxu0 0.0
    %354 = vmatprep.subr.mxu0 0.0
    %355 = vmatpush2.msra.mxu0 0.0
    %356 = vmatprep.subr.mxu0 0.0
    %357 = vmatpush2.msra.mxu0 0.0
    %358 = vmatprep.subr.mxu0 0.0
    %359 = vmatpush2.msra.mxu0 0.0
    %360 = vmatprep.subr.mxu0 0.0
    %361 = vmatpush2.msra.mxu0 0.0
    %362 = vmatprep.subr.mxu0 0.0
    %363 = vmatpush2.msra.mxu0 0.0
    %364 = vmatprep.subr.mxu0 0.0
    %365 = vmatpush2.msra.mxu0 0.0
    %366 = vmatprep.subr.mxu0 0.0
    %367 = vmatpush2.msra.mxu0 0.0
    %368 = vmatprep.subr.mxu0 0.0
    %369 = vmatpush2.msra.mxu0 0.0
    %370 = vmatprep.subr.mxu0 0.0
    %371 = vmatpush2.msra.mxu0 0.0
    %372 = vmatprep.subr.mxu0 0.0
    %373 = vmatpush2.msra.mxu0 0.0
    %374 = vmatprep.mubr.f32.mxu0 0.0
    %375 = vmatmul.mubr.f32.gmra.mxu0 %v287
    %v376 = vpop.f32.mrf.mxu0
    %v377 = vadd.f32 %v284, %v376
    %v378 = vpop.f32.mrf.mxu0
    %379 = vmatprep.mubr.f32.mxu0 0.0
    %380 = vmatmul.mubr.f32.gmra.mxu0 %v290
    %v381 = vpop.f32.mrf.mxu0
    %v382 = vadd.f32 %v284, %v381
    %v383 = vpop.f32.mrf.mxu0
    %384 = vmatprep.mubr.f32.mxu0 0.0
    %385 = vmatmul.mubr.f32.gmra.mxu0 %v293
    %v386 = vpop.f32.mrf.mxu0
    %v387 = vadd.f32 %v284, %v386
    %v388 = vpop.f32.mrf.mxu0
    %389 = vmatprep.mubr.f32.mxu0 0.0
    %390 = vmatmul.mubr.f32.gmra.mxu0 %v296
    %v391 = vpop.f32.mrf.mxu0
    %v392 = vadd.f32 %v284, %v391
    %v393 = vpop.f32.mrf.mxu0
    %394 = vmatprep.mubr.f32.mxu0 0.0
    %395 = vmatmul.mubr.f32.gmra.mxu0 %v299
    %v396 = vpop.f32.mrf.mxu0
    %v397 = vadd.f32 %v284, %v396
    %v398 = vpop.f32.mrf.mxu0
    %399 = vmatprep.mubr.f32.mxu0 0.0
    %400 = vmatmul.mubr.f32.gmra.mxu0 %v302
    %v401 = vpop.f32.mrf.mxu0
    %v402 = vadd.f32 %v284, %v401
    %v403 = vpop.f32.mrf.mxu0
    %404 = vmatprep.mubr.f32.mxu0 0.0
    %405 = vmatmul.mubr.f32.gmra.mxu0 %v305
    %v406 = vpop.f32.mrf.mxu0
    %v407 = vadd.f32 %v284, %v406
    %v408 = vpop.f32.mrf.mxu0
    %409 = vmatprep.mubr.f32.mxu0 0.0
    %410 = vmatmul.mubr.f32.gmra.mxu0 %v308
    %v411 = vpop.f32.mrf.mxu0
    %v412 = vadd.f32 %v284, %v411
    %v413 = vpop.f32.mrf.mxu0
    %414 = vdwg.mxu0
    %v415 = vld [vmem:[%s6] sm:$0xf]
    %v418 = vunpack.c.l.s4 1966171168
    %v419 = vunpack.c.0.s8 %v418
    %v420 = vlaneseq
    %v421 = vshrl.u32 %v420, 7
    %v422 = vsub.s32 %v419, %v421
    %v423 = vrot.slane %v415, %v422
    %v424 = vcombine.high %v423, %v423
    %v426 = vunpack.c.l.s4 1966171168
    %v427 = vunpack.c.0.s8 %v426
    %v428 = vlaneseq
    %v429 = vshrl.u32 %v428, 7
    %v430 = vsub.s32 %v427, %v429
    %v431 = vrot.slane %v423, %v430
    %v433 = vunpack.c.l.s4 1966171168
    %v434 = vunpack.c.0.s8 %v433
    %v435 = vlaneseq
    %v436 = vshrl.u32 %v435, 7
    %v437 = vsub.s32 %v434, %v436
    %v438 = vrot.slane %v424, %v437
    %v439 = vcombine.high %v431, %v431
    %v440 = vcombine.high %v438, %v438
    %v441 = vlaneseq
    %v442 = vshrl.u32 %v441, 7
    %v443 = vsub.s32 0, %v442
    %v444 = vrot.slane %v431, %v443
    %v445 = vlaneseq
    %v446 = vshrl.u32 %v445, 7
    %v447 = vsub.s32 0, %v446
    %v448 = vrot.slane %v438, %v447
    %v449 = vlaneseq
    %v450 = vshrl.u32 %v449, 7
    %v451 = vsub.s32 0, %v450
    %v452 = vrot.slane %v439, %v451
    %v453 = vlaneseq
    %v454 = vshrl.u32 %v453, 7
    %v455 = vsub.s32 0, %v454
    %v456 = vrot.slane %v440, %v455
    %v461 = vmul.f32 %v444, %v237
    %v462 = vmul.f32 %v444, %v242
    %v463 = vmul.f32 %v444, %v247
    %v464 = vmul.f32 %v444, %v252
    %v465 = vmul.f32 %v444, %v257
    %v466 = vmul.f32 %v444, %v262
    %v467 = vmul.f32 %v444, %v267
    %v468 = vmul.f32 %v444, %v272
    %v469 = vmul.f32 %v448, %v237
    %v470 = vmul.f32 %v448, %v242
    %v471 = vmul.f32 %v448, %v247
    %v472 = vmul.f32 %v448, %v252
    %v473 = vmul.f32 %v448, %v257
    %v474 = vmul.f32 %v448, %v262
    %v475 = vmul.f32 %v448, %v267
    %v476 = vmul.f32 %v448, %v272
    %v477 = vmul.f32 %v452, %v237
    %v478 = vmul.f32 %v452, %v242
    %v479 = vmul.f32 %v452, %v247
    %v480 = vmul.f32 %v452, %v252
    %v481 = vmul.f32 %v452, %v257
    %v482 = vmul.f32 %v452, %v262
    %v483 = vmul.f32 %v452, %v267
    %v484 = vmul.f32 %v452, %v272
    %v485 = vmul.f32 %v456, %v237
    %v486 = vmul.f32 %v456, %v242
    %v487 = vmul.f32 %v456, %v247
    %v488 = vmul.f32 %v456, %v252
    %v489 = vmul.f32 %v456, %v257
    %v490 = vmul.f32 %v456, %v262
    %v491 = vmul.f32 %v456, %v267
    %v492 = vmul.f32 %v456, %v272
    %v494 = vsel %vm145, %v461, 0
    %v497 = vsel %vm145, %v377, 0
    %499 = vmatprep.subr.mxu0 0.0
    %500 = vmatpush1.xpose.msra.mxu0 0.0
    %501 = vmatprep.subr.mxu0 0.0
    %502 = vmatpush1.xpose.msra.mxu0 0.0
    %503 = vmatprep.subr.mxu0 0.0
    %504 = vmatpush1.xpose.msra.mxu0 0.0
    %505 = vmatprep.subr.mxu0 0.0
    %506 = vmatpush1.xpose.msra.mxu0 0.0
    %507 = vmatprep.subr.mxu0 0.0
    %508 = vmatpush1.xpose.msra.mxu0 0.0
    %509 = vmatprep.subr.mxu0 0.0
    %510 = vmatpush1.xpose.msra.mxu0 0.0
    %511 = vmatprep.subr.mxu0 0.0
    %512 = vmatpush1.xpose.msra.mxu0 0.0
    %513 = vmatprep.subr.mxu0 0.0
    %514 = vmatpush1.xpose.msra.mxu0 0.0
    %515 = vmatprep.subr.mxu0 0.0
    %516 = vmatpush1.xpose.msra.mxu0 0.0
    %517 = vmatprep.subr.mxu0 0.0
    %518 = vmatpush1.xpose.msra.mxu0 0.0
    %519 = vmatprep.subr.mxu0 0.0
    %520 = vmatpush1.xpose.msra.mxu0 0.0
    %521 = vmatprep.subr.mxu0 0.0
    %522 = vmatpush1.xpose.msra.mxu0 0.0
    %523 = vmatprep.subr.mxu0 0.0
    %524 = vmatpush1.xpose.msra.mxu0 0.0
    %525 = vmatprep.subr.mxu0 0.0
    %526 = vmatpush1.xpose.msra.mxu0 0.0
    %527 = vmatprep.subr.mxu0 0.0
    %528 = vmatpush1.xpose.msra.mxu0 0.0
    %529 = vmatprep.subr.mxu0 0.0
    %530 = vmatpush1.xpose.msra.mxu0 %v497
    %531 = vmatprep.subr.mxu0 0.0
    %532 = vmatpush2.xpose.msra.mxu0 0.0
    %533 = vmatprep.subr.mxu0 0.0
    %534 = vmatpush2.xpose.msra.mxu0 0.0
    %535 = vmatprep.subr.mxu0 0.0
    %536 = vmatpush2.xpose.msra.mxu0 0.0
    %537 = vmatprep.subr.mxu0 0.0
    %538 = vmatpush2.xpose.msra.mxu0 0.0
    %539 = vmatprep.subr.mxu0 0.0
    %540 = vmatpush2.xpose.msra.mxu0 0.0
    %541 = vmatprep.subr.mxu0 0.0
    %542 = vmatpush2.xpose.msra.mxu0 0.0
    %543 = vmatprep.subr.mxu0 0.0
    %544 = vmatpush2.xpose.msra.mxu0 0.0
    %545 = vmatprep.subr.mxu0 0.0
    %546 = vmatpush2.xpose.msra.mxu0 0.0
    %547 = vmatprep.subr.mxu0 0.0
    %548 = vmatpush2.xpose.msra.mxu0 0.0
    %549 = vmatprep.subr.mxu0 0.0
    %550 = vmatpush2.xpose.msra.mxu0 0.0
    %551 = vmatprep.subr.mxu0 0.0
    %552 = vmatpush2.xpose.msra.mxu0 0.0
    %553 = vmatprep.subr.mxu0 0.0
    %554 = vmatpush2.xpose.msra.mxu0 0.0
    %555 = vmatprep.subr.mxu0 0.0
    %556 = vmatpush2.xpose.msra.mxu0 0.0
    %557 = vmatprep.subr.mxu0 0.0
    %558 = vmatpush2.xpose.msra.mxu0 0.0
    %559 = vmatprep.subr.mxu0 0.0
    %560 = vmatpush2.xpose.msra.mxu0 0.0
    %561 = vmatprep.subr.mxu0 0.0
    %562 = vmatpush2.xpose.msra.mxu0 0.0
    %563 = vmatprep.mubr.f32.mxu0 0.0
    %564 = vmatmul.mubr.f32.gmra.mxu0 %v494
    %v565 = vpop.f32.mrf.mxu0
    %v566 = vadd.f32 0.0, %v565
    %v567 = vpop.f32.mrf.mxu0
    %568 = vdwg.mxu0
    %v570 = vsel %vm145, %v462, 0
    %v573 = vsel %vm145, %v382, 0
    %575 = vmatprep.subr.mxu0 0.0
    %576 = vmatpush1.xpose.msra.mxu0 0.0
    %577 = vmatprep.subr.mxu0 0.0
    %578 = vmatpush1.xpose.msra.mxu0 0.0
    %579 = vmatprep.subr.mxu0 0.0
    %580 = vmatpush1.xpose.msra.mxu0 0.0
    %581 = vmatprep.subr.mxu0 0.0
    %582 = vmatpush1.xpose.msra.mxu0 0.0
    %583 = vmatprep.subr.mxu0 0.0
    %584 = vmatpush1.xpose.msra.mxu0 0.0
    %585 = vmatprep.subr.mxu0 0.0
    %586 = vmatpush1.xpose.msra.mxu0 0.0
    %587 = vmatprep.subr.mxu0 0.0
    %588 = vmatpush1.xpose.msra.mxu0 0.0
    %589 = vmatprep.subr.mxu0 0.0
    %590 = vmatpush1.xpose.msra.mxu0 0.0
    %591 = vmatprep.subr.mxu0 0.0
    %592 = vmatpush1.xpose.msra.mxu0 0.0
    %593 = vmatprep.subr.mxu0 0.0
    %594 = vmatpush1.xpose.msra.mxu0 0.0
    %595 = vmatprep.subr.mxu0 0.0
    %596 = vmatpush1.xpose.msra.mxu0 0.0
    %597 = vmatprep.subr.mxu0 0.0
    %598 = vmatpush1.xpose.msra.mxu0 0.0
    %599 = vmatprep.subr.mxu0 0.0
    %600 = vmatpush1.xpose.msra.mxu0 0.0
    %601 = vmatprep.subr.mxu0 0.0
    %602 = vmatpush1.xpose.msra.mxu0 0.0
    %603 = vmatprep.subr.mxu0 0.0
    %604 = vmatpush1.xpose.msra.mxu0 0.0
    %605 = vmatprep.subr.mxu0 0.0
    %606 = vmatpush1.xpose.msra.mxu0 %v573
    %607 = vmatprep.subr.mxu0 0.0
    %608 = vmatpush2.xpose.msra.mxu0 0.0
    %609 = vmatprep.subr.mxu0 0.0
    %610 = vmatpush2.xpose.msra.mxu0 0.0
    %611 = vmatprep.subr.mxu0 0.0
    %612 = vmatpush2.xpose.msra.mxu0 0.0
    %613 = vmatprep.subr.mxu0 0.0
    %614 = vmatpush2.xpose.msra.mxu0 0.0
    %615 = vmatprep.subr.mxu0 0.0
    %616 = vmatpush2.xpose.msra.mxu0 0.0
    %617 = vmatprep.subr.mxu0 0.0
    %618 = vmatpush2.xpose.msra.mxu0 0.0
    %619 = vmatprep.subr.mxu0 0.0
    %620 = vmatpush2.xpose.msra.mxu0 0.0
    %621 = vmatprep.subr.mxu0 0.0
    %622 = vmatpush2.xpose.msra.mxu0 0.0
    %623 = vmatprep.subr.mxu0 0.0
    %624 = vmatpush2.xpose.msra.mxu0 0.0
    %625 = vmatprep.subr.mxu0 0.0
    %626 = vmatpush2.xpose.msra.mxu0 0.0
    %627 = vmatprep.subr.mxu0 0.0
    %628 = vmatpush2.xpose.msra.mxu0 0.0
    %629 = vmatprep.subr.mxu0 0.0
    %630 = vmatpush2.xpose.msra.mxu0 0.0
    %631 = vmatprep.subr.mxu0 0.0
    %632 = vmatpush2.xpose.msra.mxu0 0.0
    %633 = vmatprep.subr.mxu0 0.0
    %634 = vmatpush2.xpose.msra.mxu0 0.0
    %635 = vmatprep.subr.mxu0 0.0
    %636 = vmatpush2.xpose.msra.mxu0 0.0
    %637 = vmatprep.subr.mxu0 0.0
    %638 = vmatpush2.xpose.msra.mxu0 0.0
    %639 = vmatprep.mubr.f32.mxu0 0.0
    %640 = vmatmul.mubr.f32.gmra.mxu0 %v570
    %v641 = vpop.f32.mrf.mxu0
    %v642 = vadd.f32 0.0, %v641
    %v643 = vpop.f32.mrf.mxu0
    %644 = vdwg.mxu0
    %v646 = vsel %vm145, %v463, 0
    %v649 = vsel %vm145, %v387, 0
    %651 = vmatprep.subr.mxu0 0.0
    %652 = vmatpush1.xpose.msra.mxu0 0.0
    %653 = vmatprep.subr.mxu0 0.0
    %654 = vmatpush1.xpose.msra.mxu0 0.0
    %655 = vmatprep.subr.mxu0 0.0
    %656 = vmatpush1.xpose.msra.mxu0 0.0
    %657 = vmatprep.subr.mxu0 0.0
    %658 = vmatpush1.xpose.msra.mxu0 0.0
    %659 = vmatprep.subr.mxu0 0.0
    %660 = vmatpush1.xpose.msra.mxu0 0.0
    %661 = vmatprep.subr.mxu0 0.0
    %662 = vmatpush1.xpose.msra.mxu0 0.0
    %663 = vmatprep.subr.mxu0 0.0
    %664 = vmatpush1.xpose.msra.mxu0 0.0
    %665 = vmatprep.subr.mxu0 0.0
    %666 = vmatpush1.xpose.msra.mxu0 0.0
    %667 = vmatprep.subr.mxu0 0.0
    %668 = vmatpush1.xpose.msra.mxu0 0.0
    %669 = vmatprep.subr.mxu0 0.0
    %670 = vmatpush1.xpose.msra.mxu0 0.0
    %671 = vmatprep.subr.mxu0 0.0
    %672 = vmatpush1.xpose.msra.mxu0 0.0
    %673 = vmatprep.subr.mxu0 0.0
    %674 = vmatpush1.xpose.msra.mxu0 0.0
    %675 = vmatprep.subr.mxu0 0.0
    %676 = vmatpush1.xpose.msra.mxu0 0.0
    %677 = vmatprep.subr.mxu0 0.0
    %678 = vmatpush1.xpose.msra.mxu0 0.0
    %679 = vmatprep.subr.mxu0 0.0
    %680 = vmatpush1.xpose.msra.mxu0 0.0
    %681 = vmatprep.subr.mxu0 0.0
    %682 = vmatpush1.xpose.msra.mxu0 %v649
    %683 = vmatprep.subr.mxu0 0.0
    %684 = vmatpush2.xpose.msra.mxu0 0.0
    %685 = vmatprep.subr.mxu0 0.0
    %686 = vmatpush2.xpose.msra.mxu0 0.0
    %687 = vmatprep.subr.mxu0 0.0
    %688 = vmatpush2.xpose.msra.mxu0 0.0
    %689 = vmatprep.subr.mxu0 0.0
    %690 = vmatpush2.xpose.msra.mxu0 0.0
    %691 = vmatprep.subr.mxu0 0.0
    %692 = vmatpush2.xpose.msra.mxu0 0.0
    %693 = vmatprep.subr.mxu0 0.0
    %694 = vmatpush2.xpose.msra.mxu0 0.0
    %695 = vmatprep.subr.mxu0 0.0
    %696 = vmatpush2.xpose.msra.mxu0 0.0
    %697 = vmatprep.subr.mxu0 0.0
    %698 = vmatpush2.xpose.msra.mxu0 0.0
    %699 = vmatprep.subr.mxu0 0.0
    %700 = vmatpush2.xpose.msra.mxu0 0.0
    %701 = vmatprep.subr.mxu0 0.0
    %702 = vmatpush2.xpose.msra.mxu0 0.0
    %703 = vmatprep.subr.mxu0 0.0
    %704 = vmatpush2.xpose.msra.mxu0 0.0
    %705 = vmatprep.subr.mxu0 0.0
    %706 = vmatpush2.xpose.msra.mxu0 0.0
    %707 = vmatprep.subr.mxu0 0.0
    %708 = vmatpush2.xpose.msra.mxu0 0.0
    %709 = vmatprep.subr.mxu0 0.0
    %710 = vmatpush2.xpose.msra.mxu0 0.0
    %711 = vmatprep.subr.mxu0 0.0
    %712 = vmatpush2.xpose.msra.mxu0 0.0
    %713 = vmatprep.subr.mxu0 0.0
    %714 = vmatpush2.xpose.msra.mxu0 0.0
    %715 = vmatprep.mubr.f32.mxu0 0.0
    %716 = vmatmul.mubr.f32.gmra.mxu0 %v646
    %v717 = vpop.f32.mrf.mxu0
    %v718 = vadd.f32 0.0, %v717
    %v719 = vpop.f32.mrf.mxu0
    %720 = vdwg.mxu0
    %v722 = vsel %vm145, %v464, 0
    %v725 = vsel %vm145, %v392, 0
    %727 = vmatprep.subr.mxu0 0.0
    %728 = vmatpush1.xpose.msra.mxu0 0.0
    %729 = vmatprep.subr.mxu0 0.0
    %730 = vmatpush1.xpose.msra.mxu0 0.0
    %731 = vmatprep.subr.mxu0 0.0
    %732 = vmatpush1.xpose.msra.mxu0 0.0
    %733 = vmatprep.subr.mxu0 0.0
    %734 = vmatpush1.xpose.msra.mxu0 0.0
    %735 = vmatprep.subr.mxu0 0.0
    %736 = vmatpush1.xpose.msra.mxu0 0.0
    %737 = vmatprep.subr.mxu0 0.0
    %738 = vmatpush1.xpose.msra.mxu0 0.0
    %739 = vmatprep.subr.mxu0 0.0
    %740 = vmatpush1.xpose.msra.mxu0 0.0
    %741 = vmatprep.subr.mxu0 0.0
    %742 = vmatpush1.xpose.msra.mxu0 0.0
    %743 = vmatprep.subr.mxu0 0.0
    %744 = vmatpush1.xpose.msra.mxu0 0.0
    %745 = vmatprep.subr.mxu0 0.0
    %746 = vmatpush1.xpose.msra.mxu0 0.0
    %747 = vmatprep.subr.mxu0 0.0
    %748 = vmatpush1.xpose.msra.mxu0 0.0
    %749 = vmatprep.subr.mxu0 0.0
    %750 = vmatpush1.xpose.msra.mxu0 0.0
    %751 = vmatprep.subr.mxu0 0.0
    %752 = vmatpush1.xpose.msra.mxu0 0.0
    %753 = vmatprep.subr.mxu0 0.0
    %754 = vmatpush1.xpose.msra.mxu0 0.0
    %755 = vmatprep.subr.mxu0 0.0
    %756 = vmatpush1.xpose.msra.mxu0 0.0
    %757 = vmatprep.subr.mxu0 0.0
    %758 = vmatpush1.xpose.msra.mxu0 %v725
    %759 = vmatprep.subr.mxu0 0.0
    %760 = vmatpush2.xpose.msra.mxu0 0.0
    %761 = vmatprep.subr.mxu0 0.0
    %762 = vmatpush2.xpose.msra.mxu0 0.0
    %763 = vmatprep.subr.mxu0 0.0
    %764 = vmatpush2.xpose.msra.mxu0 0.0
    %765 = vmatprep.subr.mxu0 0.0
    %766 = vmatpush2.xpose.msra.mxu0 0.0
    %767 = vmatprep.subr.mxu0 0.0
    %768 = vmatpush2.xpose.msra.mxu0 0.0
    %769 = vmatprep.subr.mxu0 0.0
    %770 = vmatpush2.xpose.msra.mxu0 0.0
    %771 = vmatprep.subr.mxu0 0.0
    %772 = vmatpush2.xpose.msra.mxu0 0.0
    %773 = vmatprep.subr.mxu0 0.0
    %774 = vmatpush2.xpose.msra.mxu0 0.0
    %775 = vmatprep.subr.mxu0 0.0
    %776 = vmatpush2.xpose.msra.mxu0 0.0
    %777 = vmatprep.subr.mxu0 0.0
    %778 = vmatpush2.xpose.msra.mxu0 0.0
    %779 = vmatprep.subr.mxu0 0.0
    %780 = vmatpush2.xpose.msra.mxu0 0.0
    %781 = vmatprep.subr.mxu0 0.0
    %782 = vmatpush2.xpose.msra.mxu0 0.0
    %783 = vmatprep.subr.mxu0 0.0
    %784 = vmatpush2.xpose.msra.mxu0 0.0
    %785 = vmatprep.subr.mxu0 0.0
    %786 = vmatpush2.xpose.msra.mxu0 0.0
    %787 = vmatprep.subr.mxu0 0.0
    %788 = vmatpush2.xpose.msra.mxu0 0.0
    %789 = vmatprep.subr.mxu0 0.0
    %790 = vmatpush2.xpose.msra.mxu0 0.0
    %791 = vmatprep.mubr.f32.mxu0 0.0
    %792 = vmatmul.mubr.f32.gmra.mxu0 %v722
    %v793 = vpop.f32.mrf.mxu0
    %v794 = vadd.f32 0.0, %v793
    %v795 = vpop.f32.mrf.mxu0
    %796 = vdwg.mxu0
    %v798 = vsel %vm145, %v465, 0
    %v801 = vsel %vm145, %v397, 0
    %803 = vmatprep.subr.mxu0 0.0
    %804 = vmatpush1.xpose.msra.mxu0 0.0
    %805 = vmatprep.subr.mxu0 0.0
    %806 = vmatpush1.xpose.msra.mxu0 0.0
    %807 = vmatprep.subr.mxu0 0.0
    %808 = vmatpush1.xpose.msra.mxu0 0.0
    %809 = vmatprep.subr.mxu0 0.0
    %810 = vmatpush1.xpose.msra.mxu0 0.0
    %811 = vmatprep.subr.mxu0 0.0
    %812 = vmatpush1.xpose.msra.mxu0 0.0
    %813 = vmatprep.subr.mxu0 0.0
    %814 = vmatpush1.xpose.msra.mxu0 0.0
    %815 = vmatprep.subr.mxu0 0.0
    %816 = vmatpush1.xpose.msra.mxu0 0.0
    %817 = vmatprep.subr.mxu0 0.0
    %818 = vmatpush1.xpose.msra.mxu0 0.0
    %819 = vmatprep.subr.mxu0 0.0
    %820 = vmatpush1.xpose.msra.mxu0 0.0
    %821 = vmatprep.subr.mxu0 0.0
    %822 = vmatpush1.xpose.msra.mxu0 0.0
    %823 = vmatprep.subr.mxu0 0.0
    %824 = vmatpush1.xpose.msra.mxu0 0.0
    %825 = vmatprep.subr.mxu0 0.0
    %826 = vmatpush1.xpose.msra.mxu0 0.0
    %827 = vmatprep.subr.mxu0 0.0
    %828 = vmatpush1.xpose.msra.mxu0 0.0
    %829 = vmatprep.subr.mxu0 0.0
    %830 = vmatpush1.xpose.msra.mxu0 0.0
    %831 = vmatprep.subr.mxu0 0.0
    %832 = vmatpush1.xpose.msra.mxu0 0.0
    %833 = vmatprep.subr.mxu0 0.0
    %834 = vmatpush1.xpose.msra.mxu0 %v801
    %835 = vmatprep.subr.mxu0 0.0
    %836 = vmatpush2.xpose.msra.mxu0 0.0
    %837 = vmatprep.subr.mxu0 0.0
    %838 = vmatpush2.xpose.msra.mxu0 0.0
    %839 = vmatprep.subr.mxu0 0.0
    %840 = vmatpush2.xpose.msra.mxu0 0.0
    %841 = vmatprep.subr.mxu0 0.0
    %842 = vmatpush2.xpose.msra.mxu0 0.0
    %843 = vmatprep.subr.mxu0 0.0
    %844 = vmatpush2.xpose.msra.mxu0 0.0
    %845 = vmatprep.subr.mxu0 0.0
    %846 = vmatpush2.xpose.msra.mxu0 0.0
    %847 = vmatprep.subr.mxu0 0.0
    %848 = vmatpush2.xpose.msra.mxu0 0.0
    %849 = vmatprep.subr.mxu0 0.0
    %850 = vmatpush2.xpose.msra.mxu0 0.0
    %851 = vmatprep.subr.mxu0 0.0
    %852 = vmatpush2.xpose.msra.mxu0 0.0
    %853 = vmatprep.subr.mxu0 0.0
    %854 = vmatpush2.xpose.msra.mxu0 0.0
    %855 = vmatprep.subr.mxu0 0.0
    %856 = vmatpush2.xpose.msra.mxu0 0.0
    %857 = vmatprep.subr.mxu0 0.0
    %858 = vmatpush2.xpose.msra.mxu0 0.0
    %859 = vmatprep.subr.mxu0 0.0
    %860 = vmatpush2.xpose.msra.mxu0 0.0
    %861 = vmatprep.subr.mxu0 0.0
    %862 = vmatpush2.xpose.msra.mxu0 0.0
    %863 = vmatprep.subr.mxu0 0.0
    %864 = vmatpush2.xpose.msra.mxu0 0.0
    %865 = vmatprep.subr.mxu0 0.0
    %866 = vmatpush2.xpose.msra.mxu0 0.0
    %867 = vmatprep.mubr.f32.mxu0 0.0
    %868 = vmatmul.mubr.f32.gmra.mxu0 %v798
    %v869 = vpop.f32.mrf.mxu0
    %v870 = vadd.f32 0.0, %v869
    %v871 = vpop.f32.mrf.mxu0
    %872 = vdwg.mxu0
    %v874 = vsel %vm145, %v466, 0
    %v877 = vsel %vm145, %v402, 0
    %879 = vmatprep.subr.mxu0 0.0
    %880 = vmatpush1.xpose.msra.mxu0 0.0
    %881 = vmatprep.subr.mxu0 0.0
    %882 = vmatpush1.xpose.msra.mxu0 0.0
    %883 = vmatprep.subr.mxu0 0.0
    %884 = vmatpush1.xpose.msra.mxu0 0.0
    %885 = vmatprep.subr.mxu0 0.0
    %886 = vmatpush1.xpose.msra.mxu0 0.0
    %887 = vmatprep.subr.mxu0 0.0
    %888 = vmatpush1.xpose.msra.mxu0 0.0
    %889 = vmatprep.subr.mxu0 0.0
    %890 = vmatpush1.xpose.msra.mxu0 0.0
    %891 = vmatprep.subr.mxu0 0.0
    %892 = vmatpush1.xpose.msra.mxu0 0.0
    %893 = vmatprep.subr.mxu0 0.0
    %894 = vmatpush1.xpose.msra.mxu0 0.0
    %895 = vmatprep.subr.mxu0 0.0
    %896 = vmatpush1.xpose.msra.mxu0 0.0
    %897 = vmatprep.subr.mxu0 0.0
    %898 = vmatpush1.xpose.msra.mxu0 0.0
    %899 = vmatprep.subr.mxu0 0.0
    %900 = vmatpush1.xpose.msra.mxu0 0.0
    %901 = vmatprep.subr.mxu0 0.0
    %902 = vmatpush1.xpose.msra.mxu0 0.0
    %903 = vmatprep.subr.mxu0 0.0
    %904 = vmatpush1.xpose.msra.mxu0 0.0
    %905 = vmatprep.subr.mxu0 0.0
    %906 = vmatpush1.xpose.msra.mxu0 0.0
    %907 = vmatprep.subr.mxu0 0.0
    %908 = vmatpush1.xpose.msra.mxu0 0.0
    %909 = vmatprep.subr.mxu0 0.0
    %910 = vmatpush1.xpose.msra.mxu0 %v877
    %911 = vmatprep.subr.mxu0 0.0
    %912 = vmatpush2.xpose.msra.mxu0 0.0
    %913 = vmatprep.subr.mxu0 0.0
    %914 = vmatpush2.xpose.msra.mxu0 0.0
    %915 = vmatprep.subr.mxu0 0.0
    %916 = vmatpush2.xpose.msra.mxu0 0.0
    %917 = vmatprep.subr.mxu0 0.0
    %918 = vmatpush2.xpose.msra.mxu0 0.0
    %919 = vmatprep.subr.mxu0 0.0
    %920 = vmatpush2.xpose.msra.mxu0 0.0
    %921 = vmatprep.subr.mxu0 0.0
    %922 = vmatpush2.xpose.msra.mxu0 0.0
    %923 = vmatprep.subr.mxu0 0.0
    %924 = vmatpush2.xpose.msra.mxu0 0.0
    %925 = vmatprep.subr.mxu0 0.0
    %926 = vmatpush2.xpose.msra.mxu0 0.0
    %927 = vmatprep.subr.mxu0 0.0
    %928 = vmatpush2.xpose.msra.mxu0 0.0
    %929 = vmatprep.subr.mxu0 0.0
    %930 = vmatpush2.xpose.msra.mxu0 0.0
    %931 = vmatprep.subr.mxu0 0.0
    %932 = vmatpush2.xpose.msra.mxu0 0.0
    %933 = vmatprep.subr.mxu0 0.0
    %934 = vmatpush2.xpose.msra.mxu0 0.0
    %935 = vmatprep.subr.mxu0 0.0
    %936 = vmatpush2.xpose.msra.mxu0 0.0
    %937 = vmatprep.subr.mxu0 0.0
    %938 = vmatpush2.xpose.msra.mxu0 0.0
    %939 = vmatprep.subr.mxu0 0.0
    %940 = vmatpush2.xpose.msra.mxu0 0.0
    %941 = vmatprep.subr.mxu0 0.0
    %942 = vmatpush2.xpose.msra.mxu0 0.0
    %943 = vmatprep.mubr.f32.mxu0 0.0
    %944 = vmatmul.mubr.f32.gmra.mxu0 %v874
    %v945 = vpop.f32.mrf.mxu0
    %v946 = vadd.f32 0.0, %v945
    %v947 = vpop.f32.mrf.mxu0
    %948 = vdwg.mxu0
    %v950 = vsel %vm145, %v467, 0
    %v953 = vsel %vm145, %v407, 0
    %955 = vmatprep.subr.mxu0 0.0
    %956 = vmatpush1.xpose.msra.mxu0 0.0
    %957 = vmatprep.subr.mxu0 0.0
    %958 = vmatpush1.xpose.msra.mxu0 0.0
    %959 = vmatprep.subr.mxu0 0.0
    %960 = vmatpush1.xpose.msra.mxu0 0.0
    %961 = vmatprep.subr.mxu0 0.0
    %962 = vmatpush1.xpose.msra.mxu0 0.0
    %963 = vmatprep.subr.mxu0 0.0
    %964 = vmatpush1.xpose.msra.mxu0 0.0
    %965 = vmatprep.subr.mxu0 0.0
    %966 = vmatpush1.xpose.msra.mxu0 0.0
    %967 = vmatprep.subr.mxu0 0.0
    %968 = vmatpush1.xpose.msra.mxu0 0.0
    %969 = vmatprep.subr.mxu0 0.0
    %970 = vmatpush1.xpose.msra.mxu0 0.0
    %971 = vmatprep.subr.mxu0 0.0
    %972 = vmatpush1.xpose.msra.mxu0 0.0
    %973 = vmatprep.subr.mxu0 0.0
    %974 = vmatpush1.xpose.msra.mxu0 0.0
    %975 = vmatprep.subr.mxu0 0.0
    %976 = vmatpush1.xpose.msra.mxu0 0.0
    %977 = vmatprep.subr.mxu0 0.0
    %978 = vmatpush1.xpose.msra.mxu0 0.0
    %979 = vmatprep.subr.mxu0 0.0
    %980 = vmatpush1.xpose.msra.mxu0 0.0
    %981 = vmatprep.subr.mxu0 0.0
    %982 = vmatpush1.xpose.msra.mxu0 0.0
    %983 = vmatprep.subr.mxu0 0.0
    %984 = vmatpush1.xpose.msra.mxu0 0.0
    %985 = vmatprep.subr.mxu0 0.0
    %986 = vmatpush1.xpose.msra.mxu0 %v953
    %987 = vmatprep.subr.mxu0 0.0
    %988 = vmatpush2.xpose.msra.mxu0 0.0
    %989 = vmatprep.subr.mxu0 0.0
    %990 = vmatpush2.xpose.msra.mxu0 0.0
    %991 = vmatprep.subr.mxu0 0.0
    %992 = vmatpush2.xpose.msra.mxu0 0.0
    %993 = vmatprep.subr.mxu0 0.0
    %994 = vmatpush2.xpose.msra.mxu0 0.0
    %995 = vmatprep.subr.mxu0 0.0
    %996 = vmatpush2.xpose.msra.mxu0 0.0
    %997 = vmatprep.subr.mxu0 0.0
    %998 = vmatpush2.xpose.msra.mxu0 0.0
    %999 = vmatprep.subr.mxu0 0.0
    %1000 = vmatpush2.xpose.msra.mxu0 0.0
    %1001 = vmatprep.subr.mxu0 0.0
    %1002 = vmatpush2.xpose.msra.mxu0 0.0
    %1003 = vmatprep.subr.mxu0 0.0
    %1004 = vmatpush2.xpose.msra.mxu0 0.0
    %1005 = vmatprep.subr.mxu0 0.0
    %1006 = vmatpush2.xpose.msra.mxu0 0.0
    %1007 = vmatprep.subr.mxu0 0.0
    %1008 = vmatpush2.xpose.msra.mxu0 0.0
    %1009 = vmatprep.subr.mxu0 0.0
    %1010 = vmatpush2.xpose.msra.mxu0 0.0
    %1011 = vmatprep.subr.mxu0 0.0
    %1012 = vmatpush2.xpose.msra.mxu0 0.0
    %1013 = vmatprep.subr.mxu0 0.0
    %1014 = vmatpush2.xpose.msra.mxu0 0.0
    %1015 = vmatprep.subr.mxu0 0.0
    %1016 = vmatpush2.xpose.msra.mxu0 0.0
    %1017 = vmatprep.subr.mxu0 0.0
    %1018 = vmatpush2.xpose.msra.mxu0 0.0
    %1019 = vmatprep.mubr.f32.mxu0 0.0
    %1020 = vmatmul.mubr.f32.gmra.mxu0 %v950
    %v1021 = vpop.f32.mrf.mxu0
    %v1022 = vadd.f32 0.0, %v1021
    %v1023 = vpop.f32.mrf.mxu0
    %1024 = vdwg.mxu0
    %v1026 = vsel %vm145, %v468, 0
    %v1029 = vsel %vm145, %v412, 0
    %1031 = vmatprep.subr.mxu0 0.0
    %1032 = vmatpush1.xpose.msra.mxu0 0.0
    %1033 = vmatprep.subr.mxu0 0.0
    %1034 = vmatpush1.xpose.msra.mxu0 0.0
    %1035 = vmatprep.subr.mxu0 0.0
    %1036 = vmatpush1.xpose.msra.mxu0 0.0
    %1037 = vmatprep.subr.mxu0 0.0
    %1038 = vmatpush1.xpose.msra.mxu0 0.0
    %1039 = vmatprep.subr.mxu0 0.0
    %1040 = vmatpush1.xpose.msra.mxu0 0.0
    %1041 = vmatprep.subr.mxu0 0.0
    %1042 = vmatpush1.xpose.msra.mxu0 0.0
    %1043 = vmatprep.subr.mxu0 0.0
    %1044 = vmatpush1.xpose.msra.mxu0 0.0
    %1045 = vmatprep.subr.mxu0 0.0
    %1046 = vmatpush1.xpose.msra.mxu0 0.0
    %1047 = vmatprep.subr.mxu0 0.0
    %1048 = vmatpush1.xpose.msra.mxu0 0.0
    %1049 = vmatprep.subr.mxu0 0.0
    %1050 = vmatpush1.xpose.msra.mxu0 0.0
    %1051 = vmatprep.subr.mxu0 0.0
    %1052 = vmatpush1.xpose.msra.mxu0 0.0
    %1053 = vmatprep.subr.mxu0 0.0
    %1054 = vmatpush1.xpose.msra.mxu0 0.0
    %1055 = vmatprep.subr.mxu0 0.0
    %1056 = vmatpush1.xpose.msra.mxu0 0.0
    %1057 = vmatprep.subr.mxu0 0.0
    %1058 = vmatpush1.xpose.msra.mxu0 0.0
    %1059 = vmatprep.subr.mxu0 0.0
    %1060 = vmatpush1.xpose.msra.mxu0 0.0
    %1061 = vmatprep.subr.mxu0 0.0
    %1062 = vmatpush1.xpose.msra.mxu0 %v1029
    %1063 = vmatprep.subr.mxu0 0.0
    %1064 = vmatpush2.xpose.msra.mxu0 0.0
    %1065 = vmatprep.subr.mxu0 0.0
    %1066 = vmatpush2.xpose.msra.mxu0 0.0
    %1067 = vmatprep.subr.mxu0 0.0
    %1068 = vmatpush2.xpose.msra.mxu0 0.0
    %1069 = vmatprep.subr.mxu0 0.0
    %1070 = vmatpush2.xpose.msra.mxu0 0.0
    %1071 = vmatprep.subr.mxu0 0.0
    %1072 = vmatpush2.xpose.msra.mxu0 0.0
    %1073 = vmatprep.subr.mxu0 0.0
    %1074 = vmatpush2.xpose.msra.mxu0 0.0
    %1075 = vmatprep.subr.mxu0 0.0
    %1076 = vmatpush2.xpose.msra.mxu0 0.0
    %1077 = vmatprep.subr.mxu0 0.0
    %1078 = vmatpush2.xpose.msra.mxu0 0.0
    %1079 = vmatprep.subr.mxu0 0.0
    %1080 = vmatpush2.xpose.msra.mxu0 0.0
    %1081 = vmatprep.subr.mxu0 0.0
    %1082 = vmatpush2.xpose.msra.mxu0 0.0
    %1083 = vmatprep.subr.mxu0 0.0
    %1084 = vmatpush2.xpose.msra.mxu0 0.0
    %1085 = vmatprep.subr.mxu0 0.0
    %1086 = vmatpush2.xpose.msra.mxu0 0.0
    %1087 = vmatprep.subr.mxu0 0.0
    %1088 = vmatpush2.xpose.msra.mxu0 0.0
    %1089 = vmatprep.subr.mxu0 0.0
    %1090 = vmatpush2.xpose.msra.mxu0 0.0
    %1091 = vmatprep.subr.mxu0 0.0
    %1092 = vmatpush2.xpose.msra.mxu0 0.0
    %1093 = vmatprep.subr.mxu0 0.0
    %1094 = vmatpush2.xpose.msra.mxu0 0.0
    %1095 = vmatprep.mubr.f32.mxu0 0.0
    %1096 = vmatmul.mubr.f32.gmra.mxu0 %v1026
    %v1097 = vpop.f32.mrf.mxu0
    %v1098 = vadd.f32 0.0, %v1097
    %v1099 = vpop.f32.mrf.mxu0
    %1100 = vdwg.mxu0
    %v1102 = vsel %vm145, %v469, 0
    %1104 = vmatprep.subr.mxu0 0.0
    %1105 = vmatpush1.xpose.msra.mxu0 0.0
    %1106 = vmatprep.subr.mxu0 0.0
    %1107 = vmatpush1.xpose.msra.mxu0 0.0
    %1108 = vmatprep.subr.mxu0 0.0
    %1109 = vmatpush1.xpose.msra.mxu0 0.0
    %1110 = vmatprep.subr.mxu0 0.0
    %1111 = vmatpush1.xpose.msra.mxu0 0.0
    %1112 = vmatprep.subr.mxu0 0.0
    %1113 = vmatpush1.xpose.msra.mxu0 0.0
    %1114 = vmatprep.subr.mxu0 0.0
    %1115 = vmatpush1.xpose.msra.mxu0 0.0
    %1116 = vmatprep.subr.mxu0 0.0
    %1117 = vmatpush1.xpose.msra.mxu0 0.0
    %1118 = vmatprep.subr.mxu0 0.0
    %1119 = vmatpush1.xpose.msra.mxu0 0.0
    %1120 = vmatprep.subr.mxu0 0.0
    %1121 = vmatpush1.xpose.msra.mxu0 0.0
    %1122 = vmatprep.subr.mxu0 0.0
    %1123 = vmatpush1.xpose.msra.mxu0 0.0
    %1124 = vmatprep.subr.mxu0 0.0
    %1125 = vmatpush1.xpose.msra.mxu0 0.0
    %1126 = vmatprep.subr.mxu0 0.0
    %1127 = vmatpush1.xpose.msra.mxu0 0.0
    %1128 = vmatprep.subr.mxu0 0.0
    %1129 = vmatpush1.xpose.msra.mxu0 0.0
    %1130 = vmatprep.subr.mxu0 0.0
    %1131 = vmatpush1.xpose.msra.mxu0 0.0
    %1132 = vmatprep.subr.mxu0 0.0
    %1133 = vmatpush1.xpose.msra.mxu0 0.0
    %1134 = vmatprep.subr.mxu0 0.0
    %1135 = vmatpush1.xpose.msra.mxu0 %v497
    %1136 = vmatprep.subr.mxu0 0.0
    %1137 = vmatpush2.xpose.msra.mxu0 0.0
    %1138 = vmatprep.subr.mxu0 0.0
    %1139 = vmatpush2.xpose.msra.mxu0 0.0
    %1140 = vmatprep.subr.mxu0 0.0
    %1141 = vmatpush2.xpose.msra.mxu0 0.0
    %1142 = vmatprep.subr.mxu0 0.0
    %1143 = vmatpush2.xpose.msra.mxu0 0.0
    %1144 = vmatprep.subr.mxu0 0.0
    %1145 = vmatpush2.xpose.msra.mxu0 0.0
    %1146 = vmatprep.subr.mxu0 0.0
    %1147 = vmatpush2.xpose.msra.mxu0 0.0
    %1148 = vmatprep.subr.mxu0 0.0
    %1149 = vmatpush2.xpose.msra.mxu0 0.0
    %1150 = vmatprep.subr.mxu0 0.0
    %1151 = vmatpush2.xpose.msra.mxu0 0.0
    %1152 = vmatprep.subr.mxu0 0.0
    %1153 = vmatpush2.xpose.msra.mxu0 0.0
    %1154 = vmatprep.subr.mxu0 0.0
    %1155 = vmatpush2.xpose.msra.mxu0 0.0
    %1156 = vmatprep.subr.mxu0 0.0
    %1157 = vmatpush2.xpose.msra.mxu0 0.0
    %1158 = vmatprep.subr.mxu0 0.0
    %1159 = vmatpush2.xpose.msra.mxu0 0.0
    %1160 = vmatprep.subr.mxu0 0.0
    %1161 = vmatpush2.xpose.msra.mxu0 0.0
    %1162 = vmatprep.subr.mxu0 0.0
    %1163 = vmatpush2.xpose.msra.mxu0 0.0
    %1164 = vmatprep.subr.mxu0 0.0
    %1165 = vmatpush2.xpose.msra.mxu0 0.0
    %1166 = vmatprep.subr.mxu0 0.0
    %1167 = vmatpush2.xpose.msra.mxu0 0.0
    %1168 = vmatprep.mubr.f32.mxu0 0.0
    %1169 = vmatmul.mubr.f32.gmra.mxu0 %v1102
    %v1170 = vpop.f32.mrf.mxu0
    %v1171 = vadd.f32 0.0, %v1170
    %v1172 = vpop.f32.mrf.mxu0
    %1173 = vdwg.mxu0
    %v1175 = vsel %vm145, %v470, 0
    %1177 = vmatprep.subr.mxu0 0.0
    %1178 = vmatpush1.xpose.msra.mxu0 0.0
    %1179 = vmatprep.subr.mxu0 0.0
    %1180 = vmatpush1.xpose.msra.mxu0 0.0
    %1181 = vmatprep.subr.mxu0 0.0
    %1182 = vmatpush1.xpose.msra.mxu0 0.0
    %1183 = vmatprep.subr.mxu0 0.0
    %1184 = vmatpush1.xpose.msra.mxu0 0.0
    %1185 = vmatprep.subr.mxu0 0.0
    %1186 = vmatpush1.xpose.msra.mxu0 0.0
    %1187 = vmatprep.subr.mxu0 0.0
    %1188 = vmatpush1.xpose.msra.mxu0 0.0
    %1189 = vmatprep.subr.mxu0 0.0
    %1190 = vmatpush1.xpose.msra.mxu0 0.0
    %1191 = vmatprep.subr.mxu0 0.0
    %1192 = vmatpush1.xpose.msra.mxu0 0.0
    %1193 = vmatprep.subr.mxu0 0.0
    %1194 = vmatpush1.xpose.msra.mxu0 0.0
    %1195 = vmatprep.subr.mxu0 0.0
    %1196 = vmatpush1.xpose.msra.mxu0 0.0
    %1197 = vmatprep.subr.mxu0 0.0
    %1198 = vmatpush1.xpose.msra.mxu0 0.0
    %1199 = vmatprep.subr.mxu0 0.0
    %1200 = vmatpush1.xpose.msra.mxu0 0.0
    %1201 = vmatprep.subr.mxu0 0.0
    %1202 = vmatpush1.xpose.msra.mxu0 0.0
    %1203 = vmatprep.subr.mxu0 0.0
    %1204 = vmatpush1.xpose.msra.mxu0 0.0
    %1205 = vmatprep.subr.mxu0 0.0
    %1206 = vmatpush1.xpose.msra.mxu0 0.0
    %1207 = vmatprep.subr.mxu0 0.0
    %1208 = vmatpush1.xpose.msra.mxu0 %v573
    %1209 = vmatprep.subr.mxu0 0.0
    %1210 = vmatpush2.xpose.msra.mxu0 0.0
    %1211 = vmatprep.subr.mxu0 0.0
    %1212 = vmatpush2.xpose.msra.mxu0 0.0
    %1213 = vmatprep.subr.mxu0 0.0
    %1214 = vmatpush2.xpose.msra.mxu0 0.0
    %1215 = vmatprep.subr.mxu0 0.0
    %1216 = vmatpush2.xpose.msra.mxu0 0.0
    %1217 = vmatprep.subr.mxu0 0.0
    %1218 = vmatpush2.xpose.msra.mxu0 0.0
    %1219 = vmatprep.subr.mxu0 0.0
    %1220 = vmatpush2.xpose.msra.mxu0 0.0
    %1221 = vmatprep.subr.mxu0 0.0
    %1222 = vmatpush2.xpose.msra.mxu0 0.0
    %1223 = vmatprep.subr.mxu0 0.0
    %1224 = vmatpush2.xpose.msra.mxu0 0.0
    %1225 = vmatprep.subr.mxu0 0.0
    %1226 = vmatpush2.xpose.msra.mxu0 0.0
    %1227 = vmatprep.subr.mxu0 0.0
    %1228 = vmatpush2.xpose.msra.mxu0 0.0
    %1229 = vmatprep.subr.mxu0 0.0
    %1230 = vmatpush2.xpose.msra.mxu0 0.0
    %1231 = vmatprep.subr.mxu0 0.0
    %1232 = vmatpush2.xpose.msra.mxu0 0.0
    %1233 = vmatprep.subr.mxu0 0.0
    %1234 = vmatpush2.xpose.msra.mxu0 0.0
    %1235 = vmatprep.subr.mxu0 0.0
    %1236 = vmatpush2.xpose.msra.mxu0 0.0
    %1237 = vmatprep.subr.mxu0 0.0
    %1238 = vmatpush2.xpose.msra.mxu0 0.0
    %1239 = vmatprep.subr.mxu0 0.0
    %1240 = vmatpush2.xpose.msra.mxu0 0.0
    %1241 = vmatprep.mubr.f32.mxu0 0.0
    %1242 = vmatmul.mubr.f32.gmra.mxu0 %v1175
    %v1243 = vpop.f32.mrf.mxu0
    %v1244 = vadd.f32 0.0, %v1243
    %v1245 = vpop.f32.mrf.mxu0
    %1246 = vdwg.mxu0
    %v1248 = vsel %vm145, %v471, 0
    %1250 = vmatprep.subr.mxu0 0.0
    %1251 = vmatpush1.xpose.msra.mxu0 0.0
    %1252 = vmatprep.subr.mxu0 0.0
    %1253 = vmatpush1.xpose.msra.mxu0 0.0
    %1254 = vmatprep.subr.mxu0 0.0
    %1255 = vmatpush1.xpose.msra.mxu0 0.0
    %1256 = vmatprep.subr.mxu0 0.0
    %1257 = vmatpush1.xpose.msra.mxu0 0.0
    %1258 = vmatprep.subr.mxu0 0.0
    %1259 = vmatpush1.xpose.msra.mxu0 0.0
    %1260 = vmatprep.subr.mxu0 0.0
    %1261 = vmatpush1.xpose.msra.mxu0 0.0
    %1262 = vmatprep.subr.mxu0 0.0
    %1263 = vmatpush1.xpose.msra.mxu0 0.0
    %1264 = vmatprep.subr.mxu0 0.0
    %1265 = vmatpush1.xpose.msra.mxu0 0.0
    %1266 = vmatprep.subr.mxu0 0.0
    %1267 = vmatpush1.xpose.msra.mxu0 0.0
    %1268 = vmatprep.subr.mxu0 0.0
    %1269 = vmatpush1.xpose.msra.mxu0 0.0
    %1270 = vmatprep.subr.mxu0 0.0
    %1271 = vmatpush1.xpose.msra.mxu0 0.0
    %1272 = vmatprep.subr.mxu0 0.0
    %1273 = vmatpush1.xpose.msra.mxu0 0.0
    %1274 = vmatprep.subr.mxu0 0.0
    %1275 = vmatpush1.xpose.msra.mxu0 0.0
    %1276 = vmatprep.subr.mxu0 0.0
    %1277 = vmatpush1.xpose.msra.mxu0 0.0
    %1278 = vmatprep.subr.mxu0 0.0
    %1279 = vmatpush1.xpose.msra.mxu0 0.0
    %1280 = vmatprep.subr.mxu0 0.0
    %1281 = vmatpush1.xpose.msra.mxu0 %v649
    %1282 = vmatprep.subr.mxu0 0.0
    %1283 = vmatpush2.xpose.msra.mxu0 0.0
    %1284 = vmatprep.subr.mxu0 0.0
    %1285 = vmatpush2.xpose.msra.mxu0 0.0
    %1286 = vmatprep.subr.mxu0 0.0
    %1287 = vmatpush2.xpose.msra.mxu0 0.0
    %1288 = vmatprep.subr.mxu0 0.0
    %1289 = vmatpush2.xpose.msra.mxu0 0.0
    %1290 = vmatprep.subr.mxu0 0.0
    %1291 = vmatpush2.xpose.msra.mxu0 0.0
    %1292 = vmatprep.subr.mxu0 0.0
    %1293 = vmatpush2.xpose.msra.mxu0 0.0
    %1294 = vmatprep.subr.mxu0 0.0
    %1295 = vmatpush2.xpose.msra.mxu0 0.0
    %1296 = vmatprep.subr.mxu0 0.0
    %1297 = vmatpush2.xpose.msra.mxu0 0.0
    %1298 = vmatprep.subr.mxu0 0.0
    %1299 = vmatpush2.xpose.msra.mxu0 0.0
    %1300 = vmatprep.subr.mxu0 0.0
    %1301 = vmatpush2.xpose.msra.mxu0 0.0
    %1302 = vmatprep.subr.mxu0 0.0
    %1303 = vmatpush2.xpose.msra.mxu0 0.0
    %1304 = vmatprep.subr.mxu0 0.0
    %1305 = vmatpush2.xpose.msra.mxu0 0.0
    %1306 = vmatprep.subr.mxu0 0.0
    %1307 = vmatpush2.xpose.msra.mxu0 0.0
    %1308 = vmatprep.subr.mxu0 0.0
    %1309 = vmatpush2.xpose.msra.mxu0 0.0
    %1310 = vmatprep.subr.mxu0 0.0
    %1311 = vmatpush2.xpose.msra.mxu0 0.0
    %1312 = vmatprep.subr.mxu0 0.0
    %1313 = vmatpush2.xpose.msra.mxu0 0.0
    %1314 = vmatprep.mubr.f32.mxu0 0.0
    %1315 = vmatmul.mubr.f32.gmra.mxu0 %v1248
    %v1316 = vpop.f32.mrf.mxu0
    %v1317 = vadd.f32 0.0, %v1316
    %v1318 = vpop.f32.mrf.mxu0
    %1319 = vdwg.mxu0
    %v1321 = vsel %vm145, %v472, 0
    %1323 = vmatprep.subr.mxu0 0.0
    %1324 = vmatpush1.xpose.msra.mxu0 0.0
    %1325 = vmatprep.subr.mxu0 0.0
    %1326 = vmatpush1.xpose.msra.mxu0 0.0
    %1327 = vmatprep.subr.mxu0 0.0
    %1328 = vmatpush1.xpose.msra.mxu0 0.0
    %1329 = vmatprep.subr.mxu0 0.0
    %1330 = vmatpush1.xpose.msra.mxu0 0.0
    %1331 = vmatprep.subr.mxu0 0.0
    %1332 = vmatpush1.xpose.msra.mxu0 0.0
    %1333 = vmatprep.subr.mxu0 0.0
    %1334 = vmatpush1.xpose.msra.mxu0 0.0
    %1335 = vmatprep.subr.mxu0 0.0
    %1336 = vmatpush1.xpose.msra.mxu0 0.0
    %1337 = vmatprep.subr.mxu0 0.0
    %1338 = vmatpush1.xpose.msra.mxu0 0.0
    %1339 = vmatprep.subr.mxu0 0.0
    %1340 = vmatpush1.xpose.msra.mxu0 0.0
    %1341 = vmatprep.subr.mxu0 0.0
    %1342 = vmatpush1.xpose.msra.mxu0 0.0
    %1343 = vmatprep.subr.mxu0 0.0
    %1344 = vmatpush1.xpose.msra.mxu0 0.0
    %1345 = vmatprep.subr.mxu0 0.0
    %1346 = vmatpush1.xpose.msra.mxu0 0.0
    %1347 = vmatprep.subr.mxu0 0.0
    %1348 = vmatpush1.xpose.msra.mxu0 0.0
    %1349 = vmatprep.subr.mxu0 0.0
    %1350 = vmatpush1.xpose.msra.mxu0 0.0
    %1351 = vmatprep.subr.mxu0 0.0
    %1352 = vmatpush1.xpose.msra.mxu0 0.0
    %1353 = vmatprep.subr.mxu0 0.0
    %1354 = vmatpush1.xpose.msra.mxu0 %v725
    %1355 = vmatprep.subr.mxu0 0.0
    %1356 = vmatpush2.xpose.msra.mxu0 0.0
    %1357 = vmatprep.subr.mxu0 0.0
    %1358 = vmatpush2.xpose.msra.mxu0 0.0
    %1359 = vmatprep.subr.mxu0 0.0
    %1360 = vmatpush2.xpose.msra.mxu0 0.0
    %1361 = vmatprep.subr.mxu0 0.0
    %1362 = vmatpush2.xpose.msra.mxu0 0.0
    %1363 = vmatprep.subr.mxu0 0.0
    %1364 = vmatpush2.xpose.msra.mxu0 0.0
    %1365 = vmatprep.subr.mxu0 0.0
    %1366 = vmatpush2.xpose.msra.mxu0 0.0
    %1367 = vmatprep.subr.mxu0 0.0
    %1368 = vmatpush2.xpose.msra.mxu0 0.0
    %1369 = vmatprep.subr.mxu0 0.0
    %1370 = vmatpush2.xpose.msra.mxu0 0.0
    %1371 = vmatprep.subr.mxu0 0.0
    %1372 = vmatpush2.xpose.msra.mxu0 0.0
    %1373 = vmatprep.subr.mxu0 0.0
    %1374 = vmatpush2.xpose.msra.mxu0 0.0
    %1375 = vmatprep.subr.mxu0 0.0
    %1376 = vmatpush2.xpose.msra.mxu0 0.0
    %1377 = vmatprep.subr.mxu0 0.0
    %1378 = vmatpush2.xpose.msra.mxu0 0.0
    %1379 = vmatprep.subr.mxu0 0.0
    %1380 = vmatpush2.xpose.msra.mxu0 0.0
    %1381 = vmatprep.subr.mxu0 0.0
    %1382 = vmatpush2.xpose.msra.mxu0 0.0
    %1383 = vmatprep.subr.mxu0 0.0
    %1384 = vmatpush2.xpose.msra.mxu0 0.0
    %1385 = vmatprep.subr.mxu0 0.0
    %1386 = vmatpush2.xpose.msra.mxu0 0.0
    %1387 = vmatprep.mubr.f32.mxu0 0.0
    %1388 = vmatmul.mubr.f32.gmra.mxu0 %v1321
    %v1389 = vpop.f32.mrf.mxu0
    %v1390 = vadd.f32 0.0, %v1389
    %v1391 = vpop.f32.mrf.mxu0
    %1392 = vdwg.mxu0
    %v1394 = vsel %vm145, %v473, 0
    %1396 = vmatprep.subr.mxu0 0.0
    %1397 = vmatpush1.xpose.msra.mxu0 0.0
    %1398 = vmatprep.subr.mxu0 0.0
    %1399 = vmatpush1.xpose.msra.mxu0 0.0
    %1400 = vmatprep.subr.mxu0 0.0
    %1401 = vmatpush1.xpose.msra.mxu0 0.0
    %1402 = vmatprep.subr.mxu0 0.0
    %1403 = vmatpush1.xpose.msra.mxu0 0.0
    %1404 = vmatprep.subr.mxu0 0.0
    %1405 = vmatpush1.xpose.msra.mxu0 0.0
    %1406 = vmatprep.subr.mxu0 0.0
    %1407 = vmatpush1.xpose.msra.mxu0 0.0
    %1408 = vmatprep.subr.mxu0 0.0
    %1409 = vmatpush1.xpose.msra.mxu0 0.0
    %1410 = vmatprep.subr.mxu0 0.0
    %1411 = vmatpush1.xpose.msra.mxu0 0.0
    %1412 = vmatprep.subr.mxu0 0.0
    %1413 = vmatpush1.xpose.msra.mxu0 0.0
    %1414 = vmatprep.subr.mxu0 0.0
    %1415 = vmatpush1.xpose.msra.mxu0 0.0
    %1416 = vmatprep.subr.mxu0 0.0
    %1417 = vmatpush1.xpose.msra.mxu0 0.0
    %1418 = vmatprep.subr.mxu0 0.0
    %1419 = vmatpush1.xpose.msra.mxu0 0.0
    %1420 = vmatprep.subr.mxu0 0.0
    %1421 = vmatpush1.xpose.msra.mxu0 0.0
    %1422 = vmatprep.subr.mxu0 0.0
    %1423 = vmatpush1.xpose.msra.mxu0 0.0
    %1424 = vmatprep.subr.mxu0 0.0
    %1425 = vmatpush1.xpose.msra.mxu0 0.0
    %1426 = vmatprep.subr.mxu0 0.0
    %1427 = vmatpush1.xpose.msra.mxu0 %v801
    %1428 = vmatprep.subr.mxu0 0.0
    %1429 = vmatpush2.xpose.msra.mxu0 0.0
    %1430 = vmatprep.subr.mxu0 0.0
    %1431 = vmatpush2.xpose.msra.mxu0 0.0
    %1432 = vmatprep.subr.mxu0 0.0
    %1433 = vmatpush2.xpose.msra.mxu0 0.0
    %1434 = vmatprep.subr.mxu0 0.0
    %1435 = vmatpush2.xpose.msra.mxu0 0.0
    %1436 = vmatprep.subr.mxu0 0.0
    %1437 = vmatpush2.xpose.msra.mxu0 0.0
    %1438 = vmatprep.subr.mxu0 0.0
    %1439 = vmatpush2.xpose.msra.mxu0 0.0
    %1440 = vmatprep.subr.mxu0 0.0
    %1441 = vmatpush2.xpose.msra.mxu0 0.0
    %1442 = vmatprep.subr.mxu0 0.0
    %1443 = vmatpush2.xpose.msra.mxu0 0.0
    %1444 = vmatprep.subr.mxu0 0.0
    %1445 = vmatpush2.xpose.msra.mxu0 0.0
    %1446 = vmatprep.subr.mxu0 0.0
    %1447 = vmatpush2.xpose.msra.mxu0 0.0
    %1448 = vmatprep.subr.mxu0 0.0
    %1449 = vmatpush2.xpose.msra.mxu0 0.0
    %1450 = vmatprep.subr.mxu0 0.0
    %1451 = vmatpush2.xpose.msra.mxu0 0.0
    %1452 = vmatprep.subr.mxu0 0.0
    %1453 = vmatpush2.xpose.msra.mxu0 0.0
    %1454 = vmatprep.subr.mxu0 0.0
    %1455 = vmatpush2.xpose.msra.mxu0 0.0
    %1456 = vmatprep.subr.mxu0 0.0
    %1457 = vmatpush2.xpose.msra.mxu0 0.0
    %1458 = vmatprep.subr.mxu0 0.0
    %1459 = vmatpush2.xpose.msra.mxu0 0.0
    %1460 = vmatprep.mubr.f32.mxu0 0.0
    %1461 = vmatmul.mubr.f32.gmra.mxu0 %v1394
    %v1462 = vpop.f32.mrf.mxu0
    %v1463 = vadd.f32 0.0, %v1462
    %v1464 = vpop.f32.mrf.mxu0
    %1465 = vdwg.mxu0
    %v1467 = vsel %vm145, %v474, 0
    %1469 = vmatprep.subr.mxu0 0.0
    %1470 = vmatpush1.xpose.msra.mxu0 0.0
    %1471 = vmatprep.subr.mxu0 0.0
    %1472 = vmatpush1.xpose.msra.mxu0 0.0
    %1473 = vmatprep.subr.mxu0 0.0
    %1474 = vmatpush1.xpose.msra.mxu0 0.0
    %1475 = vmatprep.subr.mxu0 0.0
    %1476 = vmatpush1.xpose.msra.mxu0 0.0
    %1477 = vmatprep.subr.mxu0 0.0
    %1478 = vmatpush1.xpose.msra.mxu0 0.0
    %1479 = vmatprep.subr.mxu0 0.0
    %1480 = vmatpush1.xpose.msra.mxu0 0.0
    %1481 = vmatprep.subr.mxu0 0.0
    %1482 = vmatpush1.xpose.msra.mxu0 0.0
    %1483 = vmatprep.subr.mxu0 0.0
    %1484 = vmatpush1.xpose.msra.mxu0 0.0
    %1485 = vmatprep.subr.mxu0 0.0
    %1486 = vmatpush1.xpose.msra.mxu0 0.0
    %1487 = vmatprep.subr.mxu0 0.0
    %1488 = vmatpush1.xpose.msra.mxu0 0.0
    %1489 = vmatprep.subr.mxu0 0.0
    %1490 = vmatpush1.xpose.msra.mxu0 0.0
    %1491 = vmatprep.subr.mxu0 0.0
    %1492 = vmatpush1.xpose.msra.mxu0 0.0
    %1493 = vmatprep.subr.mxu0 0.0
    %1494 = vmatpush1.xpose.msra.mxu0 0.0
    %1495 = vmatprep.subr.mxu0 0.0
    %1496 = vmatpush1.xpose.msra.mxu0 0.0
    %1497 = vmatprep.subr.mxu0 0.0
    %1498 = vmatpush1.xpose.msra.mxu0 0.0
    %1499 = vmatprep.subr.mxu0 0.0
    %1500 = vmatpush1.xpose.msra.mxu0 %v877
    %1501 = vmatprep.subr.mxu0 0.0
    %1502 = vmatpush2.xpose.msra.mxu0 0.0
    %1503 = vmatprep.subr.mxu0 0.0
    %1504 = vmatpush2.xpose.msra.mxu0 0.0
    %1505 = vmatprep.subr.mxu0 0.0
    %1506 = vmatpush2.xpose.msra.mxu0 0.0
    %1507 = vmatprep.subr.mxu0 0.0
    %1508 = vmatpush2.xpose.msra.mxu0 0.0
    %1509 = vmatprep.subr.mxu0 0.0
    %1510 = vmatpush2.xpose.msra.mxu0 0.0
    %1511 = vmatprep.subr.mxu0 0.0
    %1512 = vmatpush2.xpose.msra.mxu0 0.0
    %1513 = vmatprep.subr.mxu0 0.0
    %1514 = vmatpush2.xpose.msra.mxu0 0.0
    %1515 = vmatprep.subr.mxu0 0.0
    %1516 = vmatpush2.xpose.msra.mxu0 0.0
    %1517 = vmatprep.subr.mxu0 0.0
    %1518 = vmatpush2.xpose.msra.mxu0 0.0
    %1519 = vmatprep.subr.mxu0 0.0
    %1520 = vmatpush2.xpose.msra.mxu0 0.0
    %1521 = vmatprep.subr.mxu0 0.0
    %1522 = vmatpush2.xpose.msra.mxu0 0.0
    %1523 = vmatprep.subr.mxu0 0.0
    %1524 = vmatpush2.xpose.msra.mxu0 0.0
    %1525 = vmatprep.subr.mxu0 0.0
    %1526 = vmatpush2.xpose.msra.mxu0 0.0
    %1527 = vmatprep.subr.mxu0 0.0
    %1528 = vmatpush2.xpose.msra.mxu0 0.0
    %1529 = vmatprep.subr.mxu0 0.0
    %1530 = vmatpush2.xpose.msra.mxu0 0.0
    %1531 = vmatprep.subr.mxu0 0.0
    %1532 = vmatpush2.xpose.msra.mxu0 0.0
    %1533 = vmatprep.mubr.f32.mxu0 0.0
    %1534 = vmatmul.mubr.f32.gmra.mxu0 %v1467
    %v1535 = vpop.f32.mrf.mxu0
    %v1536 = vadd.f32 0.0, %v1535
    %v1537 = vpop.f32.mrf.mxu0
    %1538 = vdwg.mxu0
    %v1540 = vsel %vm145, %v475, 0
    %1542 = vmatprep.subr.mxu0 0.0
    %1543 = vmatpush1.xpose.msra.mxu0 0.0
    %1544 = vmatprep.subr.mxu0 0.0
    %1545 = vmatpush1.xpose.msra.mxu0 0.0
    %1546 = vmatprep.subr.mxu0 0.0
    %1547 = vmatpush1.xpose.msra.mxu0 0.0
    %1548 = vmatprep.subr.mxu0 0.0
    %1549 = vmatpush1.xpose.msra.mxu0 0.0
    %1550 = vmatprep.subr.mxu0 0.0
    %1551 = vmatpush1.xpose.msra.mxu0 0.0
    %1552 = vmatprep.subr.mxu0 0.0
    %1553 = vmatpush1.xpose.msra.mxu0 0.0
    %1554 = vmatprep.subr.mxu0 0.0
    %1555 = vmatpush1.xpose.msra.mxu0 0.0
    %1556 = vmatprep.subr.mxu0 0.0
    %1557 = vmatpush1.xpose.msra.mxu0 0.0
    %1558 = vmatprep.subr.mxu0 0.0
    %1559 = vmatpush1.xpose.msra.mxu0 0.0
    %1560 = vmatprep.subr.mxu0 0.0
    %1561 = vmatpush1.xpose.msra.mxu0 0.0
    %1562 = vmatprep.subr.mxu0 0.0
    %1563 = vmatpush1.xpose.msra.mxu0 0.0
    %1564 = vmatprep.subr.mxu0 0.0
    %1565 = vmatpush1.xpose.msra.mxu0 0.0
    %1566 = vmatprep.subr.mxu0 0.0
    %1567 = vmatpush1.xpose.msra.mxu0 0.0
    %1568 = vmatprep.subr.mxu0 0.0
    %1569 = vmatpush1.xpose.msra.mxu0 0.0
    %1570 = vmatprep.subr.mxu0 0.0
    %1571 = vmatpush1.xpose.msra.mxu0 0.0
    %1572 = vmatprep.subr.mxu0 0.0
    %1573 = vmatpush1.xpose.msra.mxu0 %v953
    %1574 = vmatprep.subr.mxu0 0.0
    %1575 = vmatpush2.xpose.msra.mxu0 0.0
    %1576 = vmatprep.subr.mxu0 0.0
    %1577 = vmatpush2.xpose.msra.mxu0 0.0
    %1578 = vmatprep.subr.mxu0 0.0
    %1579 = vmatpush2.xpose.msra.mxu0 0.0
    %1580 = vmatprep.subr.mxu0 0.0
    %1581 = vmatpush2.xpose.msra.mxu0 0.0
    %1582 = vmatprep.subr.mxu0 0.0
    %1583 = vmatpush2.xpose.msra.mxu0 0.0
    %1584 = vmatprep.subr.mxu0 0.0
    %1585 = vmatpush2.xpose.msra.mxu0 0.0
    %1586 = vmatprep.subr.mxu0 0.0
    %1587 = vmatpush2.xpose.msra.mxu0 0.0
    %1588 = vmatprep.subr.mxu0 0.0
    %1589 = vmatpush2.xpose.msra.mxu0 0.0
    %1590 = vmatprep.subr.mxu0 0.0
    %1591 = vmatpush2.xpose.msra.mxu0 0.0
    %1592 = vmatprep.subr.mxu0 0.0
    %1593 = vmatpush2.xpose.msra.mxu0 0.0
    %1594 = vmatprep.subr.mxu0 0.0
    %1595 = vmatpush2.xpose.msra.mxu0 0.0
    %1596 = vmatprep.subr.mxu0 0.0
    %1597 = vmatpush2.xpose.msra.mxu0 0.0
    %1598 = vmatprep.subr.mxu0 0.0
    %1599 = vmatpush2.xpose.msra.mxu0 0.0
    %1600 = vmatprep.subr.mxu0 0.0
    %1601 = vmatpush2.xpose.msra.mxu0 0.0
    %1602 = vmatprep.subr.mxu0 0.0
    %1603 = vmatpush2.xpose.msra.mxu0 0.0
    %1604 = vmatprep.subr.mxu0 0.0
    %1605 = vmatpush2.xpose.msra.mxu0 0.0
    %1606 = vmatprep.mubr.f32.mxu0 0.0
    %1607 = vmatmul.mubr.f32.gmra.mxu0 %v1540
    %v1608 = vpop.f32.mrf.mxu0
    %v1609 = vadd.f32 0.0, %v1608
    %v1610 = vpop.f32.mrf.mxu0
    %1611 = vdwg.mxu0
    %v1613 = vsel %vm145, %v476, 0
    %1615 = vmatprep.subr.mxu0 0.0
    %1616 = vmatpush1.xpose.msra.mxu0 0.0
    %1617 = vmatprep.subr.mxu0 0.0
    %1618 = vmatpush1.xpose.msra.mxu0 0.0
    %1619 = vmatprep.subr.mxu0 0.0
    %1620 = vmatpush1.xpose.msra.mxu0 0.0
    %1621 = vmatprep.subr.mxu0 0.0
    %1622 = vmatpush1.xpose.msra.mxu0 0.0
    %1623 = vmatprep.subr.mxu0 0.0
    %1624 = vmatpush1.xpose.msra.mxu0 0.0
    %1625 = vmatprep.subr.mxu0 0.0
    %1626 = vmatpush1.xpose.msra.mxu0 0.0
    %1627 = vmatprep.subr.mxu0 0.0
    %1628 = vmatpush1.xpose.msra.mxu0 0.0
    %1629 = vmatprep.subr.mxu0 0.0
    %1630 = vmatpush1.xpose.msra.mxu0 0.0
    %1631 = vmatprep.subr.mxu0 0.0
    %1632 = vmatpush1.xpose.msra.mxu0 0.0
    %1633 = vmatprep.subr.mxu0 0.0
    %1634 = vmatpush1.xpose.msra.mxu0 0.0
    %1635 = vmatprep.subr.mxu0 0.0
    %1636 = vmatpush1.xpose.msra.mxu0 0.0
    %1637 = vmatprep.subr.mxu0 0.0
    %1638 = vmatpush1.xpose.msra.mxu0 0.0
    %1639 = vmatprep.subr.mxu0 0.0
    %1640 = vmatpush1.xpose.msra.mxu0 0.0
    %1641 = vmatprep.subr.mxu0 0.0
    %1642 = vmatpush1.xpose.msra.mxu0 0.0
    %1643 = vmatprep.subr.mxu0 0.0
    %1644 = vmatpush1.xpose.msra.mxu0 0.0
    %1645 = vmatprep.subr.mxu0 0.0
    %1646 = vmatpush1.xpose.msra.mxu0 %v1029
    %1647 = vmatprep.subr.mxu0 0.0
    %1648 = vmatpush2.xpose.msra.mxu0 0.0
    %1649 = vmatprep.subr.mxu0 0.0
    %1650 = vmatpush2.xpose.msra.mxu0 0.0
    %1651 = vmatprep.subr.mxu0 0.0
    %1652 = vmatpush2.xpose.msra.mxu0 0.0
    %1653 = vmatprep.subr.mxu0 0.0
    %1654 = vmatpush2.xpose.msra.mxu0 0.0
    %1655 = vmatprep.subr.mxu0 0.0
    %1656 = vmatpush2.xpose.msra.mxu0 0.0
    %1657 = vmatprep.subr.mxu0 0.0
    %1658 = vmatpush2.xpose.msra.mxu0 0.0
    %1659 = vmatprep.subr.mxu0 0.0
    %1660 = vmatpush2.xpose.msra.mxu0 0.0
    %1661 = vmatprep.subr.mxu0 0.0
    %1662 = vmatpush2.xpose.msra.mxu0 0.0
    %1663 = vmatprep.subr.mxu0 0.0
    %1664 = vmatpush2.xpose.msra.mxu0 0.0
    %1665 = vmatprep.subr.mxu0 0.0
    %1666 = vmatpush2.xpose.msra.mxu0 0.0
    %1667 = vmatprep.subr.mxu0 0.0
    %1668 = vmatpush2.xpose.msra.mxu0 0.0
    %1669 = vmatprep.subr.mxu0 0.0
    %1670 = vmatpush2.xpose.msra.mxu0 0.0
    %1671 = vmatprep.subr.mxu0 0.0
    %1672 = vmatpush2.xpose.msra.mxu0 0.0
    %1673 = vmatprep.subr.mxu0 0.0
    %1674 = vmatpush2.xpose.msra.mxu0 0.0
    %1675 = vmatprep.subr.mxu0 0.0
    %1676 = vmatpush2.xpose.msra.mxu0 0.0
    %1677 = vmatprep.subr.mxu0 0.0
    %1678 = vmatpush2.xpose.msra.mxu0 0.0
    %1679 = vmatprep.mubr.f32.mxu0 0.0
    %1680 = vmatmul.mubr.f32.gmra.mxu0 %v1613
    %v1681 = vpop.f32.mrf.mxu0
    %v1682 = vadd.f32 0.0, %v1681
    %v1683 = vpop.f32.mrf.mxu0
    %1684 = vdwg.mxu0
    %v1686 = vsel %vm145, %v477, 0
    %1688 = vmatprep.subr.mxu0 0.0
    %1689 = vmatpush1.xpose.msra.mxu0 0.0
    %1690 = vmatprep.subr.mxu0 0.0
    %1691 = vmatpush1.xpose.msra.mxu0 0.0
    %1692 = vmatprep.subr.mxu0 0.0
    %1693 = vmatpush1.xpose.msra.mxu0 0.0
    %1694 = vmatprep.subr.mxu0 0.0
    %1695 = vmatpush1.xpose.msra.mxu0 0.0
    %1696 = vmatprep.subr.mxu0 0.0
    %1697 = vmatpush1.xpose.msra.mxu0 0.0
    %1698 = vmatprep.subr.mxu0 0.0
    %1699 = vmatpush1.xpose.msra.mxu0 0.0
    %1700 = vmatprep.subr.mxu0 0.0
    %1701 = vmatpush1.xpose.msra.mxu0 0.0
    %1702 = vmatprep.subr.mxu0 0.0
    %1703 = vmatpush1.xpose.msra.mxu0 0.0
    %1704 = vmatprep.subr.mxu0 0.0
    %1705 = vmatpush1.xpose.msra.mxu0 0.0
    %1706 = vmatprep.subr.mxu0 0.0
    %1707 = vmatpush1.xpose.msra.mxu0 0.0
    %1708 = vmatprep.subr.mxu0 0.0
    %1709 = vmatpush1.xpose.msra.mxu0 0.0
    %1710 = vmatprep.subr.mxu0 0.0
    %1711 = vmatpush1.xpose.msra.mxu0 0.0
    %1712 = vmatprep.subr.mxu0 0.0
    %1713 = vmatpush1.xpose.msra.mxu0 0.0
    %1714 = vmatprep.subr.mxu0 0.0
    %1715 = vmatpush1.xpose.msra.mxu0 0.0
    %1716 = vmatprep.subr.mxu0 0.0
    %1717 = vmatpush1.xpose.msra.mxu0 0.0
    %1718 = vmatprep.subr.mxu0 0.0
    %1719 = vmatpush1.xpose.msra.mxu0 %v497
    %1720 = vmatprep.subr.mxu0 0.0
    %1721 = vmatpush2.xpose.msra.mxu0 0.0
    %1722 = vmatprep.subr.mxu0 0.0
    %1723 = vmatpush2.xpose.msra.mxu0 0.0
    %1724 = vmatprep.subr.mxu0 0.0
    %1725 = vmatpush2.xpose.msra.mxu0 0.0
    %1726 = vmatprep.subr.mxu0 0.0
    %1727 = vmatpush2.xpose.msra.mxu0 0.0
    %1728 = vmatprep.subr.mxu0 0.0
    %1729 = vmatpush2.xpose.msra.mxu0 0.0
    %1730 = vmatprep.subr.mxu0 0.0
    %1731 = vmatpush2.xpose.msra.mxu0 0.0
    %1732 = vmatprep.subr.mxu0 0.0
    %1733 = vmatpush2.xpose.msra.mxu0 0.0
    %1734 = vmatprep.subr.mxu0 0.0
    %1735 = vmatpush2.xpose.msra.mxu0 0.0
    %1736 = vmatprep.subr.mxu0 0.0
    %1737 = vmatpush2.xpose.msra.mxu0 0.0
    %1738 = vmatprep.subr.mxu0 0.0
    %1739 = vmatpush2.xpose.msra.mxu0 0.0
    %1740 = vmatprep.subr.mxu0 0.0
    %1741 = vmatpush2.xpose.msra.mxu0 0.0
    %1742 = vmatprep.subr.mxu0 0.0
    %1743 = vmatpush2.xpose.msra.mxu0 0.0
    %1744 = vmatprep.subr.mxu0 0.0
    %1745 = vmatpush2.xpose.msra.mxu0 0.0
    %1746 = vmatprep.subr.mxu0 0.0
    %1747 = vmatpush2.xpose.msra.mxu0 0.0
    %1748 = vmatprep.subr.mxu0 0.0
    %1749 = vmatpush2.xpose.msra.mxu0 0.0
    %1750 = vmatprep.subr.mxu0 0.0
    %1751 = vmatpush2.xpose.msra.mxu0 0.0
    %1752 = vmatprep.mubr.f32.mxu0 0.0
    %1753 = vmatmul.mubr.f32.gmra.mxu0 %v1686
    %v1754 = vpop.f32.mrf.mxu0
    %v1755 = vadd.f32 0.0, %v1754
    %v1756 = vpop.f32.mrf.mxu0
    %1757 = vdwg.mxu0
    %v1759 = vsel %vm145, %v478, 0
    %1761 = vmatprep.subr.mxu0 0.0
    %1762 = vmatpush1.xpose.msra.mxu0 0.0
    %1763 = vmatprep.subr.mxu0 0.0
    %1764 = vmatpush1.xpose.msra.mxu0 0.0
    %1765 = vmatprep.subr.mxu0 0.0
    %1766 = vmatpush1.xpose.msra.mxu0 0.0
    %1767 = vmatprep.subr.mxu0 0.0
    %1768 = vmatpush1.xpose.msra.mxu0 0.0
    %1769 = vmatprep.subr.mxu0 0.0
    %1770 = vmatpush1.xpose.msra.mxu0 0.0
    %1771 = vmatprep.subr.mxu0 0.0
    %1772 = vmatpush1.xpose.msra.mxu0 0.0
    %1773 = vmatprep.subr.mxu0 0.0
    %1774 = vmatpush1.xpose.msra.mxu0 0.0
    %1775 = vmatprep.subr.mxu0 0.0
    %1776 = vmatpush1.xpose.msra.mxu0 0.0
    %1777 = vmatprep.subr.mxu0 0.0
    %1778 = vmatpush1.xpose.msra.mxu0 0.0
    %1779 = vmatprep.subr.mxu0 0.0
    %1780 = vmatpush1.xpose.msra.mxu0 0.0
    %1781 = vmatprep.subr.mxu0 0.0
    %1782 = vmatpush1.xpose.msra.mxu0 0.0
    %1783 = vmatprep.subr.mxu0 0.0
    %1784 = vmatpush1.xpose.msra.mxu0 0.0
    %1785 = vmatprep.subr.mxu0 0.0
    %1786 = vmatpush1.xpose.msra.mxu0 0.0
    %1787 = vmatprep.subr.mxu0 0.0
    %1788 = vmatpush1.xpose.msra.mxu0 0.0
    %1789 = vmatprep.subr.mxu0 0.0
    %1790 = vmatpush1.xpose.msra.mxu0 0.0
    %1791 = vmatprep.subr.mxu0 0.0
    %1792 = vmatpush1.xpose.msra.mxu0 %v573
    %1793 = vmatprep.subr.mxu0 0.0
    %1794 = vmatpush2.xpose.msra.mxu0 0.0
    %1795 = vmatprep.subr.mxu0 0.0
    %1796 = vmatpush2.xpose.msra.mxu0 0.0
    %1797 = vmatprep.subr.mxu0 0.0
    %1798 = vmatpush2.xpose.msra.mxu0 0.0
    %1799 = vmatprep.subr.mxu0 0.0
    %1800 = vmatpush2.xpose.msra.mxu0 0.0
    %1801 = vmatprep.subr.mxu0 0.0
    %1802 = vmatpush2.xpose.msra.mxu0 0.0
    %1803 = vmatprep.subr.mxu0 0.0
    %1804 = vmatpush2.xpose.msra.mxu0 0.0
    %1805 = vmatprep.subr.mxu0 0.0
    %1806 = vmatpush2.xpose.msra.mxu0 0.0
    %1807 = vmatprep.subr.mxu0 0.0
    %1808 = vmatpush2.xpose.msra.mxu0 0.0
    %1809 = vmatprep.subr.mxu0 0.0
    %1810 = vmatpush2.xpose.msra.mxu0 0.0
    %1811 = vmatprep.subr.mxu0 0.0
    %1812 = vmatpush2.xpose.msra.mxu0 0.0
    %1813 = vmatprep.subr.mxu0 0.0
    %1814 = vmatpush2.xpose.msra.mxu0 0.0
    %1815 = vmatprep.subr.mxu0 0.0
    %1816 = vmatpush2.xpose.msra.mxu0 0.0
    %1817 = vmatprep.subr.mxu0 0.0
    %1818 = vmatpush2.xpose.msra.mxu0 0.0
    %1819 = vmatprep.subr.mxu0 0.0
    %1820 = vmatpush2.xpose.msra.mxu0 0.0
    %1821 = vmatprep.subr.mxu0 0.0
    %1822 = vmatpush2.xpose.msra.mxu0 0.0
    %1823 = vmatprep.subr.mxu0 0.0
    %1824 = vmatpush2.xpose.msra.mxu0 0.0
    %1825 = vmatprep.mubr.f32.mxu0 0.0
    %1826 = vmatmul.mubr.f32.gmra.mxu0 %v1759
    %v1827 = vpop.f32.mrf.mxu0
    %v1828 = vadd.f32 0.0, %v1827
    %v1829 = vpop.f32.mrf.mxu0
    %1830 = vdwg.mxu0
    %v1832 = vsel %vm145, %v479, 0
    %1834 = vmatprep.subr.mxu0 0.0
    %1835 = vmatpush1.xpose.msra.mxu0 0.0
    %1836 = vmatprep.subr.mxu0 0.0
    %1837 = vmatpush1.xpose.msra.mxu0 0.0
    %1838 = vmatprep.subr.mxu0 0.0
    %1839 = vmatpush1.xpose.msra.mxu0 0.0
    %1840 = vmatprep.subr.mxu0 0.0
    %1841 = vmatpush1.xpose.msra.mxu0 0.0
    %1842 = vmatprep.subr.mxu0 0.0
    %1843 = vmatpush1.xpose.msra.mxu0 0.0
    %1844 = vmatprep.subr.mxu0 0.0
    %1845 = vmatpush1.xpose.msra.mxu0 0.0
    %1846 = vmatprep.subr.mxu0 0.0
    %1847 = vmatpush1.xpose.msra.mxu0 0.0
    %1848 = vmatprep.subr.mxu0 0.0
    %1849 = vmatpush1.xpose.msra.mxu0 0.0
    %1850 = vmatprep.subr.mxu0 0.0
    %1851 = vmatpush1.xpose.msra.mxu0 0.0
    %1852 = vmatprep.subr.mxu0 0.0
    %1853 = vmatpush1.xpose.msra.mxu0 0.0
    %1854 = vmatprep.subr.mxu0 0.0
    %1855 = vmatpush1.xpose.msra.mxu0 0.0
    %1856 = vmatprep.subr.mxu0 0.0
    %1857 = vmatpush1.xpose.msra.mxu0 0.0
    %1858 = vmatprep.subr.mxu0 0.0
    %1859 = vmatpush1.xpose.msra.mxu0 0.0
    %1860 = vmatprep.subr.mxu0 0.0
    %1861 = vmatpush1.xpose.msra.mxu0 0.0
    %1862 = vmatprep.subr.mxu0 0.0
    %1863 = vmatpush1.xpose.msra.mxu0 0.0
    %1864 = vmatprep.subr.mxu0 0.0
    %1865 = vmatpush1.xpose.msra.mxu0 %v649
    %1866 = vmatprep.subr.mxu0 0.0
    %1867 = vmatpush2.xpose.msra.mxu0 0.0
    %1868 = vmatprep.subr.mxu0 0.0
    %1869 = vmatpush2.xpose.msra.mxu0 0.0
    %1870 = vmatprep.subr.mxu0 0.0
    %1871 = vmatpush2.xpose.msra.mxu0 0.0
    %1872 = vmatprep.subr.mxu0 0.0
    %1873 = vmatpush2.xpose.msra.mxu0 0.0
    %1874 = vmatprep.subr.mxu0 0.0
    %1875 = vmatpush2.xpose.msra.mxu0 0.0
    %1876 = vmatprep.subr.mxu0 0.0
    %1877 = vmatpush2.xpose.msra.mxu0 0.0
    %1878 = vmatprep.subr.mxu0 0.0
    %1879 = vmatpush2.xpose.msra.mxu0 0.0
    %1880 = vmatprep.subr.mxu0 0.0
    %1881 = vmatpush2.xpose.msra.mxu0 0.0
    %1882 = vmatprep.subr.mxu0 0.0
    %1883 = vmatpush2.xpose.msra.mxu0 0.0
    %1884 = vmatprep.subr.mxu0 0.0
    %1885 = vmatpush2.xpose.msra.mxu0 0.0
    %1886 = vmatprep.subr.mxu0 0.0
    %1887 = vmatpush2.xpose.msra.mxu0 0.0
    %1888 = vmatprep.subr.mxu0 0.0
    %1889 = vmatpush2.xpose.msra.mxu0 0.0
    %1890 = vmatprep.subr.mxu0 0.0
    %1891 = vmatpush2.xpose.msra.mxu0 0.0
    %1892 = vmatprep.subr.mxu0 0.0
    %1893 = vmatpush2.xpose.msra.mxu0 0.0
    %1894 = vmatprep.subr.mxu0 0.0
    %1895 = vmatpush2.xpose.msra.mxu0 0.0
    %1896 = vmatprep.subr.mxu0 0.0
    %1897 = vmatpush2.xpose.msra.mxu0 0.0
    %1898 = vmatprep.mubr.f32.mxu0 0.0
    %1899 = vmatmul.mubr.f32.gmra.mxu0 %v1832
    %v1900 = vpop.f32.mrf.mxu0
    %v1901 = vadd.f32 0.0, %v1900
    %v1902 = vpop.f32.mrf.mxu0
    %1903 = vdwg.mxu0
    %v1905 = vsel %vm145, %v480, 0
    %1907 = vmatprep.subr.mxu0 0.0
    %1908 = vmatpush1.xpose.msra.mxu0 0.0
    %1909 = vmatprep.subr.mxu0 0.0
    %1910 = vmatpush1.xpose.msra.mxu0 0.0
    %1911 = vmatprep.subr.mxu0 0.0
    %1912 = vmatpush1.xpose.msra.mxu0 0.0
    %1913 = vmatprep.subr.mxu0 0.0
    %1914 = vmatpush1.xpose.msra.mxu0 0.0
    %1915 = vmatprep.subr.mxu0 0.0
    %1916 = vmatpush1.xpose.msra.mxu0 0.0
    %1917 = vmatprep.subr.mxu0 0.0
    %1918 = vmatpush1.xpose.msra.mxu0 0.0
    %1919 = vmatprep.subr.mxu0 0.0
    %1920 = vmatpush1.xpose.msra.mxu0 0.0
    %1921 = vmatprep.subr.mxu0 0.0
    %1922 = vmatpush1.xpose.msra.mxu0 0.0
    %1923 = vmatprep.subr.mxu0 0.0
    %1924 = vmatpush1.xpose.msra.mxu0 0.0
    %1925 = vmatprep.subr.mxu0 0.0
    %1926 = vmatpush1.xpose.msra.mxu0 0.0
    %1927 = vmatprep.subr.mxu0 0.0
    %1928 = vmatpush1.xpose.msra.mxu0 0.0
    %1929 = vmatprep.subr.mxu0 0.0
    %1930 = vmatpush1.xpose.msra.mxu0 0.0
    %1931 = vmatprep.subr.mxu0 0.0
    %1932 = vmatpush1.xpose.msra.mxu0 0.0
    %1933 = vmatprep.subr.mxu0 0.0
    %1934 = vmatpush1.xpose.msra.mxu0 0.0
    %1935 = vmatprep.subr.mxu0 0.0
    %1936 = vmatpush1.xpose.msra.mxu0 0.0
    %1937 = vmatprep.subr.mxu0 0.0
    %1938 = vmatpush1.xpose.msra.mxu0 %v725
    %1939 = vmatprep.subr.mxu0 0.0
    %1940 = vmatpush2.xpose.msra.mxu0 0.0
    %1941 = vmatprep.subr.mxu0 0.0
    %1942 = vmatpush2.xpose.msra.mxu0 0.0
    %1943 = vmatprep.subr.mxu0 0.0
    %1944 = vmatpush2.xpose.msra.mxu0 0.0
    %1945 = vmatprep.subr.mxu0 0.0
    %1946 = vmatpush2.xpose.msra.mxu0 0.0
    %1947 = vmatprep.subr.mxu0 0.0
    %1948 = vmatpush2.xpose.msra.mxu0 0.0
    %1949 = vmatprep.subr.mxu0 0.0
    %1950 = vmatpush2.xpose.msra.mxu0 0.0
    %1951 = vmatprep.subr.mxu0 0.0
    %1952 = vmatpush2.xpose.msra.mxu0 0.0
    %1953 = vmatprep.subr.mxu0 0.0
    %1954 = vmatpush2.xpose.msra.mxu0 0.0
    %1955 = vmatprep.subr.mxu0 0.0
    %1956 = vmatpush2.xpose.msra.mxu0 0.0
    %1957 = vmatprep.subr.mxu0 0.0
    %1958 = vmatpush2.xpose.msra.mxu0 0.0
    %1959 = vmatprep.subr.mxu0 0.0
    %1960 = vmatpush2.xpose.msra.mxu0 0.0
    %1961 = vmatprep.subr.mxu0 0.0
    %1962 = vmatpush2.xpose.msra.mxu0 0.0
    %1963 = vmatprep.subr.mxu0 0.0
    %1964 = vmatpush2.xpose.msra.mxu0 0.0
    %1965 = vmatprep.subr.mxu0 0.0
    %1966 = vmatpush2.xpose.msra.mxu0 0.0
    %1967 = vmatprep.subr.mxu0 0.0
    %1968 = vmatpush2.xpose.msra.mxu0 0.0
    %1969 = vmatprep.subr.mxu0 0.0
    %1970 = vmatpush2.xpose.msra.mxu0 0.0
    %1971 = vmatprep.mubr.f32.mxu0 0.0
    %1972 = vmatmul.mubr.f32.gmra.mxu0 %v1905
    %v1973 = vpop.f32.mrf.mxu0
    %v1974 = vadd.f32 0.0, %v1973
    %v1975 = vpop.f32.mrf.mxu0
    %1976 = vdwg.mxu0
    %v1978 = vsel %vm145, %v481, 0
    %1980 = vmatprep.subr.mxu0 0.0
    %1981 = vmatpush1.xpose.msra.mxu0 0.0
    %1982 = vmatprep.subr.mxu0 0.0
    %1983 = vmatpush1.xpose.msra.mxu0 0.0
    %1984 = vmatprep.subr.mxu0 0.0
    %1985 = vmatpush1.xpose.msra.mxu0 0.0
    %1986 = vmatprep.subr.mxu0 0.0
    %1987 = vmatpush1.xpose.msra.mxu0 0.0
    %1988 = vmatprep.subr.mxu0 0.0
    %1989 = vmatpush1.xpose.msra.mxu0 0.0
    %1990 = vmatprep.subr.mxu0 0.0
    %1991 = vmatpush1.xpose.msra.mxu0 0.0
    %1992 = vmatprep.subr.mxu0 0.0
    %1993 = vmatpush1.xpose.msra.mxu0 0.0
    %1994 = vmatprep.subr.mxu0 0.0
    %1995 = vmatpush1.xpose.msra.mxu0 0.0
    %1996 = vmatprep.subr.mxu0 0.0
    %1997 = vmatpush1.xpose.msra.mxu0 0.0
    %1998 = vmatprep.subr.mxu0 0.0
    %1999 = vmatpush1.xpose.msra.mxu0 0.0
    %2000 = vmatprep.subr.mxu0 0.0
    %2001 = vmatpush1.xpose.msra.mxu0 0.0
    %2002 = vmatprep.subr.mxu0 0.0
    %2003 = vmatpush1.xpose.msra.mxu0 0.0
    %2004 = vmatprep.subr.mxu0 0.0
    %2005 = vmatpush1.xpose.msra.mxu0 0.0
    %2006 = vmatprep.subr.mxu0 0.0
    %2007 = vmatpush1.xpose.msra.mxu0 0.0
    %2008 = vmatprep.subr.mxu0 0.0
    %2009 = vmatpush1.xpose.msra.mxu0 0.0
    %2010 = vmatprep.subr.mxu0 0.0
    %2011 = vmatpush1.xpose.msra.mxu0 %v801
    %2012 = vmatprep.subr.mxu0 0.0
    %2013 = vmatpush2.xpose.msra.mxu0 0.0
    %2014 = vmatprep.subr.mxu0 0.0
    %2015 = vmatpush2.xpose.msra.mxu0 0.0
    %2016 = vmatprep.subr.mxu0 0.0
    %2017 = vmatpush2.xpose.msra.mxu0 0.0
    %2018 = vmatprep.subr.mxu0 0.0
    %2019 = vmatpush2.xpose.msra.mxu0 0.0
    %2020 = vmatprep.subr.mxu0 0.0
    %2021 = vmatpush2.xpose.msra.mxu0 0.0
    %2022 = vmatprep.subr.mxu0 0.0
    %2023 = vmatpush2.xpose.msra.mxu0 0.0
    %2024 = vmatprep.subr.mxu0 0.0
    %2025 = vmatpush2.xpose.msra.mxu0 0.0
    %2026 = vmatprep.subr.mxu0 0.0
    %2027 = vmatpush2.xpose.msra.mxu0 0.0
    %2028 = vmatprep.subr.mxu0 0.0
    %2029 = vmatpush2.xpose.msra.mxu0 0.0
    %2030 = vmatprep.subr.mxu0 0.0
    %2031 = vmatpush2.xpose.msra.mxu0 0.0
    %2032 = vmatprep.subr.mxu0 0.0
    %2033 = vmatpush2.xpose.msra.mxu0 0.0
    %2034 = vmatprep.subr.mxu0 0.0
    %2035 = vmatpush2.xpose.msra.mxu0 0.0
    %2036 = vmatprep.subr.mxu0 0.0
    %2037 = vmatpush2.xpose.msra.mxu0 0.0
    %2038 = vmatprep.subr.mxu0 0.0
    %2039 = vmatpush2.xpose.msra.mxu0 0.0
    %2040 = vmatprep.subr.mxu0 0.0
    %2041 = vmatpush2.xpose.msra.mxu0 0.0
    %2042 = vmatprep.subr.mxu0 0.0
    %2043 = vmatpush2.xpose.msra.mxu0 0.0
    %2044 = vmatprep.mubr.f32.mxu0 0.0
    %2045 = vmatmul.mubr.f32.gmra.mxu0 %v1978
    %v2046 = vpop.f32.mrf.mxu0
    %v2047 = vadd.f32 0.0, %v2046
    %v2048 = vpop.f32.mrf.mxu0
    %2049 = vdwg.mxu0
    %v2051 = vsel %vm145, %v482, 0
    %2053 = vmatprep.subr.mxu0 0.0
    %2054 = vmatpush1.xpose.msra.mxu0 0.0
    %2055 = vmatprep.subr.mxu0 0.0
    %2056 = vmatpush1.xpose.msra.mxu0 0.0
    %2057 = vmatprep.subr.mxu0 0.0
    %2058 = vmatpush1.xpose.msra.mxu0 0.0
    %2059 = vmatprep.subr.mxu0 0.0
    %2060 = vmatpush1.xpose.msra.mxu0 0.0
    %2061 = vmatprep.subr.mxu0 0.0
    %2062 = vmatpush1.xpose.msra.mxu0 0.0
    %2063 = vmatprep.subr.mxu0 0.0
    %2064 = vmatpush1.xpose.msra.mxu0 0.0
    %2065 = vmatprep.subr.mxu0 0.0
    %2066 = vmatpush1.xpose.msra.mxu0 0.0
    %2067 = vmatprep.subr.mxu0 0.0
    %2068 = vmatpush1.xpose.msra.mxu0 0.0
    %2069 = vmatprep.subr.mxu0 0.0
    %2070 = vmatpush1.xpose.msra.mxu0 0.0
    %2071 = vmatprep.subr.mxu0 0.0
    %2072 = vmatpush1.xpose.msra.mxu0 0.0
    %2073 = vmatprep.subr.mxu0 0.0
    %2074 = vmatpush1.xpose.msra.mxu0 0.0
    %2075 = vmatprep.subr.mxu0 0.0
    %2076 = vmatpush1.xpose.msra.mxu0 0.0
    %2077 = vmatprep.subr.mxu0 0.0
    %2078 = vmatpush1.xpose.msra.mxu0 0.0
    %2079 = vmatprep.subr.mxu0 0.0
    %2080 = vmatpush1.xpose.msra.mxu0 0.0
    %2081 = vmatprep.subr.mxu0 0.0
    %2082 = vmatpush1.xpose.msra.mxu0 0.0
    %2083 = vmatprep.subr.mxu0 0.0
    %2084 = vmatpush1.xpose.msra.mxu0 %v877
    %2085 = vmatprep.subr.mxu0 0.0
    %2086 = vmatpush2.xpose.msra.mxu0 0.0
    %2087 = vmatprep.subr.mxu0 0.0
    %2088 = vmatpush2.xpose.msra.mxu0 0.0
    %2089 = vmatprep.subr.mxu0 0.0
    %2090 = vmatpush2.xpose.msra.mxu0 0.0
    %2091 = vmatprep.subr.mxu0 0.0
    %2092 = vmatpush2.xpose.msra.mxu0 0.0
    %2093 = vmatprep.subr.mxu0 0.0
    %2094 = vmatpush2.xpose.msra.mxu0 0.0
    %2095 = vmatprep.subr.mxu0 0.0
    %2096 = vmatpush2.xpose.msra.mxu0 0.0
    %2097 = vmatprep.subr.mxu0 0.0
    %2098 = vmatpush2.xpose.msra.mxu0 0.0
    %2099 = vmatprep.subr.mxu0 0.0
    %2100 = vmatpush2.xpose.msra.mxu0 0.0
    %2101 = vmatprep.subr.mxu0 0.0
    %2102 = vmatpush2.xpose.msra.mxu0 0.0
    %2103 = vmatprep.subr.mxu0 0.0
    %2104 = vmatpush2.xpose.msra.mxu0 0.0
    %2105 = vmatprep.subr.mxu0 0.0
    %2106 = vmatpush2.xpose.msra.mxu0 0.0
    %2107 = vmatprep.subr.mxu0 0.0
    %2108 = vmatpush2.xpose.msra.mxu0 0.0
    %2109 = vmatprep.subr.mxu0 0.0
    %2110 = vmatpush2.xpose.msra.mxu0 0.0
    %2111 = vmatprep.subr.mxu0 0.0
    %2112 = vmatpush2.xpose.msra.mxu0 0.0
    %2113 = vmatprep.subr.mxu0 0.0
    %2114 = vmatpush2.xpose.msra.mxu0 0.0
    %2115 = vmatprep.subr.mxu0 0.0
    %2116 = vmatpush2.xpose.msra.mxu0 0.0
    %2117 = vmatprep.mubr.f32.mxu0 0.0
    %2118 = vmatmul.mubr.f32.gmra.mxu0 %v2051
    %v2119 = vpop.f32.mrf.mxu0
    %v2120 = vadd.f32 0.0, %v2119
    %v2121 = vpop.f32.mrf.mxu0
    %2122 = vdwg.mxu0
    %v2124 = vsel %vm145, %v483, 0
    %2126 = vmatprep.subr.mxu0 0.0
    %2127 = vmatpush1.xpose.msra.mxu0 0.0
    %2128 = vmatprep.subr.mxu0 0.0
    %2129 = vmatpush1.xpose.msra.mxu0 0.0
    %2130 = vmatprep.subr.mxu0 0.0
    %2131 = vmatpush1.xpose.msra.mxu0 0.0
    %2132 = vmatprep.subr.mxu0 0.0
    %2133 = vmatpush1.xpose.msra.mxu0 0.0
    %2134 = vmatprep.subr.mxu0 0.0
    %2135 = vmatpush1.xpose.msra.mxu0 0.0
    %2136 = vmatprep.subr.mxu0 0.0
    %2137 = vmatpush1.xpose.msra.mxu0 0.0
    %2138 = vmatprep.subr.mxu0 0.0
    %2139 = vmatpush1.xpose.msra.mxu0 0.0
    %2140 = vmatprep.subr.mxu0 0.0
    %2141 = vmatpush1.xpose.msra.mxu0 0.0
    %2142 = vmatprep.subr.mxu0 0.0
    %2143 = vmatpush1.xpose.msra.mxu0 0.0
    %2144 = vmatprep.subr.mxu0 0.0
    %2145 = vmatpush1.xpose.msra.mxu0 0.0
    %2146 = vmatprep.subr.mxu0 0.0
    %2147 = vmatpush1.xpose.msra.mxu0 0.0
    %2148 = vmatprep.subr.mxu0 0.0
    %2149 = vmatpush1.xpose.msra.mxu0 0.0
    %2150 = vmatprep.subr.mxu0 0.0
    %2151 = vmatpush1.xpose.msra.mxu0 0.0
    %2152 = vmatprep.subr.mxu0 0.0
    %2153 = vmatpush1.xpose.msra.mxu0 0.0
    %2154 = vmatprep.subr.mxu0 0.0
    %2155 = vmatpush1.xpose.msra.mxu0 0.0
    %2156 = vmatprep.subr.mxu0 0.0
    %2157 = vmatpush1.xpose.msra.mxu0 %v953
    %2158 = vmatprep.subr.mxu0 0.0
    %2159 = vmatpush2.xpose.msra.mxu0 0.0
    %2160 = vmatprep.subr.mxu0 0.0
    %2161 = vmatpush2.xpose.msra.mxu0 0.0
    %2162 = vmatprep.subr.mxu0 0.0
    %2163 = vmatpush2.xpose.msra.mxu0 0.0
    %2164 = vmatprep.subr.mxu0 0.0
    %2165 = vmatpush2.xpose.msra.mxu0 0.0
    %2166 = vmatprep.subr.mxu0 0.0
    %2167 = vmatpush2.xpose.msra.mxu0 0.0
    %2168 = vmatprep.subr.mxu0 0.0
    %2169 = vmatpush2.xpose.msra.mxu0 0.0
    %2170 = vmatprep.subr.mxu0 0.0
    %2171 = vmatpush2.xpose.msra.mxu0 0.0
    %2172 = vmatprep.subr.mxu0 0.0
    %2173 = vmatpush2.xpose.msra.mxu0 0.0
    %2174 = vmatprep.subr.mxu0 0.0
    %2175 = vmatpush2.xpose.msra.mxu0 0.0
    %2176 = vmatprep.subr.mxu0 0.0
    %2177 = vmatpush2.xpose.msra.mxu0 0.0
    %2178 = vmatprep.subr.mxu0 0.0
    %2179 = vmatpush2.xpose.msra.mxu0 0.0
    %2180 = vmatprep.subr.mxu0 0.0
    %2181 = vmatpush2.xpose.msra.mxu0 0.0
    %2182 = vmatprep.subr.mxu0 0.0
    %2183 = vmatpush2.xpose.msra.mxu0 0.0
    %2184 = vmatprep.subr.mxu0 0.0
    %2185 = vmatpush2.xpose.msra.mxu0 0.0
    %2186 = vmatprep.subr.mxu0 0.0
    %2187 = vmatpush2.xpose.msra.mxu0 0.0
    %2188 = vmatprep.subr.mxu0 0.0
    %2189 = vmatpush2.xpose.msra.mxu0 0.0
    %2190 = vmatprep.mubr.f32.mxu0 0.0
    %2191 = vmatmul.mubr.f32.gmra.mxu0 %v2124
    %v2192 = vpop.f32.mrf.mxu0
    %v2193 = vadd.f32 0.0, %v2192
    %v2194 = vpop.f32.mrf.mxu0
    %2195 = vdwg.mxu0
    %v2197 = vsel %vm145, %v484, 0
    %2199 = vmatprep.subr.mxu0 0.0
    %2200 = vmatpush1.xpose.msra.mxu0 0.0
    %2201 = vmatprep.subr.mxu0 0.0
    %2202 = vmatpush1.xpose.msra.mxu0 0.0
    %2203 = vmatprep.subr.mxu0 0.0
    %2204 = vmatpush1.xpose.msra.mxu0 0.0
    %2205 = vmatprep.subr.mxu0 0.0
    %2206 = vmatpush1.xpose.msra.mxu0 0.0
    %2207 = vmatprep.subr.mxu0 0.0
    %2208 = vmatpush1.xpose.msra.mxu0 0.0
    %2209 = vmatprep.subr.mxu0 0.0
    %2210 = vmatpush1.xpose.msra.mxu0 0.0
    %2211 = vmatprep.subr.mxu0 0.0
    %2212 = vmatpush1.xpose.msra.mxu0 0.0
    %2213 = vmatprep.subr.mxu0 0.0
    %2214 = vmatpush1.xpose.msra.mxu0 0.0
    %2215 = vmatprep.subr.mxu0 0.0
    %2216 = vmatpush1.xpose.msra.mxu0 0.0
    %2217 = vmatprep.subr.mxu0 0.0
    %2218 = vmatpush1.xpose.msra.mxu0 0.0
    %2219 = vmatprep.subr.mxu0 0.0
    %2220 = vmatpush1.xpose.msra.mxu0 0.0
    %2221 = vmatprep.subr.mxu0 0.0
    %2222 = vmatpush1.xpose.msra.mxu0 0.0
    %2223 = vmatprep.subr.mxu0 0.0
    %2224 = vmatpush1.xpose.msra.mxu0 0.0
    %2225 = vmatprep.subr.mxu0 0.0
    %2226 = vmatpush1.xpose.msra.mxu0 0.0
    %2227 = vmatprep.subr.mxu0 0.0
    %2228 = vmatpush1.xpose.msra.mxu0 0.0
    %2229 = vmatprep.subr.mxu0 0.0
    %2230 = vmatpush1.xpose.msra.mxu0 %v1029
    %2231 = vmatprep.subr.mxu0 0.0
    %2232 = vmatpush2.xpose.msra.mxu0 0.0
    %2233 = vmatprep.subr.mxu0 0.0
    %2234 = vmatpush2.xpose.msra.mxu0 0.0
    %2235 = vmatprep.subr.mxu0 0.0
    %2236 = vmatpush2.xpose.msra.mxu0 0.0
    %2237 = vmatprep.subr.mxu0 0.0
    %2238 = vmatpush2.xpose.msra.mxu0 0.0
    %2239 = vmatprep.subr.mxu0 0.0
    %2240 = vmatpush2.xpose.msra.mxu0 0.0
    %2241 = vmatprep.subr.mxu0 0.0
    %2242 = vmatpush2.xpose.msra.mxu0 0.0
    %2243 = vmatprep.subr.mxu0 0.0
    %2244 = vmatpush2.xpose.msra.mxu0 0.0
    %2245 = vmatprep.subr.mxu0 0.0
    %2246 = vmatpush2.xpose.msra.mxu0 0.0
    %2247 = vmatprep.subr.mxu0 0.0
    %2248 = vmatpush2.xpose.msra.mxu0 0.0
    %2249 = vmatprep.subr.mxu0 0.0
    %2250 = vmatpush2.xpose.msra.mxu0 0.0
    %2251 = vmatprep.subr.mxu0 0.0
    %2252 = vmatpush2.xpose.msra.mxu0 0.0
    %2253 = vmatprep.subr.mxu0 0.0
    %2254 = vmatpush2.xpose.msra.mxu0 0.0
    %2255 = vmatprep.subr.mxu0 0.0
    %2256 = vmatpush2.xpose.msra.mxu0 0.0
    %2257 = vmatprep.subr.mxu0 0.0
    %2258 = vmatpush2.xpose.msra.mxu0 0.0
    %2259 = vmatprep.subr.mxu0 0.0
    %2260 = vmatpush2.xpose.msra.mxu0 0.0
    %2261 = vmatprep.subr.mxu0 0.0
    %2262 = vmatpush2.xpose.msra.mxu0 0.0
    %2263 = vmatprep.mubr.f32.mxu0 0.0
    %2264 = vmatmul.mubr.f32.gmra.mxu0 %v2197
    %v2265 = vpop.f32.mrf.mxu0
    %v2266 = vadd.f32 0.0, %v2265
    %v2267 = vpop.f32.mrf.mxu0
    %2268 = vdwg.mxu0
    %v2270 = vsel %vm145, %v485, 0
    %2272 = vmatprep.subr.mxu0 0.0
    %2273 = vmatpush1.xpose.msra.mxu0 0.0
    %2274 = vmatprep.subr.mxu0 0.0
    %2275 = vmatpush1.xpose.msra.mxu0 0.0
    %2276 = vmatprep.subr.mxu0 0.0
    %2277 = vmatpush1.xpose.msra.mxu0 0.0
    %2278 = vmatprep.subr.mxu0 0.0
    %2279 = vmatpush1.xpose.msra.mxu0 0.0
    %2280 = vmatprep.subr.mxu0 0.0
    %2281 = vmatpush1.xpose.msra.mxu0 0.0
    %2282 = vmatprep.subr.mxu0 0.0
    %2283 = vmatpush1.xpose.msra.mxu0 0.0
    %2284 = vmatprep.subr.mxu0 0.0
    %2285 = vmatpush1.xpose.msra.mxu0 0.0
    %2286 = vmatprep.subr.mxu0 0.0
    %2287 = vmatpush1.xpose.msra.mxu0 0.0
    %2288 = vmatprep.subr.mxu0 0.0
    %2289 = vmatpush1.xpose.msra.mxu0 0.0
    %2290 = vmatprep.subr.mxu0 0.0
    %2291 = vmatpush1.xpose.msra.mxu0 0.0
    %2292 = vmatprep.subr.mxu0 0.0
    %2293 = vmatpush1.xpose.msra.mxu0 0.0
    %2294 = vmatprep.subr.mxu0 0.0
    %2295 = vmatpush1.xpose.msra.mxu0 0.0
    %2296 = vmatprep.subr.mxu0 0.0
    %2297 = vmatpush1.xpose.msra.mxu0 0.0
    %2298 = vmatprep.subr.mxu0 0.0
    %2299 = vmatpush1.xpose.msra.mxu0 0.0
    %2300 = vmatprep.subr.mxu0 0.0
    %2301 = vmatpush1.xpose.msra.mxu0 0.0
    %2302 = vmatprep.subr.mxu0 0.0
    %2303 = vmatpush1.xpose.msra.mxu0 %v497
    %2304 = vmatprep.subr.mxu0 0.0
    %2305 = vmatpush2.xpose.msra.mxu0 0.0
    %2306 = vmatprep.subr.mxu0 0.0
    %2307 = vmatpush2.xpose.msra.mxu0 0.0
    %2308 = vmatprep.subr.mxu0 0.0
    %2309 = vmatpush2.xpose.msra.mxu0 0.0
    %2310 = vmatprep.subr.mxu0 0.0
    %2311 = vmatpush2.xpose.msra.mxu0 0.0
    %2312 = vmatprep.subr.mxu0 0.0
    %2313 = vmatpush2.xpose.msra.mxu0 0.0
    %2314 = vmatprep.subr.mxu0 0.0
    %2315 = vmatpush2.xpose.msra.mxu0 0.0
    %2316 = vmatprep.subr.mxu0 0.0
    %2317 = vmatpush2.xpose.msra.mxu0 0.0
    %2318 = vmatprep.subr.mxu0 0.0
    %2319 = vmatpush2.xpose.msra.mxu0 0.0
    %2320 = vmatprep.subr.mxu0 0.0
    %2321 = vmatpush2.xpose.msra.mxu0 0.0
    %2322 = vmatprep.subr.mxu0 0.0
    %2323 = vmatpush2.xpose.msra.mxu0 0.0
    %2324 = vmatprep.subr.mxu0 0.0
    %2325 = vmatpush2.xpose.msra.mxu0 0.0
    %2326 = vmatprep.subr.mxu0 0.0
    %2327 = vmatpush2.xpose.msra.mxu0 0.0
    %2328 = vmatprep.subr.mxu0 0.0
    %2329 = vmatpush2.xpose.msra.mxu0 0.0
    %2330 = vmatprep.subr.mxu0 0.0
    %2331 = vmatpush2.xpose.msra.mxu0 0.0
    %2332 = vmatprep.subr.mxu0 0.0
    %2333 = vmatpush2.xpose.msra.mxu0 0.0
    %2334 = vmatprep.subr.mxu0 0.0
    %2335 = vmatpush2.xpose.msra.mxu0 0.0
    %2336 = vmatprep.mubr.f32.mxu0 0.0
    %2337 = vmatmul.mubr.f32.gmra.mxu0 %v2270
    %v2338 = vpop.f32.mrf.mxu0
    %v2339 = vadd.f32 0.0, %v2338
    %v2340 = vpop.f32.mrf.mxu0
    %2341 = vdwg.mxu0
    %v2343 = vsel %vm145, %v486, 0
    %2345 = vmatprep.subr.mxu0 0.0
    %2346 = vmatpush1.xpose.msra.mxu0 0.0
    %2347 = vmatprep.subr.mxu0 0.0
    %2348 = vmatpush1.xpose.msra.mxu0 0.0
    %2349 = vmatprep.subr.mxu0 0.0
    %2350 = vmatpush1.xpose.msra.mxu0 0.0
    %2351 = vmatprep.subr.mxu0 0.0
    %2352 = vmatpush1.xpose.msra.mxu0 0.0
    %2353 = vmatprep.subr.mxu0 0.0
    %2354 = vmatpush1.xpose.msra.mxu0 0.0
    %2355 = vmatprep.subr.mxu0 0.0
    %2356 = vmatpush1.xpose.msra.mxu0 0.0
    %2357 = vmatprep.subr.mxu0 0.0
    %2358 = vmatpush1.xpose.msra.mxu0 0.0
    %2359 = vmatprep.subr.mxu0 0.0
    %2360 = vmatpush1.xpose.msra.mxu0 0.0
    %2361 = vmatprep.subr.mxu0 0.0
    %2362 = vmatpush1.xpose.msra.mxu0 0.0
    %2363 = vmatprep.subr.mxu0 0.0
    %2364 = vmatpush1.xpose.msra.mxu0 0.0
    %2365 = vmatprep.subr.mxu0 0.0
    %2366 = vmatpush1.xpose.msra.mxu0 0.0
    %2367 = vmatprep.subr.mxu0 0.0
    %2368 = vmatpush1.xpose.msra.mxu0 0.0
    %2369 = vmatprep.subr.mxu0 0.0
    %2370 = vmatpush1.xpose.msra.mxu0 0.0
    %2371 = vmatprep.subr.mxu0 0.0
    %2372 = vmatpush1.xpose.msra.mxu0 0.0
    %2373 = vmatprep.subr.mxu0 0.0
    %2374 = vmatpush1.xpose.msra.mxu0 0.0
    %2375 = vmatprep.subr.mxu0 0.0
    %2376 = vmatpush1.xpose.msra.mxu0 %v573
    %2377 = vmatprep.subr.mxu0 0.0
    %2378 = vmatpush2.xpose.msra.mxu0 0.0
    %2379 = vmatprep.subr.mxu0 0.0
    %2380 = vmatpush2.xpose.msra.mxu0 0.0
    %2381 = vmatprep.subr.mxu0 0.0
    %2382 = vmatpush2.xpose.msra.mxu0 0.0
    %2383 = vmatprep.subr.mxu0 0.0
    %2384 = vmatpush2.xpose.msra.mxu0 0.0
    %2385 = vmatprep.subr.mxu0 0.0
    %2386 = vmatpush2.xpose.msra.mxu0 0.0
    %2387 = vmatprep.subr.mxu0 0.0
    %2388 = vmatpush2.xpose.msra.mxu0 0.0
    %2389 = vmatprep.subr.mxu0 0.0
    %2390 = vmatpush2.xpose.msra.mxu0 0.0
    %2391 = vmatprep.subr.mxu0 0.0
    %2392 = vmatpush2.xpose.msra.mxu0 0.0
    %2393 = vmatprep.subr.mxu0 0.0
    %2394 = vmatpush2.xpose.msra.mxu0 0.0
    %2395 = vmatprep.subr.mxu0 0.0
    %2396 = vmatpush2.xpose.msra.mxu0 0.0
    %2397 = vmatprep.subr.mxu0 0.0
    %2398 = vmatpush2.xpose.msra.mxu0 0.0
    %2399 = vmatprep.subr.mxu0 0.0
    %2400 = vmatpush2.xpose.msra.mxu0 0.0
    %2401 = vmatprep.subr.mxu0 0.0
    %2402 = vmatpush2.xpose.msra.mxu0 0.0
    %2403 = vmatprep.subr.mxu0 0.0
    %2404 = vmatpush2.xpose.msra.mxu0 0.0
    %2405 = vmatprep.subr.mxu0 0.0
    %2406 = vmatpush2.xpose.msra.mxu0 0.0
    %2407 = vmatprep.subr.mxu0 0.0
    %2408 = vmatpush2.xpose.msra.mxu0 0.0
    %2409 = vmatprep.mubr.f32.mxu0 0.0
    %2410 = vmatmul.mubr.f32.gmra.mxu0 %v2343
    %v2411 = vpop.f32.mrf.mxu0
    %v2412 = vadd.f32 0.0, %v2411
    %v2413 = vpop.f32.mrf.mxu0
    %2414 = vdwg.mxu0
    %v2416 = vsel %vm145, %v487, 0
    %2418 = vmatprep.subr.mxu0 0.0
    %2419 = vmatpush1.xpose.msra.mxu0 0.0
    %2420 = vmatprep.subr.mxu0 0.0
    %2421 = vmatpush1.xpose.msra.mxu0 0.0
    %2422 = vmatprep.subr.mxu0 0.0
    %2423 = vmatpush1.xpose.msra.mxu0 0.0
    %2424 = vmatprep.subr.mxu0 0.0
    %2425 = vmatpush1.xpose.msra.mxu0 0.0
    %2426 = vmatprep.subr.mxu0 0.0
    %2427 = vmatpush1.xpose.msra.mxu0 0.0
    %2428 = vmatprep.subr.mxu0 0.0
    %2429 = vmatpush1.xpose.msra.mxu0 0.0
    %2430 = vmatprep.subr.mxu0 0.0
    %2431 = vmatpush1.xpose.msra.mxu0 0.0
    %2432 = vmatprep.subr.mxu0 0.0
    %2433 = vmatpush1.xpose.msra.mxu0 0.0
    %2434 = vmatprep.subr.mxu0 0.0
    %2435 = vmatpush1.xpose.msra.mxu0 0.0
    %2436 = vmatprep.subr.mxu0 0.0
    %2437 = vmatpush1.xpose.msra.mxu0 0.0
    %2438 = vmatprep.subr.mxu0 0.0
    %2439 = vmatpush1.xpose.msra.mxu0 0.0
    %2440 = vmatprep.subr.mxu0 0.0
    %2441 = vmatpush1.xpose.msra.mxu0 0.0
    %2442 = vmatprep.subr.mxu0 0.0
    %2443 = vmatpush1.xpose.msra.mxu0 0.0
    %2444 = vmatprep.subr.mxu0 0.0
    %2445 = vmatpush1.xpose.msra.mxu0 0.0
    %2446 = vmatprep.subr.mxu0 0.0
    %2447 = vmatpush1.xpose.msra.mxu0 0.0
    %2448 = vmatprep.subr.mxu0 0.0
    %2449 = vmatpush1.xpose.msra.mxu0 %v649
    %2450 = vmatprep.subr.mxu0 0.0
    %2451 = vmatpush2.xpose.msra.mxu0 0.0
    %2452 = vmatprep.subr.mxu0 0.0
    %2453 = vmatpush2.xpose.msra.mxu0 0.0
    %2454 = vmatprep.subr.mxu0 0.0
    %2455 = vmatpush2.xpose.msra.mxu0 0.0
    %2456 = vmatprep.subr.mxu0 0.0
    %2457 = vmatpush2.xpose.msra.mxu0 0.0
    %2458 = vmatprep.subr.mxu0 0.0
    %2459 = vmatpush2.xpose.msra.mxu0 0.0
    %2460 = vmatprep.subr.mxu0 0.0
    %2461 = vmatpush2.xpose.msra.mxu0 0.0
    %2462 = vmatprep.subr.mxu0 0.0
    %2463 = vmatpush2.xpose.msra.mxu0 0.0
    %2464 = vmatprep.subr.mxu0 0.0
    %2465 = vmatpush2.xpose.msra.mxu0 0.0
    %2466 = vmatprep.subr.mxu0 0.0
    %2467 = vmatpush2.xpose.msra.mxu0 0.0
    %2468 = vmatprep.subr.mxu0 0.0
    %2469 = vmatpush2.xpose.msra.mxu0 0.0
    %2470 = vmatprep.subr.mxu0 0.0
    %2471 = vmatpush2.xpose.msra.mxu0 0.0
    %2472 = vmatprep.subr.mxu0 0.0
    %2473 = vmatpush2.xpose.msra.mxu0 0.0
    %2474 = vmatprep.subr.mxu0 0.0
    %2475 = vmatpush2.xpose.msra.mxu0 0.0
    %2476 = vmatprep.subr.mxu0 0.0
    %2477 = vmatpush2.xpose.msra.mxu0 0.0
    %2478 = vmatprep.subr.mxu0 0.0
    %2479 = vmatpush2.xpose.msra.mxu0 0.0
    %2480 = vmatprep.subr.mxu0 0.0
    %2481 = vmatpush2.xpose.msra.mxu0 0.0
    %2482 = vmatprep.mubr.f32.mxu0 0.0
    %2483 = vmatmul.mubr.f32.gmra.mxu0 %v2416
    %v2484 = vpop.f32.mrf.mxu0
    %v2485 = vadd.f32 0.0, %v2484
    %v2486 = vpop.f32.mrf.mxu0
    %2487 = vdwg.mxu0
    %v2489 = vsel %vm145, %v488, 0
    %2491 = vmatprep.subr.mxu0 0.0
    %2492 = vmatpush1.xpose.msra.mxu0 0.0
    %2493 = vmatprep.subr.mxu0 0.0
    %2494 = vmatpush1.xpose.msra.mxu0 0.0
    %2495 = vmatprep.subr.mxu0 0.0
    %2496 = vmatpush1.xpose.msra.mxu0 0.0
    %2497 = vmatprep.subr.mxu0 0.0
    %2498 = vmatpush1.xpose.msra.mxu0 0.0
    %2499 = vmatprep.subr.mxu0 0.0
    %2500 = vmatpush1.xpose.msra.mxu0 0.0
    %2501 = vmatprep.subr.mxu0 0.0
    %2502 = vmatpush1.xpose.msra.mxu0 0.0
    %2503 = vmatprep.subr.mxu0 0.0
    %2504 = vmatpush1.xpose.msra.mxu0 0.0
    %2505 = vmatprep.subr.mxu0 0.0
    %2506 = vmatpush1.xpose.msra.mxu0 0.0
    %2507 = vmatprep.subr.mxu0 0.0
    %2508 = vmatpush1.xpose.msra.mxu0 0.0
    %2509 = vmatprep.subr.mxu0 0.0
    %2510 = vmatpush1.xpose.msra.mxu0 0.0
    %2511 = vmatprep.subr.mxu0 0.0
    %2512 = vmatpush1.xpose.msra.mxu0 0.0
    %2513 = vmatprep.subr.mxu0 0.0
    %2514 = vmatpush1.xpose.msra.mxu0 0.0
    %2515 = vmatprep.subr.mxu0 0.0
    %2516 = vmatpush1.xpose.msra.mxu0 0.0
    %2517 = vmatprep.subr.mxu0 0.0
    %2518 = vmatpush1.xpose.msra.mxu0 0.0
    %2519 = vmatprep.subr.mxu0 0.0
    %2520 = vmatpush1.xpose.msra.mxu0 0.0
    %2521 = vmatprep.subr.mxu0 0.0
    %2522 = vmatpush1.xpose.msra.mxu0 %v725
    %2523 = vmatprep.subr.mxu0 0.0
    %2524 = vmatpush2.xpose.msra.mxu0 0.0
    %2525 = vmatprep.subr.mxu0 0.0
    %2526 = vmatpush2.xpose.msra.mxu0 0.0
    %2527 = vmatprep.subr.mxu0 0.0
    %2528 = vmatpush2.xpose.msra.mxu0 0.0
    %2529 = vmatprep.subr.mxu0 0.0
    %2530 = vmatpush2.xpose.msra.mxu0 0.0
    %2531 = vmatprep.subr.mxu0 0.0
    %2532 = vmatpush2.xpose.msra.mxu0 0.0
    %2533 = vmatprep.subr.mxu0 0.0
    %2534 = vmatpush2.xpose.msra.mxu0 0.0
    %2535 = vmatprep.subr.mxu0 0.0
    %2536 = vmatpush2.xpose.msra.mxu0 0.0
    %2537 = vmatprep.subr.mxu0 0.0
    %2538 = vmatpush2.xpose.msra.mxu0 0.0
    %2539 = vmatprep.subr.mxu0 0.0
    %2540 = vmatpush2.xpose.msra.mxu0 0.0
    %2541 = vmatprep.subr.mxu0 0.0
    %2542 = vmatpush2.xpose.msra.mxu0 0.0
    %2543 = vmatprep.subr.mxu0 0.0
    %2544 = vmatpush2.xpose.msra.mxu0 0.0
    %2545 = vmatprep.subr.mxu0 0.0
    %2546 = vmatpush2.xpose.msra.mxu0 0.0
    %2547 = vmatprep.subr.mxu0 0.0
    %2548 = vmatpush2.xpose.msra.mxu0 0.0
    %2549 = vmatprep.subr.mxu0 0.0
    %2550 = vmatpush2.xpose.msra.mxu0 0.0
    %2551 = vmatprep.subr.mxu0 0.0
    %2552 = vmatpush2.xpose.msra.mxu0 0.0
    %2553 = vmatprep.subr.mxu0 0.0
    %2554 = vmatpush2.xpose.msra.mxu0 0.0
    %2555 = vmatprep.mubr.f32.mxu0 0.0
    %2556 = vmatmul.mubr.f32.gmra.mxu0 %v2489
    %v2557 = vpop.f32.mrf.mxu0
    %v2558 = vadd.f32 0.0, %v2557
    %v2559 = vpop.f32.mrf.mxu0
    %2560 = vdwg.mxu0
    %v2562 = vsel %vm145, %v489, 0
    %2564 = vmatprep.subr.mxu0 0.0
    %2565 = vmatpush1.xpose.msra.mxu0 0.0
    %2566 = vmatprep.subr.mxu0 0.0
    %2567 = vmatpush1.xpose.msra.mxu0 0.0
    %2568 = vmatprep.subr.mxu0 0.0
    %2569 = vmatpush1.xpose.msra.mxu0 0.0
    %2570 = vmatprep.subr.mxu0 0.0
    %2571 = vmatpush1.xpose.msra.mxu0 0.0
    %2572 = vmatprep.subr.mxu0 0.0
    %2573 = vmatpush1.xpose.msra.mxu0 0.0
    %2574 = vmatprep.subr.mxu0 0.0
    %2575 = vmatpush1.xpose.msra.mxu0 0.0
    %2576 = vmatprep.subr.mxu0 0.0
    %2577 = vmatpush1.xpose.msra.mxu0 0.0
    %2578 = vmatprep.subr.mxu0 0.0
    %2579 = vmatpush1.xpose.msra.mxu0 0.0
    %2580 = vmatprep.subr.mxu0 0.0
    %2581 = vmatpush1.xpose.msra.mxu0 0.0
    %2582 = vmatprep.subr.mxu0 0.0
    %2583 = vmatpush1.xpose.msra.mxu0 0.0
    %2584 = vmatprep.subr.mxu0 0.0
    %2585 = vmatpush1.xpose.msra.mxu0 0.0
    %2586 = vmatprep.subr.mxu0 0.0
    %2587 = vmatpush1.xpose.msra.mxu0 0.0
    %2588 = vmatprep.subr.mxu0 0.0
    %2589 = vmatpush1.xpose.msra.mxu0 0.0
    %2590 = vmatprep.subr.mxu0 0.0
    %2591 = vmatpush1.xpose.msra.mxu0 0.0
    %2592 = vmatprep.subr.mxu0 0.0
    %2593 = vmatpush1.xpose.msra.mxu0 0.0
    %2594 = vmatprep.subr.mxu0 0.0
    %2595 = vmatpush1.xpose.msra.mxu0 %v801
    %2596 = vmatprep.subr.mxu0 0.0
    %2597 = vmatpush2.xpose.msra.mxu0 0.0
    %2598 = vmatprep.subr.mxu0 0.0
    %2599 = vmatpush2.xpose.msra.mxu0 0.0
    %2600 = vmatprep.subr.mxu0 0.0
    %2601 = vmatpush2.xpose.msra.mxu0 0.0
    %2602 = vmatprep.subr.mxu0 0.0
    %2603 = vmatpush2.xpose.msra.mxu0 0.0
    %2604 = vmatprep.subr.mxu0 0.0
    %2605 = vmatpush2.xpose.msra.mxu0 0.0
    %2606 = vmatprep.subr.mxu0 0.0
    %2607 = vmatpush2.xpose.msra.mxu0 0.0
    %2608 = vmatprep.subr.mxu0 0.0
    %2609 = vmatpush2.xpose.msra.mxu0 0.0
    %2610 = vmatprep.subr.mxu0 0.0
    %2611 = vmatpush2.xpose.msra.mxu0 0.0
    %2612 = vmatprep.subr.mxu0 0.0
    %2613 = vmatpush2.xpose.msra.mxu0 0.0
    %2614 = vmatprep.subr.mxu0 0.0
    %2615 = vmatpush2.xpose.msra.mxu0 0.0
    %2616 = vmatprep.subr.mxu0 0.0
    %2617 = vmatpush2.xpose.msra.mxu0 0.0
    %2618 = vmatprep.subr.mxu0 0.0
    %2619 = vmatpush2.xpose.msra.mxu0 0.0
    %2620 = vmatprep.subr.mxu0 0.0
    %2621 = vmatpush2.xpose.msra.mxu0 0.0
    %2622 = vmatprep.subr.mxu0 0.0
    %2623 = vmatpush2.xpose.msra.mxu0 0.0
    %2624 = vmatprep.subr.mxu0 0.0
    %2625 = vmatpush2.xpose.msra.mxu0 0.0
    %2626 = vmatprep.subr.mxu0 0.0
    %2627 = vmatpush2.xpose.msra.mxu0 0.0
    %2628 = vmatprep.mubr.f32.mxu0 0.0
    %2629 = vmatmul.mubr.f32.gmra.mxu0 %v2562
    %v2630 = vpop.f32.mrf.mxu0
    %v2631 = vadd.f32 0.0, %v2630
    %v2632 = vpop.f32.mrf.mxu0
    %2633 = vdwg.mxu0
    %v2635 = vsel %vm145, %v490, 0
    %2637 = vmatprep.subr.mxu0 0.0
    %2638 = vmatpush1.xpose.msra.mxu0 0.0
    %2639 = vmatprep.subr.mxu0 0.0
    %2640 = vmatpush1.xpose.msra.mxu0 0.0
    %2641 = vmatprep.subr.mxu0 0.0
    %2642 = vmatpush1.xpose.msra.mxu0 0.0
    %2643 = vmatprep.subr.mxu0 0.0
    %2644 = vmatpush1.xpose.msra.mxu0 0.0
    %2645 = vmatprep.subr.mxu0 0.0
    %2646 = vmatpush1.xpose.msra.mxu0 0.0
    %2647 = vmatprep.subr.mxu0 0.0
    %2648 = vmatpush1.xpose.msra.mxu0 0.0
    %2649 = vmatprep.subr.mxu0 0.0
    %2650 = vmatpush1.xpose.msra.mxu0 0.0
    %2651 = vmatprep.subr.mxu0 0.0
    %2652 = vmatpush1.xpose.msra.mxu0 0.0
    %2653 = vmatprep.subr.mxu0 0.0
    %2654 = vmatpush1.xpose.msra.mxu0 0.0
    %2655 = vmatprep.subr.mxu0 0.0
    %2656 = vmatpush1.xpose.msra.mxu0 0.0
    %2657 = vmatprep.subr.mxu0 0.0
    %2658 = vmatpush1.xpose.msra.mxu0 0.0
    %2659 = vmatprep.subr.mxu0 0.0
    %2660 = vmatpush1.xpose.msra.mxu0 0.0
    %2661 = vmatprep.subr.mxu0 0.0
    %2662 = vmatpush1.xpose.msra.mxu0 0.0
    %2663 = vmatprep.subr.mxu0 0.0
    %2664 = vmatpush1.xpose.msra.mxu0 0.0
    %2665 = vmatprep.subr.mxu0 0.0
    %2666 = vmatpush1.xpose.msra.mxu0 0.0
    %2667 = vmatprep.subr.mxu0 0.0
    %2668 = vmatpush1.xpose.msra.mxu0 %v877
    %2669 = vmatprep.subr.mxu0 0.0
    %2670 = vmatpush2.xpose.msra.mxu0 0.0
    %2671 = vmatprep.subr.mxu0 0.0
    %2672 = vmatpush2.xpose.msra.mxu0 0.0
    %2673 = vmatprep.subr.mxu0 0.0
    %2674 = vmatpush2.xpose.msra.mxu0 0.0
    %2675 = vmatprep.subr.mxu0 0.0
    %2676 = vmatpush2.xpose.msra.mxu0 0.0
    %2677 = vmatprep.subr.mxu0 0.0
    %2678 = vmatpush2.xpose.msra.mxu0 0.0
    %2679 = vmatprep.subr.mxu0 0.0
    %2680 = vmatpush2.xpose.msra.mxu0 0.0
    %2681 = vmatprep.subr.mxu0 0.0
    %2682 = vmatpush2.xpose.msra.mxu0 0.0
    %2683 = vmatprep.subr.mxu0 0.0
    %2684 = vmatpush2.xpose.msra.mxu0 0.0
    %2685 = vmatprep.subr.mxu0 0.0
    %2686 = vmatpush2.xpose.msra.mxu0 0.0
    %2687 = vmatprep.subr.mxu0 0.0
    %2688 = vmatpush2.xpose.msra.mxu0 0.0
    %2689 = vmatprep.subr.mxu0 0.0
    %2690 = vmatpush2.xpose.msra.mxu0 0.0
    %2691 = vmatprep.subr.mxu0 0.0
    %2692 = vmatpush2.xpose.msra.mxu0 0.0
    %2693 = vmatprep.subr.mxu0 0.0
    %2694 = vmatpush2.xpose.msra.mxu0 0.0
    %2695 = vmatprep.subr.mxu0 0.0
    %2696 = vmatpush2.xpose.msra.mxu0 0.0
    %2697 = vmatprep.subr.mxu0 0.0
    %2698 = vmatpush2.xpose.msra.mxu0 0.0
    %2699 = vmatprep.subr.mxu0 0.0
    %2700 = vmatpush2.xpose.msra.mxu0 0.0
    %2701 = vmatprep.mubr.f32.mxu0 0.0
    %2702 = vmatmul.mubr.f32.gmra.mxu0 %v2635
    %v2703 = vpop.f32.mrf.mxu0
    %v2704 = vadd.f32 0.0, %v2703
    %v2705 = vpop.f32.mrf.mxu0
    %2706 = vdwg.mxu0
    %v2708 = vsel %vm145, %v491, 0
    %2710 = vmatprep.subr.mxu0 0.0
    %2711 = vmatpush1.xpose.msra.mxu0 0.0
    %2712 = vmatprep.subr.mxu0 0.0
    %2713 = vmatpush1.xpose.msra.mxu0 0.0
    %2714 = vmatprep.subr.mxu0 0.0
    %2715 = vmatpush1.xpose.msra.mxu0 0.0
    %2716 = vmatprep.subr.mxu0 0.0
    %2717 = vmatpush1.xpose.msra.mxu0 0.0
    %2718 = vmatprep.subr.mxu0 0.0
    %2719 = vmatpush1.xpose.msra.mxu0 0.0
    %2720 = vmatprep.subr.mxu0 0.0
    %2721 = vmatpush1.xpose.msra.mxu0 0.0
    %2722 = vmatprep.subr.mxu0 0.0
    %2723 = vmatpush1.xpose.msra.mxu0 0.0
    %2724 = vmatprep.subr.mxu0 0.0
    %2725 = vmatpush1.xpose.msra.mxu0 0.0
    %2726 = vmatprep.subr.mxu0 0.0
    %2727 = vmatpush1.xpose.msra.mxu0 0.0
    %2728 = vmatprep.subr.mxu0 0.0
    %2729 = vmatpush1.xpose.msra.mxu0 0.0
    %2730 = vmatprep.subr.mxu0 0.0
    %2731 = vmatpush1.xpose.msra.mxu0 0.0
    %2732 = vmatprep.subr.mxu0 0.0
    %2733 = vmatpush1.xpose.msra.mxu0 0.0
    %2734 = vmatprep.subr.mxu0 0.0
    %2735 = vmatpush1.xpose.msra.mxu0 0.0
    %2736 = vmatprep.subr.mxu0 0.0
    %2737 = vmatpush1.xpose.msra.mxu0 0.0
    %2738 = vmatprep.subr.mxu0 0.0
    %2739 = vmatpush1.xpose.msra.mxu0 0.0
    %2740 = vmatprep.subr.mxu0 0.0
    %2741 = vmatpush1.xpose.msra.mxu0 %v953
    %2742 = vmatprep.subr.mxu0 0.0
    %2743 = vmatpush2.xpose.msra.mxu0 0.0
    %2744 = vmatprep.subr.mxu0 0.0
    %2745 = vmatpush2.xpose.msra.mxu0 0.0
    %2746 = vmatprep.subr.mxu0 0.0
    %2747 = vmatpush2.xpose.msra.mxu0 0.0
    %2748 = vmatprep.subr.mxu0 0.0
    %2749 = vmatpush2.xpose.msra.mxu0 0.0
    %2750 = vmatprep.subr.mxu0 0.0
    %2751 = vmatpush2.xpose.msra.mxu0 0.0
    %2752 = vmatprep.subr.mxu0 0.0
    %2753 = vmatpush2.xpose.msra.mxu0 0.0
    %2754 = vmatprep.subr.mxu0 0.0
    %2755 = vmatpush2.xpose.msra.mxu0 0.0
    %2756 = vmatprep.subr.mxu0 0.0
    %2757 = vmatpush2.xpose.msra.mxu0 0.0
    %2758 = vmatprep.subr.mxu0 0.0
    %2759 = vmatpush2.xpose.msra.mxu0 0.0
    %2760 = vmatprep.subr.mxu0 0.0
    %2761 = vmatpush2.xpose.msra.mxu0 0.0
    %2762 = vmatprep.subr.mxu0 0.0
    %2763 = vmatpush2.xpose.msra.mxu0 0.0
    %2764 = vmatprep.subr.mxu0 0.0
    %2765 = vmatpush2.xpose.msra.mxu0 0.0
    %2766 = vmatprep.subr.mxu0 0.0
    %2767 = vmatpush2.xpose.msra.mxu0 0.0
    %2768 = vmatprep.subr.mxu0 0.0
    %2769 = vmatpush2.xpose.msra.mxu0 0.0
    %2770 = vmatprep.subr.mxu0 0.0
    %2771 = vmatpush2.xpose.msra.mxu0 0.0
    %2772 = vmatprep.subr.mxu0 0.0
    %2773 = vmatpush2.xpose.msra.mxu0 0.0
    %2774 = vmatprep.mubr.f32.mxu0 0.0
    %2775 = vmatmul.mubr.f32.gmra.mxu0 %v2708
    %v2776 = vpop.f32.mrf.mxu0
    %v2777 = vadd.f32 0.0, %v2776
    %v2778 = vpop.f32.mrf.mxu0
    %2779 = vdwg.mxu0
    %v2781 = vsel %vm145, %v492, 0
    %2783 = vmatprep.subr.mxu0 0.0
    %2784 = vmatpush1.xpose.msra.mxu0 0.0
    %2785 = vmatprep.subr.mxu0 0.0
    %2786 = vmatpush1.xpose.msra.mxu0 0.0
    %2787 = vmatprep.subr.mxu0 0.0
    %2788 = vmatpush1.xpose.msra.mxu0 0.0
    %2789 = vmatprep.subr.mxu0 0.0
    %2790 = vmatpush1.xpose.msra.mxu0 0.0
    %2791 = vmatprep.subr.mxu0 0.0
    %2792 = vmatpush1.xpose.msra.mxu0 0.0
    %2793 = vmatprep.subr.mxu0 0.0
    %2794 = vmatpush1.xpose.msra.mxu0 0.0
    %2795 = vmatprep.subr.mxu0 0.0
    %2796 = vmatpush1.xpose.msra.mxu0 0.0
    %2797 = vmatprep.subr.mxu0 0.0
    %2798 = vmatpush1.xpose.msra.mxu0 0.0
    %2799 = vmatprep.subr.mxu0 0.0
    %2800 = vmatpush1.xpose.msra.mxu0 0.0
    %2801 = vmatprep.subr.mxu0 0.0
    %2802 = vmatpush1.xpose.msra.mxu0 0.0
    %2803 = vmatprep.subr.mxu0 0.0
    %2804 = vmatpush1.xpose.msra.mxu0 0.0
    %2805 = vmatprep.subr.mxu0 0.0
    %2806 = vmatpush1.xpose.msra.mxu0 0.0
    %2807 = vmatprep.subr.mxu0 0.0
    %2808 = vmatpush1.xpose.msra.mxu0 0.0
    %2809 = vmatprep.subr.mxu0 0.0
    %2810 = vmatpush1.xpose.msra.mxu0 0.0
    %2811 = vmatprep.subr.mxu0 0.0
    %2812 = vmatpush1.xpose.msra.mxu0 0.0
    %2813 = vmatprep.subr.mxu0 0.0
    %2814 = vmatpush1.xpose.msra.mxu0 %v1029
    %2815 = vmatprep.subr.mxu0 0.0
    %2816 = vmatpush2.xpose.msra.mxu0 0.0
    %2817 = vmatprep.subr.mxu0 0.0
    %2818 = vmatpush2.xpose.msra.mxu0 0.0
    %2819 = vmatprep.subr.mxu0 0.0
    %2820 = vmatpush2.xpose.msra.mxu0 0.0
    %2821 = vmatprep.subr.mxu0 0.0
    %2822 = vmatpush2.xpose.msra.mxu0 0.0
    %2823 = vmatprep.subr.mxu0 0.0
    %2824 = vmatpush2.xpose.msra.mxu0 0.0
    %2825 = vmatprep.subr.mxu0 0.0
    %2826 = vmatpush2.xpose.msra.mxu0 0.0
    %2827 = vmatprep.subr.mxu0 0.0
    %2828 = vmatpush2.xpose.msra.mxu0 0.0
    %2829 = vmatprep.subr.mxu0 0.0
    %2830 = vmatpush2.xpose.msra.mxu0 0.0
    %2831 = vmatprep.subr.mxu0 0.0
    %2832 = vmatpush2.xpose.msra.mxu0 0.0
    %2833 = vmatprep.subr.mxu0 0.0
    %2834 = vmatpush2.xpose.msra.mxu0 0.0
    %2835 = vmatprep.subr.mxu0 0.0
    %2836 = vmatpush2.xpose.msra.mxu0 0.0
    %2837 = vmatprep.subr.mxu0 0.0
    %2838 = vmatpush2.xpose.msra.mxu0 0.0
    %2839 = vmatprep.subr.mxu0 0.0
    %2840 = vmatpush2.xpose.msra.mxu0 0.0
    %2841 = vmatprep.subr.mxu0 0.0
    %2842 = vmatpush2.xpose.msra.mxu0 0.0
    %2843 = vmatprep.subr.mxu0 0.0
    %2844 = vmatpush2.xpose.msra.mxu0 0.0
    %2845 = vmatprep.subr.mxu0 0.0
    %2846 = vmatpush2.xpose.msra.mxu0 0.0
    %2847 = vmatprep.mubr.f32.mxu0 0.0
    %2848 = vmatmul.mubr.f32.gmra.mxu0 %v2781
    %v2849 = vpop.f32.mrf.mxu0
    %v2850 = vadd.f32 0.0, %v2849
    %v2851 = vpop.f32.mrf.mxu0
    %2852 = vdwg.mxu0
    %vm2853 = vcmask 64512
    %v2854 = vsel %vm2853, %v566, -inf
    %2855 = vmax.xlane.f32.xlu0 %v2854
    %v2856 = vpop.xlane.xlu0 %2855
    %v2857 = vsel %vm2853, %v642, -inf
    %2858 = vmax.xlane.f32.xlu0 %v2857
    %v2859 = vpop.xlane.xlu0 %2858
    %v2860 = vsel %vm2853, %v718, -inf
    %2861 = vmax.xlane.f32.xlu0 %v2860
    %v2862 = vpop.xlane.xlu0 %2861
    %v2863 = vsel %vm2853, %v794, -inf
    %2864 = vmax.xlane.f32.xlu0 %v2863
    %v2865 = vpop.xlane.xlu0 %2864
    %v2866 = vsel %vm2853, %v870, -inf
    %2867 = vmax.xlane.f32.xlu0 %v2866
    %v2868 = vpop.xlane.xlu0 %2867
    %v2869 = vsel %vm2853, %v946, -inf
    %2870 = vmax.xlane.f32.xlu0 %v2869
    %v2871 = vpop.xlane.xlu0 %2870
    %v2872 = vsel %vm2853, %v1022, -inf
    %2873 = vmax.xlane.f32.xlu0 %v2872
    %v2874 = vpop.xlane.xlu0 %2873
    %v2875 = vsel %vm2853, %v1098, -inf
    %2876 = vmax.xlane.f32.xlu0 %v2875
    %v2877 = vpop.xlane.xlu0 %2876
    %v2878 = vsel %vm2853, %v1171, -inf
    %2879 = vmax.xlane.f32.xlu0 %v2878
    %v2880 = vpop.xlane.xlu0 %2879
    %v2881 = vsel %vm2853, %v1244, -inf
    %2882 = vmax.xlane.f32.xlu0 %v2881
    %v2883 = vpop.xlane.xlu0 %2882
    %v2884 = vsel %vm2853, %v1317, -inf
    %2885 = vmax.xlane.f32.xlu0 %v2884
    %v2886 = vpop.xlane.xlu0 %2885
    %v2887 = vsel %vm2853, %v1390, -inf
    %2888 = vmax.xlane.f32.xlu0 %v2887
    %v2889 = vpop.xlane.xlu0 %2888
    %v2890 = vsel %vm2853, %v1463, -inf
    %2891 = vmax.xlane.f32.xlu0 %v2890
    %v2892 = vpop.xlane.xlu0 %2891
    %v2893 = vsel %vm2853, %v1536, -inf
    %2894 = vmax.xlane.f32.xlu0 %v2893
    %v2895 = vpop.xlane.xlu0 %2894
    %v2896 = vsel %vm2853, %v1609, -inf
    %2897 = vmax.xlane.f32.xlu0 %v2896
    %v2898 = vpop.xlane.xlu0 %2897
    %v2899 = vsel %vm2853, %v1682, -inf
    %2900 = vmax.xlane.f32.xlu0 %v2899
    %v2901 = vpop.xlane.xlu0 %2900
    %v2902 = vsel %vm2853, %v1755, -inf
    %2903 = vmax.xlane.f32.xlu0 %v2902
    %v2904 = vpop.xlane.xlu0 %2903
    %v2905 = vsel %vm2853, %v1828, -inf
    %2906 = vmax.xlane.f32.xlu0 %v2905
    %v2907 = vpop.xlane.xlu0 %2906
    %v2908 = vsel %vm2853, %v1901, -inf
    %2909 = vmax.xlane.f32.xlu0 %v2908
    %v2910 = vpop.xlane.xlu0 %2909
    %v2911 = vsel %vm2853, %v1974, -inf
    %2912 = vmax.xlane.f32.xlu0 %v2911
    %v2913 = vpop.xlane.xlu0 %2912
    %v2914 = vsel %vm2853, %v2047, -inf
    %2915 = vmax.xlane.f32.xlu0 %v2914
    %v2916 = vpop.xlane.xlu0 %2915
    %v2917 = vsel %vm2853, %v2120, -inf
    %2918 = vmax.xlane.f32.xlu0 %v2917
    %v2919 = vpop.xlane.xlu0 %2918
    %v2920 = vsel %vm2853, %v2193, -inf
    %2921 = vmax.xlane.f32.xlu0 %v2920
    %v2922 = vpop.xlane.xlu0 %2921
    %v2923 = vsel %vm2853, %v2266, -inf
    %2924 = vmax.xlane.f32.xlu0 %v2923
    %v2925 = vpop.xlane.xlu0 %2924
    %v2926 = vsel %vm2853, %v2339, -inf
    %2927 = vmax.xlane.f32.xlu0 %v2926
    %v2928 = vpop.xlane.xlu0 %2927
    %v2929 = vsel %vm2853, %v2412, -inf
    %2930 = vmax.xlane.f32.xlu0 %v2929
    %v2931 = vpop.xlane.xlu0 %2930
    %v2932 = vsel %vm2853, %v2485, -inf
    %2933 = vmax.xlane.f32.xlu0 %v2932
    %v2934 = vpop.xlane.xlu0 %2933
    %v2935 = vsel %vm2853, %v2558, -inf
    %2936 = vmax.xlane.f32.xlu0 %v2935
    %v2937 = vpop.xlane.xlu0 %2936
    %v2938 = vsel %vm2853, %v2631, -inf
    %2939 = vmax.xlane.f32.xlu0 %v2938
    %v2940 = vpop.xlane.xlu0 %2939
    %v2941 = vsel %vm2853, %v2704, -inf
    %2942 = vmax.xlane.f32.xlu0 %v2941
    %v2943 = vpop.xlane.xlu0 %2942
    %v2944 = vsel %vm2853, %v2777, -inf
    %2945 = vmax.xlane.f32.xlu0 %v2944
    %v2946 = vpop.xlane.xlu0 %2945
    %v2947 = vsel %vm2853, %v2850, -inf
    %2948 = vmax.xlane.f32.xlu0 %v2947
    %v2949 = vpop.xlane.xlu0 %2948
    %v2950 = vrot.slane %v2856, 4
    %v2951 = vmax.f32 %v2856, %v2950
    %v2952 = vrot.slane %v2951, 2
    %v2953 = vmax.f32 %v2951, %v2952
    %v2954 = vrot.slane %v2953, 1
    %v2955 = vmax.f32 %v2953, %v2954
    %v2956 = vrot.slane %v2859, 4
    %v2957 = vmax.f32 %v2859, %v2956
    %v2958 = vrot.slane %v2957, 2
    %v2959 = vmax.f32 %v2957, %v2958
    %v2960 = vrot.slane %v2959, 1
    %v2961 = vmax.f32 %v2959, %v2960
    %v2962 = vrot.slane %v2862, 4
    %v2963 = vmax.f32 %v2862, %v2962
    %v2964 = vrot.slane %v2963, 2
    %v2965 = vmax.f32 %v2963, %v2964
    %v2966 = vrot.slane %v2965, 1
    %v2967 = vmax.f32 %v2965, %v2966
    %v2968 = vrot.slane %v2865, 4
    %v2969 = vmax.f32 %v2865, %v2968
    %v2970 = vrot.slane %v2969, 2
    %v2971 = vmax.f32 %v2969, %v2970
    %v2972 = vrot.slane %v2971, 1
    %v2973 = vmax.f32 %v2971, %v2972
    %v2974 = vrot.slane %v2868, 4
    %v2975 = vmax.f32 %v2868, %v2974
    %v2976 = vrot.slane %v2975, 2
    %v2977 = vmax.f32 %v2975, %v2976
    %v2978 = vrot.slane %v2977, 1
    %v2979 = vmax.f32 %v2977, %v2978
    %v2980 = vrot.slane %v2871, 4
    %v2981 = vmax.f32 %v2871, %v2980
    %v2982 = vrot.slane %v2981, 2
    %v2983 = vmax.f32 %v2981, %v2982
    %v2984 = vrot.slane %v2983, 1
    %v2985 = vmax.f32 %v2983, %v2984
    %v2986 = vrot.slane %v2874, 4
    %v2987 = vmax.f32 %v2874, %v2986
    %v2988 = vrot.slane %v2987, 2
    %v2989 = vmax.f32 %v2987, %v2988
    %v2990 = vrot.slane %v2989, 1
    %v2991 = vmax.f32 %v2989, %v2990
    %v2992 = vrot.slane %v2877, 4
    %v2993 = vmax.f32 %v2877, %v2992
    %v2994 = vrot.slane %v2993, 2
    %v2995 = vmax.f32 %v2993, %v2994
    %v2996 = vrot.slane %v2995, 1
    %v2997 = vmax.f32 %v2995, %v2996
    %v2998 = vrot.slane %v2880, 4
    %v2999 = vmax.f32 %v2880, %v2998
    %v3000 = vrot.slane %v2999, 2
    %v3001 = vmax.f32 %v2999, %v3000
    %v3002 = vrot.slane %v3001, 1
    %v3003 = vmax.f32 %v3001, %v3002
    %v3004 = vrot.slane %v2883, 4
    %v3005 = vmax.f32 %v2883, %v3004
    %v3006 = vrot.slane %v3005, 2
    %v3007 = vmax.f32 %v3005, %v3006
    %v3008 = vrot.slane %v3007, 1
    %v3009 = vmax.f32 %v3007, %v3008
    %v3010 = vrot.slane %v2886, 4
    %v3011 = vmax.f32 %v2886, %v3010
    %v3012 = vrot.slane %v3011, 2
    %v3013 = vmax.f32 %v3011, %v3012
    %v3014 = vrot.slane %v3013, 1
    %v3015 = vmax.f32 %v3013, %v3014
    %v3016 = vrot.slane %v2889, 4
    %v3017 = vmax.f32 %v2889, %v3016
    %v3018 = vrot.slane %v3017, 2
    %v3019 = vmax.f32 %v3017, %v3018
    %v3020 = vrot.slane %v3019, 1
    %v3021 = vmax.f32 %v3019, %v3020
    %v3022 = vrot.slane %v2892, 4
    %v3023 = vmax.f32 %v2892, %v3022
    %v3024 = vrot.slane %v3023, 2
    %v3025 = vmax.f32 %v3023, %v3024
    %v3026 = vrot.slane %v3025, 1
    %v3027 = vmax.f32 %v3025, %v3026
    %v3028 = vrot.slane %v2895, 4
    %v3029 = vmax.f32 %v2895, %v3028
    %v3030 = vrot.slane %v3029, 2
    %v3031 = vmax.f32 %v3029, %v3030
    %v3032 = vrot.slane %v3031, 1
    %v3033 = vmax.f32 %v3031, %v3032
    %v3034 = vrot.slane %v2898, 4
    %v3035 = vmax.f32 %v2898, %v3034
    %v3036 = vrot.slane %v3035, 2
    %v3037 = vmax.f32 %v3035, %v3036
    %v3038 = vrot.slane %v3037, 1
    %v3039 = vmax.f32 %v3037, %v3038
    %v3040 = vrot.slane %v2901, 4
    %v3041 = vmax.f32 %v2901, %v3040
    %v3042 = vrot.slane %v3041, 2
    %v3043 = vmax.f32 %v3041, %v3042
    %v3044 = vrot.slane %v3043, 1
    %v3045 = vmax.f32 %v3043, %v3044
    %v3046 = vrot.slane %v2904, 4
    %v3047 = vmax.f32 %v2904, %v3046
    %v3048 = vrot.slane %v3047, 2
    %v3049 = vmax.f32 %v3047, %v3048
    %v3050 = vrot.slane %v3049, 1
    %v3051 = vmax.f32 %v3049, %v3050
    %v3052 = vrot.slane %v2907, 4
    %v3053 = vmax.f32 %v2907, %v3052
    %v3054 = vrot.slane %v3053, 2
    %v3055 = vmax.f32 %v3053, %v3054
    %v3056 = vrot.slane %v3055, 1
    %v3057 = vmax.f32 %v3055, %v3056
    %v3058 = vrot.slane %v2910, 4
    %v3059 = vmax.f32 %v2910, %v3058
    %v3060 = vrot.slane %v3059, 2
    %v3061 = vmax.f32 %v3059, %v3060
    %v3062 = vrot.slane %v3061, 1
    %v3063 = vmax.f32 %v3061, %v3062
    %v3064 = vrot.slane %v2913, 4
    %v3065 = vmax.f32 %v2913, %v3064
    %v3066 = vrot.slane %v3065, 2
    %v3067 = vmax.f32 %v3065, %v3066
    %v3068 = vrot.slane %v3067, 1
    %v3069 = vmax.f32 %v3067, %v3068
    %v3070 = vrot.slane %v2916, 4
    %v3071 = vmax.f32 %v2916, %v3070
    %v3072 = vrot.slane %v3071, 2
    %v3073 = vmax.f32 %v3071, %v3072
    %v3074 = vrot.slane %v3073, 1
    %v3075 = vmax.f32 %v3073, %v3074
    %v3076 = vrot.slane %v2919, 4
    %v3077 = vmax.f32 %v2919, %v3076
    %v3078 = vrot.slane %v3077, 2
    %v3079 = vmax.f32 %v3077, %v3078
    %v3080 = vrot.slane %v3079, 1
    %v3081 = vmax.f32 %v3079, %v3080
    %v3082 = vrot.slane %v2922, 4
    %v3083 = vmax.f32 %v2922, %v3082
    %v3084 = vrot.slane %v3083, 2
    %v3085 = vmax.f32 %v3083, %v3084
    %v3086 = vrot.slane %v3085, 1
    %v3087 = vmax.f32 %v3085, %v3086
    %v3088 = vrot.slane %v2925, 4
    %v3089 = vmax.f32 %v2925, %v3088
    %v3090 = vrot.slane %v3089, 2
    %v3091 = vmax.f32 %v3089, %v3090
    %v3092 = vrot.slane %v3091, 1
    %v3093 = vmax.f32 %v3091, %v3092
    %v3094 = vrot.slane %v2928, 4
    %v3095 = vmax.f32 %v2928, %v3094
    %v3096 = vrot.slane %v3095, 2
    %v3097 = vmax.f32 %v3095, %v3096
    %v3098 = vrot.slane %v3097, 1
    %v3099 = vmax.f32 %v3097, %v3098
    %v3100 = vrot.slane %v2931, 4
    %v3101 = vmax.f32 %v2931, %v3100
    %v3102 = vrot.slane %v3101, 2
    %v3103 = vmax.f32 %v3101, %v3102
    %v3104 = vrot.slane %v3103, 1
    %v3105 = vmax.f32 %v3103, %v3104
    %v3106 = vrot.slane %v2934, 4
    %v3107 = vmax.f32 %v2934, %v3106
    %v3108 = vrot.slane %v3107, 2
    %v3109 = vmax.f32 %v3107, %v3108
    %v3110 = vrot.slane %v3109, 1
    %v3111 = vmax.f32 %v3109, %v3110
    %v3112 = vrot.slane %v2937, 4
    %v3113 = vmax.f32 %v2937, %v3112
    %v3114 = vrot.slane %v3113, 2
    %v3115 = vmax.f32 %v3113, %v3114
    %v3116 = vrot.slane %v3115, 1
    %v3117 = vmax.f32 %v3115, %v3116
    %v3118 = vrot.slane %v2940, 4
    %v3119 = vmax.f32 %v2940, %v3118
    %v3120 = vrot.slane %v3119, 2
    %v3121 = vmax.f32 %v3119, %v3120
    %v3122 = vrot.slane %v3121, 1
    %v3123 = vmax.f32 %v3121, %v3122
    %v3124 = vrot.slane %v2943, 4
    %v3125 = vmax.f32 %v2943, %v3124
    %v3126 = vrot.slane %v3125, 2
    %v3127 = vmax.f32 %v3125, %v3126
    %v3128 = vrot.slane %v3127, 1
    %v3129 = vmax.f32 %v3127, %v3128
    %v3130 = vrot.slane %v2946, 4
    %v3131 = vmax.f32 %v2946, %v3130
    %v3132 = vrot.slane %v3131, 2
    %v3133 = vmax.f32 %v3131, %v3132
    %v3134 = vrot.slane %v3133, 1
    %v3135 = vmax.f32 %v3133, %v3134
    %v3136 = vrot.slane %v2949, 4
    %v3137 = vmax.f32 %v2949, %v3136
    %v3138 = vrot.slane %v3137, 2
    %v3139 = vmax.f32 %v3137, %v3138
    %v3140 = vrot.slane %v3139, 1
    %v3141 = vmax.f32 %v3139, %v3140
    %v3142 = vsub.f32 %v566, %v2955
    %v3143 = vsub.f32 %v642, %v2961
    %v3144 = vsub.f32 %v718, %v2967
    %v3145 = vsub.f32 %v794, %v2973
    %v3146 = vsub.f32 %v870, %v2979
    %v3147 = vsub.f32 %v946, %v2985
    %v3148 = vsub.f32 %v1022, %v2991
    %v3149 = vsub.f32 %v1098, %v2997
    %v3150 = vsub.f32 %v1171, %v3003
    %v3151 = vsub.f32 %v1244, %v3009
    %v3152 = vsub.f32 %v1317, %v3015
    %v3153 = vsub.f32 %v1390, %v3021
    %v3154 = vsub.f32 %v1463, %v3027
    %v3155 = vsub.f32 %v1536, %v3033
    %v3156 = vsub.f32 %v1609, %v3039
    %v3157 = vsub.f32 %v1682, %v3045
    %v3158 = vsub.f32 %v1755, %v3051
    %v3159 = vsub.f32 %v1828, %v3057
    %v3160 = vsub.f32 %v1901, %v3063
    %v3161 = vsub.f32 %v1974, %v3069
    %v3162 = vsub.f32 %v2047, %v3075
    %v3163 = vsub.f32 %v2120, %v3081
    %v3164 = vsub.f32 %v2193, %v3087
    %v3165 = vsub.f32 %v2266, %v3093
    %v3166 = vsub.f32 %v2339, %v3099
    %v3167 = vsub.f32 %v2412, %v3105
    %v3168 = vsub.f32 %v2485, %v3111
    %v3169 = vsub.f32 %v2558, %v3117
    %v3170 = vsub.f32 %v2631, %v3123
    %v3171 = vsub.f32 %v2704, %v3129
    %v3172 = vsub.f32 %v2777, %v3135
    %v3173 = vsub.f32 %v2850, %v3141
    %v3174 = vmul.f32 %v3142, 1.442695
    %v3175 = vpow.pop %v3174
    %v3176 = vmul.f32 %v3143, 1.442695
    %v3177 = vpow.pop %v3176
    %v3178 = vmul.f32 %v3144, 1.442695
    %v3179 = vpow.pop %v3178
    %v3180 = vmul.f32 %v3145, 1.442695
    %v3181 = vpow.pop %v3180
    %v3182 = vmul.f32 %v3146, 1.442695
    %v3183 = vpow.pop %v3182
    %v3184 = vmul.f32 %v3147, 1.442695
    %v3185 = vpow.pop %v3184
    %v3186 = vmul.f32 %v3148, 1.442695
    %v3187 = vpow.pop %v3186
    %v3188 = vmul.f32 %v3149, 1.442695
    %v3189 = vpow.pop %v3188
    %v3190 = vmul.f32 %v3150, 1.442695
    %v3191 = vpow.pop %v3190
    %v3192 = vmul.f32 %v3151, 1.442695
    %v3193 = vpow.pop %v3192
    %v3194 = vmul.f32 %v3152, 1.442695
    %v3195 = vpow.pop %v3194
    %v3196 = vmul.f32 %v3153, 1.442695
    %v3197 = vpow.pop %v3196
    %v3198 = vmul.f32 %v3154, 1.442695
    %v3199 = vpow.pop %v3198
    %v3200 = vmul.f32 %v3155, 1.442695
    %v3201 = vpow.pop %v3200
    %v3202 = vmul.f32 %v3156, 1.442695
    %v3203 = vpow.pop %v3202
    %v3204 = vmul.f32 %v3157, 1.442695
    %v3205 = vpow.pop %v3204
    %v3206 = vmul.f32 %v3158, 1.442695
    %v3207 = vpow.pop %v3206
    %v3208 = vmul.f32 %v3159, 1.442695
    %v3209 = vpow.pop %v3208
    %v3210 = vmul.f32 %v3160, 1.442695
    %v3211 = vpow.pop %v3210
    %v3212 = vmul.f32 %v3161, 1.442695
    %v3213 = vpow.pop %v3212
    %v3214 = vmul.f32 %v3162, 1.442695
    %v3215 = vpow.pop %v3214
    %v3216 = vmul.f32 %v3163, 1.442695
    %v3217 = vpow.pop %v3216
    %v3218 = vmul.f32 %v3164, 1.442695
    %v3219 = vpow.pop %v3218
    %v3220 = vmul.f32 %v3165, 1.442695
    %v3221 = vpow.pop %v3220
    %v3222 = vmul.f32 %v3166, 1.442695
    %v3223 = vpow.pop %v3222
    %v3224 = vmul.f32 %v3167, 1.442695
    %v3225 = vpow.pop %v3224
    %v3226 = vmul.f32 %v3168, 1.442695
    %v3227 = vpow.pop %v3226
    %v3228 = vmul.f32 %v3169, 1.442695
    %v3229 = vpow.pop %v3228
    %v3230 = vmul.f32 %v3170, 1.442695
    %v3231 = vpow.pop %v3230
    %v3232 = vmul.f32 %v3171, 1.442695
    %v3233 = vpow.pop %v3232
    %v3234 = vmul.f32 %v3172, 1.442695
    %v3235 = vpow.pop %v3234
    %v3236 = vmul.f32 %v3173, 1.442695
    %v3237 = vpow.pop %v3236
    %v3238 = vsel %vm2853, %v3175, 0.0
    %3239 = vadd.xlane.f32.xlu0 %v3238
    %v3240 = vpop.xlane.xlu0 %3239
    %v3241 = vsel %vm2853, %v3177, 0.0
    %3242 = vadd.xlane.f32.xlu0 %v3241
    %v3243 = vpop.xlane.xlu0 %3242
    %v3244 = vsel %vm2853, %v3179, 0.0
    %3245 = vadd.xlane.f32.xlu0 %v3244
    %v3246 = vpop.xlane.xlu0 %3245
    %v3247 = vsel %vm2853, %v3181, 0.0
    %3248 = vadd.xlane.f32.xlu0 %v3247
    %v3249 = vpop.xlane.xlu0 %3248
    %v3250 = vsel %vm2853, %v3183, 0.0
    %3251 = vadd.xlane.f32.xlu0 %v3250
    %v3252 = vpop.xlane.xlu0 %3251
    %v3253 = vsel %vm2853, %v3185, 0.0
    %3254 = vadd.xlane.f32.xlu0 %v3253
    %v3255 = vpop.xlane.xlu0 %3254
    %v3256 = vsel %vm2853, %v3187, 0.0
    %3257 = vadd.xlane.f32.xlu0 %v3256
    %v3258 = vpop.xlane.xlu0 %3257
    %v3259 = vsel %vm2853, %v3189, 0.0
    %3260 = vadd.xlane.f32.xlu0 %v3259
    %v3261 = vpop.xlane.xlu0 %3260
    %v3262 = vsel %vm2853, %v3191, 0.0
    %3263 = vadd.xlane.f32.xlu0 %v3262
    %v3264 = vpop.xlane.xlu0 %3263
    %v3265 = vsel %vm2853, %v3193, 0.0
    %3266 = vadd.xlane.f32.xlu0 %v3265
    %v3267 = vpop.xlane.xlu0 %3266
    %v3268 = vsel %vm2853, %v3195, 0.0
    %3269 = vadd.xlane.f32.xlu0 %v3268
    %v3270 = vpop.xlane.xlu0 %3269
    %v3271 = vsel %vm2853, %v3197, 0.0
    %3272 = vadd.xlane.f32.xlu0 %v3271
    %v3273 = vpop.xlane.xlu0 %3272
    %v3274 = vsel %vm2853, %v3199, 0.0
    %3275 = vadd.xlane.f32.xlu0 %v3274
    %v3276 = vpop.xlane.xlu0 %3275
    %v3277 = vsel %vm2853, %v3201, 0.0
    %3278 = vadd.xlane.f32.xlu0 %v3277
    %v3279 = vpop.xlane.xlu0 %3278
    %v3280 = vsel %vm2853, %v3203, 0.0
    %3281 = vadd.xlane.f32.xlu0 %v3280
    %v3282 = vpop.xlane.xlu0 %3281
    %v3283 = vsel %vm2853, %v3205, 0.0
    %3284 = vadd.xlane.f32.xlu0 %v3283
    %v3285 = vpop.xlane.xlu0 %3284
    %v3286 = vsel %vm2853, %v3207, 0.0
    %3287 = vadd.xlane.f32.xlu0 %v3286
    %v3288 = vpop.xlane.xlu0 %3287
    %v3289 = vsel %vm2853, %v3209, 0.0
    %3290 = vadd.xlane.f32.xlu0 %v3289
    %v3291 = vpop.xlane.xlu0 %3290
    %v3292 = vsel %vm2853, %v3211, 0.0
    %3293 = vadd.xlane.f32.xlu0 %v3292
    %v3294 = vpop.xlane.xlu0 %3293
    %v3295 = vsel %vm2853, %v3213, 0.0
    %3296 = vadd.xlane.f32.xlu0 %v3295
    %v3297 = vpop.xlane.xlu0 %3296
    %v3298 = vsel %vm2853, %v3215, 0.0
    %3299 = vadd.xlane.f32.xlu0 %v3298
    %v3300 = vpop.xlane.xlu0 %3299
    %v3301 = vsel %vm2853, %v3217, 0.0
    %3302 = vadd.xlane.f32.xlu0 %v3301
    %v3303 = vpop.xlane.xlu0 %3302
    %v3304 = vsel %vm2853, %v3219, 0.0
    %3305 = vadd.xlane.f32.xlu0 %v3304
    %v3306 = vpop.xlane.xlu0 %3305
    %v3307 = vsel %vm2853, %v3221, 0.0
    %3308 = vadd.xlane.f32.xlu0 %v3307
    %v3309 = vpop.xlane.xlu0 %3308
    %v3310 = vsel %vm2853, %v3223, 0.0
    %3311 = vadd.xlane.f32.xlu0 %v3310
    %v3312 = vpop.xlane.xlu0 %3311
    %v3313 = vsel %vm2853, %v3225, 0.0
    %3314 = vadd.xlane.f32.xlu0 %v3313
    %v3315 = vpop.xlane.xlu0 %3314
    %v3316 = vsel %vm2853, %v3227, 0.0
    %3317 = vadd.xlane.f32.xlu0 %v3316
    %v3318 = vpop.xlane.xlu0 %3317
    %v3319 = vsel %vm2853, %v3229, 0.0
    %3320 = vadd.xlane.f32.xlu0 %v3319
    %v3321 = vpop.xlane.xlu0 %3320
    %v3322 = vsel %vm2853, %v3231, 0.0
    %3323 = vadd.xlane.f32.xlu0 %v3322
    %v3324 = vpop.xlane.xlu0 %3323
    %v3325 = vsel %vm2853, %v3233, 0.0
    %3326 = vadd.xlane.f32.xlu0 %v3325
    %v3327 = vpop.xlane.xlu0 %3326
    %v3328 = vsel %vm2853, %v3235, 0.0
    %3329 = vadd.xlane.f32.xlu0 %v3328
    %v3330 = vpop.xlane.xlu0 %3329
    %v3331 = vsel %vm2853, %v3237, 0.0
    %3332 = vadd.xlane.f32.xlu0 %v3331
    %v3333 = vpop.xlane.xlu0 %3332
    %v3334 = vrot.slane %v3240, 4
    %v3335 = vadd.f32 %v3240, %v3334
    %v3336 = vrot.slane %v3335, 2
    %v3337 = vadd.f32 %v3335, %v3336
    %v3338 = vrot.slane %v3337, 1
    %v3339 = vadd.f32 %v3337, %v3338
    %v3340 = vrot.slane %v3243, 4
    %v3341 = vadd.f32 %v3243, %v3340
    %v3342 = vrot.slane %v3341, 2
    %v3343 = vadd.f32 %v3341, %v3342
    %v3344 = vrot.slane %v3343, 1
    %v3345 = vadd.f32 %v3343, %v3344
    %v3346 = vrot.slane %v3246, 4
    %v3347 = vadd.f32 %v3246, %v3346
    %v3348 = vrot.slane %v3347, 2
    %v3349 = vadd.f32 %v3347, %v3348
    %v3350 = vrot.slane %v3349, 1
    %v3351 = vadd.f32 %v3349, %v3350
    %v3352 = vrot.slane %v3249, 4
    %v3353 = vadd.f32 %v3249, %v3352
    %v3354 = vrot.slane %v3353, 2
    %v3355 = vadd.f32 %v3353, %v3354
    %v3356 = vrot.slane %v3355, 1
    %v3357 = vadd.f32 %v3355, %v3356
    %v3358 = vrot.slane %v3252, 4
    %v3359 = vadd.f32 %v3252, %v3358
    %v3360 = vrot.slane %v3359, 2
    %v3361 = vadd.f32 %v3359, %v3360
    %v3362 = vrot.slane %v3361, 1
    %v3363 = vadd.f32 %v3361, %v3362
    %v3364 = vrot.slane %v3255, 4
    %v3365 = vadd.f32 %v3255, %v3364
    %v3366 = vrot.slane %v3365, 2
    %v3367 = vadd.f32 %v3365, %v3366
    %v3368 = vrot.slane %v3367, 1
    %v3369 = vadd.f32 %v3367, %v3368
    %v3370 = vrot.slane %v3258, 4
    %v3371 = vadd.f32 %v3258, %v3370
    %v3372 = vrot.slane %v3371, 2
    %v3373 = vadd.f32 %v3371, %v3372
    %v3374 = vrot.slane %v3373, 1
    %v3375 = vadd.f32 %v3373, %v3374
    %v3376 = vrot.slane %v3261, 4
    %v3377 = vadd.f32 %v3261, %v3376
    %v3378 = vrot.slane %v3377, 2
    %v3379 = vadd.f32 %v3377, %v3378
    %v3380 = vrot.slane %v3379, 1
    %v3381 = vadd.f32 %v3379, %v3380
    %v3382 = vrot.slane %v3264, 4
    %v3383 = vadd.f32 %v3264, %v3382
    %v3384 = vrot.slane %v3383, 2
    %v3385 = vadd.f32 %v3383, %v3384
    %v3386 = vrot.slane %v3385, 1
    %v3387 = vadd.f32 %v3385, %v3386
    %v3388 = vrot.slane %v3267, 4
    %v3389 = vadd.f32 %v3267, %v3388
    %v3390 = vrot.slane %v3389, 2
    %v3391 = vadd.f32 %v3389, %v3390
    %v3392 = vrot.slane %v3391, 1
    %v3393 = vadd.f32 %v3391, %v3392
    %v3394 = vrot.slane %v3270, 4
    %v3395 = vadd.f32 %v3270, %v3394
    %v3396 = vrot.slane %v3395, 2
    %v3397 = vadd.f32 %v3395, %v3396
    %v3398 = vrot.slane %v3397, 1
    %v3399 = vadd.f32 %v3397, %v3398
    %v3400 = vrot.slane %v3273, 4
    %v3401 = vadd.f32 %v3273, %v3400
    %v3402 = vrot.slane %v3401, 2
    %v3403 = vadd.f32 %v3401, %v3402
    %v3404 = vrot.slane %v3403, 1
    %v3405 = vadd.f32 %v3403, %v3404
    %v3406 = vrot.slane %v3276, 4
    %v3407 = vadd.f32 %v3276, %v3406
    %v3408 = vrot.slane %v3407, 2
    %v3409 = vadd.f32 %v3407, %v3408
    %v3410 = vrot.slane %v3409, 1
    %v3411 = vadd.f32 %v3409, %v3410
    %v3412 = vrot.slane %v3279, 4
    %v3413 = vadd.f32 %v3279, %v3412
    %v3414 = vrot.slane %v3413, 2
    %v3415 = vadd.f32 %v3413, %v3414
    %v3416 = vrot.slane %v3415, 1
    %v3417 = vadd.f32 %v3415, %v3416
    %v3418 = vrot.slane %v3282, 4
    %v3419 = vadd.f32 %v3282, %v3418
    %v3420 = vrot.slane %v3419, 2
    %v3421 = vadd.f32 %v3419, %v3420
    %v3422 = vrot.slane %v3421, 1
    %v3423 = vadd.f32 %v3421, %v3422
    %v3424 = vrot.slane %v3285, 4
    %v3425 = vadd.f32 %v3285, %v3424
    %v3426 = vrot.slane %v3425, 2
    %v3427 = vadd.f32 %v3425, %v3426
    %v3428 = vrot.slane %v3427, 1
    %v3429 = vadd.f32 %v3427, %v3428
    %v3430 = vrot.slane %v3288, 4
    %v3431 = vadd.f32 %v3288, %v3430
    %v3432 = vrot.slane %v3431, 2
    %v3433 = vadd.f32 %v3431, %v3432
    %v3434 = vrot.slane %v3433, 1
    %v3435 = vadd.f32 %v3433, %v3434
    %v3436 = vrot.slane %v3291, 4
    %v3437 = vadd.f32 %v3291, %v3436
    %v3438 = vrot.slane %v3437, 2
    %v3439 = vadd.f32 %v3437, %v3438
    %v3440 = vrot.slane %v3439, 1
    %v3441 = vadd.f32 %v3439, %v3440
    %v3442 = vrot.slane %v3294, 4
    %v3443 = vadd.f32 %v3294, %v3442
    %v3444 = vrot.slane %v3443, 2
    %v3445 = vadd.f32 %v3443, %v3444
    %v3446 = vrot.slane %v3445, 1
    %v3447 = vadd.f32 %v3445, %v3446
    %v3448 = vrot.slane %v3297, 4
    %v3449 = vadd.f32 %v3297, %v3448
    %v3450 = vrot.slane %v3449, 2
    %v3451 = vadd.f32 %v3449, %v3450
    %v3452 = vrot.slane %v3451, 1
    %v3453 = vadd.f32 %v3451, %v3452
    %v3454 = vrot.slane %v3300, 4
    %v3455 = vadd.f32 %v3300, %v3454
    %v3456 = vrot.slane %v3455, 2
    %v3457 = vadd.f32 %v3455, %v3456
    %v3458 = vrot.slane %v3457, 1
    %v3459 = vadd.f32 %v3457, %v3458
    %v3460 = vrot.slane %v3303, 4
    %v3461 = vadd.f32 %v3303, %v3460
    %v3462 = vrot.slane %v3461, 2
    %v3463 = vadd.f32 %v3461, %v3462
    %v3464 = vrot.slane %v3463, 1
    %v3465 = vadd.f32 %v3463, %v3464
    %v3466 = vrot.slane %v3306, 4
    %v3467 = vadd.f32 %v3306, %v3466
    %v3468 = vrot.slane %v3467, 2
    %v3469 = vadd.f32 %v3467, %v3468
    %v3470 = vrot.slane %v3469, 1
    %v3471 = vadd.f32 %v3469, %v3470
    %v3472 = vrot.slane %v3309, 4
    %v3473 = vadd.f32 %v3309, %v3472
    %v3474 = vrot.slane %v3473, 2
    %v3475 = vadd.f32 %v3473, %v3474
    %v3476 = vrot.slane %v3475, 1
    %v3477 = vadd.f32 %v3475, %v3476
    %v3478 = vrot.slane %v3312, 4
    %v3479 = vadd.f32 %v3312, %v3478
    %v3480 = vrot.slane %v3479, 2
    %v3481 = vadd.f32 %v3479, %v3480
    %v3482 = vrot.slane %v3481, 1
    %v3483 = vadd.f32 %v3481, %v3482
    %v3484 = vrot.slane %v3315, 4
    %v3485 = vadd.f32 %v3315, %v3484
    %v3486 = vrot.slane %v3485, 2
    %v3487 = vadd.f32 %v3485, %v3486
    %v3488 = vrot.slane %v3487, 1
    %v3489 = vadd.f32 %v3487, %v3488
    %v3490 = vrot.slane %v3318, 4
    %v3491 = vadd.f32 %v3318, %v3490
    %v3492 = vrot.slane %v3491, 2
    %v3493 = vadd.f32 %v3491, %v3492
    %v3494 = vrot.slane %v3493, 1
    %v3495 = vadd.f32 %v3493, %v3494
    %v3496 = vrot.slane %v3321, 4
    %v3497 = vadd.f32 %v3321, %v3496
    %v3498 = vrot.slane %v3497, 2
    %v3499 = vadd.f32 %v3497, %v3498
    %v3500 = vrot.slane %v3499, 1
    %v3501 = vadd.f32 %v3499, %v3500
    %v3502 = vrot.slane %v3324, 4
    %v3503 = vadd.f32 %v3324, %v3502
    %v3504 = vrot.slane %v3503, 2
    %v3505 = vadd.f32 %v3503, %v3504
    %v3506 = vrot.slane %v3505, 1
    %v3507 = vadd.f32 %v3505, %v3506
    %v3508 = vrot.slane %v3327, 4
    %v3509 = vadd.f32 %v3327, %v3508
    %v3510 = vrot.slane %v3509, 2
    %v3511 = vadd.f32 %v3509, %v3510
    %v3512 = vrot.slane %v3511, 1
    %v3513 = vadd.f32 %v3511, %v3512
    %v3514 = vrot.slane %v3330, 4
    %v3515 = vadd.f32 %v3330, %v3514
    %v3516 = vrot.slane %v3515, 2
    %v3517 = vadd.f32 %v3515, %v3516
    %v3518 = vrot.slane %v3517, 1
    %v3519 = vadd.f32 %v3517, %v3518
    %v3520 = vrot.slane %v3333, 4
    %v3521 = vadd.f32 %v3333, %v3520
    %v3522 = vrot.slane %v3521, 2
    %v3523 = vadd.f32 %v3521, %v3522
    %v3524 = vrot.slane %v3523, 1
    %v3525 = vadd.f32 %v3523, %v3524
    %v3527 = vsel %vm2853, %v3175, 0
    %3529 = vmatprep.subr.mxu0 0.0
    %3530 = vmatpush1.msra.mxu0 0.0
    %3531 = vmatprep.subr.mxu0 0.0
    %3532 = vmatpush1.msra.mxu0 0.0
    %3533 = vmatprep.subr.mxu0 0.0
    %3534 = vmatpush1.msra.mxu0 0.0
    %3535 = vmatprep.subr.mxu0 0.0
    %3536 = vmatpush1.msra.mxu0 0.0
    %3537 = vmatprep.subr.mxu0 0.0
    %3538 = vmatpush1.msra.mxu0 0.0
    %3539 = vmatprep.subr.mxu0 0.0
    %3540 = vmatpush1.msra.mxu0 0.0
    %3541 = vmatprep.subr.mxu0 0.0
    %3542 = vmatpush1.msra.mxu0 0.0
    %3543 = vmatprep.subr.mxu0 0.0
    %3544 = vmatpush1.msra.mxu0 0.0
    %3545 = vmatprep.subr.mxu0 0.0
    %3546 = vmatpush1.msra.mxu0 0.0
    %3547 = vmatprep.subr.mxu0 0.0
    %3548 = vmatpush1.msra.mxu0 0.0
    %3549 = vmatprep.subr.mxu0 0.0
    %3550 = vmatpush1.msra.mxu0 0.0
    %3551 = vmatprep.subr.mxu0 0.0
    %3552 = vmatpush1.msra.mxu0 0.0
    %3553 = vmatprep.subr.mxu0 0.0
    %3554 = vmatpush1.msra.mxu0 0.0
    %3555 = vmatprep.subr.mxu0 0.0
    %3556 = vmatpush1.msra.mxu0 0.0
    %3557 = vmatprep.subr.mxu0 0.0
    %3558 = vmatpush1.msra.mxu0 0.0
    %3559 = vmatprep.subr.mxu0 0.0
    %3560 = vmatpush1.msra.mxu0 %v377
    %3561 = vmatprep.subr.mxu0 0.0
    %3562 = vmatpush2.msra.mxu0 0.0
    %3563 = vmatprep.subr.mxu0 0.0
    %3564 = vmatpush2.msra.mxu0 0.0
    %3565 = vmatprep.subr.mxu0 0.0
    %3566 = vmatpush2.msra.mxu0 0.0
    %3567 = vmatprep.subr.mxu0 0.0
    %3568 = vmatpush2.msra.mxu0 0.0
    %3569 = vmatprep.subr.mxu0 0.0
    %3570 = vmatpush2.msra.mxu0 0.0
    %3571 = vmatprep.subr.mxu0 0.0
    %3572 = vmatpush2.msra.mxu0 0.0
    %3573 = vmatprep.subr.mxu0 0.0
    %3574 = vmatpush2.msra.mxu0 0.0
    %3575 = vmatprep.subr.mxu0 0.0
    %3576 = vmatpush2.msra.mxu0 0.0
    %3577 = vmatprep.subr.mxu0 0.0
    %3578 = vmatpush2.msra.mxu0 0.0
    %3579 = vmatprep.subr.mxu0 0.0
    %3580 = vmatpush2.msra.mxu0 0.0
    %3581 = vmatprep.subr.mxu0 0.0
    %3582 = vmatpush2.msra.mxu0 0.0
    %3583 = vmatprep.subr.mxu0 0.0
    %3584 = vmatpush2.msra.mxu0 0.0
    %3585 = vmatprep.subr.mxu0 0.0
    %3586 = vmatpush2.msra.mxu0 0.0
    %3587 = vmatprep.subr.mxu0 0.0
    %3588 = vmatpush2.msra.mxu0 0.0
    %3589 = vmatprep.subr.mxu0 0.0
    %3590 = vmatpush2.msra.mxu0 0.0
    %3591 = vmatprep.subr.mxu0 0.0
    %3592 = vmatpush2.msra.mxu0 0.0
    %3593 = vmatprep.mubr.f32.mxu0 0.0
    %3594 = vmatmul.mubr.f32.gmra.mxu0 %v3527
    %v3595 = vpop.f32.mrf.mxu0
    %v3596 = vadd.f32 0.0, %v3595
    %v3597 = vpop.f32.mrf.mxu0
    %3598 = vdwg.mxu0
    %v3600 = vsel %vm2853, %v3177, 0
    %3602 = vmatprep.subr.mxu0 0.0
    %3603 = vmatpush1.msra.mxu0 0.0
    %3604 = vmatprep.subr.mxu0 0.0
    %3605 = vmatpush1.msra.mxu0 0.0
    %3606 = vmatprep.subr.mxu0 0.0
    %3607 = vmatpush1.msra.mxu0 0.0
    %3608 = vmatprep.subr.mxu0 0.0
    %3609 = vmatpush1.msra.mxu0 0.0
    %3610 = vmatprep.subr.mxu0 0.0
    %3611 = vmatpush1.msra.mxu0 0.0
    %3612 = vmatprep.subr.mxu0 0.0
    %3613 = vmatpush1.msra.mxu0 0.0
    %3614 = vmatprep.subr.mxu0 0.0
    %3615 = vmatpush1.msra.mxu0 0.0
    %3616 = vmatprep.subr.mxu0 0.0
    %3617 = vmatpush1.msra.mxu0 0.0
    %3618 = vmatprep.subr.mxu0 0.0
    %3619 = vmatpush1.msra.mxu0 0.0
    %3620 = vmatprep.subr.mxu0 0.0
    %3621 = vmatpush1.msra.mxu0 0.0
    %3622 = vmatprep.subr.mxu0 0.0
    %3623 = vmatpush1.msra.mxu0 0.0
    %3624 = vmatprep.subr.mxu0 0.0
    %3625 = vmatpush1.msra.mxu0 0.0
    %3626 = vmatprep.subr.mxu0 0.0
    %3627 = vmatpush1.msra.mxu0 0.0
    %3628 = vmatprep.subr.mxu0 0.0
    %3629 = vmatpush1.msra.mxu0 0.0
    %3630 = vmatprep.subr.mxu0 0.0
    %3631 = vmatpush1.msra.mxu0 0.0
    %3632 = vmatprep.subr.mxu0 0.0
    %3633 = vmatpush1.msra.mxu0 %v382
    %3634 = vmatprep.subr.mxu0 0.0
    %3635 = vmatpush2.msra.mxu0 0.0
    %3636 = vmatprep.subr.mxu0 0.0
    %3637 = vmatpush2.msra.mxu0 0.0
    %3638 = vmatprep.subr.mxu0 0.0
    %3639 = vmatpush2.msra.mxu0 0.0
    %3640 = vmatprep.subr.mxu0 0.0
    %3641 = vmatpush2.msra.mxu0 0.0
    %3642 = vmatprep.subr.mxu0 0.0
    %3643 = vmatpush2.msra.mxu0 0.0
    %3644 = vmatprep.subr.mxu0 0.0
    %3645 = vmatpush2.msra.mxu0 0.0
    %3646 = vmatprep.subr.mxu0 0.0
    %3647 = vmatpush2.msra.mxu0 0.0
    %3648 = vmatprep.subr.mxu0 0.0
    %3649 = vmatpush2.msra.mxu0 0.0
    %3650 = vmatprep.subr.mxu0 0.0
    %3651 = vmatpush2.msra.mxu0 0.0
    %3652 = vmatprep.subr.mxu0 0.0
    %3653 = vmatpush2.msra.mxu0 0.0
    %3654 = vmatprep.subr.mxu0 0.0
    %3655 = vmatpush2.msra.mxu0 0.0
    %3656 = vmatprep.subr.mxu0 0.0
    %3657 = vmatpush2.msra.mxu0 0.0
    %3658 = vmatprep.subr.mxu0 0.0
    %3659 = vmatpush2.msra.mxu0 0.0
    %3660 = vmatprep.subr.mxu0 0.0
    %3661 = vmatpush2.msra.mxu0 0.0
    %3662 = vmatprep.subr.mxu0 0.0
    %3663 = vmatpush2.msra.mxu0 0.0
    %3664 = vmatprep.subr.mxu0 0.0
    %3665 = vmatpush2.msra.mxu0 0.0
    %3666 = vmatprep.mubr.f32.mxu0 0.0
    %3667 = vmatmul.mubr.f32.gmra.mxu0 %v3600
    %v3668 = vpop.f32.mrf.mxu0
    %v3669 = vadd.f32 0.0, %v3668
    %v3670 = vpop.f32.mrf.mxu0
    %3671 = vdwg.mxu0
    %v3673 = vsel %vm2853, %v3179, 0
    %3675 = vmatprep.subr.mxu0 0.0
    %3676 = vmatpush1.msra.mxu0 0.0
    %3677 = vmatprep.subr.mxu0 0.0
    %3678 = vmatpush1.msra.mxu0 0.0
    %3679 = vmatprep.subr.mxu0 0.0
    %3680 = vmatpush1.msra.mxu0 0.0
    %3681 = vmatprep.subr.mxu0 0.0
    %3682 = vmatpush1.msra.mxu0 0.0
    %3683 = vmatprep.subr.mxu0 0.0
    %3684 = vmatpush1.msra.mxu0 0.0
    %3685 = vmatprep.subr.mxu0 0.0
    %3686 = vmatpush1.msra.mxu0 0.0
    %3687 = vmatprep.subr.mxu0 0.0
    %3688 = vmatpush1.msra.mxu0 0.0
    %3689 = vmatprep.subr.mxu0 0.0
    %3690 = vmatpush1.msra.mxu0 0.0
    %3691 = vmatprep.subr.mxu0 0.0
    %3692 = vmatpush1.msra.mxu0 0.0
    %3693 = vmatprep.subr.mxu0 0.0
    %3694 = vmatpush1.msra.mxu0 0.0
    %3695 = vmatprep.subr.mxu0 0.0
    %3696 = vmatpush1.msra.mxu0 0.0
    %3697 = vmatprep.subr.mxu0 0.0
    %3698 = vmatpush1.msra.mxu0 0.0
    %3699 = vmatprep.subr.mxu0 0.0
    %3700 = vmatpush1.msra.mxu0 0.0
    %3701 = vmatprep.subr.mxu0 0.0
    %3702 = vmatpush1.msra.mxu0 0.0
    %3703 = vmatprep.subr.mxu0 0.0
    %3704 = vmatpush1.msra.mxu0 0.0
    %3705 = vmatprep.subr.mxu0 0.0
    %3706 = vmatpush1.msra.mxu0 %v387
    %3707 = vmatprep.subr.mxu0 0.0
    %3708 = vmatpush2.msra.mxu0 0.0
    %3709 = vmatprep.subr.mxu0 0.0
    %3710 = vmatpush2.msra.mxu0 0.0
    %3711 = vmatprep.subr.mxu0 0.0
    %3712 = vmatpush2.msra.mxu0 0.0
    %3713 = vmatprep.subr.mxu0 0.0
    %3714 = vmatpush2.msra.mxu0 0.0
    %3715 = vmatprep.subr.mxu0 0.0
    %3716 = vmatpush2.msra.mxu0 0.0
    %3717 = vmatprep.subr.mxu0 0.0
    %3718 = vmatpush2.msra.mxu0 0.0
    %3719 = vmatprep.subr.mxu0 0.0
    %3720 = vmatpush2.msra.mxu0 0.0
    %3721 = vmatprep.subr.mxu0 0.0
    %3722 = vmatpush2.msra.mxu0 0.0
    %3723 = vmatprep.subr.mxu0 0.0
    %3724 = vmatpush2.msra.mxu0 0.0
    %3725 = vmatprep.subr.mxu0 0.0
    %3726 = vmatpush2.msra.mxu0 0.0
    %3727 = vmatprep.subr.mxu0 0.0
    %3728 = vmatpush2.msra.mxu0 0.0
    %3729 = vmatprep.subr.mxu0 0.0
    %3730 = vmatpush2.msra.mxu0 0.0
    %3731 = vmatprep.subr.mxu0 0.0
    %3732 = vmatpush2.msra.mxu0 0.0
    %3733 = vmatprep.subr.mxu0 0.0
    %3734 = vmatpush2.msra.mxu0 0.0
    %3735 = vmatprep.subr.mxu0 0.0
    %3736 = vmatpush2.msra.mxu0 0.0
    %3737 = vmatprep.subr.mxu0 0.0
    %3738 = vmatpush2.msra.mxu0 0.0
    %3739 = vmatprep.mubr.f32.mxu0 0.0
    %3740 = vmatmul.mubr.f32.gmra.mxu0 %v3673
    %v3741 = vpop.f32.mrf.mxu0
    %v3742 = vadd.f32 0.0, %v3741
    %v3743 = vpop.f32.mrf.mxu0
    %3744 = vdwg.mxu0
    %v3746 = vsel %vm2853, %v3181, 0
    %3748 = vmatprep.subr.mxu0 0.0
    %3749 = vmatpush1.msra.mxu0 0.0
    %3750 = vmatprep.subr.mxu0 0.0
    %3751 = vmatpush1.msra.mxu0 0.0
    %3752 = vmatprep.subr.mxu0 0.0
    %3753 = vmatpush1.msra.mxu0 0.0
    %3754 = vmatprep.subr.mxu0 0.0
    %3755 = vmatpush1.msra.mxu0 0.0
    %3756 = vmatprep.subr.mxu0 0.0
    %3757 = vmatpush1.msra.mxu0 0.0
    %3758 = vmatprep.subr.mxu0 0.0
    %3759 = vmatpush1.msra.mxu0 0.0
    %3760 = vmatprep.subr.mxu0 0.0
    %3761 = vmatpush1.msra.mxu0 0.0
    %3762 = vmatprep.subr.mxu0 0.0
    %3763 = vmatpush1.msra.mxu0 0.0
    %3764 = vmatprep.subr.mxu0 0.0
    %3765 = vmatpush1.msra.mxu0 0.0
    %3766 = vmatprep.subr.mxu0 0.0
    %3767 = vmatpush1.msra.mxu0 0.0
    %3768 = vmatprep.subr.mxu0 0.0
    %3769 = vmatpush1.msra.mxu0 0.0
    %3770 = vmatprep.subr.mxu0 0.0
    %3771 = vmatpush1.msra.mxu0 0.0
    %3772 = vmatprep.subr.mxu0 0.0
    %3773 = vmatpush1.msra.mxu0 0.0
    %3774 = vmatprep.subr.mxu0 0.0
    %3775 = vmatpush1.msra.mxu0 0.0
    %3776 = vmatprep.subr.mxu0 0.0
    %3777 = vmatpush1.msra.mxu0 0.0
    %3778 = vmatprep.subr.mxu0 0.0
    %3779 = vmatpush1.msra.mxu0 %v392
    %3780 = vmatprep.subr.mxu0 0.0
    %3781 = vmatpush2.msra.mxu0 0.0
    %3782 = vmatprep.subr.mxu0 0.0
    %3783 = vmatpush2.msra.mxu0 0.0
    %3784 = vmatprep.subr.mxu0 0.0
    %3785 = vmatpush2.msra.mxu0 0.0
    %3786 = vmatprep.subr.mxu0 0.0
    %3787 = vmatpush2.msra.mxu0 0.0
    %3788 = vmatprep.subr.mxu0 0.0
    %3789 = vmatpush2.msra.mxu0 0.0
    %3790 = vmatprep.subr.mxu0 0.0
    %3791 = vmatpush2.msra.mxu0 0.0
    %3792 = vmatprep.subr.mxu0 0.0
    %3793 = vmatpush2.msra.mxu0 0.0
    %3794 = vmatprep.subr.mxu0 0.0
    %3795 = vmatpush2.msra.mxu0 0.0
    %3796 = vmatprep.subr.mxu0 0.0
    %3797 = vmatpush2.msra.mxu0 0.0
    %3798 = vmatprep.subr.mxu0 0.0
    %3799 = vmatpush2.msra.mxu0 0.0
    %3800 = vmatprep.subr.mxu0 0.0
    %3801 = vmatpush2.msra.mxu0 0.0
    %3802 = vmatprep.subr.mxu0 0.0
    %3803 = vmatpush2.msra.mxu0 0.0
    %3804 = vmatprep.subr.mxu0 0.0
    %3805 = vmatpush2.msra.mxu0 0.0
    %3806 = vmatprep.subr.mxu0 0.0
    %3807 = vmatpush2.msra.mxu0 0.0
    %3808 = vmatprep.subr.mxu0 0.0
    %3809 = vmatpush2.msra.mxu0 0.0
    %3810 = vmatprep.subr.mxu0 0.0
    %3811 = vmatpush2.msra.mxu0 0.0
    %3812 = vmatprep.mubr.f32.mxu0 0.0
    %3813 = vmatmul.mubr.f32.gmra.mxu0 %v3746
    %v3814 = vpop.f32.mrf.mxu0
    %v3815 = vadd.f32 0.0, %v3814
    %v3816 = vpop.f32.mrf.mxu0
    %3817 = vdwg.mxu0
    %v3819 = vsel %vm2853, %v3183, 0
    %3821 = vmatprep.subr.mxu0 0.0
    %3822 = vmatpush1.msra.mxu0 0.0
    %3823 = vmatprep.subr.mxu0 0.0
    %3824 = vmatpush1.msra.mxu0 0.0
    %3825 = vmatprep.subr.mxu0 0.0
    %3826 = vmatpush1.msra.mxu0 0.0
    %3827 = vmatprep.subr.mxu0 0.0
    %3828 = vmatpush1.msra.mxu0 0.0
    %3829 = vmatprep.subr.mxu0 0.0
    %3830 = vmatpush1.msra.mxu0 0.0
    %3831 = vmatprep.subr.mxu0 0.0
    %3832 = vmatpush1.msra.mxu0 0.0
    %3833 = vmatprep.subr.mxu0 0.0
    %3834 = vmatpush1.msra.mxu0 0.0
    %3835 = vmatprep.subr.mxu0 0.0
    %3836 = vmatpush1.msra.mxu0 0.0
    %3837 = vmatprep.subr.mxu0 0.0
    %3838 = vmatpush1.msra.mxu0 0.0
    %3839 = vmatprep.subr.mxu0 0.0
    %3840 = vmatpush1.msra.mxu0 0.0
    %3841 = vmatprep.subr.mxu0 0.0
    %3842 = vmatpush1.msra.mxu0 0.0
    %3843 = vmatprep.subr.mxu0 0.0
    %3844 = vmatpush1.msra.mxu0 0.0
    %3845 = vmatprep.subr.mxu0 0.0
    %3846 = vmatpush1.msra.mxu0 0.0
    %3847 = vmatprep.subr.mxu0 0.0
    %3848 = vmatpush1.msra.mxu0 0.0
    %3849 = vmatprep.subr.mxu0 0.0
    %3850 = vmatpush1.msra.mxu0 0.0
    %3851 = vmatprep.subr.mxu0 0.0
    %3852 = vmatpush1.msra.mxu0 %v397
    %3853 = vmatprep.subr.mxu0 0.0
    %3854 = vmatpush2.msra.mxu0 0.0
    %3855 = vmatprep.subr.mxu0 0.0
    %3856 = vmatpush2.msra.mxu0 0.0
    %3857 = vmatprep.subr.mxu0 0.0
    %3858 = vmatpush2.msra.mxu0 0.0
    %3859 = vmatprep.subr.mxu0 0.0
    %3860 = vmatpush2.msra.mxu0 0.0
    %3861 = vmatprep.subr.mxu0 0.0
    %3862 = vmatpush2.msra.mxu0 0.0
    %3863 = vmatprep.subr.mxu0 0.0
    %3864 = vmatpush2.msra.mxu0 0.0
    %3865 = vmatprep.subr.mxu0 0.0
    %3866 = vmatpush2.msra.mxu0 0.0
    %3867 = vmatprep.subr.mxu0 0.0
    %3868 = vmatpush2.msra.mxu0 0.0
    %3869 = vmatprep.subr.mxu0 0.0
    %3870 = vmatpush2.msra.mxu0 0.0
    %3871 = vmatprep.subr.mxu0 0.0
    %3872 = vmatpush2.msra.mxu0 0.0
    %3873 = vmatprep.subr.mxu0 0.0
    %3874 = vmatpush2.msra.mxu0 0.0
    %3875 = vmatprep.subr.mxu0 0.0
    %3876 = vmatpush2.msra.mxu0 0.0
    %3877 = vmatprep.subr.mxu0 0.0
    %3878 = vmatpush2.msra.mxu0 0.0
    %3879 = vmatprep.subr.mxu0 0.0
    %3880 = vmatpush2.msra.mxu0 0.0
    %3881 = vmatprep.subr.mxu0 0.0
    %3882 = vmatpush2.msra.mxu0 0.0
    %3883 = vmatprep.subr.mxu0 0.0
    %3884 = vmatpush2.msra.mxu0 0.0
    %3885 = vmatprep.mubr.f32.mxu0 0.0
    %3886 = vmatmul.mubr.f32.gmra.mxu0 %v3819
    %v3887 = vpop.f32.mrf.mxu0
    %v3888 = vadd.f32 0.0, %v3887
    %v3889 = vpop.f32.mrf.mxu0
    %3890 = vdwg.mxu0
    %v3892 = vsel %vm2853, %v3185, 0
    %3894 = vmatprep.subr.mxu0 0.0
    %3895 = vmatpush1.msra.mxu0 0.0
    %3896 = vmatprep.subr.mxu0 0.0
    %3897 = vmatpush1.msra.mxu0 0.0
    %3898 = vmatprep.subr.mxu0 0.0
    %3899 = vmatpush1.msra.mxu0 0.0
    %3900 = vmatprep.subr.mxu0 0.0
    %3901 = vmatpush1.msra.mxu0 0.0
    %3902 = vmatprep.subr.mxu0 0.0
    %3903 = vmatpush1.msra.mxu0 0.0
    %3904 = vmatprep.subr.mxu0 0.0
    %3905 = vmatpush1.msra.mxu0 0.0
    %3906 = vmatprep.subr.mxu0 0.0
    %3907 = vmatpush1.msra.mxu0 0.0
    %3908 = vmatprep.subr.mxu0 0.0
    %3909 = vmatpush1.msra.mxu0 0.0
    %3910 = vmatprep.subr.mxu0 0.0
    %3911 = vmatpush1.msra.mxu0 0.0
    %3912 = vmatprep.subr.mxu0 0.0
    %3913 = vmatpush1.msra.mxu0 0.0
    %3914 = vmatprep.subr.mxu0 0.0
    %3915 = vmatpush1.msra.mxu0 0.0
    %3916 = vmatprep.subr.mxu0 0.0
    %3917 = vmatpush1.msra.mxu0 0.0
    %3918 = vmatprep.subr.mxu0 0.0
    %3919 = vmatpush1.msra.mxu0 0.0
    %3920 = vmatprep.subr.mxu0 0.0
    %3921 = vmatpush1.msra.mxu0 0.0
    %3922 = vmatprep.subr.mxu0 0.0
    %3923 = vmatpush1.msra.mxu0 0.0
    %3924 = vmatprep.subr.mxu0 0.0
    %3925 = vmatpush1.msra.mxu0 %v402
    %3926 = vmatprep.subr.mxu0 0.0
    %3927 = vmatpush2.msra.mxu0 0.0
    %3928 = vmatprep.subr.mxu0 0.0
    %3929 = vmatpush2.msra.mxu0 0.0
    %3930 = vmatprep.subr.mxu0 0.0
    %3931 = vmatpush2.msra.mxu0 0.0
    %3932 = vmatprep.subr.mxu0 0.0
    %3933 = vmatpush2.msra.mxu0 0.0
    %3934 = vmatprep.subr.mxu0 0.0
    %3935 = vmatpush2.msra.mxu0 0.0
    %3936 = vmatprep.subr.mxu0 0.0
    %3937 = vmatpush2.msra.mxu0 0.0
    %3938 = vmatprep.subr.mxu0 0.0
    %3939 = vmatpush2.msra.mxu0 0.0
    %3940 = vmatprep.subr.mxu0 0.0
    %3941 = vmatpush2.msra.mxu0 0.0
    %3942 = vmatprep.subr.mxu0 0.0
    %3943 = vmatpush2.msra.mxu0 0.0
    %3944 = vmatprep.subr.mxu0 0.0
    %3945 = vmatpush2.msra.mxu0 0.0
    %3946 = vmatprep.subr.mxu0 0.0
    %3947 = vmatpush2.msra.mxu0 0.0
    %3948 = vmatprep.subr.mxu0 0.0
    %3949 = vmatpush2.msra.mxu0 0.0
    %3950 = vmatprep.subr.mxu0 0.0
    %3951 = vmatpush2.msra.mxu0 0.0
    %3952 = vmatprep.subr.mxu0 0.0
    %3953 = vmatpush2.msra.mxu0 0.0
    %3954 = vmatprep.subr.mxu0 0.0
    %3955 = vmatpush2.msra.mxu0 0.0
    %3956 = vmatprep.subr.mxu0 0.0
    %3957 = vmatpush2.msra.mxu0 0.0
    %3958 = vmatprep.mubr.f32.mxu0 0.0
    %3959 = vmatmul.mubr.f32.gmra.mxu0 %v3892
    %v3960 = vpop.f32.mrf.mxu0
    %v3961 = vadd.f32 0.0, %v3960
    %v3962 = vpop.f32.mrf.mxu0
    %3963 = vdwg.mxu0
    %v3965 = vsel %vm2853, %v3187, 0
    %3967 = vmatprep.subr.mxu0 0.0
    %3968 = vmatpush1.msra.mxu0 0.0
    %3969 = vmatprep.subr.mxu0 0.0
    %3970 = vmatpush1.msra.mxu0 0.0
    %3971 = vmatprep.subr.mxu0 0.0
    %3972 = vmatpush1.msra.mxu0 0.0
    %3973 = vmatprep.subr.mxu0 0.0
    %3974 = vmatpush1.msra.mxu0 0.0
    %3975 = vmatprep.subr.mxu0 0.0
    %3976 = vmatpush1.msra.mxu0 0.0
    %3977 = vmatprep.subr.mxu0 0.0
    %3978 = vmatpush1.msra.mxu0 0.0
    %3979 = vmatprep.subr.mxu0 0.0
    %3980 = vmatpush1.msra.mxu0 0.0
    %3981 = vmatprep.subr.mxu0 0.0
    %3982 = vmatpush1.msra.mxu0 0.0
    %3983 = vmatprep.subr.mxu0 0.0
    %3984 = vmatpush1.msra.mxu0 0.0
    %3985 = vmatprep.subr.mxu0 0.0
    %3986 = vmatpush1.msra.mxu0 0.0
    %3987 = vmatprep.subr.mxu0 0.0
    %3988 = vmatpush1.msra.mxu0 0.0
    %3989 = vmatprep.subr.mxu0 0.0
    %3990 = vmatpush1.msra.mxu0 0.0
    %3991 = vmatprep.subr.mxu0 0.0
    %3992 = vmatpush1.msra.mxu0 0.0
    %3993 = vmatprep.subr.mxu0 0.0
    %3994 = vmatpush1.msra.mxu0 0.0
    %3995 = vmatprep.subr.mxu0 0.0
    %3996 = vmatpush1.msra.mxu0 0.0
    %3997 = vmatprep.subr.mxu0 0.0
    %3998 = vmatpush1.msra.mxu0 %v407
    %3999 = vmatprep.subr.mxu0 0.0
    %4000 = vmatpush2.msra.mxu0 0.0
    %4001 = vmatprep.subr.mxu0 0.0
    %4002 = vmatpush2.msra.mxu0 0.0
    %4003 = vmatprep.subr.mxu0 0.0
    %4004 = vmatpush2.msra.mxu0 0.0
    %4005 = vmatprep.subr.mxu0 0.0
    %4006 = vmatpush2.msra.mxu0 0.0
    %4007 = vmatprep.subr.mxu0 0.0
    %4008 = vmatpush2.msra.mxu0 0.0
    %4009 = vmatprep.subr.mxu0 0.0
    %4010 = vmatpush2.msra.mxu0 0.0
    %4011 = vmatprep.subr.mxu0 0.0
    %4012 = vmatpush2.msra.mxu0 0.0
    %4013 = vmatprep.subr.mxu0 0.0
    %4014 = vmatpush2.msra.mxu0 0.0
    %4015 = vmatprep.subr.mxu0 0.0
    %4016 = vmatpush2.msra.mxu0 0.0
    %4017 = vmatprep.subr.mxu0 0.0
    %4018 = vmatpush2.msra.mxu0 0.0
    %4019 = vmatprep.subr.mxu0 0.0
    %4020 = vmatpush2.msra.mxu0 0.0
    %4021 = vmatprep.subr.mxu0 0.0
    %4022 = vmatpush2.msra.mxu0 0.0
    %4023 = vmatprep.subr.mxu0 0.0
    %4024 = vmatpush2.msra.mxu0 0.0
    %4025 = vmatprep.subr.mxu0 0.0
    %4026 = vmatpush2.msra.mxu0 0.0
    %4027 = vmatprep.subr.mxu0 0.0
    %4028 = vmatpush2.msra.mxu0 0.0
    %4029 = vmatprep.subr.mxu0 0.0
    %4030 = vmatpush2.msra.mxu0 0.0
    %4031 = vmatprep.mubr.f32.mxu0 0.0
    %4032 = vmatmul.mubr.f32.gmra.mxu0 %v3965
    %v4033 = vpop.f32.mrf.mxu0
    %v4034 = vadd.f32 0.0, %v4033
    %v4035 = vpop.f32.mrf.mxu0
    %4036 = vdwg.mxu0
    %v4038 = vsel %vm2853, %v3189, 0
    %4040 = vmatprep.subr.mxu0 0.0
    %4041 = vmatpush1.msra.mxu0 0.0
    %4042 = vmatprep.subr.mxu0 0.0
    %4043 = vmatpush1.msra.mxu0 0.0
    %4044 = vmatprep.subr.mxu0 0.0
    %4045 = vmatpush1.msra.mxu0 0.0
    %4046 = vmatprep.subr.mxu0 0.0
    %4047 = vmatpush1.msra.mxu0 0.0
    %4048 = vmatprep.subr.mxu0 0.0
    %4049 = vmatpush1.msra.mxu0 0.0
    %4050 = vmatprep.subr.mxu0 0.0
    %4051 = vmatpush1.msra.mxu0 0.0
    %4052 = vmatprep.subr.mxu0 0.0
    %4053 = vmatpush1.msra.mxu0 0.0
    %4054 = vmatprep.subr.mxu0 0.0
    %4055 = vmatpush1.msra.mxu0 0.0
    %4056 = vmatprep.subr.mxu0 0.0
    %4057 = vmatpush1.msra.mxu0 0.0
    %4058 = vmatprep.subr.mxu0 0.0
    %4059 = vmatpush1.msra.mxu0 0.0
    %4060 = vmatprep.subr.mxu0 0.0
    %4061 = vmatpush1.msra.mxu0 0.0
    %4062 = vmatprep.subr.mxu0 0.0
    %4063 = vmatpush1.msra.mxu0 0.0
    %4064 = vmatprep.subr.mxu0 0.0
    %4065 = vmatpush1.msra.mxu0 0.0
    %4066 = vmatprep.subr.mxu0 0.0
    %4067 = vmatpush1.msra.mxu0 0.0
    %4068 = vmatprep.subr.mxu0 0.0
    %4069 = vmatpush1.msra.mxu0 0.0
    %4070 = vmatprep.subr.mxu0 0.0
    %4071 = vmatpush1.msra.mxu0 %v412
    %4072 = vmatprep.subr.mxu0 0.0
    %4073 = vmatpush2.msra.mxu0 0.0
    %4074 = vmatprep.subr.mxu0 0.0
    %4075 = vmatpush2.msra.mxu0 0.0
    %4076 = vmatprep.subr.mxu0 0.0
    %4077 = vmatpush2.msra.mxu0 0.0
    %4078 = vmatprep.subr.mxu0 0.0
    %4079 = vmatpush2.msra.mxu0 0.0
    %4080 = vmatprep.subr.mxu0 0.0
    %4081 = vmatpush2.msra.mxu0 0.0
    %4082 = vmatprep.subr.mxu0 0.0
    %4083 = vmatpush2.msra.mxu0 0.0
    %4084 = vmatprep.subr.mxu0 0.0
    %4085 = vmatpush2.msra.mxu0 0.0
    %4086 = vmatprep.subr.mxu0 0.0
    %4087 = vmatpush2.msra.mxu0 0.0
    %4088 = vmatprep.subr.mxu0 0.0
    %4089 = vmatpush2.msra.mxu0 0.0
    %4090 = vmatprep.subr.mxu0 0.0
    %4091 = vmatpush2.msra.mxu0 0.0
    %4092 = vmatprep.subr.mxu0 0.0
    %4093 = vmatpush2.msra.mxu0 0.0
    %4094 = vmatprep.subr.mxu0 0.0
    %4095 = vmatpush2.msra.mxu0 0.0
    %4096 = vmatprep.subr.mxu0 0.0
    %4097 = vmatpush2.msra.mxu0 0.0
    %4098 = vmatprep.subr.mxu0 0.0
    %4099 = vmatpush2.msra.mxu0 0.0
    %4100 = vmatprep.subr.mxu0 0.0
    %4101 = vmatpush2.msra.mxu0 0.0
    %4102 = vmatprep.subr.mxu0 0.0
    %4103 = vmatpush2.msra.mxu0 0.0
    %4104 = vmatprep.mubr.f32.mxu0 0.0
    %4105 = vmatmul.mubr.f32.gmra.mxu0 %v4038
    %v4106 = vpop.f32.mrf.mxu0
    %v4107 = vadd.f32 0.0, %v4106
    %v4108 = vpop.f32.mrf.mxu0
    %4109 = vdwg.mxu0
    %v4111 = vsel %vm2853, %v3191, 0
    %4113 = vmatprep.subr.mxu0 0.0
    %4114 = vmatpush1.msra.mxu0 0.0
    %4115 = vmatprep.subr.mxu0 0.0
    %4116 = vmatpush1.msra.mxu0 0.0
    %4117 = vmatprep.subr.mxu0 0.0
    %4118 = vmatpush1.msra.mxu0 0.0
    %4119 = vmatprep.subr.mxu0 0.0
    %4120 = vmatpush1.msra.mxu0 0.0
    %4121 = vmatprep.subr.mxu0 0.0
    %4122 = vmatpush1.msra.mxu0 0.0
    %4123 = vmatprep.subr.mxu0 0.0
    %4124 = vmatpush1.msra.mxu0 0.0
    %4125 = vmatprep.subr.mxu0 0.0
    %4126 = vmatpush1.msra.mxu0 0.0
    %4127 = vmatprep.subr.mxu0 0.0
    %4128 = vmatpush1.msra.mxu0 0.0
    %4129 = vmatprep.subr.mxu0 0.0
    %4130 = vmatpush1.msra.mxu0 0.0
    %4131 = vmatprep.subr.mxu0 0.0
    %4132 = vmatpush1.msra.mxu0 0.0
    %4133 = vmatprep.subr.mxu0 0.0
    %4134 = vmatpush1.msra.mxu0 0.0
    %4135 = vmatprep.subr.mxu0 0.0
    %4136 = vmatpush1.msra.mxu0 0.0
    %4137 = vmatprep.subr.mxu0 0.0
    %4138 = vmatpush1.msra.mxu0 0.0
    %4139 = vmatprep.subr.mxu0 0.0
    %4140 = vmatpush1.msra.mxu0 0.0
    %4141 = vmatprep.subr.mxu0 0.0
    %4142 = vmatpush1.msra.mxu0 0.0
    %4143 = vmatprep.subr.mxu0 0.0
    %4144 = vmatpush1.msra.mxu0 %v377
    %4145 = vmatprep.subr.mxu0 0.0
    %4146 = vmatpush2.msra.mxu0 0.0
    %4147 = vmatprep.subr.mxu0 0.0
    %4148 = vmatpush2.msra.mxu0 0.0
    %4149 = vmatprep.subr.mxu0 0.0
    %4150 = vmatpush2.msra.mxu0 0.0
    %4151 = vmatprep.subr.mxu0 0.0
    %4152 = vmatpush2.msra.mxu0 0.0
    %4153 = vmatprep.subr.mxu0 0.0
    %4154 = vmatpush2.msra.mxu0 0.0
    %4155 = vmatprep.subr.mxu0 0.0
    %4156 = vmatpush2.msra.mxu0 0.0
    %4157 = vmatprep.subr.mxu0 0.0
    %4158 = vmatpush2.msra.mxu0 0.0
    %4159 = vmatprep.subr.mxu0 0.0
    %4160 = vmatpush2.msra.mxu0 0.0
    %4161 = vmatprep.subr.mxu0 0.0
    %4162 = vmatpush2.msra.mxu0 0.0
    %4163 = vmatprep.subr.mxu0 0.0
    %4164 = vmatpush2.msra.mxu0 0.0
    %4165 = vmatprep.subr.mxu0 0.0
    %4166 = vmatpush2.msra.mxu0 0.0
    %4167 = vmatprep.subr.mxu0 0.0
    %4168 = vmatpush2.msra.mxu0 0.0
    %4169 = vmatprep.subr.mxu0 0.0
    %4170 = vmatpush2.msra.mxu0 0.0
    %4171 = vmatprep.subr.mxu0 0.0
    %4172 = vmatpush2.msra.mxu0 0.0
    %4173 = vmatprep.subr.mxu0 0.0
    %4174 = vmatpush2.msra.mxu0 0.0
    %4175 = vmatprep.subr.mxu0 0.0
    %4176 = vmatpush2.msra.mxu0 0.0
    %4177 = vmatprep.mubr.f32.mxu0 0.0
    %4178 = vmatmul.mubr.f32.gmra.mxu0 %v4111
    %v4179 = vpop.f32.mrf.mxu0
    %v4180 = vadd.f32 0.0, %v4179
    %v4181 = vpop.f32.mrf.mxu0
    %4182 = vdwg.mxu0
    %v4184 = vsel %vm2853, %v3193, 0
    %4186 = vmatprep.subr.mxu0 0.0
    %4187 = vmatpush1.msra.mxu0 0.0
    %4188 = vmatprep.subr.mxu0 0.0
    %4189 = vmatpush1.msra.mxu0 0.0
    %4190 = vmatprep.subr.mxu0 0.0
    %4191 = vmatpush1.msra.mxu0 0.0
    %4192 = vmatprep.subr.mxu0 0.0
    %4193 = vmatpush1.msra.mxu0 0.0
    %4194 = vmatprep.subr.mxu0 0.0
    %4195 = vmatpush1.msra.mxu0 0.0
    %4196 = vmatprep.subr.mxu0 0.0
    %4197 = vmatpush1.msra.mxu0 0.0
    %4198 = vmatprep.subr.mxu0 0.0
    %4199 = vmatpush1.msra.mxu0 0.0
    %4200 = vmatprep.subr.mxu0 0.0
    %4201 = vmatpush1.msra.mxu0 0.0
    %4202 = vmatprep.subr.mxu0 0.0
    %4203 = vmatpush1.msra.mxu0 0.0
    %4204 = vmatprep.subr.mxu0 0.0
    %4205 = vmatpush1.msra.mxu0 0.0
    %4206 = vmatprep.subr.mxu0 0.0
    %4207 = vmatpush1.msra.mxu0 0.0
    %4208 = vmatprep.subr.mxu0 0.0
    %4209 = vmatpush1.msra.mxu0 0.0
    %4210 = vmatprep.subr.mxu0 0.0
    %4211 = vmatpush1.msra.mxu0 0.0
    %4212 = vmatprep.subr.mxu0 0.0
    %4213 = vmatpush1.msra.mxu0 0.0
    %4214 = vmatprep.subr.mxu0 0.0
    %4215 = vmatpush1.msra.mxu0 0.0
    %4216 = vmatprep.subr.mxu0 0.0
    %4217 = vmatpush1.msra.mxu0 %v382
    %4218 = vmatprep.subr.mxu0 0.0
    %4219 = vmatpush2.msra.mxu0 0.0
    %4220 = vmatprep.subr.mxu0 0.0
    %4221 = vmatpush2.msra.mxu0 0.0
    %4222 = vmatprep.subr.mxu0 0.0
    %4223 = vmatpush2.msra.mxu0 0.0
    %4224 = vmatprep.subr.mxu0 0.0
    %4225 = vmatpush2.msra.mxu0 0.0
    %4226 = vmatprep.subr.mxu0 0.0
    %4227 = vmatpush2.msra.mxu0 0.0
    %4228 = vmatprep.subr.mxu0 0.0
    %4229 = vmatpush2.msra.mxu0 0.0
    %4230 = vmatprep.subr.mxu0 0.0
    %4231 = vmatpush2.msra.mxu0 0.0
    %4232 = vmatprep.subr.mxu0 0.0
    %4233 = vmatpush2.msra.mxu0 0.0
    %4234 = vmatprep.subr.mxu0 0.0
    %4235 = vmatpush2.msra.mxu0 0.0
    %4236 = vmatprep.subr.mxu0 0.0
    %4237 = vmatpush2.msra.mxu0 0.0
    %4238 = vmatprep.subr.mxu0 0.0
    %4239 = vmatpush2.msra.mxu0 0.0
    %4240 = vmatprep.subr.mxu0 0.0
    %4241 = vmatpush2.msra.mxu0 0.0
    %4242 = vmatprep.subr.mxu0 0.0
    %4243 = vmatpush2.msra.mxu0 0.0
    %4244 = vmatprep.subr.mxu0 0.0
    %4245 = vmatpush2.msra.mxu0 0.0
    %4246 = vmatprep.subr.mxu0 0.0
    %4247 = vmatpush2.msra.mxu0 0.0
    %4248 = vmatprep.subr.mxu0 0.0
    %4249 = vmatpush2.msra.mxu0 0.0
    %4250 = vmatprep.mubr.f32.mxu0 0.0
    %4251 = vmatmul.mubr.f32.gmra.mxu0 %v4184
    %v4252 = vpop.f32.mrf.mxu0
    %v4253 = vadd.f32 0.0, %v4252
    %v4254 = vpop.f32.mrf.mxu0
    %4255 = vdwg.mxu0
    %v4257 = vsel %vm2853, %v3195, 0
    %4259 = vmatprep.subr.mxu0 0.0
    %4260 = vmatpush1.msra.mxu0 0.0
    %4261 = vmatprep.subr.mxu0 0.0
    %4262 = vmatpush1.msra.mxu0 0.0
    %4263 = vmatprep.subr.mxu0 0.0
    %4264 = vmatpush1.msra.mxu0 0.0
    %4265 = vmatprep.subr.mxu0 0.0
    %4266 = vmatpush1.msra.mxu0 0.0
    %4267 = vmatprep.subr.mxu0 0.0
    %4268 = vmatpush1.msra.mxu0 0.0
    %4269 = vmatprep.subr.mxu0 0.0
    %4270 = vmatpush1.msra.mxu0 0.0
    %4271 = vmatprep.subr.mxu0 0.0
    %4272 = vmatpush1.msra.mxu0 0.0
    %4273 = vmatprep.subr.mxu0 0.0
    %4274 = vmatpush1.msra.mxu0 0.0
    %4275 = vmatprep.subr.mxu0 0.0
    %4276 = vmatpush1.msra.mxu0 0.0
    %4277 = vmatprep.subr.mxu0 0.0
    %4278 = vmatpush1.msra.mxu0 0.0
    %4279 = vmatprep.subr.mxu0 0.0
    %4280 = vmatpush1.msra.mxu0 0.0
    %4281 = vmatprep.subr.mxu0 0.0
    %4282 = vmatpush1.msra.mxu0 0.0
    %4283 = vmatprep.subr.mxu0 0.0
    %4284 = vmatpush1.msra.mxu0 0.0
    %4285 = vmatprep.subr.mxu0 0.0
    %4286 = vmatpush1.msra.mxu0 0.0
    %4287 = vmatprep.subr.mxu0 0.0
    %4288 = vmatpush1.msra.mxu0 0.0
    %4289 = vmatprep.subr.mxu0 0.0
    %4290 = vmatpush1.msra.mxu0 %v387
    %4291 = vmatprep.subr.mxu0 0.0
    %4292 = vmatpush2.msra.mxu0 0.0
    %4293 = vmatprep.subr.mxu0 0.0
    %4294 = vmatpush2.msra.mxu0 0.0
    %4295 = vmatprep.subr.mxu0 0.0
    %4296 = vmatpush2.msra.mxu0 0.0
    %4297 = vmatprep.subr.mxu0 0.0
    %4298 = vmatpush2.msra.mxu0 0.0
    %4299 = vmatprep.subr.mxu0 0.0
    %4300 = vmatpush2.msra.mxu0 0.0
    %4301 = vmatprep.subr.mxu0 0.0
    %4302 = vmatpush2.msra.mxu0 0.0
    %4303 = vmatprep.subr.mxu0 0.0
    %4304 = vmatpush2.msra.mxu0 0.0
    %4305 = vmatprep.subr.mxu0 0.0
    %4306 = vmatpush2.msra.mxu0 0.0
    %4307 = vmatprep.subr.mxu0 0.0
    %4308 = vmatpush2.msra.mxu0 0.0
    %4309 = vmatprep.subr.mxu0 0.0
    %4310 = vmatpush2.msra.mxu0 0.0
    %4311 = vmatprep.subr.mxu0 0.0
    %4312 = vmatpush2.msra.mxu0 0.0
    %4313 = vmatprep.subr.mxu0 0.0
    %4314 = vmatpush2.msra.mxu0 0.0
    %4315 = vmatprep.subr.mxu0 0.0
    %4316 = vmatpush2.msra.mxu0 0.0
    %4317 = vmatprep.subr.mxu0 0.0
    %4318 = vmatpush2.msra.mxu0 0.0
    %4319 = vmatprep.subr.mxu0 0.0
    %4320 = vmatpush2.msra.mxu0 0.0
    %4321 = vmatprep.subr.mxu0 0.0
    %4322 = vmatpush2.msra.mxu0 0.0
    %4323 = vmatprep.mubr.f32.mxu0 0.0
    %4324 = vmatmul.mubr.f32.gmra.mxu0 %v4257
    %v4325 = vpop.f32.mrf.mxu0
    %v4326 = vadd.f32 0.0, %v4325
    %v4327 = vpop.f32.mrf.mxu0
    %4328 = vdwg.mxu0
    %v4330 = vsel %vm2853, %v3197, 0
    %4332 = vmatprep.subr.mxu0 0.0
    %4333 = vmatpush1.msra.mxu0 0.0
    %4334 = vmatprep.subr.mxu0 0.0
    %4335 = vmatpush1.msra.mxu0 0.0
    %4336 = vmatprep.subr.mxu0 0.0
    %4337 = vmatpush1.msra.mxu0 0.0
    %4338 = vmatprep.subr.mxu0 0.0
    %4339 = vmatpush1.msra.mxu0 0.0
    %4340 = vmatprep.subr.mxu0 0.0
    %4341 = vmatpush1.msra.mxu0 0.0
    %4342 = vmatprep.subr.mxu0 0.0
    %4343 = vmatpush1.msra.mxu0 0.0
    %4344 = vmatprep.subr.mxu0 0.0
    %4345 = vmatpush1.msra.mxu0 0.0
    %4346 = vmatprep.subr.mxu0 0.0
    %4347 = vmatpush1.msra.mxu0 0.0
    %4348 = vmatprep.subr.mxu0 0.0
    %4349 = vmatpush1.msra.mxu0 0.0
    %4350 = vmatprep.subr.mxu0 0.0
    %4351 = vmatpush1.msra.mxu0 0.0
    %4352 = vmatprep.subr.mxu0 0.0
    %4353 = vmatpush1.msra.mxu0 0.0
    %4354 = vmatprep.subr.mxu0 0.0
    %4355 = vmatpush1.msra.mxu0 0.0
    %4356 = vmatprep.subr.mxu0 0.0
    %4357 = vmatpush1.msra.mxu0 0.0
    %4358 = vmatprep.subr.mxu0 0.0
    %4359 = vmatpush1.msra.mxu0 0.0
    %4360 = vmatprep.subr.mxu0 0.0
    %4361 = vmatpush1.msra.mxu0 0.0
    %4362 = vmatprep.subr.mxu0 0.0
    %4363 = vmatpush1.msra.mxu0 %v392
    %4364 = vmatprep.subr.mxu0 0.0
    %4365 = vmatpush2.msra.mxu0 0.0
    %4366 = vmatprep.subr.mxu0 0.0
    %4367 = vmatpush2.msra.mxu0 0.0
    %4368 = vmatprep.subr.mxu0 0.0
    %4369 = vmatpush2.msra.mxu0 0.0
    %4370 = vmatprep.subr.mxu0 0.0
    %4371 = vmatpush2.msra.mxu0 0.0
    %4372 = vmatprep.subr.mxu0 0.0
    %4373 = vmatpush2.msra.mxu0 0.0
    %4374 = vmatprep.subr.mxu0 0.0
    %4375 = vmatpush2.msra.mxu0 0.0
    %4376 = vmatprep.subr.mxu0 0.0
    %4377 = vmatpush2.msra.mxu0 0.0
    %4378 = vmatprep.subr.mxu0 0.0
    %4379 = vmatpush2.msra.mxu0 0.0
    %4380 = vmatprep.subr.mxu0 0.0
    %4381 = vmatpush2.msra.mxu0 0.0
    %4382 = vmatprep.subr.mxu0 0.0
    %4383 = vmatpush2.msra.mxu0 0.0
    %4384 = vmatprep.subr.mxu0 0.0
    %4385 = vmatpush2.msra.mxu0 0.0
    %4386 = vmatprep.subr.mxu0 0.0
    %4387 = vmatpush2.msra.mxu0 0.0
    %4388 = vmatprep.subr.mxu0 0.0
    %4389 = vmatpush2.msra.mxu0 0.0
    %4390 = vmatprep.subr.mxu0 0.0
    %4391 = vmatpush2.msra.mxu0 0.0
    %4392 = vmatprep.subr.mxu0 0.0
    %4393 = vmatpush2.msra.mxu0 0.0
    %4394 = vmatprep.subr.mxu0 0.0
    %4395 = vmatpush2.msra.mxu0 0.0
    %4396 = vmatprep.mubr.f32.mxu0 0.0
    %4397 = vmatmul.mubr.f32.gmra.mxu0 %v4330
    %v4398 = vpop.f32.mrf.mxu0
    %v4399 = vadd.f32 0.0, %v4398
    %v4400 = vpop.f32.mrf.mxu0
    %4401 = vdwg.mxu0
    %v4403 = vsel %vm2853, %v3199, 0
    %4405 = vmatprep.subr.mxu0 0.0
    %4406 = vmatpush1.msra.mxu0 0.0
    %4407 = vmatprep.subr.mxu0 0.0
    %4408 = vmatpush1.msra.mxu0 0.0
    %4409 = vmatprep.subr.mxu0 0.0
    %4410 = vmatpush1.msra.mxu0 0.0
    %4411 = vmatprep.subr.mxu0 0.0
    %4412 = vmatpush1.msra.mxu0 0.0
    %4413 = vmatprep.subr.mxu0 0.0
    %4414 = vmatpush1.msra.mxu0 0.0
    %4415 = vmatprep.subr.mxu0 0.0
    %4416 = vmatpush1.msra.mxu0 0.0
    %4417 = vmatprep.subr.mxu0 0.0
    %4418 = vmatpush1.msra.mxu0 0.0
    %4419 = vmatprep.subr.mxu0 0.0
    %4420 = vmatpush1.msra.mxu0 0.0
    %4421 = vmatprep.subr.mxu0 0.0
    %4422 = vmatpush1.msra.mxu0 0.0
    %4423 = vmatprep.subr.mxu0 0.0
    %4424 = vmatpush1.msra.mxu0 0.0
    %4425 = vmatprep.subr.mxu0 0.0
    %4426 = vmatpush1.msra.mxu0 0.0
    %4427 = vmatprep.subr.mxu0 0.0
    %4428 = vmatpush1.msra.mxu0 0.0
    %4429 = vmatprep.subr.mxu0 0.0
    %4430 = vmatpush1.msra.mxu0 0.0
    %4431 = vmatprep.subr.mxu0 0.0
    %4432 = vmatpush1.msra.mxu0 0.0
    %4433 = vmatprep.subr.mxu0 0.0
    %4434 = vmatpush1.msra.mxu0 0.0
    %4435 = vmatprep.subr.mxu0 0.0
    %4436 = vmatpush1.msra.mxu0 %v397
    %4437 = vmatprep.subr.mxu0 0.0
    %4438 = vmatpush2.msra.mxu0 0.0
    %4439 = vmatprep.subr.mxu0 0.0
    %4440 = vmatpush2.msra.mxu0 0.0
    %4441 = vmatprep.subr.mxu0 0.0
    %4442 = vmatpush2.msra.mxu0 0.0
    %4443 = vmatprep.subr.mxu0 0.0
    %4444 = vmatpush2.msra.mxu0 0.0
    %4445 = vmatprep.subr.mxu0 0.0
    %4446 = vmatpush2.msra.mxu0 0.0
    %4447 = vmatprep.subr.mxu0 0.0
    %4448 = vmatpush2.msra.mxu0 0.0
    %4449 = vmatprep.subr.mxu0 0.0
    %4450 = vmatpush2.msra.mxu0 0.0
    %4451 = vmatprep.subr.mxu0 0.0
    %4452 = vmatpush2.msra.mxu0 0.0
    %4453 = vmatprep.subr.mxu0 0.0
    %4454 = vmatpush2.msra.mxu0 0.0
    %4455 = vmatprep.subr.mxu0 0.0
    %4456 = vmatpush2.msra.mxu0 0.0
    %4457 = vmatprep.subr.mxu0 0.0
    %4458 = vmatpush2.msra.mxu0 0.0
    %4459 = vmatprep.subr.mxu0 0.0
    %4460 = vmatpush2.msra.mxu0 0.0
    %4461 = vmatprep.subr.mxu0 0.0
    %4462 = vmatpush2.msra.mxu0 0.0
    %4463 = vmatprep.subr.mxu0 0.0
    %4464 = vmatpush2.msra.mxu0 0.0
    %4465 = vmatprep.subr.mxu0 0.0
    %4466 = vmatpush2.msra.mxu0 0.0
    %4467 = vmatprep.subr.mxu0 0.0
    %4468 = vmatpush2.msra.mxu0 0.0
    %4469 = vmatprep.mubr.f32.mxu0 0.0
    %4470 = vmatmul.mubr.f32.gmra.mxu0 %v4403
    %v4471 = vpop.f32.mrf.mxu0
    %v4472 = vadd.f32 0.0, %v4471
    %v4473 = vpop.f32.mrf.mxu0
    %4474 = vdwg.mxu0
    %v4476 = vsel %vm2853, %v3201, 0
    %4478 = vmatprep.subr.mxu0 0.0
    %4479 = vmatpush1.msra.mxu0 0.0
    %4480 = vmatprep.subr.mxu0 0.0
    %4481 = vmatpush1.msra.mxu0 0.0
    %4482 = vmatprep.subr.mxu0 0.0
    %4483 = vmatpush1.msra.mxu0 0.0
    %4484 = vmatprep.subr.mxu0 0.0
    %4485 = vmatpush1.msra.mxu0 0.0
    %4486 = vmatprep.subr.mxu0 0.0
    %4487 = vmatpush1.msra.mxu0 0.0
    %4488 = vmatprep.subr.mxu0 0.0
    %4489 = vmatpush1.msra.mxu0 0.0
    %4490 = vmatprep.subr.mxu0 0.0
    %4491 = vmatpush1.msra.mxu0 0.0
    %4492 = vmatprep.subr.mxu0 0.0
    %4493 = vmatpush1.msra.mxu0 0.0
    %4494 = vmatprep.subr.mxu0 0.0
    %4495 = vmatpush1.msra.mxu0 0.0
    %4496 = vmatprep.subr.mxu0 0.0
    %4497 = vmatpush1.msra.mxu0 0.0
    %4498 = vmatprep.subr.mxu0 0.0
    %4499 = vmatpush1.msra.mxu0 0.0
    %4500 = vmatprep.subr.mxu0 0.0
    %4501 = vmatpush1.msra.mxu0 0.0
    %4502 = vmatprep.subr.mxu0 0.0
    %4503 = vmatpush1.msra.mxu0 0.0
    %4504 = vmatprep.subr.mxu0 0.0
    %4505 = vmatpush1.msra.mxu0 0.0
    %4506 = vmatprep.subr.mxu0 0.0
    %4507 = vmatpush1.msra.mxu0 0.0
    %4508 = vmatprep.subr.mxu0 0.0
    %4509 = vmatpush1.msra.mxu0 %v402
    %4510 = vmatprep.subr.mxu0 0.0
    %4511 = vmatpush2.msra.mxu0 0.0
    %4512 = vmatprep.subr.mxu0 0.0
    %4513 = vmatpush2.msra.mxu0 0.0
    %4514 = vmatprep.subr.mxu0 0.0
    %4515 = vmatpush2.msra.mxu0 0.0
    %4516 = vmatprep.subr.mxu0 0.0
    %4517 = vmatpush2.msra.mxu0 0.0
    %4518 = vmatprep.subr.mxu0 0.0
    %4519 = vmatpush2.msra.mxu0 0.0
    %4520 = vmatprep.subr.mxu0 0.0
    %4521 = vmatpush2.msra.mxu0 0.0
    %4522 = vmatprep.subr.mxu0 0.0
    %4523 = vmatpush2.msra.mxu0 0.0
    %4524 = vmatprep.subr.mxu0 0.0
    %4525 = vmatpush2.msra.mxu0 0.0
    %4526 = vmatprep.subr.mxu0 0.0
    %4527 = vmatpush2.msra.mxu0 0.0
    %4528 = vmatprep.subr.mxu0 0.0
    %4529 = vmatpush2.msra.mxu0 0.0
    %4530 = vmatprep.subr.mxu0 0.0
    %4531 = vmatpush2.msra.mxu0 0.0
    %4532 = vmatprep.subr.mxu0 0.0
    %4533 = vmatpush2.msra.mxu0 0.0
    %4534 = vmatprep.subr.mxu0 0.0
    %4535 = vmatpush2.msra.mxu0 0.0
    %4536 = vmatprep.subr.mxu0 0.0
    %4537 = vmatpush2.msra.mxu0 0.0
    %4538 = vmatprep.subr.mxu0 0.0
    %4539 = vmatpush2.msra.mxu0 0.0
    %4540 = vmatprep.subr.mxu0 0.0
    %4541 = vmatpush2.msra.mxu0 0.0
    %4542 = vmatprep.mubr.f32.mxu0 0.0
    %4543 = vmatmul.mubr.f32.gmra.mxu0 %v4476
    %v4544 = vpop.f32.mrf.mxu0
    %v4545 = vadd.f32 0.0, %v4544
    %v4546 = vpop.f32.mrf.mxu0
    %4547 = vdwg.mxu0
    %v4549 = vsel %vm2853, %v3203, 0
    %4551 = vmatprep.subr.mxu0 0.0
    %4552 = vmatpush1.msra.mxu0 0.0
    %4553 = vmatprep.subr.mxu0 0.0
    %4554 = vmatpush1.msra.mxu0 0.0
    %4555 = vmatprep.subr.mxu0 0.0
    %4556 = vmatpush1.msra.mxu0 0.0
    %4557 = vmatprep.subr.mxu0 0.0
    %4558 = vmatpush1.msra.mxu0 0.0
    %4559 = vmatprep.subr.mxu0 0.0
    %4560 = vmatpush1.msra.mxu0 0.0
    %4561 = vmatprep.subr.mxu0 0.0
    %4562 = vmatpush1.msra.mxu0 0.0
    %4563 = vmatprep.subr.mxu0 0.0
    %4564 = vmatpush1.msra.mxu0 0.0
    %4565 = vmatprep.subr.mxu0 0.0
    %4566 = vmatpush1.msra.mxu0 0.0
    %4567 = vmatprep.subr.mxu0 0.0
    %4568 = vmatpush1.msra.mxu0 0.0
    %4569 = vmatprep.subr.mxu0 0.0
    %4570 = vmatpush1.msra.mxu0 0.0
    %4571 = vmatprep.subr.mxu0 0.0
    %4572 = vmatpush1.msra.mxu0 0.0
    %4573 = vmatprep.subr.mxu0 0.0
    %4574 = vmatpush1.msra.mxu0 0.0
    %4575 = vmatprep.subr.mxu0 0.0
    %4576 = vmatpush1.msra.mxu0 0.0
    %4577 = vmatprep.subr.mxu0 0.0
    %4578 = vmatpush1.msra.mxu0 0.0
    %4579 = vmatprep.subr.mxu0 0.0
    %4580 = vmatpush1.msra.mxu0 0.0
    %4581 = vmatprep.subr.mxu0 0.0
    %4582 = vmatpush1.msra.mxu0 %v407
    %4583 = vmatprep.subr.mxu0 0.0
    %4584 = vmatpush2.msra.mxu0 0.0
    %4585 = vmatprep.subr.mxu0 0.0
    %4586 = vmatpush2.msra.mxu0 0.0
    %4587 = vmatprep.subr.mxu0 0.0
    %4588 = vmatpush2.msra.mxu0 0.0
    %4589 = vmatprep.subr.mxu0 0.0
    %4590 = vmatpush2.msra.mxu0 0.0
    %4591 = vmatprep.subr.mxu0 0.0
    %4592 = vmatpush2.msra.mxu0 0.0
    %4593 = vmatprep.subr.mxu0 0.0
    %4594 = vmatpush2.msra.mxu0 0.0
    %4595 = vmatprep.subr.mxu0 0.0
    %4596 = vmatpush2.msra.mxu0 0.0
    %4597 = vmatprep.subr.mxu0 0.0
    %4598 = vmatpush2.msra.mxu0 0.0
    %4599 = vmatprep.subr.mxu0 0.0
    %4600 = vmatpush2.msra.mxu0 0.0
    %4601 = vmatprep.subr.mxu0 0.0
    %4602 = vmatpush2.msra.mxu0 0.0
    %4603 = vmatprep.subr.mxu0 0.0
    %4604 = vmatpush2.msra.mxu0 0.0
    %4605 = vmatprep.subr.mxu0 0.0
    %4606 = vmatpush2.msra.mxu0 0.0
    %4607 = vmatprep.subr.mxu0 0.0
    %4608 = vmatpush2.msra.mxu0 0.0
    %4609 = vmatprep.subr.mxu0 0.0
    %4610 = vmatpush2.msra.mxu0 0.0
    %4611 = vmatprep.subr.mxu0 0.0
    %4612 = vmatpush2.msra.mxu0 0.0
    %4613 = vmatprep.subr.mxu0 0.0
    %4614 = vmatpush2.msra.mxu0 0.0
    %4615 = vmatprep.mubr.f32.mxu0 0.0
    %4616 = vmatmul.mubr.f32.gmra.mxu0 %v4549
    %v4617 = vpop.f32.mrf.mxu0
    %v4618 = vadd.f32 0.0, %v4617
    %v4619 = vpop.f32.mrf.mxu0
    %4620 = vdwg.mxu0
    %v4622 = vsel %vm2853, %v3205, 0
    %4624 = vmatprep.subr.mxu0 0.0
    %4625 = vmatpush1.msra.mxu0 0.0
    %4626 = vmatprep.subr.mxu0 0.0
    %4627 = vmatpush1.msra.mxu0 0.0
    %4628 = vmatprep.subr.mxu0 0.0
    %4629 = vmatpush1.msra.mxu0 0.0
    %4630 = vmatprep.subr.mxu0 0.0
    %4631 = vmatpush1.msra.mxu0 0.0
    %4632 = vmatprep.subr.mxu0 0.0
    %4633 = vmatpush1.msra.mxu0 0.0
    %4634 = vmatprep.subr.mxu0 0.0
    %4635 = vmatpush1.msra.mxu0 0.0
    %4636 = vmatprep.subr.mxu0 0.0
    %4637 = vmatpush1.msra.mxu0 0.0
    %4638 = vmatprep.subr.mxu0 0.0
    %4639 = vmatpush1.msra.mxu0 0.0
    %4640 = vmatprep.subr.mxu0 0.0
    %4641 = vmatpush1.msra.mxu0 0.0
    %4642 = vmatprep.subr.mxu0 0.0
    %4643 = vmatpush1.msra.mxu0 0.0
    %4644 = vmatprep.subr.mxu0 0.0
    %4645 = vmatpush1.msra.mxu0 0.0
    %4646 = vmatprep.subr.mxu0 0.0
    %4647 = vmatpush1.msra.mxu0 0.0
    %4648 = vmatprep.subr.mxu0 0.0
    %4649 = vmatpush1.msra.mxu0 0.0
    %4650 = vmatprep.subr.mxu0 0.0
    %4651 = vmatpush1.msra.mxu0 0.0
    %4652 = vmatprep.subr.mxu0 0.0
    %4653 = vmatpush1.msra.mxu0 0.0
    %4654 = vmatprep.subr.mxu0 0.0
    %4655 = vmatpush1.msra.mxu0 %v412
    %4656 = vmatprep.subr.mxu0 0.0
    %4657 = vmatpush2.msra.mxu0 0.0
    %4658 = vmatprep.subr.mxu0 0.0
    %4659 = vmatpush2.msra.mxu0 0.0
    %4660 = vmatprep.subr.mxu0 0.0
    %4661 = vmatpush2.msra.mxu0 0.0
    %4662 = vmatprep.subr.mxu0 0.0
    %4663 = vmatpush2.msra.mxu0 0.0
    %4664 = vmatprep.subr.mxu0 0.0
    %4665 = vmatpush2.msra.mxu0 0.0
    %4666 = vmatprep.subr.mxu0 0.0
    %4667 = vmatpush2.msra.mxu0 0.0
    %4668 = vmatprep.subr.mxu0 0.0
    %4669 = vmatpush2.msra.mxu0 0.0
    %4670 = vmatprep.subr.mxu0 0.0
    %4671 = vmatpush2.msra.mxu0 0.0
    %4672 = vmatprep.subr.mxu0 0.0
    %4673 = vmatpush2.msra.mxu0 0.0
    %4674 = vmatprep.subr.mxu0 0.0
    %4675 = vmatpush2.msra.mxu0 0.0
    %4676 = vmatprep.subr.mxu0 0.0
    %4677 = vmatpush2.msra.mxu0 0.0
    %4678 = vmatprep.subr.mxu0 0.0
    %4679 = vmatpush2.msra.mxu0 0.0
    %4680 = vmatprep.subr.mxu0 0.0
    %4681 = vmatpush2.msra.mxu0 0.0
    %4682 = vmatprep.subr.mxu0 0.0
    %4683 = vmatpush2.msra.mxu0 0.0
    %4684 = vmatprep.subr.mxu0 0.0
    %4685 = vmatpush2.msra.mxu0 0.0
    %4686 = vmatprep.subr.mxu0 0.0
    %4687 = vmatpush2.msra.mxu0 0.0
    %4688 = vmatprep.mubr.f32.mxu0 0.0
    %4689 = vmatmul.mubr.f32.gmra.mxu0 %v4622
    %v4690 = vpop.f32.mrf.mxu0
    %v4691 = vadd.f32 0.0, %v4690
    %v4692 = vpop.f32.mrf.mxu0
    %4693 = vdwg.mxu0
    %v4695 = vsel %vm2853, %v3207, 0
    %4697 = vmatprep.subr.mxu0 0.0
    %4698 = vmatpush1.msra.mxu0 0.0
    %4699 = vmatprep.subr.mxu0 0.0
    %4700 = vmatpush1.msra.mxu0 0.0
    %4701 = vmatprep.subr.mxu0 0.0
    %4702 = vmatpush1.msra.mxu0 0.0
    %4703 = vmatprep.subr.mxu0 0.0
    %4704 = vmatpush1.msra.mxu0 0.0
    %4705 = vmatprep.subr.mxu0 0.0
    %4706 = vmatpush1.msra.mxu0 0.0
    %4707 = vmatprep.subr.mxu0 0.0
    %4708 = vmatpush1.msra.mxu0 0.0
    %4709 = vmatprep.subr.mxu0 0.0
    %4710 = vmatpush1.msra.mxu0 0.0
    %4711 = vmatprep.subr.mxu0 0.0
    %4712 = vmatpush1.msra.mxu0 0.0
    %4713 = vmatprep.subr.mxu0 0.0
    %4714 = vmatpush1.msra.mxu0 0.0
    %4715 = vmatprep.subr.mxu0 0.0
    %4716 = vmatpush1.msra.mxu0 0.0
    %4717 = vmatprep.subr.mxu0 0.0
    %4718 = vmatpush1.msra.mxu0 0.0
    %4719 = vmatprep.subr.mxu0 0.0
    %4720 = vmatpush1.msra.mxu0 0.0
    %4721 = vmatprep.subr.mxu0 0.0
    %4722 = vmatpush1.msra.mxu0 0.0
    %4723 = vmatprep.subr.mxu0 0.0
    %4724 = vmatpush1.msra.mxu0 0.0
    %4725 = vmatprep.subr.mxu0 0.0
    %4726 = vmatpush1.msra.mxu0 0.0
    %4727 = vmatprep.subr.mxu0 0.0
    %4728 = vmatpush1.msra.mxu0 %v377
    %4729 = vmatprep.subr.mxu0 0.0
    %4730 = vmatpush2.msra.mxu0 0.0
    %4731 = vmatprep.subr.mxu0 0.0
    %4732 = vmatpush2.msra.mxu0 0.0
    %4733 = vmatprep.subr.mxu0 0.0
    %4734 = vmatpush2.msra.mxu0 0.0
    %4735 = vmatprep.subr.mxu0 0.0
    %4736 = vmatpush2.msra.mxu0 0.0
    %4737 = vmatprep.subr.mxu0 0.0
    %4738 = vmatpush2.msra.mxu0 0.0
    %4739 = vmatprep.subr.mxu0 0.0
    %4740 = vmatpush2.msra.mxu0 0.0
    %4741 = vmatprep.subr.mxu0 0.0
    %4742 = vmatpush2.msra.mxu0 0.0
    %4743 = vmatprep.subr.mxu0 0.0
    %4744 = vmatpush2.msra.mxu0 0.0
    %4745 = vmatprep.subr.mxu0 0.0
    %4746 = vmatpush2.msra.mxu0 0.0
    %4747 = vmatprep.subr.mxu0 0.0
    %4748 = vmatpush2.msra.mxu0 0.0
    %4749 = vmatprep.subr.mxu0 0.0
    %4750 = vmatpush2.msra.mxu0 0.0
    %4751 = vmatprep.subr.mxu0 0.0
    %4752 = vmatpush2.msra.mxu0 0.0
    %4753 = vmatprep.subr.mxu0 0.0
    %4754 = vmatpush2.msra.mxu0 0.0
    %4755 = vmatprep.subr.mxu0 0.0
    %4756 = vmatpush2.msra.mxu0 0.0
    %4757 = vmatprep.subr.mxu0 0.0
    %4758 = vmatpush2.msra.mxu0 0.0
    %4759 = vmatprep.subr.mxu0 0.0
    %4760 = vmatpush2.msra.mxu0 0.0
    %4761 = vmatprep.mubr.f32.mxu0 0.0
    %4762 = vmatmul.mubr.f32.gmra.mxu0 %v4695
    %v4763 = vpop.f32.mrf.mxu0
    %v4764 = vadd.f32 0.0, %v4763
    %v4765 = vpop.f32.mrf.mxu0
    %4766 = vdwg.mxu0
    %v4768 = vsel %vm2853, %v3209, 0
    %4770 = vmatprep.subr.mxu0 0.0
    %4771 = vmatpush1.msra.mxu0 0.0
    %4772 = vmatprep.subr.mxu0 0.0
    %4773 = vmatpush1.msra.mxu0 0.0
    %4774 = vmatprep.subr.mxu0 0.0
    %4775 = vmatpush1.msra.mxu0 0.0
    %4776 = vmatprep.subr.mxu0 0.0
    %4777 = vmatpush1.msra.mxu0 0.0
    %4778 = vmatprep.subr.mxu0 0.0
    %4779 = vmatpush1.msra.mxu0 0.0
    %4780 = vmatprep.subr.mxu0 0.0
    %4781 = vmatpush1.msra.mxu0 0.0
    %4782 = vmatprep.subr.mxu0 0.0
    %4783 = vmatpush1.msra.mxu0 0.0
    %4784 = vmatprep.subr.mxu0 0.0
    %4785 = vmatpush1.msra.mxu0 0.0
    %4786 = vmatprep.subr.mxu0 0.0
    %4787 = vmatpush1.msra.mxu0 0.0
    %4788 = vmatprep.subr.mxu0 0.0
    %4789 = vmatpush1.msra.mxu0 0.0
    %4790 = vmatprep.subr.mxu0 0.0
    %4791 = vmatpush1.msra.mxu0 0.0
    %4792 = vmatprep.subr.mxu0 0.0
    %4793 = vmatpush1.msra.mxu0 0.0
    %4794 = vmatprep.subr.mxu0 0.0
    %4795 = vmatpush1.msra.mxu0 0.0
    %4796 = vmatprep.subr.mxu0 0.0
    %4797 = vmatpush1.msra.mxu0 0.0
    %4798 = vmatprep.subr.mxu0 0.0
    %4799 = vmatpush1.msra.mxu0 0.0
    %4800 = vmatprep.subr.mxu0 0.0
    %4801 = vmatpush1.msra.mxu0 %v382
    %4802 = vmatprep.subr.mxu0 0.0
    %4803 = vmatpush2.msra.mxu0 0.0
    %4804 = vmatprep.subr.mxu0 0.0
    %4805 = vmatpush2.msra.mxu0 0.0
    %4806 = vmatprep.subr.mxu0 0.0
    %4807 = vmatpush2.msra.mxu0 0.0
    %4808 = vmatprep.subr.mxu0 0.0
    %4809 = vmatpush2.msra.mxu0 0.0
    %4810 = vmatprep.subr.mxu0 0.0
    %4811 = vmatpush2.msra.mxu0 0.0
    %4812 = vmatprep.subr.mxu0 0.0
    %4813 = vmatpush2.msra.mxu0 0.0
    %4814 = vmatprep.subr.mxu0 0.0
    %4815 = vmatpush2.msra.mxu0 0.0
    %4816 = vmatprep.subr.mxu0 0.0
    %4817 = vmatpush2.msra.mxu0 0.0
    %4818 = vmatprep.subr.mxu0 0.0
    %4819 = vmatpush2.msra.mxu0 0.0
    %4820 = vmatprep.subr.mxu0 0.0
    %4821 = vmatpush2.msra.mxu0 0.0
    %4822 = vmatprep.subr.mxu0 0.0
    %4823 = vmatpush2.msra.mxu0 0.0
    %4824 = vmatprep.subr.mxu0 0.0
    %4825 = vmatpush2.msra.mxu0 0.0
    %4826 = vmatprep.subr.mxu0 0.0
    %4827 = vmatpush2.msra.mxu0 0.0
    %4828 = vmatprep.subr.mxu0 0.0
    %4829 = vmatpush2.msra.mxu0 0.0
    %4830 = vmatprep.subr.mxu0 0.0
    %4831 = vmatpush2.msra.mxu0 0.0
    %4832 = vmatprep.subr.mxu0 0.0
    %4833 = vmatpush2.msra.mxu0 0.0
    %4834 = vmatprep.mubr.f32.mxu0 0.0
    %4835 = vmatmul.mubr.f32.gmra.mxu0 %v4768
    %v4836 = vpop.f32.mrf.mxu0
    %v4837 = vadd.f32 0.0, %v4836
    %v4838 = vpop.f32.mrf.mxu0
    %4839 = vdwg.mxu0
    %v4841 = vsel %vm2853, %v3211, 0
    %4843 = vmatprep.subr.mxu0 0.0
    %4844 = vmatpush1.msra.mxu0 0.0
    %4845 = vmatprep.subr.mxu0 0.0
    %4846 = vmatpush1.msra.mxu0 0.0
    %4847 = vmatprep.subr.mxu0 0.0
    %4848 = vmatpush1.msra.mxu0 0.0
    %4849 = vmatprep.subr.mxu0 0.0
    %4850 = vmatpush1.msra.mxu0 0.0
    %4851 = vmatprep.subr.mxu0 0.0
    %4852 = vmatpush1.msra.mxu0 0.0
    %4853 = vmatprep.subr.mxu0 0.0
    %4854 = vmatpush1.msra.mxu0 0.0
    %4855 = vmatprep.subr.mxu0 0.0
    %4856 = vmatpush1.msra.mxu0 0.0
    %4857 = vmatprep.subr.mxu0 0.0
    %4858 = vmatpush1.msra.mxu0 0.0
    %4859 = vmatprep.subr.mxu0 0.0
    %4860 = vmatpush1.msra.mxu0 0.0
    %4861 = vmatprep.subr.mxu0 0.0
    %4862 = vmatpush1.msra.mxu0 0.0
    %4863 = vmatprep.subr.mxu0 0.0
    %4864 = vmatpush1.msra.mxu0 0.0
    %4865 = vmatprep.subr.mxu0 0.0
    %4866 = vmatpush1.msra.mxu0 0.0
    %4867 = vmatprep.subr.mxu0 0.0
    %4868 = vmatpush1.msra.mxu0 0.0
    %4869 = vmatprep.subr.mxu0 0.0
    %4870 = vmatpush1.msra.mxu0 0.0
    %4871 = vmatprep.subr.mxu0 0.0
    %4872 = vmatpush1.msra.mxu0 0.0
    %4873 = vmatprep.subr.mxu0 0.0
    %4874 = vmatpush1.msra.mxu0 %v387
    %4875 = vmatprep.subr.mxu0 0.0
    %4876 = vmatpush2.msra.mxu0 0.0
    %4877 = vmatprep.subr.mxu0 0.0
    %4878 = vmatpush2.msra.mxu0 0.0
    %4879 = vmatprep.subr.mxu0 0.0
    %4880 = vmatpush2.msra.mxu0 0.0
    %4881 = vmatprep.subr.mxu0 0.0
    %4882 = vmatpush2.msra.mxu0 0.0
    %4883 = vmatprep.subr.mxu0 0.0
    %4884 = vmatpush2.msra.mxu0 0.0
    %4885 = vmatprep.subr.mxu0 0.0
    %4886 = vmatpush2.msra.mxu0 0.0
    %4887 = vmatprep.subr.mxu0 0.0
    %4888 = vmatpush2.msra.mxu0 0.0
    %4889 = vmatprep.subr.mxu0 0.0
    %4890 = vmatpush2.msra.mxu0 0.0
    %4891 = vmatprep.subr.mxu0 0.0
    %4892 = vmatpush2.msra.mxu0 0.0
    %4893 = vmatprep.subr.mxu0 0.0
    %4894 = vmatpush2.msra.mxu0 0.0
    %4895 = vmatprep.subr.mxu0 0.0
    %4896 = vmatpush2.msra.mxu0 0.0
    %4897 = vmatprep.subr.mxu0 0.0
    %4898 = vmatpush2.msra.mxu0 0.0
    %4899 = vmatprep.subr.mxu0 0.0
    %4900 = vmatpush2.msra.mxu0 0.0
    %4901 = vmatprep.subr.mxu0 0.0
    %4902 = vmatpush2.msra.mxu0 0.0
    %4903 = vmatprep.subr.mxu0 0.0
    %4904 = vmatpush2.msra.mxu0 0.0
    %4905 = vmatprep.subr.mxu0 0.0
    %4906 = vmatpush2.msra.mxu0 0.0
    %4907 = vmatprep.mubr.f32.mxu0 0.0
    %4908 = vmatmul.mubr.f32.gmra.mxu0 %v4841
    %v4909 = vpop.f32.mrf.mxu0
    %v4910 = vadd.f32 0.0, %v4909
    %v4911 = vpop.f32.mrf.mxu0
    %4912 = vdwg.mxu0
    %v4914 = vsel %vm2853, %v3213, 0
    %4916 = vmatprep.subr.mxu0 0.0
    %4917 = vmatpush1.msra.mxu0 0.0
    %4918 = vmatprep.subr.mxu0 0.0
    %4919 = vmatpush1.msra.mxu0 0.0
    %4920 = vmatprep.subr.mxu0 0.0
    %4921 = vmatpush1.msra.mxu0 0.0
    %4922 = vmatprep.subr.mxu0 0.0
    %4923 = vmatpush1.msra.mxu0 0.0
    %4924 = vmatprep.subr.mxu0 0.0
    %4925 = vmatpush1.msra.mxu0 0.0
    %4926 = vmatprep.subr.mxu0 0.0
    %4927 = vmatpush1.msra.mxu0 0.0
    %4928 = vmatprep.subr.mxu0 0.0
    %4929 = vmatpush1.msra.mxu0 0.0
    %4930 = vmatprep.subr.mxu0 0.0
    %4931 = vmatpush1.msra.mxu0 0.0
    %4932 = vmatprep.subr.mxu0 0.0
    %4933 = vmatpush1.msra.mxu0 0.0
    %4934 = vmatprep.subr.mxu0 0.0
    %4935 = vmatpush1.msra.mxu0 0.0
    %4936 = vmatprep.subr.mxu0 0.0
    %4937 = vmatpush1.msra.mxu0 0.0
    %4938 = vmatprep.subr.mxu0 0.0
    %4939 = vmatpush1.msra.mxu0 0.0
    %4940 = vmatprep.subr.mxu0 0.0
    %4941 = vmatpush1.msra.mxu0 0.0
    %4942 = vmatprep.subr.mxu0 0.0
    %4943 = vmatpush1.msra.mxu0 0.0
    %4944 = vmatprep.subr.mxu0 0.0
    %4945 = vmatpush1.msra.mxu0 0.0
    %4946 = vmatprep.subr.mxu0 0.0
    %4947 = vmatpush1.msra.mxu0 %v392
    %4948 = vmatprep.subr.mxu0 0.0
    %4949 = vmatpush2.msra.mxu0 0.0
    %4950 = vmatprep.subr.mxu0 0.0
    %4951 = vmatpush2.msra.mxu0 0.0
    %4952 = vmatprep.subr.mxu0 0.0
    %4953 = vmatpush2.msra.mxu0 0.0
    %4954 = vmatprep.subr.mxu0 0.0
    %4955 = vmatpush2.msra.mxu0 0.0
    %4956 = vmatprep.subr.mxu0 0.0
    %4957 = vmatpush2.msra.mxu0 0.0
    %4958 = vmatprep.subr.mxu0 0.0
    %4959 = vmatpush2.msra.mxu0 0.0
    %4960 = vmatprep.subr.mxu0 0.0
    %4961 = vmatpush2.msra.mxu0 0.0
    %4962 = vmatprep.subr.mxu0 0.0
    %4963 = vmatpush2.msra.mxu0 0.0
    %4964 = vmatprep.subr.mxu0 0.0
    %4965 = vmatpush2.msra.mxu0 0.0
    %4966 = vmatprep.subr.mxu0 0.0
    %4967 = vmatpush2.msra.mxu0 0.0
    %4968 = vmatprep.subr.mxu0 0.0
    %4969 = vmatpush2.msra.mxu0 0.0
    %4970 = vmatprep.subr.mxu0 0.0
    %4971 = vmatpush2.msra.mxu0 0.0
    %4972 = vmatprep.subr.mxu0 0.0
    %4973 = vmatpush2.msra.mxu0 0.0
    %4974 = vmatprep.subr.mxu0 0.0
    %4975 = vmatpush2.msra.mxu0 0.0
    %4976 = vmatprep.subr.mxu0 0.0
    %4977 = vmatpush2.msra.mxu0 0.0
    %4978 = vmatprep.subr.mxu0 0.0
    %4979 = vmatpush2.msra.mxu0 0.0
    %4980 = vmatprep.mubr.f32.mxu0 0.0
    %4981 = vmatmul.mubr.f32.gmra.mxu0 %v4914
    %v4982 = vpop.f32.mrf.mxu0
    %v4983 = vadd.f32 0.0, %v4982
    %v4984 = vpop.f32.mrf.mxu0
    %4985 = vdwg.mxu0
    %v4987 = vsel %vm2853, %v3215, 0
    %4989 = vmatprep.subr.mxu0 0.0
    %4990 = vmatpush1.msra.mxu0 0.0
    %4991 = vmatprep.subr.mxu0 0.0
    %4992 = vmatpush1.msra.mxu0 0.0
    %4993 = vmatprep.subr.mxu0 0.0
    %4994 = vmatpush1.msra.mxu0 0.0
    %4995 = vmatprep.subr.mxu0 0.0
    %4996 = vmatpush1.msra.mxu0 0.0
    %4997 = vmatprep.subr.mxu0 0.0
    %4998 = vmatpush1.msra.mxu0 0.0
    %4999 = vmatprep.subr.mxu0 0.0
    %5000 = vmatpush1.msra.mxu0 0.0
    %5001 = vmatprep.subr.mxu0 0.0
    %5002 = vmatpush1.msra.mxu0 0.0
    %5003 = vmatprep.subr.mxu0 0.0
    %5004 = vmatpush1.msra.mxu0 0.0
    %5005 = vmatprep.subr.mxu0 0.0
    %5006 = vmatpush1.msra.mxu0 0.0
    %5007 = vmatprep.subr.mxu0 0.0
    %5008 = vmatpush1.msra.mxu0 0.0
    %5009 = vmatprep.subr.mxu0 0.0
    %5010 = vmatpush1.msra.mxu0 0.0
    %5011 = vmatprep.subr.mxu0 0.0
    %5012 = vmatpush1.msra.mxu0 0.0
    %5013 = vmatprep.subr.mxu0 0.0
    %5014 = vmatpush1.msra.mxu0 0.0
    %5015 = vmatprep.subr.mxu0 0.0
    %5016 = vmatpush1.msra.mxu0 0.0
    %5017 = vmatprep.subr.mxu0 0.0
    %5018 = vmatpush1.msra.mxu0 0.0
    %5019 = vmatprep.subr.mxu0 0.0
    %5020 = vmatpush1.msra.mxu0 %v397
    %5021 = vmatprep.subr.mxu0 0.0
    %5022 = vmatpush2.msra.mxu0 0.0
    %5023 = vmatprep.subr.mxu0 0.0
    %5024 = vmatpush2.msra.mxu0 0.0
    %5025 = vmatprep.subr.mxu0 0.0
    %5026 = vmatpush2.msra.mxu0 0.0
    %5027 = vmatprep.subr.mxu0 0.0
    %5028 = vmatpush2.msra.mxu0 0.0
    %5029 = vmatprep.subr.mxu0 0.0
    %5030 = vmatpush2.msra.mxu0 0.0
    %5031 = vmatprep.subr.mxu0 0.0
    %5032 = vmatpush2.msra.mxu0 0.0
    %5033 = vmatprep.subr.mxu0 0.0
    %5034 = vmatpush2.msra.mxu0 0.0
    %5035 = vmatprep.subr.mxu0 0.0
    %5036 = vmatpush2.msra.mxu0 0.0
    %5037 = vmatprep.subr.mxu0 0.0
    %5038 = vmatpush2.msra.mxu0 0.0
    %5039 = vmatprep.subr.mxu0 0.0
    %5040 = vmatpush2.msra.mxu0 0.0
    %5041 = vmatprep.subr.mxu0 0.0
    %5042 = vmatpush2.msra.mxu0 0.0
    %5043 = vmatprep.subr.mxu0 0.0
    %5044 = vmatpush2.msra.mxu0 0.0
    %5045 = vmatprep.subr.mxu0 0.0
    %5046 = vmatpush2.msra.mxu0 0.0
    %5047 = vmatprep.subr.mxu0 0.0
    %5048 = vmatpush2.msra.mxu0 0.0
    %5049 = vmatprep.subr.mxu0 0.0
    %5050 = vmatpush2.msra.mxu0 0.0
    %5051 = vmatprep.subr.mxu0 0.0
    %5052 = vmatpush2.msra.mxu0 0.0
    %5053 = vmatprep.mubr.f32.mxu0 0.0
    %5054 = vmatmul.mubr.f32.gmra.mxu0 %v4987
    %v5055 = vpop.f32.mrf.mxu0
    %v5056 = vadd.f32 0.0, %v5055
    %v5057 = vpop.f32.mrf.mxu0
    %5058 = vdwg.mxu0
    %v5060 = vsel %vm2853, %v3217, 0
    %5062 = vmatprep.subr.mxu0 0.0
    %5063 = vmatpush1.msra.mxu0 0.0
    %5064 = vmatprep.subr.mxu0 0.0
    %5065 = vmatpush1.msra.mxu0 0.0
    %5066 = vmatprep.subr.mxu0 0.0
    %5067 = vmatpush1.msra.mxu0 0.0
    %5068 = vmatprep.subr.mxu0 0.0
    %5069 = vmatpush1.msra.mxu0 0.0
    %5070 = vmatprep.subr.mxu0 0.0
    %5071 = vmatpush1.msra.mxu0 0.0
    %5072 = vmatprep.subr.mxu0 0.0
    %5073 = vmatpush1.msra.mxu0 0.0
    %5074 = vmatprep.subr.mxu0 0.0
    %5075 = vmatpush1.msra.mxu0 0.0
    %5076 = vmatprep.subr.mxu0 0.0
    %5077 = vmatpush1.msra.mxu0 0.0
    %5078 = vmatprep.subr.mxu0 0.0
    %5079 = vmatpush1.msra.mxu0 0.0
    %5080 = vmatprep.subr.mxu0 0.0
    %5081 = vmatpush1.msra.mxu0 0.0
    %5082 = vmatprep.subr.mxu0 0.0
    %5083 = vmatpush1.msra.mxu0 0.0
    %5084 = vmatprep.subr.mxu0 0.0
    %5085 = vmatpush1.msra.mxu0 0.0
    %5086 = vmatprep.subr.mxu0 0.0
    %5087 = vmatpush1.msra.mxu0 0.0
    %5088 = vmatprep.subr.mxu0 0.0
    %5089 = vmatpush1.msra.mxu0 0.0
    %5090 = vmatprep.subr.mxu0 0.0
    %5091 = vmatpush1.msra.mxu0 0.0
    %5092 = vmatprep.subr.mxu0 0.0
    %5093 = vmatpush1.msra.mxu0 %v402
    %5094 = vmatprep.subr.mxu0 0.0
    %5095 = vmatpush2.msra.mxu0 0.0
    %5096 = vmatprep.subr.mxu0 0.0
    %5097 = vmatpush2.msra.mxu0 0.0
    %5098 = vmatprep.subr.mxu0 0.0
    %5099 = vmatpush2.msra.mxu0 0.0
    %5100 = vmatprep.subr.mxu0 0.0
    %5101 = vmatpush2.msra.mxu0 0.0
    %5102 = vmatprep.subr.mxu0 0.0
    %5103 = vmatpush2.msra.mxu0 0.0
    %5104 = vmatprep.subr.mxu0 0.0
    %5105 = vmatpush2.msra.mxu0 0.0
    %5106 = vmatprep.subr.mxu0 0.0
    %5107 = vmatpush2.msra.mxu0 0.0
    %5108 = vmatprep.subr.mxu0 0.0
    %5109 = vmatpush2.msra.mxu0 0.0
    %5110 = vmatprep.subr.mxu0 0.0
    %5111 = vmatpush2.msra.mxu0 0.0
    %5112 = vmatprep.subr.mxu0 0.0
    %5113 = vmatpush2.msra.mxu0 0.0
    %5114 = vmatprep.subr.mxu0 0.0
    %5115 = vmatpush2.msra.mxu0 0.0
    %5116 = vmatprep.subr.mxu0 0.0
    %5117 = vmatpush2.msra.mxu0 0.0
    %5118 = vmatprep.subr.mxu0 0.0
    %5119 = vmatpush2.msra.mxu0 0.0
    %5120 = vmatprep.subr.mxu0 0.0
    %5121 = vmatpush2.msra.mxu0 0.0
    %5122 = vmatprep.subr.mxu0 0.0
    %5123 = vmatpush2.msra.mxu0 0.0
    %5124 = vmatprep.subr.mxu0 0.0
    %5125 = vmatpush2.msra.mxu0 0.0
    %5126 = vmatprep.mubr.f32.mxu0 0.0
    %5127 = vmatmul.mubr.f32.gmra.mxu0 %v5060
    %v5128 = vpop.f32.mrf.mxu0
    %v5129 = vadd.f32 0.0, %v5128
    %v5130 = vpop.f32.mrf.mxu0
    %5131 = vdwg.mxu0
    %v5133 = vsel %vm2853, %v3219, 0
    %5135 = vmatprep.subr.mxu0 0.0
    %5136 = vmatpush1.msra.mxu0 0.0
    %5137 = vmatprep.subr.mxu0 0.0
    %5138 = vmatpush1.msra.mxu0 0.0
    %5139 = vmatprep.subr.mxu0 0.0
    %5140 = vmatpush1.msra.mxu0 0.0
    %5141 = vmatprep.subr.mxu0 0.0
    %5142 = vmatpush1.msra.mxu0 0.0
    %5143 = vmatprep.subr.mxu0 0.0
    %5144 = vmatpush1.msra.mxu0 0.0
    %5145 = vmatprep.subr.mxu0 0.0
    %5146 = vmatpush1.msra.mxu0 0.0
    %5147 = vmatprep.subr.mxu0 0.0
    %5148 = vmatpush1.msra.mxu0 0.0
    %5149 = vmatprep.subr.mxu0 0.0
    %5150 = vmatpush1.msra.mxu0 0.0
    %5151 = vmatprep.subr.mxu0 0.0
    %5152 = vmatpush1.msra.mxu0 0.0
    %5153 = vmatprep.subr.mxu0 0.0
    %5154 = vmatpush1.msra.mxu0 0.0
    %5155 = vmatprep.subr.mxu0 0.0
    %5156 = vmatpush1.msra.mxu0 0.0
    %5157 = vmatprep.subr.mxu0 0.0
    %5158 = vmatpush1.msra.mxu0 0.0
    %5159 = vmatprep.subr.mxu0 0.0
    %5160 = vmatpush1.msra.mxu0 0.0
    %5161 = vmatprep.subr.mxu0 0.0
    %5162 = vmatpush1.msra.mxu0 0.0
    %5163 = vmatprep.subr.mxu0 0.0
    %5164 = vmatpush1.msra.mxu0 0.0
    %5165 = vmatprep.subr.mxu0 0.0
    %5166 = vmatpush1.msra.mxu0 %v407
    %5167 = vmatprep.subr.mxu0 0.0
    %5168 = vmatpush2.msra.mxu0 0.0
    %5169 = vmatprep.subr.mxu0 0.0
    %5170 = vmatpush2.msra.mxu0 0.0
    %5171 = vmatprep.subr.mxu0 0.0
    %5172 = vmatpush2.msra.mxu0 0.0
    %5173 = vmatprep.subr.mxu0 0.0
    %5174 = vmatpush2.msra.mxu0 0.0
    %5175 = vmatprep.subr.mxu0 0.0
    %5176 = vmatpush2.msra.mxu0 0.0
    %5177 = vmatprep.subr.mxu0 0.0
    %5178 = vmatpush2.msra.mxu0 0.0
    %5179 = vmatprep.subr.mxu0 0.0
    %5180 = vmatpush2.msra.mxu0 0.0
    %5181 = vmatprep.subr.mxu0 0.0
    %5182 = vmatpush2.msra.mxu0 0.0
    %5183 = vmatprep.subr.mxu0 0.0
    %5184 = vmatpush2.msra.mxu0 0.0
    %5185 = vmatprep.subr.mxu0 0.0
    %5186 = vmatpush2.msra.mxu0 0.0
    %5187 = vmatprep.subr.mxu0 0.0
    %5188 = vmatpush2.msra.mxu0 0.0
    %5189 = vmatprep.subr.mxu0 0.0
    %5190 = vmatpush2.msra.mxu0 0.0
    %5191 = vmatprep.subr.mxu0 0.0
    %5192 = vmatpush2.msra.mxu0 0.0
    %5193 = vmatprep.subr.mxu0 0.0
    %5194 = vmatpush2.msra.mxu0 0.0
    %5195 = vmatprep.subr.mxu0 0.0
    %5196 = vmatpush2.msra.mxu0 0.0
    %5197 = vmatprep.subr.mxu0 0.0
    %5198 = vmatpush2.msra.mxu0 0.0
    %5199 = vmatprep.mubr.f32.mxu0 0.0
    %5200 = vmatmul.mubr.f32.gmra.mxu0 %v5133
    %v5201 = vpop.f32.mrf.mxu0
    %v5202 = vadd.f32 0.0, %v5201
    %v5203 = vpop.f32.mrf.mxu0
    %5204 = vdwg.mxu0
    %v5206 = vsel %vm2853, %v3221, 0
    %5208 = vmatprep.subr.mxu0 0.0
    %5209 = vmatpush1.msra.mxu0 0.0
    %5210 = vmatprep.subr.mxu0 0.0
    %5211 = vmatpush1.msra.mxu0 0.0
    %5212 = vmatprep.subr.mxu0 0.0
    %5213 = vmatpush1.msra.mxu0 0.0
    %5214 = vmatprep.subr.mxu0 0.0
    %5215 = vmatpush1.msra.mxu0 0.0
    %5216 = vmatprep.subr.mxu0 0.0
    %5217 = vmatpush1.msra.mxu0 0.0
    %5218 = vmatprep.subr.mxu0 0.0
    %5219 = vmatpush1.msra.mxu0 0.0
    %5220 = vmatprep.subr.mxu0 0.0
    %5221 = vmatpush1.msra.mxu0 0.0
    %5222 = vmatprep.subr.mxu0 0.0
    %5223 = vmatpush1.msra.mxu0 0.0
    %5224 = vmatprep.subr.mxu0 0.0
    %5225 = vmatpush1.msra.mxu0 0.0
    %5226 = vmatprep.subr.mxu0 0.0
    %5227 = vmatpush1.msra.mxu0 0.0
    %5228 = vmatprep.subr.mxu0 0.0
    %5229 = vmatpush1.msra.mxu0 0.0
    %5230 = vmatprep.subr.mxu0 0.0
    %5231 = vmatpush1.msra.mxu0 0.0
    %5232 = vmatprep.subr.mxu0 0.0
    %5233 = vmatpush1.msra.mxu0 0.0
    %5234 = vmatprep.subr.mxu0 0.0
    %5235 = vmatpush1.msra.mxu0 0.0
    %5236 = vmatprep.subr.mxu0 0.0
    %5237 = vmatpush1.msra.mxu0 0.0
    %5238 = vmatprep.subr.mxu0 0.0
    %5239 = vmatpush1.msra.mxu0 %v412
    %5240 = vmatprep.subr.mxu0 0.0
    %5241 = vmatpush2.msra.mxu0 0.0
    %5242 = vmatprep.subr.mxu0 0.0
    %5243 = vmatpush2.msra.mxu0 0.0
    %5244 = vmatprep.subr.mxu0 0.0
    %5245 = vmatpush2.msra.mxu0 0.0
    %5246 = vmatprep.subr.mxu0 0.0
    %5247 = vmatpush2.msra.mxu0 0.0
    %5248 = vmatprep.subr.mxu0 0.0
    %5249 = vmatpush2.msra.mxu0 0.0
    %5250 = vmatprep.subr.mxu0 0.0
    %5251 = vmatpush2.msra.mxu0 0.0
    %5252 = vmatprep.subr.mxu0 0.0
    %5253 = vmatpush2.msra.mxu0 0.0
    %5254 = vmatprep.subr.mxu0 0.0
    %5255 = vmatpush2.msra.mxu0 0.0
    %5256 = vmatprep.subr.mxu0 0.0
    %5257 = vmatpush2.msra.mxu0 0.0
    %5258 = vmatprep.subr.mxu0 0.0
    %5259 = vmatpush2.msra.mxu0 0.0
    %5260 = vmatprep.subr.mxu0 0.0
    %5261 = vmatpush2.msra.mxu0 0.0
    %5262 = vmatprep.subr.mxu0 0.0
    %5263 = vmatpush2.msra.mxu0 0.0
    %5264 = vmatprep.subr.mxu0 0.0
    %5265 = vmatpush2.msra.mxu0 0.0
    %5266 = vmatprep.subr.mxu0 0.0
    %5267 = vmatpush2.msra.mxu0 0.0
    %5268 = vmatprep.subr.mxu0 0.0
    %5269 = vmatpush2.msra.mxu0 0.0
    %5270 = vmatprep.subr.mxu0 0.0
    %5271 = vmatpush2.msra.mxu0 0.0
    %5272 = vmatprep.mubr.f32.mxu0 0.0
    %5273 = vmatmul.mubr.f32.gmra.mxu0 %v5206
    %v5274 = vpop.f32.mrf.mxu0
    %v5275 = vadd.f32 0.0, %v5274
    %v5276 = vpop.f32.mrf.mxu0
    %5277 = vdwg.mxu0
    %v5279 = vsel %vm2853, %v3223, 0
    %5281 = vmatprep.subr.mxu0 0.0
    %5282 = vmatpush1.msra.mxu0 0.0
    %5283 = vmatprep.subr.mxu0 0.0
    %5284 = vmatpush1.msra.mxu0 0.0
    %5285 = vmatprep.subr.mxu0 0.0
    %5286 = vmatpush1.msra.mxu0 0.0
    %5287 = vmatprep.subr.mxu0 0.0
    %5288 = vmatpush1.msra.mxu0 0.0
    %5289 = vmatprep.subr.mxu0 0.0
    %5290 = vmatpush1.msra.mxu0 0.0
    %5291 = vmatprep.subr.mxu0 0.0
    %5292 = vmatpush1.msra.mxu0 0.0
    %5293 = vmatprep.subr.mxu0 0.0
    %5294 = vmatpush1.msra.mxu0 0.0
    %5295 = vmatprep.subr.mxu0 0.0
    %5296 = vmatpush1.msra.mxu0 0.0
    %5297 = vmatprep.subr.mxu0 0.0
    %5298 = vmatpush1.msra.mxu0 0.0
    %5299 = vmatprep.subr.mxu0 0.0
    %5300 = vmatpush1.msra.mxu0 0.0
    %5301 = vmatprep.subr.mxu0 0.0
    %5302 = vmatpush1.msra.mxu0 0.0
    %5303 = vmatprep.subr.mxu0 0.0
    %5304 = vmatpush1.msra.mxu0 0.0
    %5305 = vmatprep.subr.mxu0 0.0
    %5306 = vmatpush1.msra.mxu0 0.0
    %5307 = vmatprep.subr.mxu0 0.0
    %5308 = vmatpush1.msra.mxu0 0.0
    %5309 = vmatprep.subr.mxu0 0.0
    %5310 = vmatpush1.msra.mxu0 0.0
    %5311 = vmatprep.subr.mxu0 0.0
    %5312 = vmatpush1.msra.mxu0 %v377
    %5313 = vmatprep.subr.mxu0 0.0
    %5314 = vmatpush2.msra.mxu0 0.0
    %5315 = vmatprep.subr.mxu0 0.0
    %5316 = vmatpush2.msra.mxu0 0.0
    %5317 = vmatprep.subr.mxu0 0.0
    %5318 = vmatpush2.msra.mxu0 0.0
    %5319 = vmatprep.subr.mxu0 0.0
    %5320 = vmatpush2.msra.mxu0 0.0
    %5321 = vmatprep.subr.mxu0 0.0
    %5322 = vmatpush2.msra.mxu0 0.0
    %5323 = vmatprep.subr.mxu0 0.0
    %5324 = vmatpush2.msra.mxu0 0.0
    %5325 = vmatprep.subr.mxu0 0.0
    %5326 = vmatpush2.msra.mxu0 0.0
    %5327 = vmatprep.subr.mxu0 0.0
    %5328 = vmatpush2.msra.mxu0 0.0
    %5329 = vmatprep.subr.mxu0 0.0
    %5330 = vmatpush2.msra.mxu0 0.0
    %5331 = vmatprep.subr.mxu0 0.0
    %5332 = vmatpush2.msra.mxu0 0.0
    %5333 = vmatprep.subr.mxu0 0.0
    %5334 = vmatpush2.msra.mxu0 0.0
    %5335 = vmatprep.subr.mxu0 0.0
    %5336 = vmatpush2.msra.mxu0 0.0
    %5337 = vmatprep.subr.mxu0 0.0
    %5338 = vmatpush2.msra.mxu0 0.0
    %5339 = vmatprep.subr.mxu0 0.0
    %5340 = vmatpush2.msra.mxu0 0.0
    %5341 = vmatprep.subr.mxu0 0.0
    %5342 = vmatpush2.msra.mxu0 0.0
    %5343 = vmatprep.subr.mxu0 0.0
    %5344 = vmatpush2.msra.mxu0 0.0
    %5345 = vmatprep.mubr.f32.mxu0 0.0
    %5346 = vmatmul.mubr.f32.gmra.mxu0 %v5279
    %v5347 = vpop.f32.mrf.mxu0
    %v5348 = vadd.f32 0.0, %v5347
    %v5349 = vpop.f32.mrf.mxu0
    %5350 = vdwg.mxu0
    %v5352 = vsel %vm2853, %v3225, 0
    %5354 = vmatprep.subr.mxu0 0.0
    %5355 = vmatpush1.msra.mxu0 0.0
    %5356 = vmatprep.subr.mxu0 0.0
    %5357 = vmatpush1.msra.mxu0 0.0
    %5358 = vmatprep.subr.mxu0 0.0
    %5359 = vmatpush1.msra.mxu0 0.0
    %5360 = vmatprep.subr.mxu0 0.0
    %5361 = vmatpush1.msra.mxu0 0.0
    %5362 = vmatprep.subr.mxu0 0.0
    %5363 = vmatpush1.msra.mxu0 0.0
    %5364 = vmatprep.subr.mxu0 0.0
    %5365 = vmatpush1.msra.mxu0 0.0
    %5366 = vmatprep.subr.mxu0 0.0
    %5367 = vmatpush1.msra.mxu0 0.0
    %5368 = vmatprep.subr.mxu0 0.0
    %5369 = vmatpush1.msra.mxu0 0.0
    %5370 = vmatprep.subr.mxu0 0.0
    %5371 = vmatpush1.msra.mxu0 0.0
    %5372 = vmatprep.subr.mxu0 0.0
    %5373 = vmatpush1.msra.mxu0 0.0
    %5374 = vmatprep.subr.mxu0 0.0
    %5375 = vmatpush1.msra.mxu0 0.0
    %5376 = vmatprep.subr.mxu0 0.0
    %5377 = vmatpush1.msra.mxu0 0.0
    %5378 = vmatprep.subr.mxu0 0.0
    %5379 = vmatpush1.msra.mxu0 0.0
    %5380 = vmatprep.subr.mxu0 0.0
    %5381 = vmatpush1.msra.mxu0 0.0
    %5382 = vmatprep.subr.mxu0 0.0
    %5383 = vmatpush1.msra.mxu0 0.0
    %5384 = vmatprep.subr.mxu0 0.0
    %5385 = vmatpush1.msra.mxu0 %v382
    %5386 = vmatprep.subr.mxu0 0.0
    %5387 = vmatpush2.msra.mxu0 0.0
    %5388 = vmatprep.subr.mxu0 0.0
    %5389 = vmatpush2.msra.mxu0 0.0
    %5390 = vmatprep.subr.mxu0 0.0
    %5391 = vmatpush2.msra.mxu0 0.0
    %5392 = vmatprep.subr.mxu0 0.0
    %5393 = vmatpush2.msra.mxu0 0.0
    %5394 = vmatprep.subr.mxu0 0.0
    %5395 = vmatpush2.msra.mxu0 0.0
    %5396 = vmatprep.subr.mxu0 0.0
    %5397 = vmatpush2.msra.mxu0 0.0
    %5398 = vmatprep.subr.mxu0 0.0
    %5399 = vmatpush2.msra.mxu0 0.0
    %5400 = vmatprep.subr.mxu0 0.0
    %5401 = vmatpush2.msra.mxu0 0.0
    %5402 = vmatprep.subr.mxu0 0.0
    %5403 = vmatpush2.msra.mxu0 0.0
    %5404 = vmatprep.subr.mxu0 0.0
    %5405 = vmatpush2.msra.mxu0 0.0
    %5406 = vmatprep.subr.mxu0 0.0
    %5407 = vmatpush2.msra.mxu0 0.0
    %5408 = vmatprep.subr.mxu0 0.0
    %5409 = vmatpush2.msra.mxu0 0.0
    %5410 = vmatprep.subr.mxu0 0.0
    %5411 = vmatpush2.msra.mxu0 0.0
    %5412 = vmatprep.subr.mxu0 0.0
    %5413 = vmatpush2.msra.mxu0 0.0
    %5414 = vmatprep.subr.mxu0 0.0
    %5415 = vmatpush2.msra.mxu0 0.0
    %5416 = vmatprep.subr.mxu0 0.0
    %5417 = vmatpush2.msra.mxu0 0.0
    %5418 = vmatprep.mubr.f32.mxu0 0.0
    %5419 = vmatmul.mubr.f32.gmra.mxu0 %v5352
    %v5420 = vpop.f32.mrf.mxu0
    %v5421 = vadd.f32 0.0, %v5420
    %v5422 = vpop.f32.mrf.mxu0
    %5423 = vdwg.mxu0
    %v5425 = vsel %vm2853, %v3227, 0
    %5427 = vmatprep.subr.mxu0 0.0
    %5428 = vmatpush1.msra.mxu0 0.0
    %5429 = vmatprep.subr.mxu0 0.0
    %5430 = vmatpush1.msra.mxu0 0.0
    %5431 = vmatprep.subr.mxu0 0.0
    %5432 = vmatpush1.msra.mxu0 0.0
    %5433 = vmatprep.subr.mxu0 0.0
    %5434 = vmatpush1.msra.mxu0 0.0
    %5435 = vmatprep.subr.mxu0 0.0
    %5436 = vmatpush1.msra.mxu0 0.0
    %5437 = vmatprep.subr.mxu0 0.0
    %5438 = vmatpush1.msra.mxu0 0.0
    %5439 = vmatprep.subr.mxu0 0.0
    %5440 = vmatpush1.msra.mxu0 0.0
    %5441 = vmatprep.subr.mxu0 0.0
    %5442 = vmatpush1.msra.mxu0 0.0
    %5443 = vmatprep.subr.mxu0 0.0
    %5444 = vmatpush1.msra.mxu0 0.0
    %5445 = vmatprep.subr.mxu0 0.0
    %5446 = vmatpush1.msra.mxu0 0.0
    %5447 = vmatprep.subr.mxu0 0.0
    %5448 = vmatpush1.msra.mxu0 0.0
    %5449 = vmatprep.subr.mxu0 0.0
    %5450 = vmatpush1.msra.mxu0 0.0
    %5451 = vmatprep.subr.mxu0 0.0
    %5452 = vmatpush1.msra.mxu0 0.0
    %5453 = vmatprep.subr.mxu0 0.0
    %5454 = vmatpush1.msra.mxu0 0.0
    %5455 = vmatprep.subr.mxu0 0.0
    %5456 = vmatpush1.msra.mxu0 0.0
    %5457 = vmatprep.subr.mxu0 0.0
    %5458 = vmatpush1.msra.mxu0 %v387
    %5459 = vmatprep.subr.mxu0 0.0
    %5460 = vmatpush2.msra.mxu0 0.0
    %5461 = vmatprep.subr.mxu0 0.0
    %5462 = vmatpush2.msra.mxu0 0.0
    %5463 = vmatprep.subr.mxu0 0.0
    %5464 = vmatpush2.msra.mxu0 0.0
    %5465 = vmatprep.subr.mxu0 0.0
    %5466 = vmatpush2.msra.mxu0 0.0
    %5467 = vmatprep.subr.mxu0 0.0
    %5468 = vmatpush2.msra.mxu0 0.0
    %5469 = vmatprep.subr.mxu0 0.0
    %5470 = vmatpush2.msra.mxu0 0.0
    %5471 = vmatprep.subr.mxu0 0.0
    %5472 = vmatpush2.msra.mxu0 0.0
    %5473 = vmatprep.subr.mxu0 0.0
    %5474 = vmatpush2.msra.mxu0 0.0
    %5475 = vmatprep.subr.mxu0 0.0
    %5476 = vmatpush2.msra.mxu0 0.0
    %5477 = vmatprep.subr.mxu0 0.0
    %5478 = vmatpush2.msra.mxu0 0.0
    %5479 = vmatprep.subr.mxu0 0.0
    %5480 = vmatpush2.msra.mxu0 0.0
    %5481 = vmatprep.subr.mxu0 0.0
    %5482 = vmatpush2.msra.mxu0 0.0
    %5483 = vmatprep.subr.mxu0 0.0
    %5484 = vmatpush2.msra.mxu0 0.0
    %5485 = vmatprep.subr.mxu0 0.0
    %5486 = vmatpush2.msra.mxu0 0.0
    %5487 = vmatprep.subr.mxu0 0.0
    %5488 = vmatpush2.msra.mxu0 0.0
    %5489 = vmatprep.subr.mxu0 0.0
    %5490 = vmatpush2.msra.mxu0 0.0
    %5491 = vmatprep.mubr.f32.mxu0 0.0
    %5492 = vmatmul.mubr.f32.gmra.mxu0 %v5425
    %v5493 = vpop.f32.mrf.mxu0
    %v5494 = vadd.f32 0.0, %v5493
    %v5495 = vpop.f32.mrf.mxu0
    %5496 = vdwg.mxu0
    %v5498 = vsel %vm2853, %v3229, 0
    %5500 = vmatprep.subr.mxu0 0.0
    %5501 = vmatpush1.msra.mxu0 0.0
    %5502 = vmatprep.subr.mxu0 0.0
    %5503 = vmatpush1.msra.mxu0 0.0
    %5504 = vmatprep.subr.mxu0 0.0
    %5505 = vmatpush1.msra.mxu0 0.0
    %5506 = vmatprep.subr.mxu0 0.0
    %5507 = vmatpush1.msra.mxu0 0.0
    %5508 = vmatprep.subr.mxu0 0.0
    %5509 = vmatpush1.msra.mxu0 0.0
    %5510 = vmatprep.subr.mxu0 0.0
    %5511 = vmatpush1.msra.mxu0 0.0
    %5512 = vmatprep.subr.mxu0 0.0
    %5513 = vmatpush1.msra.mxu0 0.0
    %5514 = vmatprep.subr.mxu0 0.0
    %5515 = vmatpush1.msra.mxu0 0.0
    %5516 = vmatprep.subr.mxu0 0.0
    %5517 = vmatpush1.msra.mxu0 0.0
    %5518 = vmatprep.subr.mxu0 0.0
    %5519 = vmatpush1.msra.mxu0 0.0
    %5520 = vmatprep.subr.mxu0 0.0
    %5521 = vmatpush1.msra.mxu0 0.0
    %5522 = vmatprep.subr.mxu0 0.0
    %5523 = vmatpush1.msra.mxu0 0.0
    %5524 = vmatprep.subr.mxu0 0.0
    %5525 = vmatpush1.msra.mxu0 0.0
    %5526 = vmatprep.subr.mxu0 0.0
    %5527 = vmatpush1.msra.mxu0 0.0
    %5528 = vmatprep.subr.mxu0 0.0
    %5529 = vmatpush1.msra.mxu0 0.0
    %5530 = vmatprep.subr.mxu0 0.0
    %5531 = vmatpush1.msra.mxu0 %v392
    %5532 = vmatprep.subr.mxu0 0.0
    %5533 = vmatpush2.msra.mxu0 0.0
    %5534 = vmatprep.subr.mxu0 0.0
    %5535 = vmatpush2.msra.mxu0 0.0
    %5536 = vmatprep.subr.mxu0 0.0
    %5537 = vmatpush2.msra.mxu0 0.0
    %5538 = vmatprep.subr.mxu0 0.0
    %5539 = vmatpush2.msra.mxu0 0.0
    %5540 = vmatprep.subr.mxu0 0.0
    %5541 = vmatpush2.msra.mxu0 0.0
    %5542 = vmatprep.subr.mxu0 0.0
    %5543 = vmatpush2.msra.mxu0 0.0
    %5544 = vmatprep.subr.mxu0 0.0
    %5545 = vmatpush2.msra.mxu0 0.0
    %5546 = vmatprep.subr.mxu0 0.0
    %5547 = vmatpush2.msra.mxu0 0.0
    %5548 = vmatprep.subr.mxu0 0.0
    %5549 = vmatpush2.msra.mxu0 0.0
    %5550 = vmatprep.subr.mxu0 0.0
    %5551 = vmatpush2.msra.mxu0 0.0
    %5552 = vmatprep.subr.mxu0 0.0
    %5553 = vmatpush2.msra.mxu0 0.0
    %5554 = vmatprep.subr.mxu0 0.0
    %5555 = vmatpush2.msra.mxu0 0.0
    %5556 = vmatprep.subr.mxu0 0.0
    %5557 = vmatpush2.msra.mxu0 0.0
    %5558 = vmatprep.subr.mxu0 0.0
    %5559 = vmatpush2.msra.mxu0 0.0
    %5560 = vmatprep.subr.mxu0 0.0
    %5561 = vmatpush2.msra.mxu0 0.0
    %5562 = vmatprep.subr.mxu0 0.0
    %5563 = vmatpush2.msra.mxu0 0.0
    %5564 = vmatprep.mubr.f32.mxu0 0.0
    %5565 = vmatmul.mubr.f32.gmra.mxu0 %v5498
    %v5566 = vpop.f32.mrf.mxu0
    %v5567 = vadd.f32 0.0, %v5566
    %v5568 = vpop.f32.mrf.mxu0
    %5569 = vdwg.mxu0
    %v5571 = vsel %vm2853, %v3231, 0
    %5573 = vmatprep.subr.mxu0 0.0
    %5574 = vmatpush1.msra.mxu0 0.0
    %5575 = vmatprep.subr.mxu0 0.0
    %5576 = vmatpush1.msra.mxu0 0.0
    %5577 = vmatprep.subr.mxu0 0.0
    %5578 = vmatpush1.msra.mxu0 0.0
    %5579 = vmatprep.subr.mxu0 0.0
    %5580 = vmatpush1.msra.mxu0 0.0
    %5581 = vmatprep.subr.mxu0 0.0
    %5582 = vmatpush1.msra.mxu0 0.0
    %5583 = vmatprep.subr.mxu0 0.0
    %5584 = vmatpush1.msra.mxu0 0.0
    %5585 = vmatprep.subr.mxu0 0.0
    %5586 = vmatpush1.msra.mxu0 0.0
    %5587 = vmatprep.subr.mxu0 0.0
    %5588 = vmatpush1.msra.mxu0 0.0
    %5589 = vmatprep.subr.mxu0 0.0
    %5590 = vmatpush1.msra.mxu0 0.0
    %5591 = vmatprep.subr.mxu0 0.0
    %5592 = vmatpush1.msra.mxu0 0.0
    %5593 = vmatprep.subr.mxu0 0.0
    %5594 = vmatpush1.msra.mxu0 0.0
    %5595 = vmatprep.subr.mxu0 0.0
    %5596 = vmatpush1.msra.mxu0 0.0
    %5597 = vmatprep.subr.mxu0 0.0
    %5598 = vmatpush1.msra.mxu0 0.0
    %5599 = vmatprep.subr.mxu0 0.0
    %5600 = vmatpush1.msra.mxu0 0.0
    %5601 = vmatprep.subr.mxu0 0.0
    %5602 = vmatpush1.msra.mxu0 0.0
    %5603 = vmatprep.subr.mxu0 0.0
    %5604 = vmatpush1.msra.mxu0 %v397
    %5605 = vmatprep.subr.mxu0 0.0
    %5606 = vmatpush2.msra.mxu0 0.0
    %5607 = vmatprep.subr.mxu0 0.0
    %5608 = vmatpush2.msra.mxu0 0.0
    %5609 = vmatprep.subr.mxu0 0.0
    %5610 = vmatpush2.msra.mxu0 0.0
    %5611 = vmatprep.subr.mxu0 0.0
    %5612 = vmatpush2.msra.mxu0 0.0
    %5613 = vmatprep.subr.mxu0 0.0
    %5614 = vmatpush2.msra.mxu0 0.0
    %5615 = vmatprep.subr.mxu0 0.0
    %5616 = vmatpush2.msra.mxu0 0.0
    %5617 = vmatprep.subr.mxu0 0.0
    %5618 = vmatpush2.msra.mxu0 0.0
    %5619 = vmatprep.subr.mxu0 0.0
    %5620 = vmatpush2.msra.mxu0 0.0
    %5621 = vmatprep.subr.mxu0 0.0
    %5622 = vmatpush2.msra.mxu0 0.0
    %5623 = vmatprep.subr.mxu0 0.0
    %5624 = vmatpush2.msra.mxu0 0.0
    %5625 = vmatprep.subr.mxu0 0.0
    %5626 = vmatpush2.msra.mxu0 0.0
    %5627 = vmatprep.subr.mxu0 0.0
    %5628 = vmatpush2.msra.mxu0 0.0
    %5629 = vmatprep.subr.mxu0 0.0
    %5630 = vmatpush2.msra.mxu0 0.0
    %5631 = vmatprep.subr.mxu0 0.0
    %5632 = vmatpush2.msra.mxu0 0.0
    %5633 = vmatprep.subr.mxu0 0.0
    %5634 = vmatpush2.msra.mxu0 0.0
    %5635 = vmatprep.subr.mxu0 0.0
    %5636 = vmatpush2.msra.mxu0 0.0
    %5637 = vmatprep.mubr.f32.mxu0 0.0
    %5638 = vmatmul.mubr.f32.gmra.mxu0 %v5571
    %v5639 = vpop.f32.mrf.mxu0
    %v5640 = vadd.f32 0.0, %v5639
    %v5641 = vpop.f32.mrf.mxu0
    %5642 = vdwg.mxu0
    %v5644 = vsel %vm2853, %v3233, 0
    %5646 = vmatprep.subr.mxu0 0.0
    %5647 = vmatpush1.msra.mxu0 0.0
    %5648 = vmatprep.subr.mxu0 0.0
    %5649 = vmatpush1.msra.mxu0 0.0
    %5650 = vmatprep.subr.mxu0 0.0
    %5651 = vmatpush1.msra.mxu0 0.0
    %5652 = vmatprep.subr.mxu0 0.0
    %5653 = vmatpush1.msra.mxu0 0.0
    %5654 = vmatprep.subr.mxu0 0.0
    %5655 = vmatpush1.msra.mxu0 0.0
    %5656 = vmatprep.subr.mxu0 0.0
    %5657 = vmatpush1.msra.mxu0 0.0
    %5658 = vmatprep.subr.mxu0 0.0
    %5659 = vmatpush1.msra.mxu0 0.0
    %5660 = vmatprep.subr.mxu0 0.0
    %5661 = vmatpush1.msra.mxu0 0.0
    %5662 = vmatprep.subr.mxu0 0.0
    %5663 = vmatpush1.msra.mxu0 0.0
    %5664 = vmatprep.subr.mxu0 0.0
    %5665 = vmatpush1.msra.mxu0 0.0
    %5666 = vmatprep.subr.mxu0 0.0
    %5667 = vmatpush1.msra.mxu0 0.0
    %5668 = vmatprep.subr.mxu0 0.0
    %5669 = vmatpush1.msra.mxu0 0.0
    %5670 = vmatprep.subr.mxu0 0.0
    %5671 = vmatpush1.msra.mxu0 0.0
    %5672 = vmatprep.subr.mxu0 0.0
    %5673 = vmatpush1.msra.mxu0 0.0
    %5674 = vmatprep.subr.mxu0 0.0
    %5675 = vmatpush1.msra.mxu0 0.0
    %5676 = vmatprep.subr.mxu0 0.0
    %5677 = vmatpush1.msra.mxu0 %v402
    %5678 = vmatprep.subr.mxu0 0.0
    %5679 = vmatpush2.msra.mxu0 0.0
    %5680 = vmatprep.subr.mxu0 0.0
    %5681 = vmatpush2.msra.mxu0 0.0
    %5682 = vmatprep.subr.mxu0 0.0
    %5683 = vmatpush2.msra.mxu0 0.0
    %5684 = vmatprep.subr.mxu0 0.0
    %5685 = vmatpush2.msra.mxu0 0.0
    %5686 = vmatprep.subr.mxu0 0.0
    %5687 = vmatpush2.msra.mxu0 0.0
    %5688 = vmatprep.subr.mxu0 0.0
    %5689 = vmatpush2.msra.mxu0 0.0
    %5690 = vmatprep.subr.mxu0 0.0
    %5691 = vmatpush2.msra.mxu0 0.0
    %5692 = vmatprep.subr.mxu0 0.0
    %5693 = vmatpush2.msra.mxu0 0.0
    %5694 = vmatprep.subr.mxu0 0.0
    %5695 = vmatpush2.msra.mxu0 0.0
    %5696 = vmatprep.subr.mxu0 0.0
    %5697 = vmatpush2.msra.mxu0 0.0
    %5698 = vmatprep.subr.mxu0 0.0
    %5699 = vmatpush2.msra.mxu0 0.0
    %5700 = vmatprep.subr.mxu0 0.0
    %5701 = vmatpush2.msra.mxu0 0.0
    %5702 = vmatprep.subr.mxu0 0.0
    %5703 = vmatpush2.msra.mxu0 0.0
    %5704 = vmatprep.subr.mxu0 0.0
    %5705 = vmatpush2.msra.mxu0 0.0
    %5706 = vmatprep.subr.mxu0 0.0
    %5707 = vmatpush2.msra.mxu0 0.0
    %5708 = vmatprep.subr.mxu0 0.0
    %5709 = vmatpush2.msra.mxu0 0.0
    %5710 = vmatprep.mubr.f32.mxu0 0.0
    %5711 = vmatmul.mubr.f32.gmra.mxu0 %v5644
    %v5712 = vpop.f32.mrf.mxu0
    %v5713 = vadd.f32 0.0, %v5712
    %v5714 = vpop.f32.mrf.mxu0
    %5715 = vdwg.mxu0
    %v5717 = vsel %vm2853, %v3235, 0
    %5719 = vmatprep.subr.mxu0 0.0
    %5720 = vmatpush1.msra.mxu0 0.0
    %5721 = vmatprep.subr.mxu0 0.0
    %5722 = vmatpush1.msra.mxu0 0.0
    %5723 = vmatprep.subr.mxu0 0.0
    %5724 = vmatpush1.msra.mxu0 0.0
    %5725 = vmatprep.subr.mxu0 0.0
    %5726 = vmatpush1.msra.mxu0 0.0
    %5727 = vmatprep.subr.mxu0 0.0
    %5728 = vmatpush1.msra.mxu0 0.0
    %5729 = vmatprep.subr.mxu0 0.0
    %5730 = vmatpush1.msra.mxu0 0.0
    %5731 = vmatprep.subr.mxu0 0.0
    %5732 = vmatpush1.msra.mxu0 0.0
    %5733 = vmatprep.subr.mxu0 0.0
    %5734 = vmatpush1.msra.mxu0 0.0
    %5735 = vmatprep.subr.mxu0 0.0
    %5736 = vmatpush1.msra.mxu0 0.0
    %5737 = vmatprep.subr.mxu0 0.0
    %5738 = vmatpush1.msra.mxu0 0.0
    %5739 = vmatprep.subr.mxu0 0.0
    %5740 = vmatpush1.msra.mxu0 0.0
    %5741 = vmatprep.subr.mxu0 0.0
    %5742 = vmatpush1.msra.mxu0 0.0
    %5743 = vmatprep.subr.mxu0 0.0
    %5744 = vmatpush1.msra.mxu0 0.0
    %5745 = vmatprep.subr.mxu0 0.0
    %5746 = vmatpush1.msra.mxu0 0.0
    %5747 = vmatprep.subr.mxu0 0.0
    %5748 = vmatpush1.msra.mxu0 0.0
    %5749 = vmatprep.subr.mxu0 0.0
    %5750 = vmatpush1.msra.mxu0 %v407
    %5751 = vmatprep.subr.mxu0 0.0
    %5752 = vmatpush2.msra.mxu0 0.0
    %5753 = vmatprep.subr.mxu0 0.0
    %5754 = vmatpush2.msra.mxu0 0.0
    %5755 = vmatprep.subr.mxu0 0.0
    %5756 = vmatpush2.msra.mxu0 0.0
    %5757 = vmatprep.subr.mxu0 0.0
    %5758 = vmatpush2.msra.mxu0 0.0
    %5759 = vmatprep.subr.mxu0 0.0
    %5760 = vmatpush2.msra.mxu0 0.0
    %5761 = vmatprep.subr.mxu0 0.0
    %5762 = vmatpush2.msra.mxu0 0.0
    %5763 = vmatprep.subr.mxu0 0.0
    %5764 = vmatpush2.msra.mxu0 0.0
    %5765 = vmatprep.subr.mxu0 0.0
    %5766 = vmatpush2.msra.mxu0 0.0
    %5767 = vmatprep.subr.mxu0 0.0
    %5768 = vmatpush2.msra.mxu0 0.0
    %5769 = vmatprep.subr.mxu0 0.0
    %5770 = vmatpush2.msra.mxu0 0.0
    %5771 = vmatprep.subr.mxu0 0.0
    %5772 = vmatpush2.msra.mxu0 0.0
    %5773 = vmatprep.subr.mxu0 0.0
    %5774 = vmatpush2.msra.mxu0 0.0
    %5775 = vmatprep.subr.mxu0 0.0
    %5776 = vmatpush2.msra.mxu0 0.0
    %5777 = vmatprep.subr.mxu0 0.0
    %5778 = vmatpush2.msra.mxu0 0.0
    %5779 = vmatprep.subr.mxu0 0.0
    %5780 = vmatpush2.msra.mxu0 0.0
    %5781 = vmatprep.subr.mxu0 0.0
    %5782 = vmatpush2.msra.mxu0 0.0
    %5783 = vmatprep.mubr.f32.mxu0 0.0
    %5784 = vmatmul.mubr.f32.gmra.mxu0 %v5717
    %v5785 = vpop.f32.mrf.mxu0
    %v5786 = vadd.f32 0.0, %v5785
    %v5787 = vpop.f32.mrf.mxu0
    %5788 = vdwg.mxu0
    %v5790 = vsel %vm2853, %v3237, 0
    %5792 = vmatprep.subr.mxu0 0.0
    %5793 = vmatpush1.msra.mxu0 0.0
    %5794 = vmatprep.subr.mxu0 0.0
    %5795 = vmatpush1.msra.mxu0 0.0
    %5796 = vmatprep.subr.mxu0 0.0
    %5797 = vmatpush1.msra.mxu0 0.0
    %5798 = vmatprep.subr.mxu0 0.0
    %5799 = vmatpush1.msra.mxu0 0.0
    %5800 = vmatprep.subr.mxu0 0.0
    %5801 = vmatpush1.msra.mxu0 0.0
    %5802 = vmatprep.subr.mxu0 0.0
    %5803 = vmatpush1.msra.mxu0 0.0
    %5804 = vmatprep.subr.mxu0 0.0
    %5805 = vmatpush1.msra.mxu0 0.0
    %5806 = vmatprep.subr.mxu0 0.0
    %5807 = vmatpush1.msra.mxu0 0.0
    %5808 = vmatprep.subr.mxu0 0.0
    %5809 = vmatpush1.msra.mxu0 0.0
    %5810 = vmatprep.subr.mxu0 0.0
    %5811 = vmatpush1.msra.mxu0 0.0
    %5812 = vmatprep.subr.mxu0 0.0
    %5813 = vmatpush1.msra.mxu0 0.0
    %5814 = vmatprep.subr.mxu0 0.0
    %5815 = vmatpush1.msra.mxu0 0.0
    %5816 = vmatprep.subr.mxu0 0.0
    %5817 = vmatpush1.msra.mxu0 0.0
    %5818 = vmatprep.subr.mxu0 0.0
    %5819 = vmatpush1.msra.mxu0 0.0
    %5820 = vmatprep.subr.mxu0 0.0
    %5821 = vmatpush1.msra.mxu0 0.0
    %5822 = vmatprep.subr.mxu0 0.0
    %5823 = vmatpush1.msra.mxu0 %v412
    %5824 = vmatprep.subr.mxu0 0.0
    %5825 = vmatpush2.msra.mxu0 0.0
    %5826 = vmatprep.subr.mxu0 0.0
    %5827 = vmatpush2.msra.mxu0 0.0
    %5828 = vmatprep.subr.mxu0 0.0
    %5829 = vmatpush2.msra.mxu0 0.0
    %5830 = vmatprep.subr.mxu0 0.0
    %5831 = vmatpush2.msra.mxu0 0.0
    %5832 = vmatprep.subr.mxu0 0.0
    %5833 = vmatpush2.msra.mxu0 0.0
    %5834 = vmatprep.subr.mxu0 0.0
    %5835 = vmatpush2.msra.mxu0 0.0
    %5836 = vmatprep.subr.mxu0 0.0
    %5837 = vmatpush2.msra.mxu0 0.0
    %5838 = vmatprep.subr.mxu0 0.0
    %5839 = vmatpush2.msra.mxu0 0.0
    %5840 = vmatprep.subr.mxu0 0.0
    %5841 = vmatpush2.msra.mxu0 0.0
    %5842 = vmatprep.subr.mxu0 0.0
    %5843 = vmatpush2.msra.mxu0 0.0
    %5844 = vmatprep.subr.mxu0 0.0
    %5845 = vmatpush2.msra.mxu0 0.0
    %5846 = vmatprep.subr.mxu0 0.0
    %5847 = vmatpush2.msra.mxu0 0.0
    %5848 = vmatprep.subr.mxu0 0.0
    %5849 = vmatpush2.msra.mxu0 0.0
    %5850 = vmatprep.subr.mxu0 0.0
    %5851 = vmatpush2.msra.mxu0 0.0
    %5852 = vmatprep.subr.mxu0 0.0
    %5853 = vmatpush2.msra.mxu0 0.0
    %5854 = vmatprep.subr.mxu0 0.0
    %5855 = vmatpush2.msra.mxu0 0.0
    %5856 = vmatprep.mubr.f32.mxu0 0.0
    %5857 = vmatmul.mubr.f32.gmra.mxu0 %v5790
    %v5858 = vpop.f32.mrf.mxu0
    %v5859 = vadd.f32 0.0, %v5858
    %v5860 = vpop.f32.mrf.mxu0
    %5861 = vdwg.mxu0
    %v5862 = vmul.f32 %v237, %v3596
    %v5863 = vmul.f32 %v242, %v3669
    %v5864 = vmul.f32 %v247, %v3742
    %v5865 = vmul.f32 %v252, %v3815
    %v5866 = vmul.f32 %v257, %v3888
    %v5867 = vmul.f32 %v262, %v3961
    %v5868 = vmul.f32 %v267, %v4034
    %v5869 = vmul.f32 %v272, %v4107
    %v5870 = vmul.f32 %v237, %v4180
    %v5871 = vmul.f32 %v242, %v4253
    %v5872 = vmul.f32 %v247, %v4326
    %v5873 = vmul.f32 %v252, %v4399
    %v5874 = vmul.f32 %v257, %v4472
    %v5875 = vmul.f32 %v262, %v4545
    %v5876 = vmul.f32 %v267, %v4618
    %v5877 = vmul.f32 %v272, %v4691
    %v5878 = vmul.f32 %v237, %v4764
    %v5879 = vmul.f32 %v242, %v4837
    %v5880 = vmul.f32 %v247, %v4910
    %v5881 = vmul.f32 %v252, %v4983
    %v5882 = vmul.f32 %v257, %v5056
    %v5883 = vmul.f32 %v262, %v5129
    %v5884 = vmul.f32 %v267, %v5202
    %v5885 = vmul.f32 %v272, %v5275
    %v5886 = vmul.f32 %v237, %v5348
    %v5887 = vmul.f32 %v242, %v5421
    %v5888 = vmul.f32 %v247, %v5494
    %v5889 = vmul.f32 %v252, %v5567
    %v5890 = vmul.f32 %v257, %v5640
    %v5891 = vmul.f32 %v262, %v5713
    %v5892 = vmul.f32 %v267, %v5786
    %v5893 = vmul.f32 %v272, %v5859
    %v5894 = vsel %vm145, %v5862, 0.0
    %v5895 = vrot.slane %v5894, 4
    %v5896 = vadd.f32 %v5894, %v5895
    %v5897 = vrot.slane %v5896, 2
    %v5898 = vadd.f32 %v5896, %v5897
    %v5899 = vrot.slane %v5898, 1
    %v5900 = vadd.f32 %v5898, %v5899
    %v5901 = vsel %vm145, %v5863, 0.0
    %v5902 = vrot.slane %v5901, 4
    %v5903 = vadd.f32 %v5901, %v5902
    %v5904 = vrot.slane %v5903, 2
    %v5905 = vadd.f32 %v5903, %v5904
    %v5906 = vrot.slane %v5905, 1
    %v5907 = vadd.f32 %v5905, %v5906
    %v5908 = vsel %vm145, %v5864, 0.0
    %v5909 = vrot.slane %v5908, 4
    %v5910 = vadd.f32 %v5908, %v5909
    %v5911 = vrot.slane %v5910, 2
    %v5912 = vadd.f32 %v5910, %v5911
    %v5913 = vrot.slane %v5912, 1
    %v5914 = vadd.f32 %v5912, %v5913
    %v5915 = vsel %vm145, %v5865, 0.0
    %v5916 = vrot.slane %v5915, 4
    %v5917 = vadd.f32 %v5915, %v5916
    %v5918 = vrot.slane %v5917, 2
    %v5919 = vadd.f32 %v5917, %v5918
    %v5920 = vrot.slane %v5919, 1
    %v5921 = vadd.f32 %v5919, %v5920
    %v5922 = vsel %vm145, %v5866, 0.0
    %v5923 = vrot.slane %v5922, 4
    %v5924 = vadd.f32 %v5922, %v5923
    %v5925 = vrot.slane %v5924, 2
    %v5926 = vadd.f32 %v5924, %v5925
    %v5927 = vrot.slane %v5926, 1
    %v5928 = vadd.f32 %v5926, %v5927
    %v5929 = vsel %vm145, %v5867, 0.0
    %v5930 = vrot.slane %v5929, 4
    %v5931 = vadd.f32 %v5929, %v5930
    %v5932 = vrot.slane %v5931, 2
    %v5933 = vadd.f32 %v5931, %v5932
    %v5934 = vrot.slane %v5933, 1
    %v5935 = vadd.f32 %v5933, %v5934
    %v5936 = vsel %vm145, %v5868, 0.0
    %v5937 = vrot.slane %v5936, 4
    %v5938 = vadd.f32 %v5936, %v5937
    %v5939 = vrot.slane %v5938, 2
    %v5940 = vadd.f32 %v5938, %v5939
    %v5941 = vrot.slane %v5940, 1
    %v5942 = vadd.f32 %v5940, %v5941
    %v5943 = vsel %vm145, %v5869, 0.0
    %v5944 = vrot.slane %v5943, 4
    %v5945 = vadd.f32 %v5943, %v5944
    %v5946 = vrot.slane %v5945, 2
    %v5947 = vadd.f32 %v5945, %v5946
    %v5948 = vrot.slane %v5947, 1
    %v5949 = vadd.f32 %v5947, %v5948
    %v5950 = vsel %vm145, %v5870, 0.0
    %v5951 = vrot.slane %v5950, 4
    %v5952 = vadd.f32 %v5950, %v5951
    %v5953 = vrot.slane %v5952, 2
    %v5954 = vadd.f32 %v5952, %v5953
    %v5955 = vrot.slane %v5954, 1
    %v5956 = vadd.f32 %v5954, %v5955
    %v5957 = vsel %vm145, %v5871, 0.0
    %v5958 = vrot.slane %v5957, 4
    %v5959 = vadd.f32 %v5957, %v5958
    %v5960 = vrot.slane %v5959, 2
    %v5961 = vadd.f32 %v5959, %v5960
    %v5962 = vrot.slane %v5961, 1
    %v5963 = vadd.f32 %v5961, %v5962
    %v5964 = vsel %vm145, %v5872, 0.0
    %v5965 = vrot.slane %v5964, 4
    %v5966 = vadd.f32 %v5964, %v5965
    %v5967 = vrot.slane %v5966, 2
    %v5968 = vadd.f32 %v5966, %v5967
    %v5969 = vrot.slane %v5968, 1
    %v5970 = vadd.f32 %v5968, %v5969
    %v5971 = vsel %vm145, %v5873, 0.0
    %v5972 = vrot.slane %v5971, 4
    %v5973 = vadd.f32 %v5971, %v5972
    %v5974 = vrot.slane %v5973, 2
    %v5975 = vadd.f32 %v5973, %v5974
    %v5976 = vrot.slane %v5975, 1
    %v5977 = vadd.f32 %v5975, %v5976
    %v5978 = vsel %vm145, %v5874, 0.0
    %v5979 = vrot.slane %v5978, 4
    %v5980 = vadd.f32 %v5978, %v5979
    %v5981 = vrot.slane %v5980, 2
    %v5982 = vadd.f32 %v5980, %v5981
    %v5983 = vrot.slane %v5982, 1
    %v5984 = vadd.f32 %v5982, %v5983
    %v5985 = vsel %vm145, %v5875, 0.0
    %v5986 = vrot.slane %v5985, 4
    %v5987 = vadd.f32 %v5985, %v5986
    %v5988 = vrot.slane %v5987, 2
    %v5989 = vadd.f32 %v5987, %v5988
    %v5990 = vrot.slane %v5989, 1
    %v5991 = vadd.f32 %v5989, %v5990
    %v5992 = vsel %vm145, %v5876, 0.0
    %v5993 = vrot.slane %v5992, 4
    %v5994 = vadd.f32 %v5992, %v5993
    %v5995 = vrot.slane %v5994, 2
    %v5996 = vadd.f32 %v5994, %v5995
    %v5997 = vrot.slane %v5996, 1
    %v5998 = vadd.f32 %v5996, %v5997
    %v5999 = vsel %vm145, %v5877, 0.0
    %v6000 = vrot.slane %v5999, 4
    %v6001 = vadd.f32 %v5999, %v6000
    %v6002 = vrot.slane %v6001, 2
    %v6003 = vadd.f32 %v6001, %v6002
    %v6004 = vrot.slane %v6003, 1
    %v6005 = vadd.f32 %v6003, %v6004
    %v6006 = vsel %vm145, %v5878, 0.0
    %v6007 = vrot.slane %v6006, 4
    %v6008 = vadd.f32 %v6006, %v6007
    %v6009 = vrot.slane %v6008, 2
    %v6010 = vadd.f32 %v6008, %v6009
    %v6011 = vrot.slane %v6010, 1
    %v6012 = vadd.f32 %v6010, %v6011
    %v6013 = vsel %vm145, %v5879, 0.0
    %v6014 = vrot.slane %v6013, 4
    %v6015 = vadd.f32 %v6013, %v6014
    %v6016 = vrot.slane %v6015, 2
    %v6017 = vadd.f32 %v6015, %v6016
    %v6018 = vrot.slane %v6017, 1
    %v6019 = vadd.f32 %v6017, %v6018
    %v6020 = vsel %vm145, %v5880, 0.0
    %v6021 = vrot.slane %v6020, 4
    %v6022 = vadd.f32 %v6020, %v6021
    %v6023 = vrot.slane %v6022, 2
    %v6024 = vadd.f32 %v6022, %v6023
    %v6025 = vrot.slane %v6024, 1
    %v6026 = vadd.f32 %v6024, %v6025
    %v6027 = vsel %vm145, %v5881, 0.0
    %v6028 = vrot.slane %v6027, 4
    %v6029 = vadd.f32 %v6027, %v6028
    %v6030 = vrot.slane %v6029, 2
    %v6031 = vadd.f32 %v6029, %v6030
    %v6032 = vrot.slane %v6031, 1
    %v6033 = vadd.f32 %v6031, %v6032
    %v6034 = vsel %vm145, %v5882, 0.0
    %v6035 = vrot.slane %v6034, 4
    %v6036 = vadd.f32 %v6034, %v6035
    %v6037 = vrot.slane %v6036, 2
    %v6038 = vadd.f32 %v6036, %v6037
    %v6039 = vrot.slane %v6038, 1
    %v6040 = vadd.f32 %v6038, %v6039
    %v6041 = vsel %vm145, %v5883, 0.0
    %v6042 = vrot.slane %v6041, 4
    %v6043 = vadd.f32 %v6041, %v6042
    %v6044 = vrot.slane %v6043, 2
    %v6045 = vadd.f32 %v6043, %v6044
    %v6046 = vrot.slane %v6045, 1
    %v6047 = vadd.f32 %v6045, %v6046
    %v6048 = vsel %vm145, %v5884, 0.0
    %v6049 = vrot.slane %v6048, 4
    %v6050 = vadd.f32 %v6048, %v6049
    %v6051 = vrot.slane %v6050, 2
    %v6052 = vadd.f32 %v6050, %v6051
    %v6053 = vrot.slane %v6052, 1
    %v6054 = vadd.f32 %v6052, %v6053
    %v6055 = vsel %vm145, %v5885, 0.0
    %v6056 = vrot.slane %v6055, 4
    %v6057 = vadd.f32 %v6055, %v6056
    %v6058 = vrot.slane %v6057, 2
    %v6059 = vadd.f32 %v6057, %v6058
    %v6060 = vrot.slane %v6059, 1
    %v6061 = vadd.f32 %v6059, %v6060
    %v6062 = vsel %vm145, %v5886, 0.0
    %v6063 = vrot.slane %v6062, 4
    %v6064 = vadd.f32 %v6062, %v6063
    %v6065 = vrot.slane %v6064, 2
    %v6066 = vadd.f32 %v6064, %v6065
    %v6067 = vrot.slane %v6066, 1
    %v6068 = vadd.f32 %v6066, %v6067
    %v6069 = vsel %vm145, %v5887, 0.0
    %v6070 = vrot.slane %v6069, 4
    %v6071 = vadd.f32 %v6069, %v6070
    %v6072 = vrot.slane %v6071, 2
    %v6073 = vadd.f32 %v6071, %v6072
    %v6074 = vrot.slane %v6073, 1
    %v6075 = vadd.f32 %v6073, %v6074
    %v6076 = vsel %vm145, %v5888, 0.0
    %v6077 = vrot.slane %v6076, 4
    %v6078 = vadd.f32 %v6076, %v6077
    %v6079 = vrot.slane %v6078, 2
    %v6080 = vadd.f32 %v6078, %v6079
    %v6081 = vrot.slane %v6080, 1
    %v6082 = vadd.f32 %v6080, %v6081
    %v6083 = vsel %vm145, %v5889, 0.0
    %v6084 = vrot.slane %v6083, 4
    %v6085 = vadd.f32 %v6083, %v6084
    %v6086 = vrot.slane %v6085, 2
    %v6087 = vadd.f32 %v6085, %v6086
    %v6088 = vrot.slane %v6087, 1
    %v6089 = vadd.f32 %v6087, %v6088
    %v6090 = vsel %vm145, %v5890, 0.0
    %v6091 = vrot.slane %v6090, 4
    %v6092 = vadd.f32 %v6090, %v6091
    %v6093 = vrot.slane %v6092, 2
    %v6094 = vadd.f32 %v6092, %v6093
    %v6095 = vrot.slane %v6094, 1
    %v6096 = vadd.f32 %v6094, %v6095
    %v6097 = vsel %vm145, %v5891, 0.0
    %v6098 = vrot.slane %v6097, 4
    %v6099 = vadd.f32 %v6097, %v6098
    %v6100 = vrot.slane %v6099, 2
    %v6101 = vadd.f32 %v6099, %v6100
    %v6102 = vrot.slane %v6101, 1
    %v6103 = vadd.f32 %v6101, %v6102
    %v6104 = vsel %vm145, %v5892, 0.0
    %v6105 = vrot.slane %v6104, 4
    %v6106 = vadd.f32 %v6104, %v6105
    %v6107 = vrot.slane %v6106, 2
    %v6108 = vadd.f32 %v6106, %v6107
    %v6109 = vrot.slane %v6108, 1
    %v6110 = vadd.f32 %v6108, %v6109
    %v6111 = vsel %vm145, %v5893, 0.0
    %v6112 = vrot.slane %v6111, 4
    %v6113 = vadd.f32 %v6111, %v6112
    %v6114 = vrot.slane %v6113, 2
    %v6115 = vadd.f32 %v6113, %v6114
    %v6116 = vrot.slane %v6115, 1
    %v6117 = vadd.f32 %v6115, %v6116
    %v6118 = vrcp.pop %v3339
    %v6119 = vrcp.pop %v3345
    %v6120 = vrcp.pop %v3351
    %v6121 = vrcp.pop %v3357
    %v6122 = vrcp.pop %v3363
    %v6123 = vrcp.pop %v3369
    %v6124 = vrcp.pop %v3375
    %v6125 = vrcp.pop %v3381
    %v6126 = vrcp.pop %v3387
    %v6127 = vrcp.pop %v3393
    %v6128 = vrcp.pop %v3399
    %v6129 = vrcp.pop %v3405
    %v6130 = vrcp.pop %v3411
    %v6131 = vrcp.pop %v3417
    %v6132 = vrcp.pop %v3423
    %v6133 = vrcp.pop %v3429
    %v6134 = vrcp.pop %v3435
    %v6135 = vrcp.pop %v3441
    %v6136 = vrcp.pop %v3447
    %v6137 = vrcp.pop %v3453
    %v6138 = vrcp.pop %v3459
    %v6139 = vrcp.pop %v3465
    %v6140 = vrcp.pop %v3471
    %v6141 = vrcp.pop %v3477
    %v6142 = vrcp.pop %v3483
    %v6143 = vrcp.pop %v3489
    %v6144 = vrcp.pop %v3495
    %v6145 = vrcp.pop %v3501
    %v6146 = vrcp.pop %v3507
    %v6147 = vrcp.pop %v3513
    %v6148 = vrcp.pop %v3519
    %v6149 = vrcp.pop %v3525
    %v6150 = vmul.f32 %v5900, %v6118
    %v6151 = vmul.f32 %v5907, %v6119
    %v6152 = vmul.f32 %v5914, %v6120
    %v6153 = vmul.f32 %v5921, %v6121
    %v6154 = vmul.f32 %v5928, %v6122
    %v6155 = vmul.f32 %v5935, %v6123
    %v6156 = vmul.f32 %v5942, %v6124
    %v6157 = vmul.f32 %v5949, %v6125
    %v6158 = vmul.f32 %v5956, %v6126
    %v6159 = vmul.f32 %v5963, %v6127
    %v6160 = vmul.f32 %v5970, %v6128
    %v6161 = vmul.f32 %v5977, %v6129
    %v6162 = vmul.f32 %v5984, %v6130
    %v6163 = vmul.f32 %v5991, %v6131
    %v6164 = vmul.f32 %v5998, %v6132
    %v6165 = vmul.f32 %v6005, %v6133
    %v6166 = vmul.f32 %v6012, %v6134
    %v6167 = vmul.f32 %v6019, %v6135
    %v6168 = vmul.f32 %v6026, %v6136
    %v6169 = vmul.f32 %v6033, %v6137
    %v6170 = vmul.f32 %v6040, %v6138
    %v6171 = vmul.f32 %v6047, %v6139
    %v6172 = vmul.f32 %v6054, %v6140
    %v6173 = vmul.f32 %v6061, %v6141
    %v6174 = vmul.f32 %v6068, %v6142
    %v6175 = vmul.f32 %v6075, %v6143
    %v6176 = vmul.f32 %v6082, %v6144
    %v6177 = vmul.f32 %v6089, %v6145
    %v6178 = vmul.f32 %v6096, %v6146
    %v6179 = vmul.f32 %v6103, %v6147
    %v6180 = vmul.f32 %v6110, %v6148
    %v6181 = vmul.f32 %v6117, %v6149
    %v6182 = vld [vmem:[#allocation10] sm:$0xff]
    %v6183 = vld [vmem:[#allocation10 + $0x8] sm:$0xff]
    %v6184 = vld [vmem:[#allocation10 + $0x10] sm:$0xff]
    %v6185 = vld [vmem:[#allocation10 + $0x18] sm:$0xff]
    %v6186 = vld [vmem:[#allocation10 + $0x20] sm:$0xff]
    %v6187 = vld [vmem:[#allocation10 + $0x28] sm:$0xff]
    %v6188 = vld [vmem:[#allocation10 + $0x30] sm:$0xff]
    %v6189 = vld [vmem:[#allocation10 + $0x38] sm:$0xff]
    %v6190 = vld [vmem:[#allocation10 + $0x40] sm:$0xff]
    %v6191 = vld [vmem:[#allocation10 + $0x48] sm:$0xff]
    %v6192 = vld [vmem:[#allocation10 + $0x50] sm:$0xff]
    %v6193 = vld [vmem:[#allocation10 + $0x58] sm:$0xff]
    %v6194 = vld [vmem:[#allocation10 + $0x60] sm:$0xff]
    %v6195 = vld [vmem:[#allocation10 + $0x68] sm:$0xff]
    %v6196 = vld [vmem:[#allocation10 + $0x70] sm:$0xff]
    %v6197 = vld [vmem:[#allocation10 + $0x78] sm:$0xff]
    %vm6206 = vcmask 1041409
    %v6207 = vsel %vm6206, %v6151, %v6150
    %vm6208 = vcmask 1042434
    %v6209 = vsel %vm6208, %v6152, %v6207
    %vm6210 = vcmask 1043459
    %v6211 = vsel %vm6210, %v6153, %v6209
    %vm6212 = vcmask 1044484
    %v6213 = vsel %vm6212, %v6154, %v6211
    %vm6214 = vcmask 1045509
    %v6215 = vsel %vm6214, %v6155, %v6213
    %vm6216 = vcmask 1046534
    %v6217 = vsel %vm6216, %v6156, %v6215
    %vm6218 = vcmask 1047559
    %v6219 = vsel %vm6218, %v6157, %v6217
    %v6220 = vsel %vm145, %v6219, 0
    %6222 = vmatprep.subr.mxu0 0.0
    %6223 = vmatpush1.msra.mxu0 0.0
    %6224 = vmatprep.subr.mxu0 0.0
    %6225 = vmatpush1.msra.mxu0 0.0
    %6226 = vmatprep.subr.mxu0 0.0
    %6227 = vmatpush1.msra.mxu0 0.0
    %6228 = vmatprep.subr.mxu0 0.0
    %6229 = vmatpush1.msra.mxu0 0.0
    %6230 = vmatprep.subr.mxu0 0.0
    %6231 = vmatpush1.msra.mxu0 0.0
    %6232 = vmatprep.subr.mxu0 0.0
    %6233 = vmatpush1.msra.mxu0 0.0
    %6234 = vmatprep.subr.mxu0 0.0
    %6235 = vmatpush1.msra.mxu0 0.0
    %6236 = vmatprep.subr.mxu0 0.0
    %6237 = vmatpush1.msra.mxu0 0.0
    %6238 = vmatprep.subr.mxu0 0.0
    %6239 = vmatpush1.msra.mxu0 0.0
    %6240 = vmatprep.subr.mxu0 0.0
    %6241 = vmatpush1.msra.mxu0 0.0
    %6242 = vmatprep.subr.mxu0 0.0
    %6243 = vmatpush1.msra.mxu0 0.0
    %6244 = vmatprep.subr.mxu0 0.0
    %6245 = vmatpush1.msra.mxu0 0.0
    %6246 = vmatprep.subr.mxu0 0.0
    %6247 = vmatpush1.msra.mxu0 %v6185
    %6248 = vmatprep.subr.mxu0 0.0
    %6249 = vmatpush1.msra.mxu0 %v6184
    %6250 = vmatprep.subr.mxu0 0.0
    %6251 = vmatpush1.msra.mxu0 %v6183
    %6252 = vmatprep.subr.mxu0 0.0
    %6253 = vmatpush1.msra.mxu0 %v6182
    %6254 = vmatprep.subr.mxu0 0.0
    %6255 = vmatpush2.msra.mxu0 0.0
    %6256 = vmatprep.subr.mxu0 0.0
    %6257 = vmatpush2.msra.mxu0 0.0
    %6258 = vmatprep.subr.mxu0 0.0
    %6259 = vmatpush2.msra.mxu0 0.0
    %6260 = vmatprep.subr.mxu0 0.0
    %6261 = vmatpush2.msra.mxu0 0.0
    %6262 = vmatprep.subr.mxu0 0.0
    %6263 = vmatpush2.msra.mxu0 0.0
    %6264 = vmatprep.subr.mxu0 0.0
    %6265 = vmatpush2.msra.mxu0 0.0
    %6266 = vmatprep.subr.mxu0 0.0
    %6267 = vmatpush2.msra.mxu0 0.0
    %6268 = vmatprep.subr.mxu0 0.0
    %6269 = vmatpush2.msra.mxu0 0.0
    %6270 = vmatprep.subr.mxu0 0.0
    %6271 = vmatpush2.msra.mxu0 0.0
    %6272 = vmatprep.subr.mxu0 0.0
    %6273 = vmatpush2.msra.mxu0 0.0
    %6274 = vmatprep.subr.mxu0 0.0
    %6275 = vmatpush2.msra.mxu0 0.0
    %6276 = vmatprep.subr.mxu0 0.0
    %6277 = vmatpush2.msra.mxu0 0.0
    %6278 = vmatprep.subr.mxu0 0.0
    %6279 = vmatpush2.msra.mxu0 0.0
    %6280 = vmatprep.subr.mxu0 0.0
    %6281 = vmatpush2.msra.mxu0 0.0
    %6282 = vmatprep.subr.mxu0 0.0
    %6283 = vmatpush2.msra.mxu0 0.0
    %6284 = vmatprep.subr.mxu0 0.0
    %6285 = vmatpush2.msra.mxu0 0.0
    %6286 = vmatprep.mubr.f32.mxu0 0.0
    %6287 = vmatmul.mubr.f32.gmra.mxu0 %v6220
    %v6288 = vpop.f32.mrf.mxu0
    %v6289 = vadd.f32 0.0, %v6288
    %v6290 = vpop.f32.mrf.mxu0
    %6291 = vdwg.mxu0
    %v6300 = vsel %vm6206, %v6159, %v6158
    %v6301 = vsel %vm6208, %v6160, %v6300
    %v6302 = vsel %vm6210, %v6161, %v6301
    %v6303 = vsel %vm6212, %v6162, %v6302
    %v6304 = vsel %vm6214, %v6163, %v6303
    %v6305 = vsel %vm6216, %v6164, %v6304
    %v6306 = vsel %vm6218, %v6165, %v6305
    %v6307 = vsel %vm145, %v6306, 0
    %6309 = vmatprep.subr.mxu0 0.0
    %6310 = vmatpush1.msra.mxu0 0.0
    %6311 = vmatprep.subr.mxu0 0.0
    %6312 = vmatpush1.msra.mxu0 0.0
    %6313 = vmatprep.subr.mxu0 0.0
    %6314 = vmatpush1.msra.mxu0 0.0
    %6315 = vmatprep.subr.mxu0 0.0
    %6316 = vmatpush1.msra.mxu0 0.0
    %6317 = vmatprep.subr.mxu0 0.0
    %6318 = vmatpush1.msra.mxu0 0.0
    %6319 = vmatprep.subr.mxu0 0.0
    %6320 = vmatpush1.msra.mxu0 0.0
    %6321 = vmatprep.subr.mxu0 0.0
    %6322 = vmatpush1.msra.mxu0 0.0
    %6323 = vmatprep.subr.mxu0 0.0
    %6324 = vmatpush1.msra.mxu0 0.0
    %6325 = vmatprep.subr.mxu0 0.0
    %6326 = vmatpush1.msra.mxu0 0.0
    %6327 = vmatprep.subr.mxu0 0.0
    %6328 = vmatpush1.msra.mxu0 0.0
    %6329 = vmatprep.subr.mxu0 0.0
    %6330 = vmatpush1.msra.mxu0 0.0
    %6331 = vmatprep.subr.mxu0 0.0
    %6332 = vmatpush1.msra.mxu0 0.0
    %6333 = vmatprep.subr.mxu0 0.0
    %6334 = vmatpush1.msra.mxu0 %v6189
    %6335 = vmatprep.subr.mxu0 0.0
    %6336 = vmatpush1.msra.mxu0 %v6188
    %6337 = vmatprep.subr.mxu0 0.0
    %6338 = vmatpush1.msra.mxu0 %v6187
    %6339 = vmatprep.subr.mxu0 0.0
    %6340 = vmatpush1.msra.mxu0 %v6186
    %6341 = vmatprep.subr.mxu0 0.0
    %6342 = vmatpush2.msra.mxu0 0.0
    %6343 = vmatprep.subr.mxu0 0.0
    %6344 = vmatpush2.msra.mxu0 0.0
    %6345 = vmatprep.subr.mxu0 0.0
    %6346 = vmatpush2.msra.mxu0 0.0
    %6347 = vmatprep.subr.mxu0 0.0
    %6348 = vmatpush2.msra.mxu0 0.0
    %6349 = vmatprep.subr.mxu0 0.0
    %6350 = vmatpush2.msra.mxu0 0.0
    %6351 = vmatprep.subr.mxu0 0.0
    %6352 = vmatpush2.msra.mxu0 0.0
    %6353 = vmatprep.subr.mxu0 0.0
    %6354 = vmatpush2.msra.mxu0 0.0
    %6355 = vmatprep.subr.mxu0 0.0
    %6356 = vmatpush2.msra.mxu0 0.0
    %6357 = vmatprep.subr.mxu0 0.0
    %6358 = vmatpush2.msra.mxu0 0.0
    %6359 = vmatprep.subr.mxu0 0.0
    %6360 = vmatpush2.msra.mxu0 0.0
    %6361 = vmatprep.subr.mxu0 0.0
    %6362 = vmatpush2.msra.mxu0 0.0
    %6363 = vmatprep.subr.mxu0 0.0
    %6364 = vmatpush2.msra.mxu0 0.0
    %6365 = vmatprep.subr.mxu0 0.0
    %6366 = vmatpush2.msra.mxu0 0.0
    %6367 = vmatprep.subr.mxu0 0.0
    %6368 = vmatpush2.msra.mxu0 0.0
    %6369 = vmatprep.subr.mxu0 0.0
    %6370 = vmatpush2.msra.mxu0 0.0
    %6371 = vmatprep.subr.mxu0 0.0
    %6372 = vmatpush2.msra.mxu0 0.0
    %6373 = vmatprep.mubr.f32.mxu0 0.0
    %6374 = vmatmul.mubr.f32.gmra.mxu0 %v6307
    %v6375 = vpop.f32.mrf.mxu0
    %v6376 = vadd.f32 0.0, %v6375
    %v6377 = vpop.f32.mrf.mxu0
    %6378 = vdwg.mxu0
    %v6387 = vsel %vm6206, %v6167, %v6166
    %v6388 = vsel %vm6208, %v6168, %v6387
    %v6389 = vsel %vm6210, %v6169, %v6388
    %v6390 = vsel %vm6212, %v6170, %v6389
    %v6391 = vsel %vm6214, %v6171, %v6390
    %v6392 = vsel %vm6216, %v6172, %v6391
    %v6393 = vsel %vm6218, %v6173, %v6392
    %v6394 = vsel %vm145, %v6393, 0
    %6396 = vmatprep.subr.mxu0 0.0
    %6397 = vmatpush1.msra.mxu0 0.0
    %6398 = vmatprep.subr.mxu0 0.0
    %6399 = vmatpush1.msra.mxu0 0.0
    %6400 = vmatprep.subr.mxu0 0.0
    %6401 = vmatpush1.msra.mxu0 0.0
    %6402 = vmatprep.subr.mxu0 0.0
    %6403 = vmatpush1.msra.mxu0 0.0
    %6404 = vmatprep.subr.mxu0 0.0
    %6405 = vmatpush1.msra.mxu0 0.0
    %6406 = vmatprep.subr.mxu0 0.0
    %6407 = vmatpush1.msra.mxu0 0.0
    %6408 = vmatprep.subr.mxu0 0.0
    %6409 = vmatpush1.msra.mxu0 0.0
    %6410 = vmatprep.subr.mxu0 0.0
    %6411 = vmatpush1.msra.mxu0 0.0
    %6412 = vmatprep.subr.mxu0 0.0
    %6413 = vmatpush1.msra.mxu0 0.0
    %6414 = vmatprep.subr.mxu0 0.0
    %6415 = vmatpush1.msra.mxu0 0.0
    %6416 = vmatprep.subr.mxu0 0.0
    %6417 = vmatpush1.msra.mxu0 0.0
    %6418 = vmatprep.subr.mxu0 0.0
    %6419 = vmatpush1.msra.mxu0 0.0
    %6420 = vmatprep.subr.mxu0 0.0
    %6421 = vmatpush1.msra.mxu0 %v6193
    %6422 = vmatprep.subr.mxu0 0.0
    %6423 = vmatpush1.msra.mxu0 %v6192
    %6424 = vmatprep.subr.mxu0 0.0
    %6425 = vmatpush1.msra.mxu0 %v6191
    %6426 = vmatprep.subr.mxu0 0.0
    %6427 = vmatpush1.msra.mxu0 %v6190
    %6428 = vmatprep.subr.mxu0 0.0
    %6429 = vmatpush2.msra.mxu0 0.0
    %6430 = vmatprep.subr.mxu0 0.0
    %6431 = vmatpush2.msra.mxu0 0.0
    %6432 = vmatprep.subr.mxu0 0.0
    %6433 = vmatpush2.msra.mxu0 0.0
    %6434 = vmatprep.subr.mxu0 0.0
    %6435 = vmatpush2.msra.mxu0 0.0
    %6436 = vmatprep.subr.mxu0 0.0
    %6437 = vmatpush2.msra.mxu0 0.0
    %6438 = vmatprep.subr.mxu0 0.0
    %6439 = vmatpush2.msra.mxu0 0.0
    %6440 = vmatprep.subr.mxu0 0.0
    %6441 = vmatpush2.msra.mxu0 0.0
    %6442 = vmatprep.subr.mxu0 0.0
    %6443 = vmatpush2.msra.mxu0 0.0
    %6444 = vmatprep.subr.mxu0 0.0
    %6445 = vmatpush2.msra.mxu0 0.0
    %6446 = vmatprep.subr.mxu0 0.0
    %6447 = vmatpush2.msra.mxu0 0.0
    %6448 = vmatprep.subr.mxu0 0.0
    %6449 = vmatpush2.msra.mxu0 0.0
    %6450 = vmatprep.subr.mxu0 0.0
    %6451 = vmatpush2.msra.mxu0 0.0
    %6452 = vmatprep.subr.mxu0 0.0
    %6453 = vmatpush2.msra.mxu0 0.0
    %6454 = vmatprep.subr.mxu0 0.0
    %6455 = vmatpush2.msra.mxu0 0.0
    %6456 = vmatprep.subr.mxu0 0.0
    %6457 = vmatpush2.msra.mxu0 0.0
    %6458 = vmatprep.subr.mxu0 0.0
    %6459 = vmatpush2.msra.mxu0 0.0
    %6460 = vmatprep.mubr.f32.mxu0 0.0
    %6461 = vmatmul.mubr.f32.gmra.mxu0 %v6394
    %v6462 = vpop.f32.mrf.mxu0
    %v6463 = vadd.f32 0.0, %v6462
    %v6464 = vpop.f32.mrf.mxu0
    %6465 = vdwg.mxu0
    %v6474 = vsel %vm6206, %v6175, %v6174
    %v6475 = vsel %vm6208, %v6176, %v6474
    %v6476 = vsel %vm6210, %v6177, %v6475
    %v6477 = vsel %vm6212, %v6178, %v6476
    %v6478 = vsel %vm6214, %v6179, %v6477
    %v6479 = vsel %vm6216, %v6180, %v6478
    %v6480 = vsel %vm6218, %v6181, %v6479
    %v6481 = vsel %vm145, %v6480, 0
    %6483 = vmatprep.subr.mxu0 0.0
    %6484 = vmatpush1.msra.mxu0 0.0
    %6485 = vmatprep.subr.mxu0 0.0
    %6486 = vmatpush1.msra.mxu0 0.0
    %6487 = vmatprep.subr.mxu0 0.0
    %6488 = vmatpush1.msra.mxu0 0.0
    %6489 = vmatprep.subr.mxu0 0.0
    %6490 = vmatpush1.msra.mxu0 0.0
    %6491 = vmatprep.subr.mxu0 0.0
    %6492 = vmatpush1.msra.mxu0 0.0
    %6493 = vmatprep.subr.mxu0 0.0
    %6494 = vmatpush1.msra.mxu0 0.0
    %6495 = vmatprep.subr.mxu0 0.0
    %6496 = vmatpush1.msra.mxu0 0.0
    %6497 = vmatprep.subr.mxu0 0.0
    %6498 = vmatpush1.msra.mxu0 0.0
    %6499 = vmatprep.subr.mxu0 0.0
    %6500 = vmatpush1.msra.mxu0 0.0
    %6501 = vmatprep.subr.mxu0 0.0
    %6502 = vmatpush1.msra.mxu0 0.0
    %6503 = vmatprep.subr.mxu0 0.0
    %6504 = vmatpush1.msra.mxu0 0.0
    %6505 = vmatprep.subr.mxu0 0.0
    %6506 = vmatpush1.msra.mxu0 0.0
    %6507 = vmatprep.subr.mxu0 0.0
    %6508 = vmatpush1.msra.mxu0 %v6197
    %6509 = vmatprep.subr.mxu0 0.0
    %6510 = vmatpush1.msra.mxu0 %v6196
    %6511 = vmatprep.subr.mxu0 0.0
    %6512 = vmatpush1.msra.mxu0 %v6195
    %6513 = vmatprep.subr.mxu0 0.0
    %6514 = vmatpush1.msra.mxu0 %v6194
    %6515 = vmatprep.subr.mxu0 0.0
    %6516 = vmatpush2.msra.mxu0 0.0
    %6517 = vmatprep.subr.mxu0 0.0
    %6518 = vmatpush2.msra.mxu0 0.0
    %6519 = vmatprep.subr.mxu0 0.0
    %6520 = vmatpush2.msra.mxu0 0.0
    %6521 = vmatprep.subr.mxu0 0.0
    %6522 = vmatpush2.msra.mxu0 0.0
    %6523 = vmatprep.subr.mxu0 0.0
    %6524 = vmatpush2.msra.mxu0 0.0
    %6525 = vmatprep.subr.mxu0 0.0
    %6526 = vmatpush2.msra.mxu0 0.0
    %6527 = vmatprep.subr.mxu0 0.0
    %6528 = vmatpush2.msra.mxu0 0.0
    %6529 = vmatprep.subr.mxu0 0.0
    %6530 = vmatpush2.msra.mxu0 0.0
    %6531 = vmatprep.subr.mxu0 0.0
    %6532 = vmatpush2.msra.mxu0 0.0
    %6533 = vmatprep.subr.mxu0 0.0
    %6534 = vmatpush2.msra.mxu0 0.0
    %6535 = vmatprep.subr.mxu0 0.0
    %6536 = vmatpush2.msra.mxu0 0.0
    %6537 = vmatprep.subr.mxu0 0.0
    %6538 = vmatpush2.msra.mxu0 0.0
    %6539 = vmatprep.subr.mxu0 0.0
    %6540 = vmatpush2.msra.mxu0 0.0
    %6541 = vmatprep.subr.mxu0 0.0
    %6542 = vmatpush2.msra.mxu0 0.0
    %6543 = vmatprep.subr.mxu0 0.0
    %6544 = vmatpush2.msra.mxu0 0.0
    %6545 = vmatprep.subr.mxu0 0.0
    %6546 = vmatpush2.msra.mxu0 0.0
    %6547 = vmatprep.mubr.f32.mxu0 0.0
    %6548 = vmatmul.mubr.f32.gmra.mxu0 %v6481
    %v6549 = vpop.f32.mrf.mxu0
    %v6550 = vadd.f32 0.0, %v6549
    %v6551 = vpop.f32.mrf.mxu0
    %6552 = vdwg.mxu0
    %v6553 = vld [vmem:[%s8] sm:$0x1]
    %v6554 = vsel %vm145, %v6289, 0.0
    %v6555 = vsel %vm145, %v6376, 0.0
    %v6556 = vadd.f32 %v6554, %v6555
    %v6557 = vsel %vm145, %v6463, 0.0
    %v6558 = vadd.f32 %v6556, %v6557
    %v6559 = vsel %vm145, %v6550, 0.0
    %v6560 = vadd.f32 %v6558, %v6559
    %v6562 = vlaneseq
    %v6563 = vshrl.u32 %v6562, 7
    %v6564 = vsub.s32 0, %v6563
    %v6565 = vrot.slane %v6553, %v6564
    %v6567 = vadd.f32 %v6565, %v6560
    %v6568 = vld [vmem:[#allocation11] sm:$0xff]
    %v6569 = vld [vmem:[#allocation11 + $0x8] sm:$0xff]
    %v6570 = vld [vmem:[#allocation11 + $0x10] sm:$0xff]
    %v6571 = vld [vmem:[#allocation11 + $0x18] sm:$0xff]
    %v6573 = vsel %vm145, %v6567, 0
    %6575 = vmatprep.subr.mxu0 0.0
    %6576 = vmatpush1.msra.mxu0 0.0
    %6577 = vmatprep.subr.mxu0 0.0
    %6578 = vmatpush1.msra.mxu0 0.0
    %6579 = vmatprep.subr.mxu0 0.0
    %6580 = vmatpush1.msra.mxu0 0.0
    %6581 = vmatprep.subr.mxu0 0.0
    %6582 = vmatpush1.msra.mxu0 0.0
    %6583 = vmatprep.subr.mxu0 0.0
    %6584 = vmatpush1.msra.mxu0 0.0
    %6585 = vmatprep.subr.mxu0 0.0
    %6586 = vmatpush1.msra.mxu0 0.0
    %6587 = vmatprep.subr.mxu0 0.0
    %6588 = vmatpush1.msra.mxu0 0.0
    %6589 = vmatprep.subr.mxu0 0.0
    %6590 = vmatpush1.msra.mxu0 0.0
    %6591 = vmatprep.subr.mxu0 0.0
    %6592 = vmatpush1.msra.mxu0 0.0
    %6593 = vmatprep.subr.mxu0 0.0
    %6594 = vmatpush1.msra.mxu0 0.0
    %6595 = vmatprep.subr.mxu0 0.0
    %6596 = vmatpush1.msra.mxu0 0.0
    %6597 = vmatprep.subr.mxu0 0.0
    %6598 = vmatpush1.msra.mxu0 0.0
    %6599 = vmatprep.subr.mxu0 0.0
    %6600 = vmatpush1.msra.mxu0 %v6571
    %6601 = vmatprep.subr.mxu0 0.0
    %6602 = vmatpush1.msra.mxu0 %v6570
    %6603 = vmatprep.subr.mxu0 0.0
    %6604 = vmatpush1.msra.mxu0 %v6569
    %6605 = vmatprep.subr.mxu0 0.0
    %6606 = vmatpush1.msra.mxu0 %v6568
    %6607 = vmatprep.subr.mxu0 0.0
    %6608 = vmatpush2.msra.mxu0 0.0
    %6609 = vmatprep.subr.mxu0 0.0
    %6610 = vmatpush2.msra.mxu0 0.0
    %6611 = vmatprep.subr.mxu0 0.0
    %6612 = vmatpush2.msra.mxu0 0.0
    %6613 = vmatprep.subr.mxu0 0.0
    %6614 = vmatpush2.msra.mxu0 0.0
    %6615 = vmatprep.subr.mxu0 0.0
    %6616 = vmatpush2.msra.mxu0 0.0
    %6617 = vmatprep.subr.mxu0 0.0
    %6618 = vmatpush2.msra.mxu0 0.0
    %6619 = vmatprep.subr.mxu0 0.0
    %6620 = vmatpush2.msra.mxu0 0.0
    %6621 = vmatprep.subr.mxu0 0.0
    %6622 = vmatpush2.msra.mxu0 0.0
    %6623 = vmatprep.subr.mxu0 0.0
    %6624 = vmatpush2.msra.mxu0 0.0
    %6625 = vmatprep.subr.mxu0 0.0
    %6626 = vmatpush2.msra.mxu0 0.0
    %6627 = vmatprep.subr.mxu0 0.0
    %6628 = vmatpush2.msra.mxu0 0.0
    %6629 = vmatprep.subr.mxu0 0.0
    %6630 = vmatpush2.msra.mxu0 0.0
    %6631 = vmatprep.subr.mxu0 0.0
    %6632 = vmatpush2.msra.mxu0 0.0
    %6633 = vmatprep.subr.mxu0 0.0
    %6634 = vmatpush2.msra.mxu0 0.0
    %6635 = vmatprep.subr.mxu0 0.0
    %6636 = vmatpush2.msra.mxu0 0.0
    %6637 = vmatprep.subr.mxu0 0.0
    %6638 = vmatpush2.msra.mxu0 0.0
    %6639 = vmatprep.mubr.f32.mxu0 0.0
    %6640 = vmatmul.mubr.f32.gmra.mxu0 %v6573
    %v6641 = vpop.f32.mrf.mxu0
    %v6642 = vadd.f32 0.0, %v6641
    %v6643 = vpop.f32.mrf.mxu0
    %6644 = vdwg.mxu0
    %v6645 = vlaneseq
    %v6646 = vand.u32 %v6645, 127
    %vm6647 = vcmp.lt.s32.totalorder %v6646, 16
    %v6648 = vsel %vm6647, %v6642, -1e+30
    %6649 = vmax.xlane.f32.xlu0 %v6648
    %v6650 = vpop.xlane.xlu0 %6649
    %v6651 = vsub.f32 %v6648, %v6650
    %v6652 = vmul.f32 %v6651, 1.442695
    %v6653 = vpow.pop %v6652
    %6654 = vadd.xlane.f32.xlu0 %v6653
    %v6655 = vpop.xlane.xlu0 %6654
    %v6656 = vlog2.pop %v6655
    %v6657 = vmul.f32 %v6656, 0.6931472
    %v6658 = vsub.f32 %v6651, %v6657
    %6659 = vst [vmem:[#allocation13] sm:$0xff] %v6658
    // Predicated region
    $region66: #{tpu_custom_call.1} parent=1 // pred_check
      _
    $region67: #{tpu_custom_call.1} parent=1 // pred_check_branch
      %6661 = sbr.rel (0) target = $region69
    $region68: #{tpu_custom_call.1} parent=1 // pred_region
      %s6663 = ssub.s32 128, 128
      %6664 = vsyncadd [#allocation4], %s6663
      %s6666 = sshll.u32 [#allocation13], 4
      %s6667 = int_to_ptr.vmem [resolvable:$true] %s6666
      %6669 = dma.vmem_to_hbm [thread:$0]  %s6667, 128, %s10, [#allocation4]
    $region69: #{tpu_custom_call.1} parent=1 // pred_fallthru
      _
    // Predicated region
    $region70: #{tpu_custom_call.1} parent=1 // pred_check
      _
    $region71: #{tpu_custom_call.1} parent=1 // pred_check_branch
      %6671 = sbr.rel (0) target = $region73
    $region72: #{tpu_custom_call.1} parent=1 // pred_region
      %6672 = dma.done [#allocation4], 128
    $region73: #{tpu_custom_call.1} parent=1 // pred_fallthru
      _
    %6673 = vsyncpa [#allocation3], 1
    %6674 = vsyncpa [#allocation6], 1
    %6675 = vsyncpa [#allocation9], 1
    %6676 = vsyncpa [#allocation12], 1
    %6677 = vsyncpa [#allocation4], 1

</llo_original>
